<compile_context>
chip_gen: v6e
topology: v6e:2x2x1
jax: 0.10.0
libtpu: 0.0.40
codegen_flags: <defaults>
</compile_context>

<pallas_src>
import jax
import jax.numpy as jnp
from jax.experimental import pallas as pl
from jax.experimental.pallas import tpu as pltpu


# ----------------------------------------------------------------------------
# Conv 3x3 (pad=1, stride=1) + bias + ReLU + 2x2 max-pool (stride 2)
# One grid step = one batch image x one tile of TH output rows (+1-row halo).
# ----------------------------------------------------------------------------
def conv3x3_relu_pool_kernel(x_ref, w_ref, b_ref, o_ref):
    # x_ref: (1, 1, Cin, TH+2, W+2)   padded row tile of one image
    # w_ref: (Cout, 9*Cin)            taps stacked along K: k = (kh*3+kw)*Cin+ci
    # b_ref: (Cout, 1)
    # o_ref: (1, 1, PW, Cout*PH)      lane-dense pooled output slab
    _, _, cin, hp, wp = x_ref.shape
    th, wid = hp - 2, wp - 2
    cout = w_ref.shape[0]
    ph, pw = th // 2, wid // 2
    cp = cout * ph

    xp = x_ref[0, 0]                                    # (Cin, TH+2, W+2)

    # Stack the 9 shifted patches along the contraction axis -> a single MXU
    # dot with K = 9*Cin (27 / 144) instead of 9 shallow dots + VPU adds.
    parts = [xp[:, kh:kh + th, kw:kw + wid]
             for kh in range(3) for kw in range(3)]
    patches = jnp.concatenate(parts, axis=0).reshape(9 * cin, th * wid)
    acc = jnp.dot(w_ref[...], patches, preferred_element_type=jnp.float32)
    acc = jnp.maximum(acc + b_ref[...], 0.0)            # bias + ReLU, (Cout, TH*W)

    # 2x2 / stride-2 max pool.
    y = acc.reshape(cp, 2 * wid)                        # rows=(c,ph); [h even | h odd]
    y = jnp.maximum(y[:, :wid], y[:, wid:])             # pool H -> (Cout*PH, W)
    yt = y.T.reshape(pw, 2 * cp)                        # one transpose; [w even | w odd]
    o_ref[0, 0] = jnp.maximum(yt[:, :cp], yt[:, cp:]).astype(o_ref.dtype)


def conv3x3_relu_pool(x, w_taps, b, *, th):
    # x: (N, Cin, H, W) f32; w_taps: (Cout, 9*Cin); b: (Cout, 1)
    n, cin, h, w = x.shape
    cout = w_taps.shape[0]
    assert h % th == 0 and th % 2 == 0 and w % 2 == 0
    t, ph, pw = h // th, th // 2, w // 2
    cp = cout * ph

    xp = jnp.pad(x, ((0, 0), (0, 0), (1, 1), (1, 1)))   # padding=1 (zeros)
    # Row tiles with a 1-row halo on each side; the duplicated halo rows are a
    # few KiB of wrapper-side glue and keep the BlockSpec overlap-free.
    xw = jnp.stack([xp[:, :, i * th:i * th + th + 2, :] for i in range(t)],
                   axis=1)                               # (N, T, Cin, TH+2, W+2)

    out = pl.pallas_call(
        conv3x3_relu_pool_kernel,
        out_shape=jax.ShapeDtypeStruct((n, t, pw, cp), x.dtype),
        grid_spec=pltpu.PrefetchScalarGridSpec(
            num_scalar_prefetch=0,
            grid=(n, t),
            in_specs=[
                pl.BlockSpec((1, 1, cin, th + 2, w + 2),
                             lambda i, j: (i, j, 0, 0, 0)),
                pl.BlockSpec((cout, 9 * cin), lambda i, j: (0, 0)),
                pl.BlockSpec((cout, 1), lambda i, j: (0, 0)),
            ],
            out_specs=pl.BlockSpec((1, 1, pw, cp), lambda i, j: (i, j, 0, 0)),
        ),
        compiler_params=pltpu.CompilerParams(
            dimension_semantics=("parallel", "parallel")),
    )(xw, w_taps, b)

    # (N, T, PW, Cout, PH) -> (N, Cout, T, PH, PW) -> NCHW.  Cheap XLA glue
    # between pallas_calls; keeps the in-kernel store lane-dense.
    out = out.reshape(n, t, pw, cout, ph).transpose(0, 3, 1, 4, 2)
    return out.reshape(n, cout, h // 2, w // 2)


# ----------------------------------------------------------------------------
# Fused fc1 (relu) + fc2:  out_partial[j] = relu(x @ W1[:, j-tile] + b1) @ W2[j-tile]
# Grid = (M_tiles, K_tiles); K innermost reduction, M tiles parallel (megacore).
# Dropout(0.5) is identity in eval mode so fc2 can consume the hidden directly.
# ----------------------------------------------------------------------------
def fc_fused_kernel(x_ref, w1_ref, b1_ref, w2_ref, o_ref, acc_ref):
    k = pl.program_id(1)

    @pl.when(k == 0)
    def _():
        acc_ref[...] = jnp.zeros_like(acc_ref)

    acc_ref[...] += jnp.dot(x_ref[...], w1_ref[...],
                            preferred_element_type=jnp.float32)

    @pl.when(k == pl.num_programs(1) - 1)
    def _():
        h = jnp.maximum(acc_ref[...] + b1_ref[...], 0.0)      # (N, tm) f32
        o_ref[0] = jnp.dot(h, w2_ref[...],
                           preferred_element_type=jnp.float32).astype(o_ref.dtype)


def fc1_relu_fc2(x, w1, b1, w2, b2, *, tm=256, tk=8192):
    # x: (N, K) f32; w1: (K, M) bf16; b1: (1, M) f32; w2: (M, O) f32; b2: (1, O)
    n, k = x.shape
    m = w1.shape[1]
    o = w2.shape[1]
    assert k % tk == 0 and m % tm == 0
    mt, kt = m // tm, k // tk

    xb = x.astype(w1.dtype)                              # bf16 MXU operands, f32 acc
    partials = pl.pallas_call(
        fc_fused_kernel,
        out_shape=jax.ShapeDtypeStruct((mt, n, o), jnp.float32),
        grid_spec=pltpu.PrefetchScalarGridSpec(
            num_scalar_prefetch=0,
            grid=(mt, kt),
            in_specs=[
                pl.BlockSpec((n, tk), lambda j, l: (0, l)),
                pl.BlockSpec((tk, tm), lambda j, l: (l, j)),
                pl.BlockSpec((1, tm), lambda j, l: (0, j)),
                pl.BlockSpec((tm, o), lambda j, l: (j, 0)),
            ],
            out_specs=pl.BlockSpec((1, n, o), lambda j, l: (j, 0, 0)),
            scratch_shapes=[pltpu.VMEM((n, tm), jnp.float32)],
        ),
        compiler_params=pltpu.CompilerParams(
            dimension_semantics=("parallel", "arbitrary")),
    )(xb, w1, b1, w2)
    return jnp.sum(partials, axis=0) + b2                # (N, O)


# ----------------------------------------------------------------------------
# Parameters (deterministic, PyTorch-default-like uniform init, PyTorch shapes)
# ----------------------------------------------------------------------------
def init_params(key):
    ks = jax.random.split(key, 8)

    def u(kk, shape, fan_in):
        bound = 1.0 / jnp.sqrt(jnp.float32(fan_in))
        return jax.random.uniform(kk, shape, jnp.float32, -bound, bound)

    return {
        "conv1_w": u(ks[0], (16, 3, 3, 3), 3 * 9),            # (Cout, Cin, kh, kw)
        "conv1_b": u(ks[1], (16,), 3 * 9),
        "conv2_w": u(ks[2], (32, 16, 3, 3), 16 * 9),
        "conv2_b": u(ks[3], (32,), 16 * 9),
        "fc1_w":   u(ks[4], (512, 32 * 32 * 32), 32 * 32 * 32),  # (out, in)
        "fc1_b":   u(ks[5], (512,), 32 * 32 * 32),
        "fc2_w":   u(ks[6], (2, 512), 512),
        "fc2_b":   u(ks[7], (2,), 512),
    }


def prepare_params(p):
    # One-time layout prep (NOT part of the per-forward cost):
    #  - conv weights reshaped to (Cout, 9*Cin) with k = (kh*3+kw)*Cin + cin
    #  - fc1 weight pre-transposed to (in, out) and cast to bf16
    return {
        "w1c": jnp.transpose(p["conv1_w"], (0, 2, 3, 1)).reshape(16, 27),
        "b1c": p["conv1_b"].reshape(16, 1),
        "w2c": jnp.transpose(p["conv2_w"], (0, 2, 3, 1)).reshape(32, 144),
        "b2c": p["conv2_b"].reshape(32, 1),
        "w_fc1": p["fc1_w"].T.astype(jnp.bfloat16),           # (32768, 512) bf16
        "b_fc1": p["fc1_b"].reshape(1, 512),
        "w_fc2": p["fc2_w"].T,                                 # (512, 2) f32
        "b_fc2": p["fc2_b"].reshape(1, 2),
    }


# ----------------------------------------------------------------------------
# Forward
# ----------------------------------------------------------------------------
def conv_features(x, prep):
    # x: (N, 3, 128, 128) f32, NCHW (fc1 = 32*32*32 implies 128x128 input).
    x = conv3x3_relu_pool(x, prep["w1c"], prep["b1c"], th=16)   # (N, 16, 64, 64)
    x = conv3x3_relu_pool(x, prep["w2c"], prep["b2c"], th=16)   # (N, 32, 32, 32)
    return x.reshape(x.shape[0], -1)                            # torch .view order


def simple_cnn_forward(x, prep):
    feat = conv_features(x, prep)                               # (N, 32768) f32
    # TODO(synk): nn.Dropout(0.5) is identity in eval mode; training-mode RNG
    # masking is not implemented here.
    return fc1_relu_fc2(feat, prep["w_fc1"], prep["b_fc1"],
                        prep["w_fc2"], prep["b_fc2"])           # (N, 2)


# ----------------------------------------------------------------------------
# Pure-JAX references (mirror the PyTorch forward) for sanity checks
# ----------------------------------------------------------------------------
def reference_conv_features(x, p):
    dn = ("NCHW", "OIHW", "NCHW")

    def conv(v, w, b):
        y = jax.lax.conv_general_dilated(v, w, (1, 1), ((1, 1), (1, 1)),
                                         dimension_numbers=dn)
        return y + b.reshape(1, -1, 1, 1)

    def pool(v):
        return jax.lax.reduce_window(v, -jnp.inf, jax.lax.max,
                                     (1, 1, 2, 2), (1, 1, 2, 2), "VALID")

    v = pool(jax.nn.relu(conv(x, p["conv1_w"], p["conv1_b"])))
    v = pool(jax.nn.relu(conv(v, p["conv2_w"], p["conv2_b"])))
    return v.reshape(v.shape[0], -1)


def reference_forward(x, p):
    v = reference_conv_features(x, p)
    v = jax.nn.relu(v @ p["fc1_w"].T + p["fc1_b"])
    v = v @ p["fc2_w"].T + p["fc2_b"]
    return v


if __name__ == "__main__":
    key = jax.random.PRNGKey(0)
    pkey, xkey = jax.random.split(key)
    params = init_params(pkey)
    prep = prepare_params(params)            # one-time transposes / bf16 cast
    x = jax.random.normal(xkey, (2, 3, 128, 128), jnp.float32)

    # Conv path is all-f32: tight tolerance.
    feat = jax.block_until_ready(jax.jit(conv_features)(x, prep))
    feat_ref = reference_conv_features(x, params)
    assert feat.shape == (2, 32 * 32 * 32)
    assert jnp.allclose(feat, feat_ref, rtol=1e-4, atol=1e-4)

    # End-to-end: fc1 uses bf16 weights/activations (f32 accumulation), so a
    # modestly looser bound applies versus the all-f32 reference.
    out = jax.block_until_ready(jax.jit(simple_cnn_forward)(x, prep))
    ref = jax.block_until_ready(reference_forward(x, params))
    assert out.shape == (2, 2) and out.dtype == jnp.float32
    assert jnp.allclose(out, ref, rtol=2e-2, atol=2e-2), (out, ref)
    print("KERNEL_OK")
</pallas_src>

<mosaic_0001>
module attributes {stable_mosaic.version = 11 : i64} {
  func.func @conv3x3_relu_pool_kernel(%arg0: i32, %arg1: i32, %arg2: memref<1x1x3x18x130xf32, #tpu.memory_space<vmem>>, %arg3: memref<16x27xf32, #tpu.memory_space<vmem>>, %arg4: memref<16x1xf32, #tpu.memory_space<vmem>>, %arg5: memref<1x1x64x128xf32, #tpu.memory_space<vmem>>) attributes {dimension_semantics = [#tpu.dimension_semantics<parallel>, #tpu.dimension_semantics<parallel>], iteration_bounds = array<i64: 2, 8>, scalar_prefetch = 0 : i64, scratch_operands = 0 : i64, tpu.core_type = #tpu.core_type<tc>, window_params = [{transform_indices = @transform_0, window_bounds = array<i64: 1, 1, 3, 18, 130>}, {pipeline_mode = #tpu.pipeline_mode<synchronous>, transform_indices = @transform_1, window_bounds = array<i64: 16, 27>}, {pipeline_mode = #tpu.pipeline_mode<synchronous>, transform_indices = @transform_2, window_bounds = array<i64: 16, 1>}, {transform_indices = @transform_3, window_bounds = array<i64: 1, 1, 64, 128>}]} {
    %c0 = arith.constant 0 : index
    %c0_0 = arith.constant 0 : index
    %c0_1 = arith.constant 0 : index
    %c0_2 = arith.constant 0 : index
    %c0_3 = arith.constant 0 : index
    %0 = vector.load %arg2[%c0, %c0_0, %c0_1, %c0_2, %c0_3] : memref<1x1x3x18x130xf32, #tpu.memory_space<vmem>>, vector<1x1x3x18x130xf32>
    %1 = vector.shape_cast %0 : vector<1x1x3x18x130xf32> to vector<3x18x130xf32>
    %2 = vector.extract_strided_slice %1 {offsets = [0, 0, 0], sizes = [3, 16, 128], strides = [1, 1, 1]} : vector<3x18x130xf32> to vector<3x16x128xf32>
    %3 = vector.extract_strided_slice %1 {offsets = [0, 0, 1], sizes = [3, 16, 128], strides = [1, 1, 1]} : vector<3x18x130xf32> to vector<3x16x128xf32>
    %4 = vector.extract_strided_slice %1 {offsets = [0, 0, 2], sizes = [3, 16, 128], strides = [1, 1, 1]} : vector<3x18x130xf32> to vector<3x16x128xf32>
    %5 = vector.extract_strided_slice %1 {offsets = [0, 1, 0], sizes = [3, 16, 128], strides = [1, 1, 1]} : vector<3x18x130xf32> to vector<3x16x128xf32>
    %6 = vector.extract_strided_slice %1 {offsets = [0, 1, 1], sizes = [3, 16, 128], strides = [1, 1, 1]} : vector<3x18x130xf32> to vector<3x16x128xf32>
    %7 = vector.extract_strided_slice %1 {offsets = [0, 1, 2], sizes = [3, 16, 128], strides = [1, 1, 1]} : vector<3x18x130xf32> to vector<3x16x128xf32>
    %8 = vector.extract_strided_slice %1 {offsets = [0, 2, 0], sizes = [3, 16, 128], strides = [1, 1, 1]} : vector<3x18x130xf32> to vector<3x16x128xf32>
    %9 = vector.extract_strided_slice %1 {offsets = [0, 2, 1], sizes = [3, 16, 128], strides = [1, 1, 1]} : vector<3x18x130xf32> to vector<3x16x128xf32>
    %10 = vector.extract_strided_slice %1 {offsets = [0, 2, 2], sizes = [3, 16, 128], strides = [1, 1, 1]} : vector<3x18x130xf32> to vector<3x16x128xf32>
    %11 = tpu.concatenate %2, %3, %4, %5, %6, %7, %8, %9, %10 in 0 : vector<3x16x128xf32>, vector<3x16x128xf32>, vector<3x16x128xf32>, vector<3x16x128xf32>, vector<3x16x128xf32>, vector<3x16x128xf32>, vector<3x16x128xf32>, vector<3x16x128xf32>, vector<3x16x128xf32> -> vector<27x16x128xf32>
    %12 = vector.shape_cast %11 : vector<27x16x128xf32> to vector<27x2048xf32>
    %c0_4 = arith.constant 0 : index
    %c0_5 = arith.constant 0 : index
    %13 = vector.load %arg3[%c0_4, %c0_5] : memref<16x27xf32, #tpu.memory_space<vmem>>, vector<16x27xf32>
    %cst = arith.constant dense<0.000000e+00> : vector<16x2048xf32>
    %14 = tpu.matmul %13, %12, %cst {dimension_numbers = #tpu.dot_dimension_numbers<[1], [0], [0], [1], [0, 0, 1, 1], [], []>} : vector<16x27xf32>, vector<27x2048xf32>, vector<16x2048xf32> -> vector<16x2048xf32>
    %c0_6 = arith.constant 0 : index
    %c0_7 = arith.constant 0 : index
    %15 = vector.load %arg4[%c0_6, %c0_7] : memref<16x1xf32, #tpu.memory_space<vmem>>, vector<16x1xf32>
    %16 = vector.broadcast %15 : vector<16x1xf32> to vector<16x2048xf32>
    %17 = arith.addf %14, %16 : vector<16x2048xf32>
    %cst_8 = arith.constant 0.000000e+00 : f32
    %18 = vector.broadcast %cst_8 : f32 to vector<16x2048xf32>
    %19 = arith.maximumf %17, %18 : vector<16x2048xf32>
    %20 = vector.shape_cast %19 : vector<16x2048xf32> to vector<128x256xf32>
    %21 = vector.extract_strided_slice %20 {offsets = [0, 0], sizes = [128, 128], strides = [1, 1]} : vector<128x256xf32> to vector<128x128xf32>
    %22 = vector.extract_strided_slice %20 {offsets = [0, 128], sizes = [128, 128], strides = [1, 1]} : vector<128x256xf32> to vector<128x128xf32>
    %23 = arith.maximumf %21, %22 : vector<128x128xf32>
    %24 = tpu.transpose %23, [1, 0] : vector<128x128xf32> -> vector<128x128xf32>
    %25 = vector.shape_cast %24 : vector<128x128xf32> to vector<64x256xf32>
    %26 = vector.extract_strided_slice %25 {offsets = [0, 0], sizes = [64, 128], strides = [1, 1]} : vector<64x256xf32> to vector<64x128xf32>
    %27 = vector.extract_strided_slice %25 {offsets = [0, 128], sizes = [64, 128], strides = [1, 1]} : vector<64x256xf32> to vector<64x128xf32>
    %28 = arith.maximumf %26, %27 : vector<64x128xf32>
    %c0_9 = arith.constant 0 : index
    %c0_10 = arith.constant 0 : index
    %c0_11 = arith.constant 0 : index
    %c0_12 = arith.constant 0 : index
    %29 = vector.load %arg5[%c0_9, %c0_10, %c0_11, %c0_12] : memref<1x1x64x128xf32, #tpu.memory_space<vmem>>, vector<1x1x64x128xf32>
    %30 = vector.shape_cast %29 : vector<1x1x64x128xf32> to vector<64x128xf32>
    %31 = vector.shape_cast %28 : vector<64x128xf32> to vector<1x1x64x128xf32>
    tpu.vector_store %arg5[%c0_9, %c0_10, %c0_11, %c0_12], %31 {strides = array<i32>} : memref<1x1x64x128xf32, #tpu.memory_space<vmem>>, vector<1x1x64x128xf32>,
    return
  }
  func.func @transform_0(%arg0: i32, %arg1: i32) -> (i32, i32, i32, i32, i32) {
    %c0_i32 = arith.constant 0 : i32
    %c0_i32_0 = arith.constant 0 : i32
    %c0_i32_1 = arith.constant 0 : i32
    %c0_i32_2 = arith.constant 0 : i32
    return %arg0, %arg1, %c0_i32, %c0_i32_0, %c0_i32_1 : i32, i32, i32, i32, i32
  }
  func.func @transform_1(%arg0: i32, %arg1: i32) -> (i32, i32) {
    %c0_i32 = arith.constant 0 : i32
    %c0_i32_0 = arith.constant 0 : i32
    %c0_i32_1 = arith.constant 0 : i32
    return %c0_i32, %c0_i32_0 : i32, i32
  }
  func.func @transform_2(%arg0: i32, %arg1: i32) -> (i32, i32) {
    %c0_i32 = arith.constant 0 : i32
    %c0_i32_0 = arith.constant 0 : i32
    %c0_i32_1 = arith.constant 0 : i32
    return %c0_i32, %c0_i32_0 : i32, i32
  }
  func.func @transform_3(%arg0: i32, %arg1: i32) -> (i32, i32, i32, i32) {
    %c0_i32 = arith.constant 0 : i32
    %c0_i32_0 = arith.constant 0 : i32
    %c0_i32_1 = arith.constant 0 : i32
    return %arg0, %arg1, %c0_i32, %c0_i32_0 : i32, i32, i32, i32
  }
}

module attributes {stable_mosaic.version = 11 : i64} {
  func.func @conv3x3_relu_pool_kernel(%arg0: i32, %arg1: i32, %arg2: memref<1x1x16x18x66xf32, #tpu.memory_space<vmem>>, %arg3: memref<32x144xf32, #tpu.memory_space<vmem>>, %arg4: memref<32x1xf32, #tpu.memory_space<vmem>>, %arg5: memref<1x1x32x256xf32, #tpu.memory_space<vmem>>) attributes {dimension_semantics = [#tpu.dimension_semantics<parallel>, #tpu.dimension_semantics<parallel>], iteration_bounds = array<i64: 2, 4>, scalar_prefetch = 0 : i64, scratch_operands = 0 : i64, tpu.core_type = #tpu.core_type<tc>, window_params = [{transform_indices = @transform_0, window_bounds = array<i64: 1, 1, 16, 18, 66>}, {pipeline_mode = #tpu.pipeline_mode<synchronous>, transform_indices = @transform_1, window_bounds = array<i64: 32, 144>}, {pipeline_mode = #tpu.pipeline_mode<synchronous>, transform_indices = @transform_2, window_bounds = array<i64: 32, 1>}, {transform_indices = @transform_3, window_bounds = array<i64: 1, 1, 32, 256>}]} {
    %c0 = arith.constant 0 : index
    %c0_0 = arith.constant 0 : index
    %c0_1 = arith.constant 0 : index
    %c0_2 = arith.constant 0 : index
    %c0_3 = arith.constant 0 : index
    %0 = vector.load %arg2[%c0, %c0_0, %c0_1, %c0_2, %c0_3] : memref<1x1x16x18x66xf32, #tpu.memory_space<vmem>>, vector<1x1x16x18x66xf32>
    %1 = vector.shape_cast %0 : vector<1x1x16x18x66xf32> to vector<16x18x66xf32>
    %2 = vector.extract_strided_slice %1 {offsets = [0, 0, 0], sizes = [16, 16, 64], strides = [1, 1, 1]} : vector<16x18x66xf32> to vector<16x16x64xf32>
    %3 = vector.extract_strided_slice %1 {offsets = [0, 0, 1], sizes = [16, 16, 64], strides = [1, 1, 1]} : vector<16x18x66xf32> to vector<16x16x64xf32>
    %4 = vector.extract_strided_slice %1 {offsets = [0, 0, 2], sizes = [16, 16, 64], strides = [1, 1, 1]} : vector<16x18x66xf32> to vector<16x16x64xf32>
    %5 = vector.extract_strided_slice %1 {offsets = [0, 1, 0], sizes = [16, 16, 64], strides = [1, 1, 1]} : vector<16x18x66xf32> to vector<16x16x64xf32>
    %6 = vector.extract_strided_slice %1 {offsets = [0, 1, 1], sizes = [16, 16, 64], strides = [1, 1, 1]} : vector<16x18x66xf32> to vector<16x16x64xf32>
    %7 = vector.extract_strided_slice %1 {offsets = [0, 1, 2], sizes = [16, 16, 64], strides = [1, 1, 1]} : vector<16x18x66xf32> to vector<16x16x64xf32>
    %8 = vector.extract_strided_slice %1 {offsets = [0, 2, 0], sizes = [16, 16, 64], strides = [1, 1, 1]} : vector<16x18x66xf32> to vector<16x16x64xf32>
    %9 = vector.extract_strided_slice %1 {offsets = [0, 2, 1], sizes = [16, 16, 64], strides = [1, 1, 1]} : vector<16x18x66xf32> to vector<16x16x64xf32>
    %10 = vector.extract_strided_slice %1 {offsets = [0, 2, 2], sizes = [16, 16, 64], strides = [1, 1, 1]} : vector<16x18x66xf32> to vector<16x16x64xf32>
    %11 = tpu.concatenate %2, %3, %4, %5, %6, %7, %8, %9, %10 in 0 : vector<16x16x64xf32>, vector<16x16x64xf32>, vector<16x16x64xf32>, vector<16x16x64xf32>, vector<16x16x64xf32>, vector<16x16x64xf32>, vector<16x16x64xf32>, vector<16x16x64xf32>, vector<16x16x64xf32> -> vector<144x16x64xf32>
    %12 = vector.shape_cast %11 : vector<144x16x64xf32> to vector<144x1024xf32>
    %c0_4 = arith.constant 0 : index
    %c0_5 = arith.constant 0 : index
    %13 = vector.load %arg3[%c0_4, %c0_5] : memref<32x144xf32, #tpu.memory_space<vmem>>, vector<32x144xf32>
    %cst = arith.constant dense<0.000000e+00> : vector<32x1024xf32>
    %14 = tpu.matmul %13, %12, %cst {dimension_numbers = #tpu.dot_dimension_numbers<[1], [0], [0], [1], [0, 0, 1, 1], [], []>} : vector<32x144xf32>, vector<144x1024xf32>, vector<32x1024xf32> -> vector<32x1024xf32>
    %c0_6 = arith.constant 0 : index
    %c0_7 = arith.constant 0 : index
    %15 = vector.load %arg4[%c0_6, %c0_7] : memref<32x1xf32, #tpu.memory_space<vmem>>, vector<32x1xf32>
    %16 = vector.broadcast %15 : vector<32x1xf32> to vector<32x1024xf32>
    %17 = arith.addf %14, %16 : vector<32x1024xf32>
    %cst_8 = arith.constant 0.000000e+00 : f32
    %18 = vector.broadcast %cst_8 : f32 to vector<32x1024xf32>
    %19 = arith.maximumf %17, %18 : vector<32x1024xf32>
    %20 = vector.shape_cast %19 : vector<32x1024xf32> to vector<256x128xf32>
    %21 = vector.extract_strided_slice %20 {offsets = [0, 0], sizes = [256, 64], strides = [1, 1]} : vector<256x128xf32> to vector<256x64xf32>
    %22 = vector.extract_strided_slice %20 {offsets = [0, 64], sizes = [256, 64], strides = [1, 1]} : vector<256x128xf32> to vector<256x64xf32>
    %23 = arith.maximumf %21, %22 : vector<256x64xf32>
    %24 = tpu.transpose %23, [1, 0] : vector<256x64xf32> -> vector<64x256xf32>
    %25 = vector.shape_cast %24 : vector<64x256xf32> to vector<32x512xf32>
    %26 = vector.extract_strided_slice %25 {offsets = [0, 0], sizes = [32, 256], strides = [1, 1]} : vector<32x512xf32> to vector<32x256xf32>
    %27 = vector.extract_strided_slice %25 {offsets = [0, 256], sizes = [32, 256], strides = [1, 1]} : vector<32x512xf32> to vector<32x256xf32>
    %28 = arith.maximumf %26, %27 : vector<32x256xf32>
    %c0_9 = arith.constant 0 : index
    %c0_10 = arith.constant 0 : index
    %c0_11 = arith.constant 0 : index
    %c0_12 = arith.constant 0 : index
    %29 = vector.load %arg5[%c0_9, %c0_10, %c0_11, %c0_12] : memref<1x1x32x256xf32, #tpu.memory_space<vmem>>, vector<1x1x32x256xf32>
    %30 = vector.shape_cast %29 : vector<1x1x32x256xf32> to vector<32x256xf32>
    %31 = vector.shape_cast %28 : vector<32x256xf32> to vector<1x1x32x256xf32>
    tpu.vector_store %arg5[%c0_9, %c0_10, %c0_11, %c0_12], %31 {strides = array<i32>} : memref<1x1x32x256xf32, #tpu.memory_space<vmem>>, vector<1x1x32x256xf32>,
    return
  }
  func.func @transform_0(%arg0: i32, %arg1: i32) -> (i32, i32, i32, i32, i32) {
    %c0_i32 = arith.constant 0 : i32
    %c0_i32_0 = arith.constant 0 : i32
    %c0_i32_1 = arith.constant 0 : i32
    %c0_i32_2 = arith.constant 0 : i32
    return %arg0, %arg1, %c0_i32, %c0_i32_0, %c0_i32_1 : i32, i32, i32, i32, i32
  }
  func.func @transform_1(%arg0: i32, %arg1: i32) -> (i32, i32) {
    %c0_i32 = arith.constant 0 : i32
    %c0_i32_0 = arith.constant 0 : i32
    %c0_i32_1 = arith.constant 0 : i32
    return %c0_i32, %c0_i32_0 : i32, i32
  }
  func.func @transform_2(%arg0: i32, %arg1: i32) -> (i32, i32) {
    %c0_i32 = arith.constant 0 : i32
    %c0_i32_0 = arith.constant 0 : i32
    %c0_i32_1 = arith.constant 0 : i32
    return %c0_i32, %c0_i32_0 : i32, i32
  }
  func.func @transform_3(%arg0: i32, %arg1: i32) -> (i32, i32, i32, i32) {
    %c0_i32 = arith.constant 0 : i32
    %c0_i32_0 = arith.constant 0 : i32
    %c0_i32_1 = arith.constant 0 : i32
    return %arg0, %arg1, %c0_i32, %c0_i32_0 : i32, i32, i32, i32
  }
}

</mosaic_0001>

<llo_original>
// kernel: conv_features.3
$region0: #{conv_features.3}
  #allocation0 [shape = 'u32[]', space=smem, size = 0x4, offset = 0x4, fixed_abs, tag = 'smem constant byte address 0x4 - core index']
  #allocation1 [shape = 'u32[144,128]{1,0:T(1,128)}', space=vmem, size = 0x12000, scoped, tag = 'internal scratch']
  %s0 = inlined_call_operand.vmem [shape: f32[2,4,16,18,66], index: 0, kind: input, shape index: {}]
  %s1 = inlined_call_operand.vmem [shape: f32[32,144], index: 1, kind: input, shape index: {}]
  %s2 = inlined_call_operand.vmem [shape: f32[32,1], index: 2, kind: input, shape index: {}]
  %s3 = inlined_call_operand.vmem [shape: f32[2,4,32,256], index: 3, kind: output, shape index: {}]
  %s4 = sld [smem:[#allocation0]]
  $region45: #{conv_features.3} parent=0
    _
  %s6 = ssub.s32 1, %s4
  %s7 = scalar_select 0, %s6, %s4
  loop: start=0, step=1, limit=10
  $region2: #{conv_features.3} parent=0 // loop_pre_header
    _
  $region3: #{conv_features.3} parent=0 // loop_header
    %s9 = sphi 0, %s13
    %p10 = scmp.ge.s32.totalorder %s9, 10
    %s16 = sphi 0, %s28
    %s17 = sphi 0, %s24
    %s18 = sphi 0, %s16
    %s19 = sphi 0, %s17
    %s20 = sphi 0, %s18
    %s21 = sphi 0, %s19
    %s33 = sphi 0, %s35
    %s36 = sphi 0, %s33
    %s37 = sphi 0, %s36
    %s53 = sphi 0, %s37
    %s57 = sphi 0, %s57
    %s59 = sphi 0, %s57
    %s60 = sphi 0, %s59
    %s74 = sphi 0, %s60
    %s78 = sphi 0, %s78
    %s80 = sphi 0, %s78
    %s81 = sphi 0, %s80
    %s95 = sphi 0, %s81
    %s103 = sphi 0, %s105
    %s106 = sphi 0, %s103
    %s107 = sphi 0, %s106
    %s123 = sphi 0, %s107
  $region4: #{conv_features.3} parent=0 // loop_header_branch
    %12 = sbr.rel (%p10) target = $region8
  $region5: #{conv_features.3} parent=0 // loop_body
    %s14 = ssub.s32 %s9, 1
    %s15 = ssub.s32 %s9, 2
    %s22 = sadd.s32 1, %s17
    %p23 = scmp.ge.s32.totalorder %s22, 4
    %s24 = scalar_select %p23, 0, %s22
    %s25 = sadd.s32 1, %s16
    %s26 = scalar_select %p23, %s25, %s16
    %p27 = scmp.ge.s32.totalorder %s26, 2
    %s28 = scalar_select %p27, 0, %s26
    %s29 = ssub.s32 %s16, %s28
    %s30 = ssub.s32 %s17, %s24
    %s31 = sor.u32 %s29, %s30
    %p32 = scmp.eq.s32.totalorder %s31, 0
    %s34 = sadd.s32 %s33, 1
    %s35 = scalar_select %p32, %s33, %s34
    %p38 = pneg %p32
    %p39 = scmp.eq.s32.totalorder %s9, 7
    %p40 = por %p38, %p39
    %p41 = scmp.ne.s32.totalorder %s33, %s36
    %p42 = scmp.eq.s32.totalorder %s9, 0
    %p43 = por %p41, %p42
    %p44 = scmp.ne.s32.totalorder %s33, %s36
    %p45 = scmp.eq.s32.totalorder %s14, 7
    %p46 = por %p44, %p45
    %p47 = scmp.ne.s32.totalorder %s36, %s37
    %p48 = scmp.eq.s32.totalorder %s14, 0
    %p49 = por %p47, %p48
    %p50 = scmp.ne.s32.totalorder %s36, %s37
    %p51 = scmp.eq.s32.totalorder %s15, 7
    %p52 = por %p50, %p51
    %p54 = scmp.ne.s32.totalorder %s37, %s53
    %p55 = scmp.eq.s32.totalorder %s15, 0
    %p56 = por %p54, %p55
    %s58 = sadd.s32 %s57, 1
    %p61 = scmp.eq.s32.totalorder %s9, 7
    %p62 = scmp.ne.s32.totalorder %s57, %s59
    %p63 = scmp.eq.s32.totalorder %s9, 0
    %p64 = por %p62, %p63
    %p65 = scmp.ne.s32.totalorder %s57, %s59
    %p66 = scmp.eq.s32.totalorder %s14, 7
    %p67 = por %p65, %p66
    %p68 = scmp.ne.s32.totalorder %s59, %s60
    %p69 = scmp.eq.s32.totalorder %s14, 0
    %p70 = por %p68, %p69
    %p71 = scmp.ne.s32.totalorder %s59, %s60
    %p72 = scmp.eq.s32.totalorder %s15, 7
    %p73 = por %p71, %p72
    %p75 = scmp.ne.s32.totalorder %s60, %s74
    %p76 = scmp.eq.s32.totalorder %s15, 0
    %p77 = por %p75, %p76
    %s79 = sadd.s32 %s78, 1
    %p82 = scmp.eq.s32.totalorder %s9, 7
    %p83 = scmp.ne.s32.totalorder %s78, %s80
    %p84 = scmp.eq.s32.totalorder %s9, 0
    %p85 = por %p83, %p84
    %p86 = scmp.ne.s32.totalorder %s78, %s80
    %p87 = scmp.eq.s32.totalorder %s14, 7
    %p88 = por %p86, %p87
    %p89 = scmp.ne.s32.totalorder %s80, %s81
    %p90 = scmp.eq.s32.totalorder %s14, 0
    %p91 = por %p89, %p90
    %p92 = scmp.ne.s32.totalorder %s80, %s81
    %p93 = scmp.eq.s32.totalorder %s15, 7
    %p94 = por %p92, %p93
    %p96 = scmp.ne.s32.totalorder %s81, %s95
    %p97 = scmp.eq.s32.totalorder %s15, 0
    %p98 = por %p96, %p97
    %s99 = ssub.s32 %s16, %s28
    %s100 = ssub.s32 %s17, %s24
    %s101 = sor.u32 %s99, %s100
    %p102 = scmp.eq.s32.totalorder %s101, 0
    %s104 = sadd.s32 %s103, 1
    %s105 = scalar_select %p102, %s103, %s104
    %p108 = pneg %p102
    %p109 = scmp.eq.s32.totalorder %s9, 7
    %p110 = por %p108, %p109
    %p111 = scmp.ne.s32.totalorder %s103, %s106
    %p112 = scmp.eq.s32.totalorder %s9, 0
    %p113 = por %p111, %p112
    %p114 = scmp.ne.s32.totalorder %s103, %s106
    %p115 = scmp.eq.s32.totalorder %s14, 7
    %p116 = por %p114, %p115
    %p117 = scmp.ne.s32.totalorder %s106, %s107
    %p118 = scmp.eq.s32.totalorder %s14, 0
    %p119 = por %p117, %p118
    %p120 = scmp.ne.s32.totalorder %s106, %s107
    %p121 = scmp.eq.s32.totalorder %s15, 7
    %p122 = por %p120, %p121
    %p124 = scmp.ne.s32.totalorder %s107, %s123
    %p125 = scmp.eq.s32.totalorder %s15, 0
    %p126 = por %p124, %p125
    %p127 = scmp.le.s32.totalorder 1, %s9
    %p128 = scmp.lt.s32.totalorder %s9, 9
    %p129 = pnand %p127, %p128
    %p130 = pneg %p129
    // Predicated region
    $region9: #{conv_features.3} parent=5 // pred_check
      _
    $region10: #{conv_features.3} parent=5 // pred_check_branch
      %132 = sbr.rel (%p129) target = $region12
    $region11: #{conv_features.3} parent=5 // pred_region
      %s133 = ssub.s32 %s9, 1
      // Predicated region
      $region13: #{conv_features.3} parent=11 // pred_check
        %p134 = pneg %p70
      $region14: #{conv_features.3} parent=11 // pred_check_branch
        %136 = sbr.rel (%p134) target = $region16
      $region15: #{conv_features.3} parent=11 // pred_region
        _
      $region16: #{conv_features.3} parent=11 // pred_fallthru
        _
      // Predicated region
      $region17: #{conv_features.3} parent=11 // pred_check
        %p137 = pneg %p91
      $region18: #{conv_features.3} parent=11 // pred_check_branch
        %139 = sbr.rel (%p137) target = $region20
      $region19: #{conv_features.3} parent=11 // pred_region
        _
      $region20: #{conv_features.3} parent=11 // pred_fallthru
        _
    $region12: #{conv_features.3} parent=5 // pred_fallthru
      _
    %p140 = scmp.lt.s32.totalorder %s9, 8
    // Predicated region
    $region21: #{conv_features.3} parent=5 // pred_check
      %p141 = pneg %p140
    $region22: #{conv_features.3} parent=5 // pred_check_branch
      %143 = sbr.rel (%p141) target = $region24
    $region23: #{conv_features.3} parent=5 // pred_region
      // Predicated region
      $region25: #{conv_features.3} parent=23 // pred_check
        %p144 = pneg %p43
      $region26: #{conv_features.3} parent=23 // pred_check_branch
        %146 = sbr.rel (%p144) target = $region28
      $region27: #{conv_features.3} parent=23 // pred_region
        %p147 = scmp.lt.s32.totalorder %s16, 1
        %s148 = scalar_select %p147, %s16, 1
        %p149 = scmp.lt.s32.totalorder %s17, 3
        %s150 = scalar_select %p149, %s17, 3
        %s151 = smul.addr %s150, 48
        %s152 = smul.addr %s148, 192
        %s153 = sadd.s32 %s151, %s152
        %s154 = smul.addr %s153, 8
        %s155 = scalar_lea.vmem %s0, %s154
      $region28: #{conv_features.3} parent=23 // pred_fallthru
        _
    $region24: #{conv_features.3} parent=5 // pred_fallthru
      _
    %p156 = scmp.le.s32.totalorder 1, %s9
    %p157 = scmp.lt.s32.totalorder %s9, 9
    %p158 = pnand %p156, %p157
    %p159 = pneg %p158
    // Predicated region
    $region29: #{conv_features.3} parent=5 // pred_check
      _
    $region30: #{conv_features.3} parent=5 // pred_check_branch
      %161 = sbr.rel (%p158) target = $region32
    $region31: #{conv_features.3} parent=5 // pred_region
      %s162 = ssub.s32 %s9, 1
      %p163 = scmp.lt.s32.totalorder %s18, 1
      %s164 = scalar_select %p163, %s18, 1
      %p165 = scmp.lt.s32.totalorder %s19, 3
      %s166 = scalar_select %p165, %s19, 3
      %s167 = smul.addr %s166, 48
      %s168 = smul.addr %s164, 192
      %s169 = sadd.s32 %s167, %s168
      %s170 = smul.addr %s169, 8
      %s171 = scalar_lea.vmem %s0, %s170
      %p172 = pneg %p49
      %p173 = pneg %p46
      %p174 = pneg %p70
      %p175 = pneg %p67
      %p176 = pneg %p91
      %p177 = pneg %p88
      %p178 = pneg %p119
      %p179 = pneg %p116
      %p180 = scmp.lt.s32.totalorder %s18, 1
      %s181 = scalar_select %p180, %s18, 1
      %p182 = scmp.lt.s32.totalorder %s19, 3
      %s183 = scalar_select %p182, %s19, 3
      %s184 = smul.addr %s183, 8
      %s185 = smul.addr %s181, 32
      %s186 = sadd.s32 %s184, %s185
      %s187 = smul.addr %s186, 8
      %s188 = scalar_lea.vmem %s3, %s187
      %p189 = scmp.lt.s32.totalorder %s18, 1
      %s190 = scalar_select %p189, %s18, 1
      %p191 = scmp.lt.s32.totalorder %s19, 3
      %s192 = scalar_select %p191, %s19, 3
      %s193 = smul.addr %s192, 48
      %s194 = smul.addr %s190, 192
      %s195 = sadd.s32 %s193, %s194
      %s196 = smul.addr %s195, 8
      %s197 = scalar_lea.vmem %s0, %s196
      %p198 = scmp.lt.s32.totalorder %s18, 1
      %s199 = scalar_select %p198, %s18, 1
      %p200 = scmp.lt.s32.totalorder %s19, 3
      %s201 = scalar_select %p200, %s19, 3
      %s202 = smul.addr %s201, 8
      %s203 = smul.addr %s199, 32
      %s204 = sadd.s32 %s202, %s203
      %s205 = smul.addr %s204, 8
      %s206 = scalar_lea.vmem %s3, %s205
      %v207 = vld [vmem:[%s197] sm:$0xff]
      %v208 = vld [vmem:[%s197 + $0x8] sm:$0xff]
      %v209 = vld [vmem:[%s197 + $0x10] sm:$0x3]
      %v210 = vld [vmem:[%s197 + $0x18] sm:$0xff]
      %v211 = vld [vmem:[%s197 + $0x20] sm:$0xff]
      %v212 = vld [vmem:[%s197 + $0x28] sm:$0x3]
      %v213 = vld [vmem:[%s197 + $0x30] sm:$0xff]
      %v214 = vld [vmem:[%s197 + $0x38] sm:$0xff]
      %v215 = vld [vmem:[%s197 + $0x40] sm:$0x3]
      %v216 = vld [vmem:[%s197 + $0x48] sm:$0xff]
      %v217 = vld [vmem:[%s197 + $0x50] sm:$0xff]
      %v218 = vld [vmem:[%s197 + $0x58] sm:$0x3]
      %v219 = vld [vmem:[%s197 + $0x60] sm:$0xff]
      %v220 = vld [vmem:[%s197 + $0x68] sm:$0xff]
      %v221 = vld [vmem:[%s197 + $0x70] sm:$0x3]
      %v222 = vld [vmem:[%s197 + $0x78] sm:$0xff]
      %v223 = vld [vmem:[%s197 + $0x80] sm:$0xff]
      %v224 = vld [vmem:[%s197 + $0x88] sm:$0x3]
      %v225 = vld [vmem:[%s197 + $0x90] sm:$0xff]
      %v226 = vld [vmem:[%s197 + $0x98] sm:$0xff]
      %v227 = vld [vmem:[%s197 + $0xa0] sm:$0x3]
      %v228 = vld [vmem:[%s197 + $0xa8] sm:$0xff]
      %v229 = vld [vmem:[%s197 + $0xb0] sm:$0xff]
      %v230 = vld [vmem:[%s197 + $0xb8] sm:$0x3]
      %v231 = vld [vmem:[%s197 + $0xc0] sm:$0xff]
      %v232 = vld [vmem:[%s197 + $0xc8] sm:$0xff]
      %v233 = vld [vmem:[%s197 + $0xd0] sm:$0x3]
      %v234 = vld [vmem:[%s197 + $0xd8] sm:$0xff]
      %v235 = vld [vmem:[%s197 + $0xe0] sm:$0xff]
      %v236 = vld [vmem:[%s197 + $0xe8] sm:$0x3]
      %v237 = vld [vmem:[%s197 + $0xf0] sm:$0xff]
      %v238 = vld [vmem:[%s197 + $0xf8] sm:$0xff]
      %v239 = vld [vmem:[%s197 + $0x100] sm:$0x3]
      %v240 = vld [vmem:[%s197 + $0x108] sm:$0xff]
      %v241 = vld [vmem:[%s197 + $0x110] sm:$0xff]
      %v242 = vld [vmem:[%s197 + $0x118] sm:$0x3]
      %v243 = vld [vmem:[%s197 + $0x120] sm:$0xff]
      %v244 = vld [vmem:[%s197 + $0x128] sm:$0xff]
      %v245 = vld [vmem:[%s197 + $0x130] sm:$0x3]
      %v246 = vld [vmem:[%s197 + $0x138] sm:$0xff]
      %v247 = vld [vmem:[%s197 + $0x140] sm:$0xff]
      %v248 = vld [vmem:[%s197 + $0x148] sm:$0x3]
      %v249 = vld [vmem:[%s197 + $0x150] sm:$0xff]
      %v250 = vld [vmem:[%s197 + $0x158] sm:$0xff]
      %v251 = vld [vmem:[%s197 + $0x160] sm:$0x3]
      %v252 = vld [vmem:[%s197 + $0x168] sm:$0xff]
      %v253 = vld [vmem:[%s197 + $0x170] sm:$0xff]
      %v254 = vld [vmem:[%s197 + $0x178] sm:$0x3]
      %287 = vrot.lane.b32.xlu0 %v207, 127
      %v288 = vpop.permute.xlu0 %287
      %289 = vrot.lane.b32.xlu0 %v208, 127
      %v290 = vpop.permute.xlu0 %289
      %291 = vrot.lane.b32.xlu0 %v210, 127
      %v292 = vpop.permute.xlu0 %291
      %293 = vrot.lane.b32.xlu0 %v211, 127
      %v294 = vpop.permute.xlu0 %293
      %295 = vrot.lane.b32.xlu0 %v213, 127
      %v296 = vpop.permute.xlu0 %295
      %297 = vrot.lane.b32.xlu0 %v214, 127
      %v298 = vpop.permute.xlu0 %297
      %299 = vrot.lane.b32.xlu0 %v216, 127
      %v300 = vpop.permute.xlu0 %299
      %301 = vrot.lane.b32.xlu0 %v217, 127
      %v302 = vpop.permute.xlu0 %301
      %303 = vrot.lane.b32.xlu0 %v219, 127
      %v304 = vpop.permute.xlu0 %303
      %305 = vrot.lane.b32.xlu0 %v220, 127
      %v306 = vpop.permute.xlu0 %305
      %307 = vrot.lane.b32.xlu0 %v222, 127
      %v308 = vpop.permute.xlu0 %307
      %309 = vrot.lane.b32.xlu0 %v223, 127
      %v310 = vpop.permute.xlu0 %309
      %311 = vrot.lane.b32.xlu0 %v225, 127
      %v312 = vpop.permute.xlu0 %311
      %313 = vrot.lane.b32.xlu0 %v226, 127
      %v314 = vpop.permute.xlu0 %313
      %315 = vrot.lane.b32.xlu0 %v228, 127
      %v316 = vpop.permute.xlu0 %315
      %317 = vrot.lane.b32.xlu0 %v229, 127
      %v318 = vpop.permute.xlu0 %317
      %319 = vrot.lane.b32.xlu0 %v231, 127
      %v320 = vpop.permute.xlu0 %319
      %321 = vrot.lane.b32.xlu0 %v232, 127
      %v322 = vpop.permute.xlu0 %321
      %323 = vrot.lane.b32.xlu0 %v234, 127
      %v324 = vpop.permute.xlu0 %323
      %325 = vrot.lane.b32.xlu0 %v235, 127
      %v326 = vpop.permute.xlu0 %325
      %327 = vrot.lane.b32.xlu0 %v237, 127
      %v328 = vpop.permute.xlu0 %327
      %329 = vrot.lane.b32.xlu0 %v238, 127
      %v330 = vpop.permute.xlu0 %329
      %331 = vrot.lane.b32.xlu0 %v240, 127
      %v332 = vpop.permute.xlu0 %331
      %333 = vrot.lane.b32.xlu0 %v241, 127
      %v334 = vpop.permute.xlu0 %333
      %335 = vrot.lane.b32.xlu0 %v243, 127
      %v336 = vpop.permute.xlu0 %335
      %337 = vrot.lane.b32.xlu0 %v244, 127
      %v338 = vpop.permute.xlu0 %337
      %339 = vrot.lane.b32.xlu0 %v246, 127
      %v340 = vpop.permute.xlu0 %339
      %341 = vrot.lane.b32.xlu0 %v247, 127
      %v342 = vpop.permute.xlu0 %341
      %343 = vrot.lane.b32.xlu0 %v249, 127
      %v344 = vpop.permute.xlu0 %343
      %345 = vrot.lane.b32.xlu0 %v250, 127
      %v346 = vpop.permute.xlu0 %345
      %347 = vrot.lane.b32.xlu0 %v252, 127
      %v348 = vpop.permute.xlu0 %347
      %349 = vrot.lane.b32.xlu0 %v253, 127
      %v350 = vpop.permute.xlu0 %349
      %383 = vrot.lane.b32.xlu0 %v207, 126
      %v384 = vpop.permute.xlu0 %383
      %385 = vrot.lane.b32.xlu0 %v208, 126
      %v386 = vpop.permute.xlu0 %385
      %387 = vrot.lane.b32.xlu0 %v210, 126
      %v388 = vpop.permute.xlu0 %387
      %389 = vrot.lane.b32.xlu0 %v211, 126
      %v390 = vpop.permute.xlu0 %389
      %391 = vrot.lane.b32.xlu0 %v213, 126
      %v392 = vpop.permute.xlu0 %391
      %393 = vrot.lane.b32.xlu0 %v214, 126
      %v394 = vpop.permute.xlu0 %393
      %395 = vrot.lane.b32.xlu0 %v216, 126
      %v396 = vpop.permute.xlu0 %395
      %397 = vrot.lane.b32.xlu0 %v217, 126
      %v398 = vpop.permute.xlu0 %397
      %399 = vrot.lane.b32.xlu0 %v219, 126
      %v400 = vpop.permute.xlu0 %399
      %401 = vrot.lane.b32.xlu0 %v220, 126
      %v402 = vpop.permute.xlu0 %401
      %403 = vrot.lane.b32.xlu0 %v222, 126
      %v404 = vpop.permute.xlu0 %403
      %405 = vrot.lane.b32.xlu0 %v223, 126
      %v406 = vpop.permute.xlu0 %405
      %407 = vrot.lane.b32.xlu0 %v225, 126
      %v408 = vpop.permute.xlu0 %407
      %409 = vrot.lane.b32.xlu0 %v226, 126
      %v410 = vpop.permute.xlu0 %409
      %411 = vrot.lane.b32.xlu0 %v228, 126
      %v412 = vpop.permute.xlu0 %411
      %413 = vrot.lane.b32.xlu0 %v229, 126
      %v414 = vpop.permute.xlu0 %413
      %415 = vrot.lane.b32.xlu0 %v231, 126
      %v416 = vpop.permute.xlu0 %415
      %417 = vrot.lane.b32.xlu0 %v232, 126
      %v418 = vpop.permute.xlu0 %417
      %419 = vrot.lane.b32.xlu0 %v234, 126
      %v420 = vpop.permute.xlu0 %419
      %421 = vrot.lane.b32.xlu0 %v235, 126
      %v422 = vpop.permute.xlu0 %421
      %423 = vrot.lane.b32.xlu0 %v237, 126
      %v424 = vpop.permute.xlu0 %423
      %425 = vrot.lane.b32.xlu0 %v238, 126
      %v426 = vpop.permute.xlu0 %425
      %427 = vrot.lane.b32.xlu0 %v240, 126
      %v428 = vpop.permute.xlu0 %427
      %429 = vrot.lane.b32.xlu0 %v241, 126
      %v430 = vpop.permute.xlu0 %429
      %431 = vrot.lane.b32.xlu0 %v243, 126
      %v432 = vpop.permute.xlu0 %431
      %433 = vrot.lane.b32.xlu0 %v244, 126
      %v434 = vpop.permute.xlu0 %433
      %435 = vrot.lane.b32.xlu0 %v246, 126
      %v436 = vpop.permute.xlu0 %435
      %437 = vrot.lane.b32.xlu0 %v247, 126
      %v438 = vpop.permute.xlu0 %437
      %439 = vrot.lane.b32.xlu0 %v249, 126
      %v440 = vpop.permute.xlu0 %439
      %441 = vrot.lane.b32.xlu0 %v250, 126
      %v442 = vpop.permute.xlu0 %441
      %443 = vrot.lane.b32.xlu0 %v252, 126
      %v444 = vpop.permute.xlu0 %443
      %445 = vrot.lane.b32.xlu0 %v253, 126
      %v446 = vpop.permute.xlu0 %445
      %vm495 = vcmask 1046528
      %v496 = vrot.slane %v207, 1
      %v497 = vrot.slane %v208, 1
      %v498 = vsel %vm495, %v496, %v497
      %v499 = vrot.slane %v209, 1
      %v500 = vsel %vm495, %v497, %v499
      %v501 = vrot.slane %v210, 1
      %v502 = vrot.slane %v211, 1
      %v503 = vsel %vm495, %v501, %v502
      %v504 = vrot.slane %v212, 1
      %v505 = vsel %vm495, %v502, %v504
      %v506 = vrot.slane %v213, 1
      %v507 = vrot.slane %v214, 1
      %v508 = vsel %vm495, %v506, %v507
      %v509 = vrot.slane %v215, 1
      %v510 = vsel %vm495, %v507, %v509
      %v511 = vrot.slane %v216, 1
      %v512 = vrot.slane %v217, 1
      %v513 = vsel %vm495, %v511, %v512
      %v514 = vrot.slane %v218, 1
      %v515 = vsel %vm495, %v512, %v514
      %v516 = vrot.slane %v219, 1
      %v517 = vrot.slane %v220, 1
      %v518 = vsel %vm495, %v516, %v517
      %v519 = vrot.slane %v221, 1
      %v520 = vsel %vm495, %v517, %v519
      %v521 = vrot.slane %v222, 1
      %v522 = vrot.slane %v223, 1
      %v523 = vsel %vm495, %v521, %v522
      %v524 = vrot.slane %v224, 1
      %v525 = vsel %vm495, %v522, %v524
      %v526 = vrot.slane %v225, 1
      %v527 = vrot.slane %v226, 1
      %v528 = vsel %vm495, %v526, %v527
      %v529 = vrot.slane %v227, 1
      %v530 = vsel %vm495, %v527, %v529
      %v531 = vrot.slane %v228, 1
      %v532 = vrot.slane %v229, 1
      %v533 = vsel %vm495, %v531, %v532
      %v534 = vrot.slane %v230, 1
      %v535 = vsel %vm495, %v532, %v534
      %v536 = vrot.slane %v231, 1
      %v537 = vrot.slane %v232, 1
      %v538 = vsel %vm495, %v536, %v537
      %v539 = vrot.slane %v233, 1
      %v540 = vsel %vm495, %v537, %v539
      %v541 = vrot.slane %v234, 1
      %v542 = vrot.slane %v235, 1
      %v543 = vsel %vm495, %v541, %v542
      %v544 = vrot.slane %v236, 1
      %v545 = vsel %vm495, %v542, %v544
      %v546 = vrot.slane %v237, 1
      %v547 = vrot.slane %v238, 1
      %v548 = vsel %vm495, %v546, %v547
      %v549 = vrot.slane %v239, 1
      %v550 = vsel %vm495, %v547, %v549
      %v551 = vrot.slane %v240, 1
      %v552 = vrot.slane %v241, 1
      %v553 = vsel %vm495, %v551, %v552
      %v554 = vrot.slane %v242, 1
      %v555 = vsel %vm495, %v552, %v554
      %v556 = vrot.slane %v243, 1
      %v557 = vrot.slane %v244, 1
      %v558 = vsel %vm495, %v556, %v557
      %v559 = vrot.slane %v245, 1
      %v560 = vsel %vm495, %v557, %v559
      %v561 = vrot.slane %v246, 1
      %v562 = vrot.slane %v247, 1
      %v563 = vsel %vm495, %v561, %v562
      %v564 = vrot.slane %v248, 1
      %v565 = vsel %vm495, %v562, %v564
      %v566 = vrot.slane %v249, 1
      %v567 = vrot.slane %v250, 1
      %v568 = vsel %vm495, %v566, %v567
      %v569 = vrot.slane %v251, 1
      %v570 = vsel %vm495, %v567, %v569
      %v571 = vrot.slane %v252, 1
      %v572 = vrot.slane %v253, 1
      %v573 = vsel %vm495, %v571, %v572
      %v574 = vrot.slane %v254, 1
      %v575 = vsel %vm495, %v572, %v574
      %608 = vrot.lane.b32.xlu0 %v498, 127
      %v609 = vpop.permute.xlu0 %608
      %610 = vrot.lane.b32.xlu0 %v500, 127
      %v611 = vpop.permute.xlu0 %610
      %612 = vrot.lane.b32.xlu0 %v503, 127
      %v613 = vpop.permute.xlu0 %612
      %614 = vrot.lane.b32.xlu0 %v505, 127
      %v615 = vpop.permute.xlu0 %614
      %616 = vrot.lane.b32.xlu0 %v508, 127
      %v617 = vpop.permute.xlu0 %616
      %618 = vrot.lane.b32.xlu0 %v510, 127
      %v619 = vpop.permute.xlu0 %618
      %620 = vrot.lane.b32.xlu0 %v513, 127
      %v621 = vpop.permute.xlu0 %620
      %622 = vrot.lane.b32.xlu0 %v515, 127
      %v623 = vpop.permute.xlu0 %622
      %624 = vrot.lane.b32.xlu0 %v518, 127
      %v625 = vpop.permute.xlu0 %624
      %626 = vrot.lane.b32.xlu0 %v520, 127
      %v627 = vpop.permute.xlu0 %626
      %628 = vrot.lane.b32.xlu0 %v523, 127
      %v629 = vpop.permute.xlu0 %628
      %630 = vrot.lane.b32.xlu0 %v525, 127
      %v631 = vpop.permute.xlu0 %630
      %632 = vrot.lane.b32.xlu0 %v528, 127
      %v633 = vpop.permute.xlu0 %632
      %634 = vrot.lane.b32.xlu0 %v530, 127
      %v635 = vpop.permute.xlu0 %634
      %636 = vrot.lane.b32.xlu0 %v533, 127
      %v637 = vpop.permute.xlu0 %636
      %638 = vrot.lane.b32.xlu0 %v535, 127
      %v639 = vpop.permute.xlu0 %638
      %640 = vrot.lane.b32.xlu0 %v538, 127
      %v641 = vpop.permute.xlu0 %640
      %642 = vrot.lane.b32.xlu0 %v540, 127
      %v643 = vpop.permute.xlu0 %642
      %644 = vrot.lane.b32.xlu0 %v543, 127
      %v645 = vpop.permute.xlu0 %644
      %646 = vrot.lane.b32.xlu0 %v545, 127
      %v647 = vpop.permute.xlu0 %646
      %648 = vrot.lane.b32.xlu0 %v548, 127
      %v649 = vpop.permute.xlu0 %648
      %650 = vrot.lane.b32.xlu0 %v550, 127
      %v651 = vpop.permute.xlu0 %650
      %652 = vrot.lane.b32.xlu0 %v553, 127
      %v653 = vpop.permute.xlu0 %652
      %654 = vrot.lane.b32.xlu0 %v555, 127
      %v655 = vpop.permute.xlu0 %654
      %656 = vrot.lane.b32.xlu0 %v558, 127
      %v657 = vpop.permute.xlu0 %656
      %658 = vrot.lane.b32.xlu0 %v560, 127
      %v659 = vpop.permute.xlu0 %658
      %660 = vrot.lane.b32.xlu0 %v563, 127
      %v661 = vpop.permute.xlu0 %660
      %662 = vrot.lane.b32.xlu0 %v565, 127
      %v663 = vpop.permute.xlu0 %662
      %664 = vrot.lane.b32.xlu0 %v568, 127
      %v665 = vpop.permute.xlu0 %664
      %666 = vrot.lane.b32.xlu0 %v570, 127
      %v667 = vpop.permute.xlu0 %666
      %668 = vrot.lane.b32.xlu0 %v573, 127
      %v669 = vpop.permute.xlu0 %668
      %670 = vrot.lane.b32.xlu0 %v575, 127
      %v671 = vpop.permute.xlu0 %670
      %704 = vrot.lane.b32.xlu0 %v498, 126
      %v705 = vpop.permute.xlu0 %704
      %706 = vrot.lane.b32.xlu0 %v500, 126
      %v707 = vpop.permute.xlu0 %706
      %708 = vrot.lane.b32.xlu0 %v503, 126
      %v709 = vpop.permute.xlu0 %708
      %710 = vrot.lane.b32.xlu0 %v505, 126
      %v711 = vpop.permute.xlu0 %710
      %712 = vrot.lane.b32.xlu0 %v508, 126
      %v713 = vpop.permute.xlu0 %712
      %714 = vrot.lane.b32.xlu0 %v510, 126
      %v715 = vpop.permute.xlu0 %714
      %716 = vrot.lane.b32.xlu0 %v513, 126
      %v717 = vpop.permute.xlu0 %716
      %718 = vrot.lane.b32.xlu0 %v515, 126
      %v719 = vpop.permute.xlu0 %718
      %720 = vrot.lane.b32.xlu0 %v518, 126
      %v721 = vpop.permute.xlu0 %720
      %722 = vrot.lane.b32.xlu0 %v520, 126
      %v723 = vpop.permute.xlu0 %722
      %724 = vrot.lane.b32.xlu0 %v523, 126
      %v725 = vpop.permute.xlu0 %724
      %726 = vrot.lane.b32.xlu0 %v525, 126
      %v727 = vpop.permute.xlu0 %726
      %728 = vrot.lane.b32.xlu0 %v528, 126
      %v729 = vpop.permute.xlu0 %728
      %730 = vrot.lane.b32.xlu0 %v530, 126
      %v731 = vpop.permute.xlu0 %730
      %732 = vrot.lane.b32.xlu0 %v533, 126
      %v733 = vpop.permute.xlu0 %732
      %734 = vrot.lane.b32.xlu0 %v535, 126
      %v735 = vpop.permute.xlu0 %734
      %736 = vrot.lane.b32.xlu0 %v538, 126
      %v737 = vpop.permute.xlu0 %736
      %738 = vrot.lane.b32.xlu0 %v540, 126
      %v739 = vpop.permute.xlu0 %738
      %740 = vrot.lane.b32.xlu0 %v543, 126
      %v741 = vpop.permute.xlu0 %740
      %742 = vrot.lane.b32.xlu0 %v545, 126
      %v743 = vpop.permute.xlu0 %742
      %744 = vrot.lane.b32.xlu0 %v548, 126
      %v745 = vpop.permute.xlu0 %744
      %746 = vrot.lane.b32.xlu0 %v550, 126
      %v747 = vpop.permute.xlu0 %746
      %748 = vrot.lane.b32.xlu0 %v553, 126
      %v749 = vpop.permute.xlu0 %748
      %750 = vrot.lane.b32.xlu0 %v555, 126
      %v751 = vpop.permute.xlu0 %750
      %752 = vrot.lane.b32.xlu0 %v558, 126
      %v753 = vpop.permute.xlu0 %752
      %754 = vrot.lane.b32.xlu0 %v560, 126
      %v755 = vpop.permute.xlu0 %754
      %756 = vrot.lane.b32.xlu0 %v563, 126
      %v757 = vpop.permute.xlu0 %756
      %758 = vrot.lane.b32.xlu0 %v565, 126
      %v759 = vpop.permute.xlu0 %758
      %760 = vrot.lane.b32.xlu0 %v568, 126
      %v761 = vpop.permute.xlu0 %760
      %762 = vrot.lane.b32.xlu0 %v570, 126
      %v763 = vpop.permute.xlu0 %762
      %764 = vrot.lane.b32.xlu0 %v573, 126
      %v765 = vpop.permute.xlu0 %764
      %766 = vrot.lane.b32.xlu0 %v575, 126
      %v767 = vpop.permute.xlu0 %766
      %vm800 = vcmask 1045504
      %v801 = vrot.slane %v207, 2
      %v802 = vrot.slane %v208, 2
      %v803 = vsel %vm800, %v801, %v802
      %v804 = vrot.slane %v209, 2
      %v805 = vsel %vm800, %v802, %v804
      %v806 = vrot.slane %v210, 2
      %v807 = vrot.slane %v211, 2
      %v808 = vsel %vm800, %v806, %v807
      %v809 = vrot.slane %v212, 2
      %v810 = vsel %vm800, %v807, %v809
      %v811 = vrot.slane %v213, 2
      %v812 = vrot.slane %v214, 2
      %v813 = vsel %vm800, %v811, %v812
      %v814 = vrot.slane %v215, 2
      %v815 = vsel %vm800, %v812, %v814
      %v816 = vrot.slane %v216, 2
      %v817 = vrot.slane %v217, 2
      %v818 = vsel %vm800, %v816, %v817
      %v819 = vrot.slane %v218, 2
      %v820 = vsel %vm800, %v817, %v819
      %v821 = vrot.slane %v219, 2
      %v822 = vrot.slane %v220, 2
      %v823 = vsel %vm800, %v821, %v822
      %v824 = vrot.slane %v221, 2
      %v825 = vsel %vm800, %v822, %v824
      %v826 = vrot.slane %v222, 2
      %v827 = vrot.slane %v223, 2
      %v828 = vsel %vm800, %v826, %v827
      %v829 = vrot.slane %v224, 2
      %v830 = vsel %vm800, %v827, %v829
      %v831 = vrot.slane %v225, 2
      %v832 = vrot.slane %v226, 2
      %v833 = vsel %vm800, %v831, %v832
      %v834 = vrot.slane %v227, 2
      %v835 = vsel %vm800, %v832, %v834
      %v836 = vrot.slane %v228, 2
      %v837 = vrot.slane %v229, 2
      %v838 = vsel %vm800, %v836, %v837
      %v839 = vrot.slane %v230, 2
      %v840 = vsel %vm800, %v837, %v839
      %v841 = vrot.slane %v231, 2
      %v842 = vrot.slane %v232, 2
      %v843 = vsel %vm800, %v841, %v842
      %v844 = vrot.slane %v233, 2
      %v845 = vsel %vm800, %v842, %v844
      %v846 = vrot.slane %v234, 2
      %v847 = vrot.slane %v235, 2
      %v848 = vsel %vm800, %v846, %v847
      %v849 = vrot.slane %v236, 2
      %v850 = vsel %vm800, %v847, %v849
      %v851 = vrot.slane %v237, 2
      %v852 = vrot.slane %v238, 2
      %v853 = vsel %vm800, %v851, %v852
      %v854 = vrot.slane %v239, 2
      %v855 = vsel %vm800, %v852, %v854
      %v856 = vrot.slane %v240, 2
      %v857 = vrot.slane %v241, 2
      %v858 = vsel %vm800, %v856, %v857
      %v859 = vrot.slane %v242, 2
      %v860 = vsel %vm800, %v857, %v859
      %v861 = vrot.slane %v243, 2
      %v862 = vrot.slane %v244, 2
      %v863 = vsel %vm800, %v861, %v862
      %v864 = vrot.slane %v245, 2
      %v865 = vsel %vm800, %v862, %v864
      %v866 = vrot.slane %v246, 2
      %v867 = vrot.slane %v247, 2
      %v868 = vsel %vm800, %v866, %v867
      %v869 = vrot.slane %v248, 2
      %v870 = vsel %vm800, %v867, %v869
      %v871 = vrot.slane %v249, 2
      %v872 = vrot.slane %v250, 2
      %v873 = vsel %vm800, %v871, %v872
      %v874 = vrot.slane %v251, 2
      %v875 = vsel %vm800, %v872, %v874
      %v876 = vrot.slane %v252, 2
      %v877 = vrot.slane %v253, 2
      %v878 = vsel %vm800, %v876, %v877
      %v879 = vrot.slane %v254, 2
      %v880 = vsel %vm800, %v877, %v879
      %913 = vrot.lane.b32.xlu0 %v803, 127
      %v914 = vpop.permute.xlu0 %913
      %915 = vrot.lane.b32.xlu0 %v805, 127
      %v916 = vpop.permute.xlu0 %915
      %917 = vrot.lane.b32.xlu0 %v808, 127
      %v918 = vpop.permute.xlu0 %917
      %919 = vrot.lane.b32.xlu0 %v810, 127
      %v920 = vpop.permute.xlu0 %919
      %921 = vrot.lane.b32.xlu0 %v813, 127
      %v922 = vpop.permute.xlu0 %921
      %923 = vrot.lane.b32.xlu0 %v815, 127
      %v924 = vpop.permute.xlu0 %923
      %925 = vrot.lane.b32.xlu0 %v818, 127
      %v926 = vpop.permute.xlu0 %925
      %927 = vrot.lane.b32.xlu0 %v820, 127
      %v928 = vpop.permute.xlu0 %927
      %929 = vrot.lane.b32.xlu0 %v823, 127
      %v930 = vpop.permute.xlu0 %929
      %931 = vrot.lane.b32.xlu0 %v825, 127
      %v932 = vpop.permute.xlu0 %931
      %933 = vrot.lane.b32.xlu0 %v828, 127
      %v934 = vpop.permute.xlu0 %933
      %935 = vrot.lane.b32.xlu0 %v830, 127
      %v936 = vpop.permute.xlu0 %935
      %937 = vrot.lane.b32.xlu0 %v833, 127
      %v938 = vpop.permute.xlu0 %937
      %939 = vrot.lane.b32.xlu0 %v835, 127
      %v940 = vpop.permute.xlu0 %939
      %941 = vrot.lane.b32.xlu0 %v838, 127
      %v942 = vpop.permute.xlu0 %941
      %943 = vrot.lane.b32.xlu0 %v840, 127
      %v944 = vpop.permute.xlu0 %943
      %945 = vrot.lane.b32.xlu0 %v843, 127
      %v946 = vpop.permute.xlu0 %945
      %947 = vrot.lane.b32.xlu0 %v845, 127
      %v948 = vpop.permute.xlu0 %947
      %949 = vrot.lane.b32.xlu0 %v848, 127
      %v950 = vpop.permute.xlu0 %949
      %951 = vrot.lane.b32.xlu0 %v850, 127
      %v952 = vpop.permute.xlu0 %951
      %953 = vrot.lane.b32.xlu0 %v853, 127
      %v954 = vpop.permute.xlu0 %953
      %955 = vrot.lane.b32.xlu0 %v855, 127
      %v956 = vpop.permute.xlu0 %955
      %957 = vrot.lane.b32.xlu0 %v858, 127
      %v958 = vpop.permute.xlu0 %957
      %959 = vrot.lane.b32.xlu0 %v860, 127
      %v960 = vpop.permute.xlu0 %959
      %961 = vrot.lane.b32.xlu0 %v863, 127
      %v962 = vpop.permute.xlu0 %961
      %963 = vrot.lane.b32.xlu0 %v865, 127
      %v964 = vpop.permute.xlu0 %963
      %965 = vrot.lane.b32.xlu0 %v868, 127
      %v966 = vpop.permute.xlu0 %965
      %967 = vrot.lane.b32.xlu0 %v870, 127
      %v968 = vpop.permute.xlu0 %967
      %969 = vrot.lane.b32.xlu0 %v873, 127
      %v970 = vpop.permute.xlu0 %969
      %971 = vrot.lane.b32.xlu0 %v875, 127
      %v972 = vpop.permute.xlu0 %971
      %973 = vrot.lane.b32.xlu0 %v878, 127
      %v974 = vpop.permute.xlu0 %973
      %975 = vrot.lane.b32.xlu0 %v880, 127
      %v976 = vpop.permute.xlu0 %975
      %1009 = vrot.lane.b32.xlu0 %v803, 126
      %v1010 = vpop.permute.xlu0 %1009
      %1011 = vrot.lane.b32.xlu0 %v805, 126
      %v1012 = vpop.permute.xlu0 %1011
      %1013 = vrot.lane.b32.xlu0 %v808, 126
      %v1014 = vpop.permute.xlu0 %1013
      %1015 = vrot.lane.b32.xlu0 %v810, 126
      %v1016 = vpop.permute.xlu0 %1015
      %1017 = vrot.lane.b32.xlu0 %v813, 126
      %v1018 = vpop.permute.xlu0 %1017
      %1019 = vrot.lane.b32.xlu0 %v815, 126
      %v1020 = vpop.permute.xlu0 %1019
      %1021 = vrot.lane.b32.xlu0 %v818, 126
      %v1022 = vpop.permute.xlu0 %1021
      %1023 = vrot.lane.b32.xlu0 %v820, 126
      %v1024 = vpop.permute.xlu0 %1023
      %1025 = vrot.lane.b32.xlu0 %v823, 126
      %v1026 = vpop.permute.xlu0 %1025
      %1027 = vrot.lane.b32.xlu0 %v825, 126
      %v1028 = vpop.permute.xlu0 %1027
      %1029 = vrot.lane.b32.xlu0 %v828, 126
      %v1030 = vpop.permute.xlu0 %1029
      %1031 = vrot.lane.b32.xlu0 %v830, 126
      %v1032 = vpop.permute.xlu0 %1031
      %1033 = vrot.lane.b32.xlu0 %v833, 126
      %v1034 = vpop.permute.xlu0 %1033
      %1035 = vrot.lane.b32.xlu0 %v835, 126
      %v1036 = vpop.permute.xlu0 %1035
      %1037 = vrot.lane.b32.xlu0 %v838, 126
      %v1038 = vpop.permute.xlu0 %1037
      %1039 = vrot.lane.b32.xlu0 %v840, 126
      %v1040 = vpop.permute.xlu0 %1039
      %1041 = vrot.lane.b32.xlu0 %v843, 126
      %v1042 = vpop.permute.xlu0 %1041
      %1043 = vrot.lane.b32.xlu0 %v845, 126
      %v1044 = vpop.permute.xlu0 %1043
      %1045 = vrot.lane.b32.xlu0 %v848, 126
      %v1046 = vpop.permute.xlu0 %1045
      %1047 = vrot.lane.b32.xlu0 %v850, 126
      %v1048 = vpop.permute.xlu0 %1047
      %1049 = vrot.lane.b32.xlu0 %v853, 126
      %v1050 = vpop.permute.xlu0 %1049
      %1051 = vrot.lane.b32.xlu0 %v855, 126
      %v1052 = vpop.permute.xlu0 %1051
      %1053 = vrot.lane.b32.xlu0 %v858, 126
      %v1054 = vpop.permute.xlu0 %1053
      %1055 = vrot.lane.b32.xlu0 %v860, 126
      %v1056 = vpop.permute.xlu0 %1055
      %1057 = vrot.lane.b32.xlu0 %v863, 126
      %v1058 = vpop.permute.xlu0 %1057
      %1059 = vrot.lane.b32.xlu0 %v865, 126
      %v1060 = vpop.permute.xlu0 %1059
      %1061 = vrot.lane.b32.xlu0 %v868, 126
      %v1062 = vpop.permute.xlu0 %1061
      %1063 = vrot.lane.b32.xlu0 %v870, 126
      %v1064 = vpop.permute.xlu0 %1063
      %1065 = vrot.lane.b32.xlu0 %v873, 126
      %v1066 = vpop.permute.xlu0 %1065
      %1067 = vrot.lane.b32.xlu0 %v875, 126
      %v1068 = vpop.permute.xlu0 %1067
      %1069 = vrot.lane.b32.xlu0 %v878, 126
      %v1070 = vpop.permute.xlu0 %1069
      %1071 = vrot.lane.b32.xlu0 %v880, 126
      %v1072 = vpop.permute.xlu0 %1071
      %v1105 = vcombine.low %v207, %v213
      %v1106 = vcombine.high %v207, %v213
      %v1108 = vunpack.c.l.s4 1983009808
      %v1109 = vunpack.c.0.s8 %v1108
      %v1110 = vlaneseq
      %v1111 = vshrl.u32 %v1110, 7
      %v1112 = vsub.s32 %v1109, %v1111
      %v1113 = vrot.slane %v1105, %v1112
      %v1115 = vunpack.c.l.s4 1983009808
      %v1116 = vunpack.c.0.s8 %v1115
      %v1117 = vlaneseq
      %v1118 = vshrl.u32 %v1117, 7
      %v1119 = vsub.s32 %v1116, %v1118
      %v1120 = vrot.slane %v1106, %v1119
      %v1121 = vcombine.low %v210, %v216
      %v1122 = vcombine.high %v210, %v216
      %v1124 = vunpack.c.l.s4 1983009808
      %v1125 = vunpack.c.0.s8 %v1124
      %v1126 = vlaneseq
      %v1127 = vshrl.u32 %v1126, 7
      %v1128 = vsub.s32 %v1125, %v1127
      %v1129 = vrot.slane %v1121, %v1128
      %v1131 = vunpack.c.l.s4 1983009808
      %v1132 = vunpack.c.0.s8 %v1131
      %v1133 = vlaneseq
      %v1134 = vshrl.u32 %v1133, 7
      %v1135 = vsub.s32 %v1132, %v1134
      %v1136 = vrot.slane %v1122, %v1135
      %v1137 = vcombine.low %v219, %v225
      %v1138 = vcombine.high %v219, %v225
      %v1140 = vunpack.c.l.s4 1983009808
      %v1141 = vunpack.c.0.s8 %v1140
      %v1142 = vlaneseq
      %v1143 = vshrl.u32 %v1142, 7
      %v1144 = vsub.s32 %v1141, %v1143
      %v1145 = vrot.slane %v1137, %v1144
      %v1147 = vunpack.c.l.s4 1983009808
      %v1148 = vunpack.c.0.s8 %v1147
      %v1149 = vlaneseq
      %v1150 = vshrl.u32 %v1149, 7
      %v1151 = vsub.s32 %v1148, %v1150
      %v1152 = vrot.slane %v1138, %v1151
      %v1153 = vcombine.low %v222, %v228
      %v1154 = vcombine.high %v222, %v228
      %v1156 = vunpack.c.l.s4 1983009808
      %v1157 = vunpack.c.0.s8 %v1156
      %v1158 = vlaneseq
      %v1159 = vshrl.u32 %v1158, 7
      %v1160 = vsub.s32 %v1157, %v1159
      %v1161 = vrot.slane %v1153, %v1160
      %v1163 = vunpack.c.l.s4 1983009808
      %v1164 = vunpack.c.0.s8 %v1163
      %v1165 = vlaneseq
      %v1166 = vshrl.u32 %v1165, 7
      %v1167 = vsub.s32 %v1164, %v1166
      %v1168 = vrot.slane %v1154, %v1167
      %v1169 = vcombine.low %v1113, %v1129
      %v1170 = vcombine.high %v1113, %v1129
      %v1172 = vunpack.c.l.s4 1934713408
      %v1173 = vunpack.c.0.s8 %v1172
      %v1174 = vlaneseq
      %v1175 = vshrl.u32 %v1174, 7
      %v1176 = vsub.s32 %v1173, %v1175
      %v1177 = vrot.slane %v1169, %v1176
      %v1179 = vunpack.c.l.s4 1934713408
      %v1180 = vunpack.c.0.s8 %v1179
      %v1181 = vlaneseq
      %v1182 = vshrl.u32 %v1181, 7
      %v1183 = vsub.s32 %v1180, %v1182
      %v1184 = vrot.slane %v1170, %v1183
      %v1185 = vcombine.low %v1120, %v1136
      %v1186 = vcombine.high %v1120, %v1136
      %v1188 = vunpack.c.l.s4 1934713408
      %v1189 = vunpack.c.0.s8 %v1188
      %v1190 = vlaneseq
      %v1191 = vshrl.u32 %v1190, 7
      %v1192 = vsub.s32 %v1189, %v1191
      %v1193 = vrot.slane %v1185, %v1192
      %v1195 = vunpack.c.l.s4 1934713408
      %v1196 = vunpack.c.0.s8 %v1195
      %v1197 = vlaneseq
      %v1198 = vshrl.u32 %v1197, 7
      %v1199 = vsub.s32 %v1196, %v1198
      %v1200 = vrot.slane %v1186, %v1199
      %v1201 = vcombine.low %v1145, %v1161
      %v1202 = vcombine.high %v1145, %v1161
      %v1204 = vunpack.c.l.s4 1934713408
      %v1205 = vunpack.c.0.s8 %v1204
      %v1206 = vlaneseq
      %v1207 = vshrl.u32 %v1206, 7
      %v1208 = vsub.s32 %v1205, %v1207
      %v1209 = vrot.slane %v1201, %v1208
      %v1211 = vunpack.c.l.s4 1934713408
      %v1212 = vunpack.c.0.s8 %v1211
      %v1213 = vlaneseq
      %v1214 = vshrl.u32 %v1213, 7
      %v1215 = vsub.s32 %v1212, %v1214
      %v1216 = vrot.slane %v1202, %v1215
      %v1217 = vcombine.low %v1152, %v1168
      %v1218 = vcombine.high %v1152, %v1168
      %v1220 = vunpack.c.l.s4 1934713408
      %v1221 = vunpack.c.0.s8 %v1220
      %v1222 = vlaneseq
      %v1223 = vshrl.u32 %v1222, 7
      %v1224 = vsub.s32 %v1221, %v1223
      %v1225 = vrot.slane %v1217, %v1224
      %v1227 = vunpack.c.l.s4 1934713408
      %v1228 = vunpack.c.0.s8 %v1227
      %v1229 = vlaneseq
      %v1230 = vshrl.u32 %v1229, 7
      %v1231 = vsub.s32 %v1228, %v1230
      %v1232 = vrot.slane %v1218, %v1231
      %v1233 = vcombine.low %v1177, %v1209
      %v1234 = vcombine.high %v1177, %v1209
      %v1235 = vcombine.low %v1184, %v1216
      %v1236 = vcombine.high %v1184, %v1216
      %v1237 = vcombine.low %v1193, %v1225
      %v1238 = vcombine.high %v1193, %v1225
      %v1239 = vcombine.low %v1200, %v1232
      %v1240 = vcombine.high %v1200, %v1232
      %v1241 = vcombine.low %v231, %v237
      %v1242 = vcombine.high %v231, %v237
      %v1244 = vunpack.c.l.s4 1983009808
      %v1245 = vunpack.c.0.s8 %v1244
      %v1246 = vlaneseq
      %v1247 = vshrl.u32 %v1246, 7
      %v1248 = vsub.s32 %v1245, %v1247
      %v1249 = vrot.slane %v1241, %v1248
      %v1251 = vunpack.c.l.s4 1983009808
      %v1252 = vunpack.c.0.s8 %v1251
      %v1253 = vlaneseq
      %v1254 = vshrl.u32 %v1253, 7
      %v1255 = vsub.s32 %v1252, %v1254
      %v1256 = vrot.slane %v1242, %v1255
      %v1257 = vcombine.low %v234, %v240
      %v1258 = vcombine.high %v234, %v240
      %v1260 = vunpack.c.l.s4 1983009808
      %v1261 = vunpack.c.0.s8 %v1260
      %v1262 = vlaneseq
      %v1263 = vshrl.u32 %v1262, 7
      %v1264 = vsub.s32 %v1261, %v1263
      %v1265 = vrot.slane %v1257, %v1264
      %v1267 = vunpack.c.l.s4 1983009808
      %v1268 = vunpack.c.0.s8 %v1267
      %v1269 = vlaneseq
      %v1270 = vshrl.u32 %v1269, 7
      %v1271 = vsub.s32 %v1268, %v1270
      %v1272 = vrot.slane %v1258, %v1271
      %v1273 = vcombine.low %v243, %v249
      %v1274 = vcombine.high %v243, %v249
      %v1276 = vunpack.c.l.s4 1983009808
      %v1277 = vunpack.c.0.s8 %v1276
      %v1278 = vlaneseq
      %v1279 = vshrl.u32 %v1278, 7
      %v1280 = vsub.s32 %v1277, %v1279
      %v1281 = vrot.slane %v1273, %v1280
      %v1283 = vunpack.c.l.s4 1983009808
      %v1284 = vunpack.c.0.s8 %v1283
      %v1285 = vlaneseq
      %v1286 = vshrl.u32 %v1285, 7
      %v1287 = vsub.s32 %v1284, %v1286
      %v1288 = vrot.slane %v1274, %v1287
      %v1289 = vcombine.low %v246, %v252
      %v1290 = vcombine.high %v246, %v252
      %v1292 = vunpack.c.l.s4 1983009808
      %v1293 = vunpack.c.0.s8 %v1292
      %v1294 = vlaneseq
      %v1295 = vshrl.u32 %v1294, 7
      %v1296 = vsub.s32 %v1293, %v1295
      %v1297 = vrot.slane %v1289, %v1296
      %v1299 = vunpack.c.l.s4 1983009808
      %v1300 = vunpack.c.0.s8 %v1299
      %v1301 = vlaneseq
      %v1302 = vshrl.u32 %v1301, 7
      %v1303 = vsub.s32 %v1300, %v1302
      %v1304 = vrot.slane %v1290, %v1303
      %v1305 = vcombine.low %v1249, %v1265
      %v1306 = vcombine.high %v1249, %v1265
      %v1308 = vunpack.c.l.s4 1934713408
      %v1309 = vunpack.c.0.s8 %v1308
      %v1310 = vlaneseq
      %v1311 = vshrl.u32 %v1310, 7
      %v1312 = vsub.s32 %v1309, %v1311
      %v1313 = vrot.slane %v1305, %v1312
      %v1315 = vunpack.c.l.s4 1934713408
      %v1316 = vunpack.c.0.s8 %v1315
      %v1317 = vlaneseq
      %v1318 = vshrl.u32 %v1317, 7
      %v1319 = vsub.s32 %v1316, %v1318
      %v1320 = vrot.slane %v1306, %v1319
      %v1321 = vcombine.low %v1256, %v1272
      %v1322 = vcombine.high %v1256, %v1272
      %v1324 = vunpack.c.l.s4 1934713408
      %v1325 = vunpack.c.0.s8 %v1324
      %v1326 = vlaneseq
      %v1327 = vshrl.u32 %v1326, 7
      %v1328 = vsub.s32 %v1325, %v1327
      %v1329 = vrot.slane %v1321, %v1328
      %v1331 = vunpack.c.l.s4 1934713408
      %v1332 = vunpack.c.0.s8 %v1331
      %v1333 = vlaneseq
      %v1334 = vshrl.u32 %v1333, 7
      %v1335 = vsub.s32 %v1332, %v1334
      %v1336 = vrot.slane %v1322, %v1335
      %v1337 = vcombine.low %v1281, %v1297
      %v1338 = vcombine.high %v1281, %v1297
      %v1340 = vunpack.c.l.s4 1934713408
      %v1341 = vunpack.c.0.s8 %v1340
      %v1342 = vlaneseq
      %v1343 = vshrl.u32 %v1342, 7
      %v1344 = vsub.s32 %v1341, %v1343
      %v1345 = vrot.slane %v1337, %v1344
      %v1347 = vunpack.c.l.s4 1934713408
      %v1348 = vunpack.c.0.s8 %v1347
      %v1349 = vlaneseq
      %v1350 = vshrl.u32 %v1349, 7
      %v1351 = vsub.s32 %v1348, %v1350
      %v1352 = vrot.slane %v1338, %v1351
      %v1353 = vcombine.low %v1288, %v1304
      %v1354 = vcombine.high %v1288, %v1304
      %v1356 = vunpack.c.l.s4 1934713408
      %v1357 = vunpack.c.0.s8 %v1356
      %v1358 = vlaneseq
      %v1359 = vshrl.u32 %v1358, 7
      %v1360 = vsub.s32 %v1357, %v1359
      %v1361 = vrot.slane %v1353, %v1360
      %v1363 = vunpack.c.l.s4 1934713408
      %v1364 = vunpack.c.0.s8 %v1363
      %v1365 = vlaneseq
      %v1366 = vshrl.u32 %v1365, 7
      %v1367 = vsub.s32 %v1364, %v1366
      %v1368 = vrot.slane %v1354, %v1367
      %v1369 = vcombine.low %v1313, %v1345
      %v1370 = vcombine.high %v1313, %v1345
      %v1371 = vcombine.low %v1320, %v1352
      %v1372 = vcombine.high %v1320, %v1352
      %v1373 = vcombine.low %v1329, %v1361
      %v1374 = vcombine.high %v1329, %v1361
      %v1375 = vcombine.low %v1336, %v1368
      %v1376 = vcombine.high %v1336, %v1368
      %v1377 = vcombine.low %v288, %v296
      %v1378 = vcombine.high %v288, %v296
      %v1380 = vunpack.c.l.s4 1983009808
      %v1381 = vunpack.c.0.s8 %v1380
      %v1382 = vlaneseq
      %v1383 = vshrl.u32 %v1382, 7
      %v1384 = vsub.s32 %v1381, %v1383
      %v1385 = vrot.slane %v1377, %v1384
      %v1387 = vunpack.c.l.s4 1983009808
      %v1388 = vunpack.c.0.s8 %v1387
      %v1389 = vlaneseq
      %v1390 = vshrl.u32 %v1389, 7
      %v1391 = vsub.s32 %v1388, %v1390
      %v1392 = vrot.slane %v1378, %v1391
      %v1393 = vcombine.low %v292, %v300
      %v1394 = vcombine.high %v292, %v300
      %v1396 = vunpack.c.l.s4 1983009808
      %v1397 = vunpack.c.0.s8 %v1396
      %v1398 = vlaneseq
      %v1399 = vshrl.u32 %v1398, 7
      %v1400 = vsub.s32 %v1397, %v1399
      %v1401 = vrot.slane %v1393, %v1400
      %v1403 = vunpack.c.l.s4 1983009808
      %v1404 = vunpack.c.0.s8 %v1403
      %v1405 = vlaneseq
      %v1406 = vshrl.u32 %v1405, 7
      %v1407 = vsub.s32 %v1404, %v1406
      %v1408 = vrot.slane %v1394, %v1407
      %v1409 = vcombine.low %v304, %v312
      %v1410 = vcombine.high %v304, %v312
      %v1412 = vunpack.c.l.s4 1983009808
      %v1413 = vunpack.c.0.s8 %v1412
      %v1414 = vlaneseq
      %v1415 = vshrl.u32 %v1414, 7
      %v1416 = vsub.s32 %v1413, %v1415
      %v1417 = vrot.slane %v1409, %v1416
      %v1419 = vunpack.c.l.s4 1983009808
      %v1420 = vunpack.c.0.s8 %v1419
      %v1421 = vlaneseq
      %v1422 = vshrl.u32 %v1421, 7
      %v1423 = vsub.s32 %v1420, %v1422
      %v1424 = vrot.slane %v1410, %v1423
      %v1425 = vcombine.low %v308, %v316
      %v1426 = vcombine.high %v308, %v316
      %v1428 = vunpack.c.l.s4 1983009808
      %v1429 = vunpack.c.0.s8 %v1428
      %v1430 = vlaneseq
      %v1431 = vshrl.u32 %v1430, 7
      %v1432 = vsub.s32 %v1429, %v1431
      %v1433 = vrot.slane %v1425, %v1432
      %v1435 = vunpack.c.l.s4 1983009808
      %v1436 = vunpack.c.0.s8 %v1435
      %v1437 = vlaneseq
      %v1438 = vshrl.u32 %v1437, 7
      %v1439 = vsub.s32 %v1436, %v1438
      %v1440 = vrot.slane %v1426, %v1439
      %v1441 = vcombine.low %v1385, %v1401
      %v1442 = vcombine.high %v1385, %v1401
      %v1444 = vunpack.c.l.s4 1934713408
      %v1445 = vunpack.c.0.s8 %v1444
      %v1446 = vlaneseq
      %v1447 = vshrl.u32 %v1446, 7
      %v1448 = vsub.s32 %v1445, %v1447
      %v1449 = vrot.slane %v1441, %v1448
      %v1451 = vunpack.c.l.s4 1934713408
      %v1452 = vunpack.c.0.s8 %v1451
      %v1453 = vlaneseq
      %v1454 = vshrl.u32 %v1453, 7
      %v1455 = vsub.s32 %v1452, %v1454
      %v1456 = vrot.slane %v1442, %v1455
      %v1457 = vcombine.low %v1392, %v1408
      %v1458 = vcombine.high %v1392, %v1408
      %v1460 = vunpack.c.l.s4 1934713408
      %v1461 = vunpack.c.0.s8 %v1460
      %v1462 = vlaneseq
      %v1463 = vshrl.u32 %v1462, 7
      %v1464 = vsub.s32 %v1461, %v1463
      %v1465 = vrot.slane %v1457, %v1464
      %v1467 = vunpack.c.l.s4 1934713408
      %v1468 = vunpack.c.0.s8 %v1467
      %v1469 = vlaneseq
      %v1470 = vshrl.u32 %v1469, 7
      %v1471 = vsub.s32 %v1468, %v1470
      %v1472 = vrot.slane %v1458, %v1471
      %v1473 = vcombine.low %v1417, %v1433
      %v1474 = vcombine.high %v1417, %v1433
      %v1476 = vunpack.c.l.s4 1934713408
      %v1477 = vunpack.c.0.s8 %v1476
      %v1478 = vlaneseq
      %v1479 = vshrl.u32 %v1478, 7
      %v1480 = vsub.s32 %v1477, %v1479
      %v1481 = vrot.slane %v1473, %v1480
      %v1483 = vunpack.c.l.s4 1934713408
      %v1484 = vunpack.c.0.s8 %v1483
      %v1485 = vlaneseq
      %v1486 = vshrl.u32 %v1485, 7
      %v1487 = vsub.s32 %v1484, %v1486
      %v1488 = vrot.slane %v1474, %v1487
      %v1489 = vcombine.low %v1424, %v1440
      %v1490 = vcombine.high %v1424, %v1440
      %v1492 = vunpack.c.l.s4 1934713408
      %v1493 = vunpack.c.0.s8 %v1492
      %v1494 = vlaneseq
      %v1495 = vshrl.u32 %v1494, 7
      %v1496 = vsub.s32 %v1493, %v1495
      %v1497 = vrot.slane %v1489, %v1496
      %v1499 = vunpack.c.l.s4 1934713408
      %v1500 = vunpack.c.0.s8 %v1499
      %v1501 = vlaneseq
      %v1502 = vshrl.u32 %v1501, 7
      %v1503 = vsub.s32 %v1500, %v1502
      %v1504 = vrot.slane %v1490, %v1503
      %v1505 = vcombine.low %v1449, %v1481
      %v1506 = vcombine.high %v1449, %v1481
      %v1507 = vcombine.low %v1456, %v1488
      %v1508 = vcombine.high %v1456, %v1488
      %v1509 = vcombine.low %v1465, %v1497
      %v1510 = vcombine.high %v1465, %v1497
      %v1511 = vcombine.low %v1472, %v1504
      %v1512 = vcombine.high %v1472, %v1504
      %v1513 = vcombine.low %v320, %v328
      %v1514 = vcombine.high %v320, %v328
      %v1516 = vunpack.c.l.s4 1983009808
      %v1517 = vunpack.c.0.s8 %v1516
      %v1518 = vlaneseq
      %v1519 = vshrl.u32 %v1518, 7
      %v1520 = vsub.s32 %v1517, %v1519
      %v1521 = vrot.slane %v1513, %v1520
      %v1523 = vunpack.c.l.s4 1983009808
      %v1524 = vunpack.c.0.s8 %v1523
      %v1525 = vlaneseq
      %v1526 = vshrl.u32 %v1525, 7
      %v1527 = vsub.s32 %v1524, %v1526
      %v1528 = vrot.slane %v1514, %v1527
      %v1529 = vcombine.low %v324, %v332
      %v1530 = vcombine.high %v324, %v332
      %v1532 = vunpack.c.l.s4 1983009808
      %v1533 = vunpack.c.0.s8 %v1532
      %v1534 = vlaneseq
      %v1535 = vshrl.u32 %v1534, 7
      %v1536 = vsub.s32 %v1533, %v1535
      %v1537 = vrot.slane %v1529, %v1536
      %v1539 = vunpack.c.l.s4 1983009808
      %v1540 = vunpack.c.0.s8 %v1539
      %v1541 = vlaneseq
      %v1542 = vshrl.u32 %v1541, 7
      %v1543 = vsub.s32 %v1540, %v1542
      %v1544 = vrot.slane %v1530, %v1543
      %v1545 = vcombine.low %v336, %v344
      %v1546 = vcombine.high %v336, %v344
      %v1548 = vunpack.c.l.s4 1983009808
      %v1549 = vunpack.c.0.s8 %v1548
      %v1550 = vlaneseq
      %v1551 = vshrl.u32 %v1550, 7
      %v1552 = vsub.s32 %v1549, %v1551
      %v1553 = vrot.slane %v1545, %v1552
      %v1555 = vunpack.c.l.s4 1983009808
      %v1556 = vunpack.c.0.s8 %v1555
      %v1557 = vlaneseq
      %v1558 = vshrl.u32 %v1557, 7
      %v1559 = vsub.s32 %v1556, %v1558
      %v1560 = vrot.slane %v1546, %v1559
      %v1561 = vcombine.low %v340, %v348
      %v1562 = vcombine.high %v340, %v348
      %v1564 = vunpack.c.l.s4 1983009808
      %v1565 = vunpack.c.0.s8 %v1564
      %v1566 = vlaneseq
      %v1567 = vshrl.u32 %v1566, 7
      %v1568 = vsub.s32 %v1565, %v1567
      %v1569 = vrot.slane %v1561, %v1568
      %v1571 = vunpack.c.l.s4 1983009808
      %v1572 = vunpack.c.0.s8 %v1571
      %v1573 = vlaneseq
      %v1574 = vshrl.u32 %v1573, 7
      %v1575 = vsub.s32 %v1572, %v1574
      %v1576 = vrot.slane %v1562, %v1575
      %v1577 = vcombine.low %v1521, %v1537
      %v1578 = vcombine.high %v1521, %v1537
      %v1580 = vunpack.c.l.s4 1934713408
      %v1581 = vunpack.c.0.s8 %v1580
      %v1582 = vlaneseq
      %v1583 = vshrl.u32 %v1582, 7
      %v1584 = vsub.s32 %v1581, %v1583
      %v1585 = vrot.slane %v1577, %v1584
      %v1587 = vunpack.c.l.s4 1934713408
      %v1588 = vunpack.c.0.s8 %v1587
      %v1589 = vlaneseq
      %v1590 = vshrl.u32 %v1589, 7
      %v1591 = vsub.s32 %v1588, %v1590
      %v1592 = vrot.slane %v1578, %v1591
      %v1593 = vcombine.low %v1528, %v1544
      %v1594 = vcombine.high %v1528, %v1544
      %v1596 = vunpack.c.l.s4 1934713408
      %v1597 = vunpack.c.0.s8 %v1596
      %v1598 = vlaneseq
      %v1599 = vshrl.u32 %v1598, 7
      %v1600 = vsub.s32 %v1597, %v1599
      %v1601 = vrot.slane %v1593, %v1600
      %v1603 = vunpack.c.l.s4 1934713408
      %v1604 = vunpack.c.0.s8 %v1603
      %v1605 = vlaneseq
      %v1606 = vshrl.u32 %v1605, 7
      %v1607 = vsub.s32 %v1604, %v1606
      %v1608 = vrot.slane %v1594, %v1607
      %v1609 = vcombine.low %v1553, %v1569
      %v1610 = vcombine.high %v1553, %v1569
      %v1612 = vunpack.c.l.s4 1934713408
      %v1613 = vunpack.c.0.s8 %v1612
      %v1614 = vlaneseq
      %v1615 = vshrl.u32 %v1614, 7
      %v1616 = vsub.s32 %v1613, %v1615
      %v1617 = vrot.slane %v1609, %v1616
      %v1619 = vunpack.c.l.s4 1934713408
      %v1620 = vunpack.c.0.s8 %v1619
      %v1621 = vlaneseq
      %v1622 = vshrl.u32 %v1621, 7
      %v1623 = vsub.s32 %v1620, %v1622
      %v1624 = vrot.slane %v1610, %v1623
      %v1625 = vcombine.low %v1560, %v1576
      %v1626 = vcombine.high %v1560, %v1576
      %v1628 = vunpack.c.l.s4 1934713408
      %v1629 = vunpack.c.0.s8 %v1628
      %v1630 = vlaneseq
      %v1631 = vshrl.u32 %v1630, 7
      %v1632 = vsub.s32 %v1629, %v1631
      %v1633 = vrot.slane %v1625, %v1632
      %v1635 = vunpack.c.l.s4 1934713408
      %v1636 = vunpack.c.0.s8 %v1635
      %v1637 = vlaneseq
      %v1638 = vshrl.u32 %v1637, 7
      %v1639 = vsub.s32 %v1636, %v1638
      %v1640 = vrot.slane %v1626, %v1639
      %v1641 = vcombine.low %v1585, %v1617
      %v1642 = vcombine.high %v1585, %v1617
      %v1643 = vcombine.low %v1592, %v1624
      %v1644 = vcombine.high %v1592, %v1624
      %v1645 = vcombine.low %v1601, %v1633
      %v1646 = vcombine.high %v1601, %v1633
      %v1647 = vcombine.low %v1608, %v1640
      %v1648 = vcombine.high %v1608, %v1640
      %v1649 = vcombine.low %v384, %v392
      %v1650 = vcombine.high %v384, %v392
      %v1652 = vunpack.c.l.s4 1983009808
      %v1653 = vunpack.c.0.s8 %v1652
      %v1654 = vlaneseq
      %v1655 = vshrl.u32 %v1654, 7
      %v1656 = vsub.s32 %v1653, %v1655
      %v1657 = vrot.slane %v1649, %v1656
      %v1659 = vunpack.c.l.s4 1983009808
      %v1660 = vunpack.c.0.s8 %v1659
      %v1661 = vlaneseq
      %v1662 = vshrl.u32 %v1661, 7
      %v1663 = vsub.s32 %v1660, %v1662
      %v1664 = vrot.slane %v1650, %v1663
      %v1665 = vcombine.low %v388, %v396
      %v1666 = vcombine.high %v388, %v396
      %v1668 = vunpack.c.l.s4 1983009808
      %v1669 = vunpack.c.0.s8 %v1668
      %v1670 = vlaneseq
      %v1671 = vshrl.u32 %v1670, 7
      %v1672 = vsub.s32 %v1669, %v1671
      %v1673 = vrot.slane %v1665, %v1672
      %v1675 = vunpack.c.l.s4 1983009808
      %v1676 = vunpack.c.0.s8 %v1675
      %v1677 = vlaneseq
      %v1678 = vshrl.u32 %v1677, 7
      %v1679 = vsub.s32 %v1676, %v1678
      %v1680 = vrot.slane %v1666, %v1679
      %v1681 = vcombine.low %v400, %v408
      %v1682 = vcombine.high %v400, %v408
      %v1684 = vunpack.c.l.s4 1983009808
      %v1685 = vunpack.c.0.s8 %v1684
      %v1686 = vlaneseq
      %v1687 = vshrl.u32 %v1686, 7
      %v1688 = vsub.s32 %v1685, %v1687
      %v1689 = vrot.slane %v1681, %v1688
      %v1691 = vunpack.c.l.s4 1983009808
      %v1692 = vunpack.c.0.s8 %v1691
      %v1693 = vlaneseq
      %v1694 = vshrl.u32 %v1693, 7
      %v1695 = vsub.s32 %v1692, %v1694
      %v1696 = vrot.slane %v1682, %v1695
      %v1697 = vcombine.low %v404, %v412
      %v1698 = vcombine.high %v404, %v412
      %v1700 = vunpack.c.l.s4 1983009808
      %v1701 = vunpack.c.0.s8 %v1700
      %v1702 = vlaneseq
      %v1703 = vshrl.u32 %v1702, 7
      %v1704 = vsub.s32 %v1701, %v1703
      %v1705 = vrot.slane %v1697, %v1704
      %v1707 = vunpack.c.l.s4 1983009808
      %v1708 = vunpack.c.0.s8 %v1707
      %v1709 = vlaneseq
      %v1710 = vshrl.u32 %v1709, 7
      %v1711 = vsub.s32 %v1708, %v1710
      %v1712 = vrot.slane %v1698, %v1711
      %v1713 = vcombine.low %v1657, %v1673
      %v1714 = vcombine.high %v1657, %v1673
      %v1716 = vunpack.c.l.s4 1934713408
      %v1717 = vunpack.c.0.s8 %v1716
      %v1718 = vlaneseq
      %v1719 = vshrl.u32 %v1718, 7
      %v1720 = vsub.s32 %v1717, %v1719
      %v1721 = vrot.slane %v1713, %v1720
      %v1723 = vunpack.c.l.s4 1934713408
      %v1724 = vunpack.c.0.s8 %v1723
      %v1725 = vlaneseq
      %v1726 = vshrl.u32 %v1725, 7
      %v1727 = vsub.s32 %v1724, %v1726
      %v1728 = vrot.slane %v1714, %v1727
      %v1729 = vcombine.low %v1664, %v1680
      %v1730 = vcombine.high %v1664, %v1680
      %v1732 = vunpack.c.l.s4 1934713408
      %v1733 = vunpack.c.0.s8 %v1732
      %v1734 = vlaneseq
      %v1735 = vshrl.u32 %v1734, 7
      %v1736 = vsub.s32 %v1733, %v1735
      %v1737 = vrot.slane %v1729, %v1736
      %v1739 = vunpack.c.l.s4 1934713408
      %v1740 = vunpack.c.0.s8 %v1739
      %v1741 = vlaneseq
      %v1742 = vshrl.u32 %v1741, 7
      %v1743 = vsub.s32 %v1740, %v1742
      %v1744 = vrot.slane %v1730, %v1743
      %v1745 = vcombine.low %v1689, %v1705
      %v1746 = vcombine.high %v1689, %v1705
      %v1748 = vunpack.c.l.s4 1934713408
      %v1749 = vunpack.c.0.s8 %v1748
      %v1750 = vlaneseq
      %v1751 = vshrl.u32 %v1750, 7
      %v1752 = vsub.s32 %v1749, %v1751
      %v1753 = vrot.slane %v1745, %v1752
      %v1755 = vunpack.c.l.s4 1934713408
      %v1756 = vunpack.c.0.s8 %v1755
      %v1757 = vlaneseq
      %v1758 = vshrl.u32 %v1757, 7
      %v1759 = vsub.s32 %v1756, %v1758
      %v1760 = vrot.slane %v1746, %v1759
      %v1761 = vcombine.low %v1696, %v1712
      %v1762 = vcombine.high %v1696, %v1712
      %v1764 = vunpack.c.l.s4 1934713408
      %v1765 = vunpack.c.0.s8 %v1764
      %v1766 = vlaneseq
      %v1767 = vshrl.u32 %v1766, 7
      %v1768 = vsub.s32 %v1765, %v1767
      %v1769 = vrot.slane %v1761, %v1768
      %v1771 = vunpack.c.l.s4 1934713408
      %v1772 = vunpack.c.0.s8 %v1771
      %v1773 = vlaneseq
      %v1774 = vshrl.u32 %v1773, 7
      %v1775 = vsub.s32 %v1772, %v1774
      %v1776 = vrot.slane %v1762, %v1775
      %v1777 = vcombine.low %v1721, %v1753
      %v1778 = vcombine.high %v1721, %v1753
      %v1779 = vcombine.low %v1728, %v1760
      %v1780 = vcombine.high %v1728, %v1760
      %v1781 = vcombine.low %v1737, %v1769
      %v1782 = vcombine.high %v1737, %v1769
      %v1783 = vcombine.low %v1744, %v1776
      %v1784 = vcombine.high %v1744, %v1776
      %v1785 = vcombine.low %v416, %v424
      %v1786 = vcombine.high %v416, %v424
      %v1788 = vunpack.c.l.s4 1983009808
      %v1789 = vunpack.c.0.s8 %v1788
      %v1790 = vlaneseq
      %v1791 = vshrl.u32 %v1790, 7
      %v1792 = vsub.s32 %v1789, %v1791
      %v1793 = vrot.slane %v1785, %v1792
      %v1795 = vunpack.c.l.s4 1983009808
      %v1796 = vunpack.c.0.s8 %v1795
      %v1797 = vlaneseq
      %v1798 = vshrl.u32 %v1797, 7
      %v1799 = vsub.s32 %v1796, %v1798
      %v1800 = vrot.slane %v1786, %v1799
      %v1801 = vcombine.low %v420, %v428
      %v1802 = vcombine.high %v420, %v428
      %v1804 = vunpack.c.l.s4 1983009808
      %v1805 = vunpack.c.0.s8 %v1804
      %v1806 = vlaneseq
      %v1807 = vshrl.u32 %v1806, 7
      %v1808 = vsub.s32 %v1805, %v1807
      %v1809 = vrot.slane %v1801, %v1808
      %v1811 = vunpack.c.l.s4 1983009808
      %v1812 = vunpack.c.0.s8 %v1811
      %v1813 = vlaneseq
      %v1814 = vshrl.u32 %v1813, 7
      %v1815 = vsub.s32 %v1812, %v1814
      %v1816 = vrot.slane %v1802, %v1815
      %v1817 = vcombine.low %v432, %v440
      %v1818 = vcombine.high %v432, %v440
      %v1820 = vunpack.c.l.s4 1983009808
      %v1821 = vunpack.c.0.s8 %v1820
      %v1822 = vlaneseq
      %v1823 = vshrl.u32 %v1822, 7
      %v1824 = vsub.s32 %v1821, %v1823
      %v1825 = vrot.slane %v1817, %v1824
      %v1827 = vunpack.c.l.s4 1983009808
      %v1828 = vunpack.c.0.s8 %v1827
      %v1829 = vlaneseq
      %v1830 = vshrl.u32 %v1829, 7
      %v1831 = vsub.s32 %v1828, %v1830
      %v1832 = vrot.slane %v1818, %v1831
      %v1833 = vcombine.low %v436, %v444
      %v1834 = vcombine.high %v436, %v444
      %v1836 = vunpack.c.l.s4 1983009808
      %v1837 = vunpack.c.0.s8 %v1836
      %v1838 = vlaneseq
      %v1839 = vshrl.u32 %v1838, 7
      %v1840 = vsub.s32 %v1837, %v1839
      %v1841 = vrot.slane %v1833, %v1840
      %v1843 = vunpack.c.l.s4 1983009808
      %v1844 = vunpack.c.0.s8 %v1843
      %v1845 = vlaneseq
      %v1846 = vshrl.u32 %v1845, 7
      %v1847 = vsub.s32 %v1844, %v1846
      %v1848 = vrot.slane %v1834, %v1847
      %v1849 = vcombine.low %v1793, %v1809
      %v1850 = vcombine.high %v1793, %v1809
      %v1852 = vunpack.c.l.s4 1934713408
      %v1853 = vunpack.c.0.s8 %v1852
      %v1854 = vlaneseq
      %v1855 = vshrl.u32 %v1854, 7
      %v1856 = vsub.s32 %v1853, %v1855
      %v1857 = vrot.slane %v1849, %v1856
      %v1859 = vunpack.c.l.s4 1934713408
      %v1860 = vunpack.c.0.s8 %v1859
      %v1861 = vlaneseq
      %v1862 = vshrl.u32 %v1861, 7
      %v1863 = vsub.s32 %v1860, %v1862
      %v1864 = vrot.slane %v1850, %v1863
      %v1865 = vcombine.low %v1800, %v1816
      %v1866 = vcombine.high %v1800, %v1816
      %v1868 = vunpack.c.l.s4 1934713408
      %v1869 = vunpack.c.0.s8 %v1868
      %v1870 = vlaneseq
      %v1871 = vshrl.u32 %v1870, 7
      %v1872 = vsub.s32 %v1869, %v1871
      %v1873 = vrot.slane %v1865, %v1872
      %v1875 = vunpack.c.l.s4 1934713408
      %v1876 = vunpack.c.0.s8 %v1875
      %v1877 = vlaneseq
      %v1878 = vshrl.u32 %v1877, 7
      %v1879 = vsub.s32 %v1876, %v1878
      %v1880 = vrot.slane %v1866, %v1879
      %v1881 = vcombine.low %v1825, %v1841
      %v1882 = vcombine.high %v1825, %v1841
      %v1884 = vunpack.c.l.s4 1934713408
      %v1885 = vunpack.c.0.s8 %v1884
      %v1886 = vlaneseq
      %v1887 = vshrl.u32 %v1886, 7
      %v1888 = vsub.s32 %v1885, %v1887
      %v1889 = vrot.slane %v1881, %v1888
      %v1891 = vunpack.c.l.s4 1934713408
      %v1892 = vunpack.c.0.s8 %v1891
      %v1893 = vlaneseq
      %v1894 = vshrl.u32 %v1893, 7
      %v1895 = vsub.s32 %v1892, %v1894
      %v1896 = vrot.slane %v1882, %v1895
      %v1897 = vcombine.low %v1832, %v1848
      %v1898 = vcombine.high %v1832, %v1848
      %v1900 = vunpack.c.l.s4 1934713408
      %v1901 = vunpack.c.0.s8 %v1900
      %v1902 = vlaneseq
      %v1903 = vshrl.u32 %v1902, 7
      %v1904 = vsub.s32 %v1901, %v1903
      %v1905 = vrot.slane %v1897, %v1904
      %v1907 = vunpack.c.l.s4 1934713408
      %v1908 = vunpack.c.0.s8 %v1907
      %v1909 = vlaneseq
      %v1910 = vshrl.u32 %v1909, 7
      %v1911 = vsub.s32 %v1908, %v1910
      %v1912 = vrot.slane %v1898, %v1911
      %v1913 = vcombine.low %v1857, %v1889
      %v1914 = vcombine.high %v1857, %v1889
      %v1915 = vcombine.low %v1864, %v1896
      %v1916 = vcombine.high %v1864, %v1896
      %v1917 = vcombine.low %v1873, %v1905
      %v1918 = vcombine.high %v1873, %v1905
      %v1919 = vcombine.low %v1880, %v1912
      %v1920 = vcombine.high %v1880, %v1912
      %v1921 = vcombine.low %v498, %v508
      %v1922 = vcombine.high %v498, %v508
      %v1924 = vunpack.c.l.s4 1983009808
      %v1925 = vunpack.c.0.s8 %v1924
      %v1926 = vlaneseq
      %v1927 = vshrl.u32 %v1926, 7
      %v1928 = vsub.s32 %v1925, %v1927
      %v1929 = vrot.slane %v1921, %v1928
      %v1931 = vunpack.c.l.s4 1983009808
      %v1932 = vunpack.c.0.s8 %v1931
      %v1933 = vlaneseq
      %v1934 = vshrl.u32 %v1933, 7
      %v1935 = vsub.s32 %v1932, %v1934
      %v1936 = vrot.slane %v1922, %v1935
      %v1937 = vcombine.low %v503, %v513
      %v1938 = vcombine.high %v503, %v513
      %v1940 = vunpack.c.l.s4 1983009808
      %v1941 = vunpack.c.0.s8 %v1940
      %v1942 = vlaneseq
      %v1943 = vshrl.u32 %v1942, 7
      %v1944 = vsub.s32 %v1941, %v1943
      %v1945 = vrot.slane %v1937, %v1944
      %v1947 = vunpack.c.l.s4 1983009808
      %v1948 = vunpack.c.0.s8 %v1947
      %v1949 = vlaneseq
      %v1950 = vshrl.u32 %v1949, 7
      %v1951 = vsub.s32 %v1948, %v1950
      %v1952 = vrot.slane %v1938, %v1951
      %v1953 = vcombine.low %v518, %v528
      %v1954 = vcombine.high %v518, %v528
      %v1956 = vunpack.c.l.s4 1983009808
      %v1957 = vunpack.c.0.s8 %v1956
      %v1958 = vlaneseq
      %v1959 = vshrl.u32 %v1958, 7
      %v1960 = vsub.s32 %v1957, %v1959
      %v1961 = vrot.slane %v1953, %v1960
      %v1963 = vunpack.c.l.s4 1983009808
      %v1964 = vunpack.c.0.s8 %v1963
      %v1965 = vlaneseq
      %v1966 = vshrl.u32 %v1965, 7
      %v1967 = vsub.s32 %v1964, %v1966
      %v1968 = vrot.slane %v1954, %v1967
      %v1969 = vcombine.low %v523, %v533
      %v1970 = vcombine.high %v523, %v533
      %v1972 = vunpack.c.l.s4 1983009808
      %v1973 = vunpack.c.0.s8 %v1972
      %v1974 = vlaneseq
      %v1975 = vshrl.u32 %v1974, 7
      %v1976 = vsub.s32 %v1973, %v1975
      %v1977 = vrot.slane %v1969, %v1976
      %v1979 = vunpack.c.l.s4 1983009808
      %v1980 = vunpack.c.0.s8 %v1979
      %v1981 = vlaneseq
      %v1982 = vshrl.u32 %v1981, 7
      %v1983 = vsub.s32 %v1980, %v1982
      %v1984 = vrot.slane %v1970, %v1983
      %v1985 = vcombine.low %v1929, %v1945
      %v1986 = vcombine.high %v1929, %v1945
      %v1988 = vunpack.c.l.s4 1934713408
      %v1989 = vunpack.c.0.s8 %v1988
      %v1990 = vlaneseq
      %v1991 = vshrl.u32 %v1990, 7
      %v1992 = vsub.s32 %v1989, %v1991
      %v1993 = vrot.slane %v1985, %v1992
      %v1995 = vunpack.c.l.s4 1934713408
      %v1996 = vunpack.c.0.s8 %v1995
      %v1997 = vlaneseq
      %v1998 = vshrl.u32 %v1997, 7
      %v1999 = vsub.s32 %v1996, %v1998
      %v2000 = vrot.slane %v1986, %v1999
      %v2001 = vcombine.low %v1936, %v1952
      %v2002 = vcombine.high %v1936, %v1952
      %v2004 = vunpack.c.l.s4 1934713408
      %v2005 = vunpack.c.0.s8 %v2004
      %v2006 = vlaneseq
      %v2007 = vshrl.u32 %v2006, 7
      %v2008 = vsub.s32 %v2005, %v2007
      %v2009 = vrot.slane %v2001, %v2008
      %v2011 = vunpack.c.l.s4 1934713408
      %v2012 = vunpack.c.0.s8 %v2011
      %v2013 = vlaneseq
      %v2014 = vshrl.u32 %v2013, 7
      %v2015 = vsub.s32 %v2012, %v2014
      %v2016 = vrot.slane %v2002, %v2015
      %v2017 = vcombine.low %v1961, %v1977
      %v2018 = vcombine.high %v1961, %v1977
      %v2020 = vunpack.c.l.s4 1934713408
      %v2021 = vunpack.c.0.s8 %v2020
      %v2022 = vlaneseq
      %v2023 = vshrl.u32 %v2022, 7
      %v2024 = vsub.s32 %v2021, %v2023
      %v2025 = vrot.slane %v2017, %v2024
      %v2027 = vunpack.c.l.s4 1934713408
      %v2028 = vunpack.c.0.s8 %v2027
      %v2029 = vlaneseq
      %v2030 = vshrl.u32 %v2029, 7
      %v2031 = vsub.s32 %v2028, %v2030
      %v2032 = vrot.slane %v2018, %v2031
      %v2033 = vcombine.low %v1968, %v1984
      %v2034 = vcombine.high %v1968, %v1984
      %v2036 = vunpack.c.l.s4 1934713408
      %v2037 = vunpack.c.0.s8 %v2036
      %v2038 = vlaneseq
      %v2039 = vshrl.u32 %v2038, 7
      %v2040 = vsub.s32 %v2037, %v2039
      %v2041 = vrot.slane %v2033, %v2040
      %v2043 = vunpack.c.l.s4 1934713408
      %v2044 = vunpack.c.0.s8 %v2043
      %v2045 = vlaneseq
      %v2046 = vshrl.u32 %v2045, 7
      %v2047 = vsub.s32 %v2044, %v2046
      %v2048 = vrot.slane %v2034, %v2047
      %v2049 = vcombine.low %v1993, %v2025
      %v2050 = vcombine.high %v1993, %v2025
      %v2051 = vcombine.low %v2000, %v2032
      %v2052 = vcombine.high %v2000, %v2032
      %v2053 = vcombine.low %v2009, %v2041
      %v2054 = vcombine.high %v2009, %v2041
      %v2055 = vcombine.low %v2016, %v2048
      %v2056 = vcombine.high %v2016, %v2048
      %v2057 = vcombine.low %v538, %v548
      %v2058 = vcombine.high %v538, %v548
      %v2060 = vunpack.c.l.s4 1983009808
      %v2061 = vunpack.c.0.s8 %v2060
      %v2062 = vlaneseq
      %v2063 = vshrl.u32 %v2062, 7
      %v2064 = vsub.s32 %v2061, %v2063
      %v2065 = vrot.slane %v2057, %v2064
      %v2067 = vunpack.c.l.s4 1983009808
      %v2068 = vunpack.c.0.s8 %v2067
      %v2069 = vlaneseq
      %v2070 = vshrl.u32 %v2069, 7
      %v2071 = vsub.s32 %v2068, %v2070
      %v2072 = vrot.slane %v2058, %v2071
      %v2073 = vcombine.low %v543, %v553
      %v2074 = vcombine.high %v543, %v553
      %v2076 = vunpack.c.l.s4 1983009808
      %v2077 = vunpack.c.0.s8 %v2076
      %v2078 = vlaneseq
      %v2079 = vshrl.u32 %v2078, 7
      %v2080 = vsub.s32 %v2077, %v2079
      %v2081 = vrot.slane %v2073, %v2080
      %v2083 = vunpack.c.l.s4 1983009808
      %v2084 = vunpack.c.0.s8 %v2083
      %v2085 = vlaneseq
      %v2086 = vshrl.u32 %v2085, 7
      %v2087 = vsub.s32 %v2084, %v2086
      %v2088 = vrot.slane %v2074, %v2087
      %v2089 = vcombine.low %v558, %v568
      %v2090 = vcombine.high %v558, %v568
      %v2092 = vunpack.c.l.s4 1983009808
      %v2093 = vunpack.c.0.s8 %v2092
      %v2094 = vlaneseq
      %v2095 = vshrl.u32 %v2094, 7
      %v2096 = vsub.s32 %v2093, %v2095
      %v2097 = vrot.slane %v2089, %v2096
      %v2099 = vunpack.c.l.s4 1983009808
      %v2100 = vunpack.c.0.s8 %v2099
      %v2101 = vlaneseq
      %v2102 = vshrl.u32 %v2101, 7
      %v2103 = vsub.s32 %v2100, %v2102
      %v2104 = vrot.slane %v2090, %v2103
      %v2105 = vcombine.low %v563, %v573
      %v2106 = vcombine.high %v563, %v573
      %v2108 = vunpack.c.l.s4 1983009808
      %v2109 = vunpack.c.0.s8 %v2108
      %v2110 = vlaneseq
      %v2111 = vshrl.u32 %v2110, 7
      %v2112 = vsub.s32 %v2109, %v2111
      %v2113 = vrot.slane %v2105, %v2112
      %v2115 = vunpack.c.l.s4 1983009808
      %v2116 = vunpack.c.0.s8 %v2115
      %v2117 = vlaneseq
      %v2118 = vshrl.u32 %v2117, 7
      %v2119 = vsub.s32 %v2116, %v2118
      %v2120 = vrot.slane %v2106, %v2119
      %v2121 = vcombine.low %v2065, %v2081
      %v2122 = vcombine.high %v2065, %v2081
      %v2124 = vunpack.c.l.s4 1934713408
      %v2125 = vunpack.c.0.s8 %v2124
      %v2126 = vlaneseq
      %v2127 = vshrl.u32 %v2126, 7
      %v2128 = vsub.s32 %v2125, %v2127
      %v2129 = vrot.slane %v2121, %v2128
      %v2131 = vunpack.c.l.s4 1934713408
      %v2132 = vunpack.c.0.s8 %v2131
      %v2133 = vlaneseq
      %v2134 = vshrl.u32 %v2133, 7
      %v2135 = vsub.s32 %v2132, %v2134
      %v2136 = vrot.slane %v2122, %v2135
      %v2137 = vcombine.low %v2072, %v2088
      %v2138 = vcombine.high %v2072, %v2088
      %v2140 = vunpack.c.l.s4 1934713408
      %v2141 = vunpack.c.0.s8 %v2140
      %v2142 = vlaneseq
      %v2143 = vshrl.u32 %v2142, 7
      %v2144 = vsub.s32 %v2141, %v2143
      %v2145 = vrot.slane %v2137, %v2144
      %v2147 = vunpack.c.l.s4 1934713408
      %v2148 = vunpack.c.0.s8 %v2147
      %v2149 = vlaneseq
      %v2150 = vshrl.u32 %v2149, 7
      %v2151 = vsub.s32 %v2148, %v2150
      %v2152 = vrot.slane %v2138, %v2151
      %v2153 = vcombine.low %v2097, %v2113
      %v2154 = vcombine.high %v2097, %v2113
      %v2156 = vunpack.c.l.s4 1934713408
      %v2157 = vunpack.c.0.s8 %v2156
      %v2158 = vlaneseq
      %v2159 = vshrl.u32 %v2158, 7
      %v2160 = vsub.s32 %v2157, %v2159
      %v2161 = vrot.slane %v2153, %v2160
      %v2163 = vunpack.c.l.s4 1934713408
      %v2164 = vunpack.c.0.s8 %v2163
      %v2165 = vlaneseq
      %v2166 = vshrl.u32 %v2165, 7
      %v2167 = vsub.s32 %v2164, %v2166
      %v2168 = vrot.slane %v2154, %v2167
      %v2169 = vcombine.low %v2104, %v2120
      %v2170 = vcombine.high %v2104, %v2120
      %v2172 = vunpack.c.l.s4 1934713408
      %v2173 = vunpack.c.0.s8 %v2172
      %v2174 = vlaneseq
      %v2175 = vshrl.u32 %v2174, 7
      %v2176 = vsub.s32 %v2173, %v2175
      %v2177 = vrot.slane %v2169, %v2176
      %v2179 = vunpack.c.l.s4 1934713408
      %v2180 = vunpack.c.0.s8 %v2179
      %v2181 = vlaneseq
      %v2182 = vshrl.u32 %v2181, 7
      %v2183 = vsub.s32 %v2180, %v2182
      %v2184 = vrot.slane %v2170, %v2183
      %v2185 = vcombine.low %v2129, %v2161
      %v2186 = vcombine.high %v2129, %v2161
      %v2187 = vcombine.low %v2136, %v2168
      %v2188 = vcombine.high %v2136, %v2168
      %v2189 = vcombine.low %v2145, %v2177
      %v2190 = vcombine.high %v2145, %v2177
      %v2191 = vcombine.low %v2152, %v2184
      %v2192 = vcombine.high %v2152, %v2184
      %v2193 = vcombine.low %v609, %v617
      %v2194 = vcombine.high %v609, %v617
      %v2196 = vunpack.c.l.s4 1983009808
      %v2197 = vunpack.c.0.s8 %v2196
      %v2198 = vlaneseq
      %v2199 = vshrl.u32 %v2198, 7
      %v2200 = vsub.s32 %v2197, %v2199
      %v2201 = vrot.slane %v2193, %v2200
      %v2203 = vunpack.c.l.s4 1983009808
      %v2204 = vunpack.c.0.s8 %v2203
      %v2205 = vlaneseq
      %v2206 = vshrl.u32 %v2205, 7
      %v2207 = vsub.s32 %v2204, %v2206
      %v2208 = vrot.slane %v2194, %v2207
      %v2209 = vcombine.low %v613, %v621
      %v2210 = vcombine.high %v613, %v621
      %v2212 = vunpack.c.l.s4 1983009808
      %v2213 = vunpack.c.0.s8 %v2212
      %v2214 = vlaneseq
      %v2215 = vshrl.u32 %v2214, 7
      %v2216 = vsub.s32 %v2213, %v2215
      %v2217 = vrot.slane %v2209, %v2216
      %v2219 = vunpack.c.l.s4 1983009808
      %v2220 = vunpack.c.0.s8 %v2219
      %v2221 = vlaneseq
      %v2222 = vshrl.u32 %v2221, 7
      %v2223 = vsub.s32 %v2220, %v2222
      %v2224 = vrot.slane %v2210, %v2223
      %v2225 = vcombine.low %v625, %v633
      %v2226 = vcombine.high %v625, %v633
      %v2228 = vunpack.c.l.s4 1983009808
      %v2229 = vunpack.c.0.s8 %v2228
      %v2230 = vlaneseq
      %v2231 = vshrl.u32 %v2230, 7
      %v2232 = vsub.s32 %v2229, %v2231
      %v2233 = vrot.slane %v2225, %v2232
      %v2235 = vunpack.c.l.s4 1983009808
      %v2236 = vunpack.c.0.s8 %v2235
      %v2237 = vlaneseq
      %v2238 = vshrl.u32 %v2237, 7
      %v2239 = vsub.s32 %v2236, %v2238
      %v2240 = vrot.slane %v2226, %v2239
      %v2241 = vcombine.low %v629, %v637
      %v2242 = vcombine.high %v629, %v637
      %v2244 = vunpack.c.l.s4 1983009808
      %v2245 = vunpack.c.0.s8 %v2244
      %v2246 = vlaneseq
      %v2247 = vshrl.u32 %v2246, 7
      %v2248 = vsub.s32 %v2245, %v2247
      %v2249 = vrot.slane %v2241, %v2248
      %v2251 = vunpack.c.l.s4 1983009808
      %v2252 = vunpack.c.0.s8 %v2251
      %v2253 = vlaneseq
      %v2254 = vshrl.u32 %v2253, 7
      %v2255 = vsub.s32 %v2252, %v2254
      %v2256 = vrot.slane %v2242, %v2255
      %v2257 = vcombine.low %v2201, %v2217
      %v2258 = vcombine.high %v2201, %v2217
      %v2260 = vunpack.c.l.s4 1934713408
      %v2261 = vunpack.c.0.s8 %v2260
      %v2262 = vlaneseq
      %v2263 = vshrl.u32 %v2262, 7
      %v2264 = vsub.s32 %v2261, %v2263
      %v2265 = vrot.slane %v2257, %v2264
      %v2267 = vunpack.c.l.s4 1934713408
      %v2268 = vunpack.c.0.s8 %v2267
      %v2269 = vlaneseq
      %v2270 = vshrl.u32 %v2269, 7
      %v2271 = vsub.s32 %v2268, %v2270
      %v2272 = vrot.slane %v2258, %v2271
      %v2273 = vcombine.low %v2208, %v2224
      %v2274 = vcombine.high %v2208, %v2224
      %v2276 = vunpack.c.l.s4 1934713408
      %v2277 = vunpack.c.0.s8 %v2276
      %v2278 = vlaneseq
      %v2279 = vshrl.u32 %v2278, 7
      %v2280 = vsub.s32 %v2277, %v2279
      %v2281 = vrot.slane %v2273, %v2280
      %v2283 = vunpack.c.l.s4 1934713408
      %v2284 = vunpack.c.0.s8 %v2283
      %v2285 = vlaneseq
      %v2286 = vshrl.u32 %v2285, 7
      %v2287 = vsub.s32 %v2284, %v2286
      %v2288 = vrot.slane %v2274, %v2287
      %v2289 = vcombine.low %v2233, %v2249
      %v2290 = vcombine.high %v2233, %v2249
      %v2292 = vunpack.c.l.s4 1934713408
      %v2293 = vunpack.c.0.s8 %v2292
      %v2294 = vlaneseq
      %v2295 = vshrl.u32 %v2294, 7
      %v2296 = vsub.s32 %v2293, %v2295
      %v2297 = vrot.slane %v2289, %v2296
      %v2299 = vunpack.c.l.s4 1934713408
      %v2300 = vunpack.c.0.s8 %v2299
      %v2301 = vlaneseq
      %v2302 = vshrl.u32 %v2301, 7
      %v2303 = vsub.s32 %v2300, %v2302
      %v2304 = vrot.slane %v2290, %v2303
      %v2305 = vcombine.low %v2240, %v2256
      %v2306 = vcombine.high %v2240, %v2256
      %v2308 = vunpack.c.l.s4 1934713408
      %v2309 = vunpack.c.0.s8 %v2308
      %v2310 = vlaneseq
      %v2311 = vshrl.u32 %v2310, 7
      %v2312 = vsub.s32 %v2309, %v2311
      %v2313 = vrot.slane %v2305, %v2312
      %v2315 = vunpack.c.l.s4 1934713408
      %v2316 = vunpack.c.0.s8 %v2315
      %v2317 = vlaneseq
      %v2318 = vshrl.u32 %v2317, 7
      %v2319 = vsub.s32 %v2316, %v2318
      %v2320 = vrot.slane %v2306, %v2319
      %v2321 = vcombine.low %v2265, %v2297
      %v2322 = vcombine.high %v2265, %v2297
      %v2323 = vcombine.low %v2272, %v2304
      %v2324 = vcombine.high %v2272, %v2304
      %v2325 = vcombine.low %v2281, %v2313
      %v2326 = vcombine.high %v2281, %v2313
      %v2327 = vcombine.low %v2288, %v2320
      %v2328 = vcombine.high %v2288, %v2320
      %v2329 = vcombine.low %v641, %v649
      %v2330 = vcombine.high %v641, %v649
      %v2332 = vunpack.c.l.s4 1983009808
      %v2333 = vunpack.c.0.s8 %v2332
      %v2334 = vlaneseq
      %v2335 = vshrl.u32 %v2334, 7
      %v2336 = vsub.s32 %v2333, %v2335
      %v2337 = vrot.slane %v2329, %v2336
      %v2339 = vunpack.c.l.s4 1983009808
      %v2340 = vunpack.c.0.s8 %v2339
      %v2341 = vlaneseq
      %v2342 = vshrl.u32 %v2341, 7
      %v2343 = vsub.s32 %v2340, %v2342
      %v2344 = vrot.slane %v2330, %v2343
      %v2345 = vcombine.low %v645, %v653
      %v2346 = vcombine.high %v645, %v653
      %v2348 = vunpack.c.l.s4 1983009808
      %v2349 = vunpack.c.0.s8 %v2348
      %v2350 = vlaneseq
      %v2351 = vshrl.u32 %v2350, 7
      %v2352 = vsub.s32 %v2349, %v2351
      %v2353 = vrot.slane %v2345, %v2352
      %v2355 = vunpack.c.l.s4 1983009808
      %v2356 = vunpack.c.0.s8 %v2355
      %v2357 = vlaneseq
      %v2358 = vshrl.u32 %v2357, 7
      %v2359 = vsub.s32 %v2356, %v2358
      %v2360 = vrot.slane %v2346, %v2359
      %v2361 = vcombine.low %v657, %v665
      %v2362 = vcombine.high %v657, %v665
      %v2364 = vunpack.c.l.s4 1983009808
      %v2365 = vunpack.c.0.s8 %v2364
      %v2366 = vlaneseq
      %v2367 = vshrl.u32 %v2366, 7
      %v2368 = vsub.s32 %v2365, %v2367
      %v2369 = vrot.slane %v2361, %v2368
      %v2371 = vunpack.c.l.s4 1983009808
      %v2372 = vunpack.c.0.s8 %v2371
      %v2373 = vlaneseq
      %v2374 = vshrl.u32 %v2373, 7
      %v2375 = vsub.s32 %v2372, %v2374
      %v2376 = vrot.slane %v2362, %v2375
      %v2377 = vcombine.low %v661, %v669
      %v2378 = vcombine.high %v661, %v669
      %v2380 = vunpack.c.l.s4 1983009808
      %v2381 = vunpack.c.0.s8 %v2380
      %v2382 = vlaneseq
      %v2383 = vshrl.u32 %v2382, 7
      %v2384 = vsub.s32 %v2381, %v2383
      %v2385 = vrot.slane %v2377, %v2384
      %v2387 = vunpack.c.l.s4 1983009808
      %v2388 = vunpack.c.0.s8 %v2387
      %v2389 = vlaneseq
      %v2390 = vshrl.u32 %v2389, 7
      %v2391 = vsub.s32 %v2388, %v2390
      %v2392 = vrot.slane %v2378, %v2391
      %v2393 = vcombine.low %v2337, %v2353
      %v2394 = vcombine.high %v2337, %v2353
      %v2396 = vunpack.c.l.s4 1934713408
      %v2397 = vunpack.c.0.s8 %v2396
      %v2398 = vlaneseq
      %v2399 = vshrl.u32 %v2398, 7
      %v2400 = vsub.s32 %v2397, %v2399
      %v2401 = vrot.slane %v2393, %v2400
      %v2403 = vunpack.c.l.s4 1934713408
      %v2404 = vunpack.c.0.s8 %v2403
      %v2405 = vlaneseq
      %v2406 = vshrl.u32 %v2405, 7
      %v2407 = vsub.s32 %v2404, %v2406
      %v2408 = vrot.slane %v2394, %v2407
      %v2409 = vcombine.low %v2344, %v2360
      %v2410 = vcombine.high %v2344, %v2360
      %v2412 = vunpack.c.l.s4 1934713408
      %v2413 = vunpack.c.0.s8 %v2412
      %v2414 = vlaneseq
      %v2415 = vshrl.u32 %v2414, 7
      %v2416 = vsub.s32 %v2413, %v2415
      %v2417 = vrot.slane %v2409, %v2416
      %v2419 = vunpack.c.l.s4 1934713408
      %v2420 = vunpack.c.0.s8 %v2419
      %v2421 = vlaneseq
      %v2422 = vshrl.u32 %v2421, 7
      %v2423 = vsub.s32 %v2420, %v2422
      %v2424 = vrot.slane %v2410, %v2423
      %v2425 = vcombine.low %v2369, %v2385
      %v2426 = vcombine.high %v2369, %v2385
      %v2428 = vunpack.c.l.s4 1934713408
      %v2429 = vunpack.c.0.s8 %v2428
      %v2430 = vlaneseq
      %v2431 = vshrl.u32 %v2430, 7
      %v2432 = vsub.s32 %v2429, %v2431
      %v2433 = vrot.slane %v2425, %v2432
      %v2435 = vunpack.c.l.s4 1934713408
      %v2436 = vunpack.c.0.s8 %v2435
      %v2437 = vlaneseq
      %v2438 = vshrl.u32 %v2437, 7
      %v2439 = vsub.s32 %v2436, %v2438
      %v2440 = vrot.slane %v2426, %v2439
      %v2441 = vcombine.low %v2376, %v2392
      %v2442 = vcombine.high %v2376, %v2392
      %v2444 = vunpack.c.l.s4 1934713408
      %v2445 = vunpack.c.0.s8 %v2444
      %v2446 = vlaneseq
      %v2447 = vshrl.u32 %v2446, 7
      %v2448 = vsub.s32 %v2445, %v2447
      %v2449 = vrot.slane %v2441, %v2448
      %v2451 = vunpack.c.l.s4 1934713408
      %v2452 = vunpack.c.0.s8 %v2451
      %v2453 = vlaneseq
      %v2454 = vshrl.u32 %v2453, 7
      %v2455 = vsub.s32 %v2452, %v2454
      %v2456 = vrot.slane %v2442, %v2455
      %v2457 = vcombine.low %v2401, %v2433
      %v2458 = vcombine.high %v2401, %v2433
      %v2459 = vcombine.low %v2408, %v2440
      %v2460 = vcombine.high %v2408, %v2440
      %v2461 = vcombine.low %v2417, %v2449
      %v2462 = vcombine.high %v2417, %v2449
      %v2463 = vcombine.low %v2424, %v2456
      %v2464 = vcombine.high %v2424, %v2456
      %v2465 = vcombine.low %v705, %v713
      %v2466 = vcombine.high %v705, %v713
      %v2468 = vunpack.c.l.s4 1983009808
      %v2469 = vunpack.c.0.s8 %v2468
      %v2470 = vlaneseq
      %v2471 = vshrl.u32 %v2470, 7
      %v2472 = vsub.s32 %v2469, %v2471
      %v2473 = vrot.slane %v2465, %v2472
      %v2475 = vunpack.c.l.s4 1983009808
      %v2476 = vunpack.c.0.s8 %v2475
      %v2477 = vlaneseq
      %v2478 = vshrl.u32 %v2477, 7
      %v2479 = vsub.s32 %v2476, %v2478
      %v2480 = vrot.slane %v2466, %v2479
      %v2481 = vcombine.low %v709, %v717
      %v2482 = vcombine.high %v709, %v717
      %v2484 = vunpack.c.l.s4 1983009808
      %v2485 = vunpack.c.0.s8 %v2484
      %v2486 = vlaneseq
      %v2487 = vshrl.u32 %v2486, 7
      %v2488 = vsub.s32 %v2485, %v2487
      %v2489 = vrot.slane %v2481, %v2488
      %v2491 = vunpack.c.l.s4 1983009808
      %v2492 = vunpack.c.0.s8 %v2491
      %v2493 = vlaneseq
      %v2494 = vshrl.u32 %v2493, 7
      %v2495 = vsub.s32 %v2492, %v2494
      %v2496 = vrot.slane %v2482, %v2495
      %v2497 = vcombine.low %v721, %v729
      %v2498 = vcombine.high %v721, %v729
      %v2500 = vunpack.c.l.s4 1983009808
      %v2501 = vunpack.c.0.s8 %v2500
      %v2502 = vlaneseq
      %v2503 = vshrl.u32 %v2502, 7
      %v2504 = vsub.s32 %v2501, %v2503
      %v2505 = vrot.slane %v2497, %v2504
      %v2507 = vunpack.c.l.s4 1983009808
      %v2508 = vunpack.c.0.s8 %v2507
      %v2509 = vlaneseq
      %v2510 = vshrl.u32 %v2509, 7
      %v2511 = vsub.s32 %v2508, %v2510
      %v2512 = vrot.slane %v2498, %v2511
      %v2513 = vcombine.low %v725, %v733
      %v2514 = vcombine.high %v725, %v733
      %v2516 = vunpack.c.l.s4 1983009808
      %v2517 = vunpack.c.0.s8 %v2516
      %v2518 = vlaneseq
      %v2519 = vshrl.u32 %v2518, 7
      %v2520 = vsub.s32 %v2517, %v2519
      %v2521 = vrot.slane %v2513, %v2520
      %v2523 = vunpack.c.l.s4 1983009808
      %v2524 = vunpack.c.0.s8 %v2523
      %v2525 = vlaneseq
      %v2526 = vshrl.u32 %v2525, 7
      %v2527 = vsub.s32 %v2524, %v2526
      %v2528 = vrot.slane %v2514, %v2527
      %v2529 = vcombine.low %v2473, %v2489
      %v2530 = vcombine.high %v2473, %v2489
      %v2532 = vunpack.c.l.s4 1934713408
      %v2533 = vunpack.c.0.s8 %v2532
      %v2534 = vlaneseq
      %v2535 = vshrl.u32 %v2534, 7
      %v2536 = vsub.s32 %v2533, %v2535
      %v2537 = vrot.slane %v2529, %v2536
      %v2539 = vunpack.c.l.s4 1934713408
      %v2540 = vunpack.c.0.s8 %v2539
      %v2541 = vlaneseq
      %v2542 = vshrl.u32 %v2541, 7
      %v2543 = vsub.s32 %v2540, %v2542
      %v2544 = vrot.slane %v2530, %v2543
      %v2545 = vcombine.low %v2480, %v2496
      %v2546 = vcombine.high %v2480, %v2496
      %v2548 = vunpack.c.l.s4 1934713408
      %v2549 = vunpack.c.0.s8 %v2548
      %v2550 = vlaneseq
      %v2551 = vshrl.u32 %v2550, 7
      %v2552 = vsub.s32 %v2549, %v2551
      %v2553 = vrot.slane %v2545, %v2552
      %v2555 = vunpack.c.l.s4 1934713408
      %v2556 = vunpack.c.0.s8 %v2555
      %v2557 = vlaneseq
      %v2558 = vshrl.u32 %v2557, 7
      %v2559 = vsub.s32 %v2556, %v2558
      %v2560 = vrot.slane %v2546, %v2559
      %v2561 = vcombine.low %v2505, %v2521
      %v2562 = vcombine.high %v2505, %v2521
      %v2564 = vunpack.c.l.s4 1934713408
      %v2565 = vunpack.c.0.s8 %v2564
      %v2566 = vlaneseq
      %v2567 = vshrl.u32 %v2566, 7
      %v2568 = vsub.s32 %v2565, %v2567
      %v2569 = vrot.slane %v2561, %v2568
      %v2571 = vunpack.c.l.s4 1934713408
      %v2572 = vunpack.c.0.s8 %v2571
      %v2573 = vlaneseq
      %v2574 = vshrl.u32 %v2573, 7
      %v2575 = vsub.s32 %v2572, %v2574
      %v2576 = vrot.slane %v2562, %v2575
      %v2577 = vcombine.low %v2512, %v2528
      %v2578 = vcombine.high %v2512, %v2528
      %v2580 = vunpack.c.l.s4 1934713408
      %v2581 = vunpack.c.0.s8 %v2580
      %v2582 = vlaneseq
      %v2583 = vshrl.u32 %v2582, 7
      %v2584 = vsub.s32 %v2581, %v2583
      %v2585 = vrot.slane %v2577, %v2584
      %v2587 = vunpack.c.l.s4 1934713408
      %v2588 = vunpack.c.0.s8 %v2587
      %v2589 = vlaneseq
      %v2590 = vshrl.u32 %v2589, 7
      %v2591 = vsub.s32 %v2588, %v2590
      %v2592 = vrot.slane %v2578, %v2591
      %v2593 = vcombine.low %v2537, %v2569
      %v2594 = vcombine.high %v2537, %v2569
      %v2595 = vcombine.low %v2544, %v2576
      %v2596 = vcombine.high %v2544, %v2576
      %v2597 = vcombine.low %v2553, %v2585
      %v2598 = vcombine.high %v2553, %v2585
      %v2599 = vcombine.low %v2560, %v2592
      %v2600 = vcombine.high %v2560, %v2592
      %v2601 = vcombine.low %v737, %v745
      %v2602 = vcombine.high %v737, %v745
      %v2604 = vunpack.c.l.s4 1983009808
      %v2605 = vunpack.c.0.s8 %v2604
      %v2606 = vlaneseq
      %v2607 = vshrl.u32 %v2606, 7
      %v2608 = vsub.s32 %v2605, %v2607
      %v2609 = vrot.slane %v2601, %v2608
      %v2611 = vunpack.c.l.s4 1983009808
      %v2612 = vunpack.c.0.s8 %v2611
      %v2613 = vlaneseq
      %v2614 = vshrl.u32 %v2613, 7
      %v2615 = vsub.s32 %v2612, %v2614
      %v2616 = vrot.slane %v2602, %v2615
      %v2617 = vcombine.low %v741, %v749
      %v2618 = vcombine.high %v741, %v749
      %v2620 = vunpack.c.l.s4 1983009808
      %v2621 = vunpack.c.0.s8 %v2620
      %v2622 = vlaneseq
      %v2623 = vshrl.u32 %v2622, 7
      %v2624 = vsub.s32 %v2621, %v2623
      %v2625 = vrot.slane %v2617, %v2624
      %v2627 = vunpack.c.l.s4 1983009808
      %v2628 = vunpack.c.0.s8 %v2627
      %v2629 = vlaneseq
      %v2630 = vshrl.u32 %v2629, 7
      %v2631 = vsub.s32 %v2628, %v2630
      %v2632 = vrot.slane %v2618, %v2631
      %v2633 = vcombine.low %v753, %v761
      %v2634 = vcombine.high %v753, %v761
      %v2636 = vunpack.c.l.s4 1983009808
      %v2637 = vunpack.c.0.s8 %v2636
      %v2638 = vlaneseq
      %v2639 = vshrl.u32 %v2638, 7
      %v2640 = vsub.s32 %v2637, %v2639
      %v2641 = vrot.slane %v2633, %v2640
      %v2643 = vunpack.c.l.s4 1983009808
      %v2644 = vunpack.c.0.s8 %v2643
      %v2645 = vlaneseq
      %v2646 = vshrl.u32 %v2645, 7
      %v2647 = vsub.s32 %v2644, %v2646
      %v2648 = vrot.slane %v2634, %v2647
      %v2649 = vcombine.low %v757, %v765
      %v2650 = vcombine.high %v757, %v765
      %v2652 = vunpack.c.l.s4 1983009808
      %v2653 = vunpack.c.0.s8 %v2652
      %v2654 = vlaneseq
      %v2655 = vshrl.u32 %v2654, 7
      %v2656 = vsub.s32 %v2653, %v2655
      %v2657 = vrot.slane %v2649, %v2656
      %v2659 = vunpack.c.l.s4 1983009808
      %v2660 = vunpack.c.0.s8 %v2659
      %v2661 = vlaneseq
      %v2662 = vshrl.u32 %v2661, 7
      %v2663 = vsub.s32 %v2660, %v2662
      %v2664 = vrot.slane %v2650, %v2663
      %v2665 = vcombine.low %v2609, %v2625
      %v2666 = vcombine.high %v2609, %v2625
      %v2668 = vunpack.c.l.s4 1934713408
      %v2669 = vunpack.c.0.s8 %v2668
      %v2670 = vlaneseq
      %v2671 = vshrl.u32 %v2670, 7
      %v2672 = vsub.s32 %v2669, %v2671
      %v2673 = vrot.slane %v2665, %v2672
      %v2675 = vunpack.c.l.s4 1934713408
      %v2676 = vunpack.c.0.s8 %v2675
      %v2677 = vlaneseq
      %v2678 = vshrl.u32 %v2677, 7
      %v2679 = vsub.s32 %v2676, %v2678
      %v2680 = vrot.slane %v2666, %v2679
      %v2681 = vcombine.low %v2616, %v2632
      %v2682 = vcombine.high %v2616, %v2632
      %v2684 = vunpack.c.l.s4 1934713408
      %v2685 = vunpack.c.0.s8 %v2684
      %v2686 = vlaneseq
      %v2687 = vshrl.u32 %v2686, 7
      %v2688 = vsub.s32 %v2685, %v2687
      %v2689 = vrot.slane %v2681, %v2688
      %v2691 = vunpack.c.l.s4 1934713408
      %v2692 = vunpack.c.0.s8 %v2691
      %v2693 = vlaneseq
      %v2694 = vshrl.u32 %v2693, 7
      %v2695 = vsub.s32 %v2692, %v2694
      %v2696 = vrot.slane %v2682, %v2695
      %v2697 = vcombine.low %v2641, %v2657
      %v2698 = vcombine.high %v2641, %v2657
      %v2700 = vunpack.c.l.s4 1934713408
      %v2701 = vunpack.c.0.s8 %v2700
      %v2702 = vlaneseq
      %v2703 = vshrl.u32 %v2702, 7
      %v2704 = vsub.s32 %v2701, %v2703
      %v2705 = vrot.slane %v2697, %v2704
      %v2707 = vunpack.c.l.s4 1934713408
      %v2708 = vunpack.c.0.s8 %v2707
      %v2709 = vlaneseq
      %v2710 = vshrl.u32 %v2709, 7
      %v2711 = vsub.s32 %v2708, %v2710
      %v2712 = vrot.slane %v2698, %v2711
      %v2713 = vcombine.low %v2648, %v2664
      %v2714 = vcombine.high %v2648, %v2664
      %v2716 = vunpack.c.l.s4 1934713408
      %v2717 = vunpack.c.0.s8 %v2716
      %v2718 = vlaneseq
      %v2719 = vshrl.u32 %v2718, 7
      %v2720 = vsub.s32 %v2717, %v2719
      %v2721 = vrot.slane %v2713, %v2720
      %v2723 = vunpack.c.l.s4 1934713408
      %v2724 = vunpack.c.0.s8 %v2723
      %v2725 = vlaneseq
      %v2726 = vshrl.u32 %v2725, 7
      %v2727 = vsub.s32 %v2724, %v2726
      %v2728 = vrot.slane %v2714, %v2727
      %v2729 = vcombine.low %v2673, %v2705
      %v2730 = vcombine.high %v2673, %v2705
      %v2731 = vcombine.low %v2680, %v2712
      %v2732 = vcombine.high %v2680, %v2712
      %v2733 = vcombine.low %v2689, %v2721
      %v2734 = vcombine.high %v2689, %v2721
      %v2735 = vcombine.low %v2696, %v2728
      %v2736 = vcombine.high %v2696, %v2728
      %v2737 = vcombine.low %v803, %v813
      %v2738 = vcombine.high %v803, %v813
      %v2740 = vunpack.c.l.s4 1983009808
      %v2741 = vunpack.c.0.s8 %v2740
      %v2742 = vlaneseq
      %v2743 = vshrl.u32 %v2742, 7
      %v2744 = vsub.s32 %v2741, %v2743
      %v2745 = vrot.slane %v2737, %v2744
      %v2747 = vunpack.c.l.s4 1983009808
      %v2748 = vunpack.c.0.s8 %v2747
      %v2749 = vlaneseq
      %v2750 = vshrl.u32 %v2749, 7
      %v2751 = vsub.s32 %v2748, %v2750
      %v2752 = vrot.slane %v2738, %v2751
      %v2753 = vcombine.low %v808, %v818
      %v2754 = vcombine.high %v808, %v818
      %v2756 = vunpack.c.l.s4 1983009808
      %v2757 = vunpack.c.0.s8 %v2756
      %v2758 = vlaneseq
      %v2759 = vshrl.u32 %v2758, 7
      %v2760 = vsub.s32 %v2757, %v2759
      %v2761 = vrot.slane %v2753, %v2760
      %v2763 = vunpack.c.l.s4 1983009808
      %v2764 = vunpack.c.0.s8 %v2763
      %v2765 = vlaneseq
      %v2766 = vshrl.u32 %v2765, 7
      %v2767 = vsub.s32 %v2764, %v2766
      %v2768 = vrot.slane %v2754, %v2767
      %v2769 = vcombine.low %v823, %v833
      %v2770 = vcombine.high %v823, %v833
      %v2772 = vunpack.c.l.s4 1983009808
      %v2773 = vunpack.c.0.s8 %v2772
      %v2774 = vlaneseq
      %v2775 = vshrl.u32 %v2774, 7
      %v2776 = vsub.s32 %v2773, %v2775
      %v2777 = vrot.slane %v2769, %v2776
      %v2779 = vunpack.c.l.s4 1983009808
      %v2780 = vunpack.c.0.s8 %v2779
      %v2781 = vlaneseq
      %v2782 = vshrl.u32 %v2781, 7
      %v2783 = vsub.s32 %v2780, %v2782
      %v2784 = vrot.slane %v2770, %v2783
      %v2785 = vcombine.low %v828, %v838
      %v2786 = vcombine.high %v828, %v838
      %v2788 = vunpack.c.l.s4 1983009808
      %v2789 = vunpack.c.0.s8 %v2788
      %v2790 = vlaneseq
      %v2791 = vshrl.u32 %v2790, 7
      %v2792 = vsub.s32 %v2789, %v2791
      %v2793 = vrot.slane %v2785, %v2792
      %v2795 = vunpack.c.l.s4 1983009808
      %v2796 = vunpack.c.0.s8 %v2795
      %v2797 = vlaneseq
      %v2798 = vshrl.u32 %v2797, 7
      %v2799 = vsub.s32 %v2796, %v2798
      %v2800 = vrot.slane %v2786, %v2799
      %v2801 = vcombine.low %v2745, %v2761
      %v2802 = vcombine.high %v2745, %v2761
      %v2804 = vunpack.c.l.s4 1934713408
      %v2805 = vunpack.c.0.s8 %v2804
      %v2806 = vlaneseq
      %v2807 = vshrl.u32 %v2806, 7
      %v2808 = vsub.s32 %v2805, %v2807
      %v2809 = vrot.slane %v2801, %v2808
      %v2811 = vunpack.c.l.s4 1934713408
      %v2812 = vunpack.c.0.s8 %v2811
      %v2813 = vlaneseq
      %v2814 = vshrl.u32 %v2813, 7
      %v2815 = vsub.s32 %v2812, %v2814
      %v2816 = vrot.slane %v2802, %v2815
      %v2817 = vcombine.low %v2752, %v2768
      %v2818 = vcombine.high %v2752, %v2768
      %v2820 = vunpack.c.l.s4 1934713408
      %v2821 = vunpack.c.0.s8 %v2820
      %v2822 = vlaneseq
      %v2823 = vshrl.u32 %v2822, 7
      %v2824 = vsub.s32 %v2821, %v2823
      %v2825 = vrot.slane %v2817, %v2824
      %v2827 = vunpack.c.l.s4 1934713408
      %v2828 = vunpack.c.0.s8 %v2827
      %v2829 = vlaneseq
      %v2830 = vshrl.u32 %v2829, 7
      %v2831 = vsub.s32 %v2828, %v2830
      %v2832 = vrot.slane %v2818, %v2831
      %v2833 = vcombine.low %v2777, %v2793
      %v2834 = vcombine.high %v2777, %v2793
      %v2836 = vunpack.c.l.s4 1934713408
      %v2837 = vunpack.c.0.s8 %v2836
      %v2838 = vlaneseq
      %v2839 = vshrl.u32 %v2838, 7
      %v2840 = vsub.s32 %v2837, %v2839
      %v2841 = vrot.slane %v2833, %v2840
      %v2843 = vunpack.c.l.s4 1934713408
      %v2844 = vunpack.c.0.s8 %v2843
      %v2845 = vlaneseq
      %v2846 = vshrl.u32 %v2845, 7
      %v2847 = vsub.s32 %v2844, %v2846
      %v2848 = vrot.slane %v2834, %v2847
      %v2849 = vcombine.low %v2784, %v2800
      %v2850 = vcombine.high %v2784, %v2800
      %v2852 = vunpack.c.l.s4 1934713408
      %v2853 = vunpack.c.0.s8 %v2852
      %v2854 = vlaneseq
      %v2855 = vshrl.u32 %v2854, 7
      %v2856 = vsub.s32 %v2853, %v2855
      %v2857 = vrot.slane %v2849, %v2856
      %v2859 = vunpack.c.l.s4 1934713408
      %v2860 = vunpack.c.0.s8 %v2859
      %v2861 = vlaneseq
      %v2862 = vshrl.u32 %v2861, 7
      %v2863 = vsub.s32 %v2860, %v2862
      %v2864 = vrot.slane %v2850, %v2863
      %v2865 = vcombine.low %v2809, %v2841
      %v2866 = vcombine.high %v2809, %v2841
      %v2867 = vcombine.low %v2816, %v2848
      %v2868 = vcombine.high %v2816, %v2848
      %v2869 = vcombine.low %v2825, %v2857
      %v2870 = vcombine.high %v2825, %v2857
      %v2871 = vcombine.low %v2832, %v2864
      %v2872 = vcombine.high %v2832, %v2864
      %v2873 = vcombine.low %v843, %v853
      %v2874 = vcombine.high %v843, %v853
      %v2876 = vunpack.c.l.s4 1983009808
      %v2877 = vunpack.c.0.s8 %v2876
      %v2878 = vlaneseq
      %v2879 = vshrl.u32 %v2878, 7
      %v2880 = vsub.s32 %v2877, %v2879
      %v2881 = vrot.slane %v2873, %v2880
      %v2883 = vunpack.c.l.s4 1983009808
      %v2884 = vunpack.c.0.s8 %v2883
      %v2885 = vlaneseq
      %v2886 = vshrl.u32 %v2885, 7
      %v2887 = vsub.s32 %v2884, %v2886
      %v2888 = vrot.slane %v2874, %v2887
      %v2889 = vcombine.low %v848, %v858
      %v2890 = vcombine.high %v848, %v858
      %v2892 = vunpack.c.l.s4 1983009808
      %v2893 = vunpack.c.0.s8 %v2892
      %v2894 = vlaneseq
      %v2895 = vshrl.u32 %v2894, 7
      %v2896 = vsub.s32 %v2893, %v2895
      %v2897 = vrot.slane %v2889, %v2896
      %v2899 = vunpack.c.l.s4 1983009808
      %v2900 = vunpack.c.0.s8 %v2899
      %v2901 = vlaneseq
      %v2902 = vshrl.u32 %v2901, 7
      %v2903 = vsub.s32 %v2900, %v2902
      %v2904 = vrot.slane %v2890, %v2903
      %v2905 = vcombine.low %v863, %v873
      %v2906 = vcombine.high %v863, %v873
      %v2908 = vunpack.c.l.s4 1983009808
      %v2909 = vunpack.c.0.s8 %v2908
      %v2910 = vlaneseq
      %v2911 = vshrl.u32 %v2910, 7
      %v2912 = vsub.s32 %v2909, %v2911
      %v2913 = vrot.slane %v2905, %v2912
      %v2915 = vunpack.c.l.s4 1983009808
      %v2916 = vunpack.c.0.s8 %v2915
      %v2917 = vlaneseq
      %v2918 = vshrl.u32 %v2917, 7
      %v2919 = vsub.s32 %v2916, %v2918
      %v2920 = vrot.slane %v2906, %v2919
      %v2921 = vcombine.low %v868, %v878
      %v2922 = vcombine.high %v868, %v878
      %v2924 = vunpack.c.l.s4 1983009808
      %v2925 = vunpack.c.0.s8 %v2924
      %v2926 = vlaneseq
      %v2927 = vshrl.u32 %v2926, 7
      %v2928 = vsub.s32 %v2925, %v2927
      %v2929 = vrot.slane %v2921, %v2928
      %v2931 = vunpack.c.l.s4 1983009808
      %v2932 = vunpack.c.0.s8 %v2931
      %v2933 = vlaneseq
      %v2934 = vshrl.u32 %v2933, 7
      %v2935 = vsub.s32 %v2932, %v2934
      %v2936 = vrot.slane %v2922, %v2935
      %v2937 = vcombine.low %v2881, %v2897
      %v2938 = vcombine.high %v2881, %v2897
      %v2940 = vunpack.c.l.s4 1934713408
      %v2941 = vunpack.c.0.s8 %v2940
      %v2942 = vlaneseq
      %v2943 = vshrl.u32 %v2942, 7
      %v2944 = vsub.s32 %v2941, %v2943
      %v2945 = vrot.slane %v2937, %v2944
      %v2947 = vunpack.c.l.s4 1934713408
      %v2948 = vunpack.c.0.s8 %v2947
      %v2949 = vlaneseq
      %v2950 = vshrl.u32 %v2949, 7
      %v2951 = vsub.s32 %v2948, %v2950
      %v2952 = vrot.slane %v2938, %v2951
      %v2953 = vcombine.low %v2888, %v2904
      %v2954 = vcombine.high %v2888, %v2904
      %v2956 = vunpack.c.l.s4 1934713408
      %v2957 = vunpack.c.0.s8 %v2956
      %v2958 = vlaneseq
      %v2959 = vshrl.u32 %v2958, 7
      %v2960 = vsub.s32 %v2957, %v2959
      %v2961 = vrot.slane %v2953, %v2960
      %v2963 = vunpack.c.l.s4 1934713408
      %v2964 = vunpack.c.0.s8 %v2963
      %v2965 = vlaneseq
      %v2966 = vshrl.u32 %v2965, 7
      %v2967 = vsub.s32 %v2964, %v2966
      %v2968 = vrot.slane %v2954, %v2967
      %v2969 = vcombine.low %v2913, %v2929
      %v2970 = vcombine.high %v2913, %v2929
      %v2972 = vunpack.c.l.s4 1934713408
      %v2973 = vunpack.c.0.s8 %v2972
      %v2974 = vlaneseq
      %v2975 = vshrl.u32 %v2974, 7
      %v2976 = vsub.s32 %v2973, %v2975
      %v2977 = vrot.slane %v2969, %v2976
      %v2979 = vunpack.c.l.s4 1934713408
      %v2980 = vunpack.c.0.s8 %v2979
      %v2981 = vlaneseq
      %v2982 = vshrl.u32 %v2981, 7
      %v2983 = vsub.s32 %v2980, %v2982
      %v2984 = vrot.slane %v2970, %v2983
      %v2985 = vcombine.low %v2920, %v2936
      %v2986 = vcombine.high %v2920, %v2936
      %v2988 = vunpack.c.l.s4 1934713408
      %v2989 = vunpack.c.0.s8 %v2988
      %v2990 = vlaneseq
      %v2991 = vshrl.u32 %v2990, 7
      %v2992 = vsub.s32 %v2989, %v2991
      %v2993 = vrot.slane %v2985, %v2992
      %v2995 = vunpack.c.l.s4 1934713408
      %v2996 = vunpack.c.0.s8 %v2995
      %v2997 = vlaneseq
      %v2998 = vshrl.u32 %v2997, 7
      %v2999 = vsub.s32 %v2996, %v2998
      %v3000 = vrot.slane %v2986, %v2999
      %v3001 = vcombine.low %v2945, %v2977
      %v3002 = vcombine.high %v2945, %v2977
      %v3003 = vcombine.low %v2952, %v2984
      %v3004 = vcombine.high %v2952, %v2984
      %v3005 = vcombine.low %v2961, %v2993
      %v3006 = vcombine.high %v2961, %v2993
      %v3007 = vcombine.low %v2968, %v3000
      %v3008 = vcombine.high %v2968, %v3000
      %v3009 = vcombine.low %v914, %v922
      %v3010 = vcombine.high %v914, %v922
      %v3012 = vunpack.c.l.s4 1983009808
      %v3013 = vunpack.c.0.s8 %v3012
      %v3014 = vlaneseq
      %v3015 = vshrl.u32 %v3014, 7
      %v3016 = vsub.s32 %v3013, %v3015
      %v3017 = vrot.slane %v3009, %v3016
      %v3019 = vunpack.c.l.s4 1983009808
      %v3020 = vunpack.c.0.s8 %v3019
      %v3021 = vlaneseq
      %v3022 = vshrl.u32 %v3021, 7
      %v3023 = vsub.s32 %v3020, %v3022
      %v3024 = vrot.slane %v3010, %v3023
      %v3025 = vcombine.low %v918, %v926
      %v3026 = vcombine.high %v918, %v926
      %v3028 = vunpack.c.l.s4 1983009808
      %v3029 = vunpack.c.0.s8 %v3028
      %v3030 = vlaneseq
      %v3031 = vshrl.u32 %v3030, 7
      %v3032 = vsub.s32 %v3029, %v3031
      %v3033 = vrot.slane %v3025, %v3032
      %v3035 = vunpack.c.l.s4 1983009808
      %v3036 = vunpack.c.0.s8 %v3035
      %v3037 = vlaneseq
      %v3038 = vshrl.u32 %v3037, 7
      %v3039 = vsub.s32 %v3036, %v3038
      %v3040 = vrot.slane %v3026, %v3039
      %v3041 = vcombine.low %v930, %v938
      %v3042 = vcombine.high %v930, %v938
      %v3044 = vunpack.c.l.s4 1983009808
      %v3045 = vunpack.c.0.s8 %v3044
      %v3046 = vlaneseq
      %v3047 = vshrl.u32 %v3046, 7
      %v3048 = vsub.s32 %v3045, %v3047
      %v3049 = vrot.slane %v3041, %v3048
      %v3051 = vunpack.c.l.s4 1983009808
      %v3052 = vunpack.c.0.s8 %v3051
      %v3053 = vlaneseq
      %v3054 = vshrl.u32 %v3053, 7
      %v3055 = vsub.s32 %v3052, %v3054
      %v3056 = vrot.slane %v3042, %v3055
      %v3057 = vcombine.low %v934, %v942
      %v3058 = vcombine.high %v934, %v942
      %v3060 = vunpack.c.l.s4 1983009808
      %v3061 = vunpack.c.0.s8 %v3060
      %v3062 = vlaneseq
      %v3063 = vshrl.u32 %v3062, 7
      %v3064 = vsub.s32 %v3061, %v3063
      %v3065 = vrot.slane %v3057, %v3064
      %v3067 = vunpack.c.l.s4 1983009808
      %v3068 = vunpack.c.0.s8 %v3067
      %v3069 = vlaneseq
      %v3070 = vshrl.u32 %v3069, 7
      %v3071 = vsub.s32 %v3068, %v3070
      %v3072 = vrot.slane %v3058, %v3071
      %v3073 = vcombine.low %v3017, %v3033
      %v3074 = vcombine.high %v3017, %v3033
      %v3076 = vunpack.c.l.s4 1934713408
      %v3077 = vunpack.c.0.s8 %v3076
      %v3078 = vlaneseq
      %v3079 = vshrl.u32 %v3078, 7
      %v3080 = vsub.s32 %v3077, %v3079
      %v3081 = vrot.slane %v3073, %v3080
      %v3083 = vunpack.c.l.s4 1934713408
      %v3084 = vunpack.c.0.s8 %v3083
      %v3085 = vlaneseq
      %v3086 = vshrl.u32 %v3085, 7
      %v3087 = vsub.s32 %v3084, %v3086
      %v3088 = vrot.slane %v3074, %v3087
      %v3089 = vcombine.low %v3024, %v3040
      %v3090 = vcombine.high %v3024, %v3040
      %v3092 = vunpack.c.l.s4 1934713408
      %v3093 = vunpack.c.0.s8 %v3092
      %v3094 = vlaneseq
      %v3095 = vshrl.u32 %v3094, 7
      %v3096 = vsub.s32 %v3093, %v3095
      %v3097 = vrot.slane %v3089, %v3096
      %v3099 = vunpack.c.l.s4 1934713408
      %v3100 = vunpack.c.0.s8 %v3099
      %v3101 = vlaneseq
      %v3102 = vshrl.u32 %v3101, 7
      %v3103 = vsub.s32 %v3100, %v3102
      %v3104 = vrot.slane %v3090, %v3103
      %v3105 = vcombine.low %v3049, %v3065
      %v3106 = vcombine.high %v3049, %v3065
      %v3108 = vunpack.c.l.s4 1934713408
      %v3109 = vunpack.c.0.s8 %v3108
      %v3110 = vlaneseq
      %v3111 = vshrl.u32 %v3110, 7
      %v3112 = vsub.s32 %v3109, %v3111
      %v3113 = vrot.slane %v3105, %v3112
      %v3115 = vunpack.c.l.s4 1934713408
      %v3116 = vunpack.c.0.s8 %v3115
      %v3117 = vlaneseq
      %v3118 = vshrl.u32 %v3117, 7
      %v3119 = vsub.s32 %v3116, %v3118
      %v3120 = vrot.slane %v3106, %v3119
      %v3121 = vcombine.low %v3056, %v3072
      %v3122 = vcombine.high %v3056, %v3072
      %v3124 = vunpack.c.l.s4 1934713408
      %v3125 = vunpack.c.0.s8 %v3124
      %v3126 = vlaneseq
      %v3127 = vshrl.u32 %v3126, 7
      %v3128 = vsub.s32 %v3125, %v3127
      %v3129 = vrot.slane %v3121, %v3128
      %v3131 = vunpack.c.l.s4 1934713408
      %v3132 = vunpack.c.0.s8 %v3131
      %v3133 = vlaneseq
      %v3134 = vshrl.u32 %v3133, 7
      %v3135 = vsub.s32 %v3132, %v3134
      %v3136 = vrot.slane %v3122, %v3135
      %v3137 = vcombine.low %v3081, %v3113
      %v3138 = vcombine.high %v3081, %v3113
      %v3139 = vcombine.low %v3088, %v3120
      %v3140 = vcombine.high %v3088, %v3120
      %v3141 = vcombine.low %v3097, %v3129
      %v3142 = vcombine.high %v3097, %v3129
      %v3143 = vcombine.low %v3104, %v3136
      %v3144 = vcombine.high %v3104, %v3136
      %v3145 = vcombine.low %v946, %v954
      %v3146 = vcombine.high %v946, %v954
      %v3148 = vunpack.c.l.s4 1983009808
      %v3149 = vunpack.c.0.s8 %v3148
      %v3150 = vlaneseq
      %v3151 = vshrl.u32 %v3150, 7
      %v3152 = vsub.s32 %v3149, %v3151
      %v3153 = vrot.slane %v3145, %v3152
      %v3155 = vunpack.c.l.s4 1983009808
      %v3156 = vunpack.c.0.s8 %v3155
      %v3157 = vlaneseq
      %v3158 = vshrl.u32 %v3157, 7
      %v3159 = vsub.s32 %v3156, %v3158
      %v3160 = vrot.slane %v3146, %v3159
      %v3161 = vcombine.low %v950, %v958
      %v3162 = vcombine.high %v950, %v958
      %v3164 = vunpack.c.l.s4 1983009808
      %v3165 = vunpack.c.0.s8 %v3164
      %v3166 = vlaneseq
      %v3167 = vshrl.u32 %v3166, 7
      %v3168 = vsub.s32 %v3165, %v3167
      %v3169 = vrot.slane %v3161, %v3168
      %v3171 = vunpack.c.l.s4 1983009808
      %v3172 = vunpack.c.0.s8 %v3171
      %v3173 = vlaneseq
      %v3174 = vshrl.u32 %v3173, 7
      %v3175 = vsub.s32 %v3172, %v3174
      %v3176 = vrot.slane %v3162, %v3175
      %v3177 = vcombine.low %v962, %v970
      %v3178 = vcombine.high %v962, %v970
      %v3180 = vunpack.c.l.s4 1983009808
      %v3181 = vunpack.c.0.s8 %v3180
      %v3182 = vlaneseq
      %v3183 = vshrl.u32 %v3182, 7
      %v3184 = vsub.s32 %v3181, %v3183
      %v3185 = vrot.slane %v3177, %v3184
      %v3187 = vunpack.c.l.s4 1983009808
      %v3188 = vunpack.c.0.s8 %v3187
      %v3189 = vlaneseq
      %v3190 = vshrl.u32 %v3189, 7
      %v3191 = vsub.s32 %v3188, %v3190
      %v3192 = vrot.slane %v3178, %v3191
      %v3193 = vcombine.low %v966, %v974
      %v3194 = vcombine.high %v966, %v974
      %v3196 = vunpack.c.l.s4 1983009808
      %v3197 = vunpack.c.0.s8 %v3196
      %v3198 = vlaneseq
      %v3199 = vshrl.u32 %v3198, 7
      %v3200 = vsub.s32 %v3197, %v3199
      %v3201 = vrot.slane %v3193, %v3200
      %v3203 = vunpack.c.l.s4 1983009808
      %v3204 = vunpack.c.0.s8 %v3203
      %v3205 = vlaneseq
      %v3206 = vshrl.u32 %v3205, 7
      %v3207 = vsub.s32 %v3204, %v3206
      %v3208 = vrot.slane %v3194, %v3207
      %v3209 = vcombine.low %v3153, %v3169
      %v3210 = vcombine.high %v3153, %v3169
      %v3212 = vunpack.c.l.s4 1934713408
      %v3213 = vunpack.c.0.s8 %v3212
      %v3214 = vlaneseq
      %v3215 = vshrl.u32 %v3214, 7
      %v3216 = vsub.s32 %v3213, %v3215
      %v3217 = vrot.slane %v3209, %v3216
      %v3219 = vunpack.c.l.s4 1934713408
      %v3220 = vunpack.c.0.s8 %v3219
      %v3221 = vlaneseq
      %v3222 = vshrl.u32 %v3221, 7
      %v3223 = vsub.s32 %v3220, %v3222
      %v3224 = vrot.slane %v3210, %v3223
      %v3225 = vcombine.low %v3160, %v3176
      %v3226 = vcombine.high %v3160, %v3176
      %v3228 = vunpack.c.l.s4 1934713408
      %v3229 = vunpack.c.0.s8 %v3228
      %v3230 = vlaneseq
      %v3231 = vshrl.u32 %v3230, 7
      %v3232 = vsub.s32 %v3229, %v3231
      %v3233 = vrot.slane %v3225, %v3232
      %v3235 = vunpack.c.l.s4 1934713408
      %v3236 = vunpack.c.0.s8 %v3235
      %v3237 = vlaneseq
      %v3238 = vshrl.u32 %v3237, 7
      %v3239 = vsub.s32 %v3236, %v3238
      %v3240 = vrot.slane %v3226, %v3239
      %v3241 = vcombine.low %v3185, %v3201
      %v3242 = vcombine.high %v3185, %v3201
      %v3244 = vunpack.c.l.s4 1934713408
      %v3245 = vunpack.c.0.s8 %v3244
      %v3246 = vlaneseq
      %v3247 = vshrl.u32 %v3246, 7
      %v3248 = vsub.s32 %v3245, %v3247
      %v3249 = vrot.slane %v3241, %v3248
      %v3251 = vunpack.c.l.s4 1934713408
      %v3252 = vunpack.c.0.s8 %v3251
      %v3253 = vlaneseq
      %v3254 = vshrl.u32 %v3253, 7
      %v3255 = vsub.s32 %v3252, %v3254
      %v3256 = vrot.slane %v3242, %v3255
      %v3257 = vcombine.low %v3192, %v3208
      %v3258 = vcombine.high %v3192, %v3208
      %v3260 = vunpack.c.l.s4 1934713408
      %v3261 = vunpack.c.0.s8 %v3260
      %v3262 = vlaneseq
      %v3263 = vshrl.u32 %v3262, 7
      %v3264 = vsub.s32 %v3261, %v3263
      %v3265 = vrot.slane %v3257, %v3264
      %v3267 = vunpack.c.l.s4 1934713408
      %v3268 = vunpack.c.0.s8 %v3267
      %v3269 = vlaneseq
      %v3270 = vshrl.u32 %v3269, 7
      %v3271 = vsub.s32 %v3268, %v3270
      %v3272 = vrot.slane %v3258, %v3271
      %v3273 = vcombine.low %v3217, %v3249
      %v3274 = vcombine.high %v3217, %v3249
      %v3275 = vcombine.low %v3224, %v3256
      %v3276 = vcombine.high %v3224, %v3256
      %v3277 = vcombine.low %v3233, %v3265
      %v3278 = vcombine.high %v3233, %v3265
      %v3279 = vcombine.low %v3240, %v3272
      %v3280 = vcombine.high %v3240, %v3272
      %v3281 = vcombine.low %v1010, %v1018
      %v3282 = vcombine.high %v1010, %v1018
      %v3284 = vunpack.c.l.s4 1983009808
      %v3285 = vunpack.c.0.s8 %v3284
      %v3286 = vlaneseq
      %v3287 = vshrl.u32 %v3286, 7
      %v3288 = vsub.s32 %v3285, %v3287
      %v3289 = vrot.slane %v3281, %v3288
      %v3291 = vunpack.c.l.s4 1983009808
      %v3292 = vunpack.c.0.s8 %v3291
      %v3293 = vlaneseq
      %v3294 = vshrl.u32 %v3293, 7
      %v3295 = vsub.s32 %v3292, %v3294
      %v3296 = vrot.slane %v3282, %v3295
      %v3297 = vcombine.low %v1014, %v1022
      %v3298 = vcombine.high %v1014, %v1022
      %v3300 = vunpack.c.l.s4 1983009808
      %v3301 = vunpack.c.0.s8 %v3300
      %v3302 = vlaneseq
      %v3303 = vshrl.u32 %v3302, 7
      %v3304 = vsub.s32 %v3301, %v3303
      %v3305 = vrot.slane %v3297, %v3304
      %v3307 = vunpack.c.l.s4 1983009808
      %v3308 = vunpack.c.0.s8 %v3307
      %v3309 = vlaneseq
      %v3310 = vshrl.u32 %v3309, 7
      %v3311 = vsub.s32 %v3308, %v3310
      %v3312 = vrot.slane %v3298, %v3311
      %v3313 = vcombine.low %v1026, %v1034
      %v3314 = vcombine.high %v1026, %v1034
      %v3316 = vunpack.c.l.s4 1983009808
      %v3317 = vunpack.c.0.s8 %v3316
      %v3318 = vlaneseq
      %v3319 = vshrl.u32 %v3318, 7
      %v3320 = vsub.s32 %v3317, %v3319
      %v3321 = vrot.slane %v3313, %v3320
      %v3323 = vunpack.c.l.s4 1983009808
      %v3324 = vunpack.c.0.s8 %v3323
      %v3325 = vlaneseq
      %v3326 = vshrl.u32 %v3325, 7
      %v3327 = vsub.s32 %v3324, %v3326
      %v3328 = vrot.slane %v3314, %v3327
      %v3329 = vcombine.low %v1030, %v1038
      %v3330 = vcombine.high %v1030, %v1038
      %v3332 = vunpack.c.l.s4 1983009808
      %v3333 = vunpack.c.0.s8 %v3332
      %v3334 = vlaneseq
      %v3335 = vshrl.u32 %v3334, 7
      %v3336 = vsub.s32 %v3333, %v3335
      %v3337 = vrot.slane %v3329, %v3336
      %v3339 = vunpack.c.l.s4 1983009808
      %v3340 = vunpack.c.0.s8 %v3339
      %v3341 = vlaneseq
      %v3342 = vshrl.u32 %v3341, 7
      %v3343 = vsub.s32 %v3340, %v3342
      %v3344 = vrot.slane %v3330, %v3343
      %v3345 = vcombine.low %v3289, %v3305
      %v3346 = vcombine.high %v3289, %v3305
      %v3348 = vunpack.c.l.s4 1934713408
      %v3349 = vunpack.c.0.s8 %v3348
      %v3350 = vlaneseq
      %v3351 = vshrl.u32 %v3350, 7
      %v3352 = vsub.s32 %v3349, %v3351
      %v3353 = vrot.slane %v3345, %v3352
      %v3355 = vunpack.c.l.s4 1934713408
      %v3356 = vunpack.c.0.s8 %v3355
      %v3357 = vlaneseq
      %v3358 = vshrl.u32 %v3357, 7
      %v3359 = vsub.s32 %v3356, %v3358
      %v3360 = vrot.slane %v3346, %v3359
      %v3361 = vcombine.low %v3296, %v3312
      %v3362 = vcombine.high %v3296, %v3312
      %v3364 = vunpack.c.l.s4 1934713408
      %v3365 = vunpack.c.0.s8 %v3364
      %v3366 = vlaneseq
      %v3367 = vshrl.u32 %v3366, 7
      %v3368 = vsub.s32 %v3365, %v3367
      %v3369 = vrot.slane %v3361, %v3368
      %v3371 = vunpack.c.l.s4 1934713408
      %v3372 = vunpack.c.0.s8 %v3371
      %v3373 = vlaneseq
      %v3374 = vshrl.u32 %v3373, 7
      %v3375 = vsub.s32 %v3372, %v3374
      %v3376 = vrot.slane %v3362, %v3375
      %v3377 = vcombine.low %v3321, %v3337
      %v3378 = vcombine.high %v3321, %v3337
      %v3380 = vunpack.c.l.s4 1934713408
      %v3381 = vunpack.c.0.s8 %v3380
      %v3382 = vlaneseq
      %v3383 = vshrl.u32 %v3382, 7
      %v3384 = vsub.s32 %v3381, %v3383
      %v3385 = vrot.slane %v3377, %v3384
      %v3387 = vunpack.c.l.s4 1934713408
      %v3388 = vunpack.c.0.s8 %v3387
      %v3389 = vlaneseq
      %v3390 = vshrl.u32 %v3389, 7
      %v3391 = vsub.s32 %v3388, %v3390
      %v3392 = vrot.slane %v3378, %v3391
      %v3393 = vcombine.low %v3328, %v3344
      %v3394 = vcombine.high %v3328, %v3344
      %v3396 = vunpack.c.l.s4 1934713408
      %v3397 = vunpack.c.0.s8 %v3396
      %v3398 = vlaneseq
      %v3399 = vshrl.u32 %v3398, 7
      %v3400 = vsub.s32 %v3397, %v3399
      %v3401 = vrot.slane %v3393, %v3400
      %v3403 = vunpack.c.l.s4 1934713408
      %v3404 = vunpack.c.0.s8 %v3403
      %v3405 = vlaneseq
      %v3406 = vshrl.u32 %v3405, 7
      %v3407 = vsub.s32 %v3404, %v3406
      %v3408 = vrot.slane %v3394, %v3407
      %v3409 = vcombine.low %v3353, %v3385
      %v3410 = vcombine.high %v3353, %v3385
      %v3411 = vcombine.low %v3360, %v3392
      %v3412 = vcombine.high %v3360, %v3392
      %v3413 = vcombine.low %v3369, %v3401
      %v3414 = vcombine.high %v3369, %v3401
      %v3415 = vcombine.low %v3376, %v3408
      %v3416 = vcombine.high %v3376, %v3408
      %v3417 = vcombine.low %v1042, %v1050
      %v3418 = vcombine.high %v1042, %v1050
      %v3420 = vunpack.c.l.s4 1983009808
      %v3421 = vunpack.c.0.s8 %v3420
      %v3422 = vlaneseq
      %v3423 = vshrl.u32 %v3422, 7
      %v3424 = vsub.s32 %v3421, %v3423
      %v3425 = vrot.slane %v3417, %v3424
      %v3427 = vunpack.c.l.s4 1983009808
      %v3428 = vunpack.c.0.s8 %v3427
      %v3429 = vlaneseq
      %v3430 = vshrl.u32 %v3429, 7
      %v3431 = vsub.s32 %v3428, %v3430
      %v3432 = vrot.slane %v3418, %v3431
      %v3433 = vcombine.low %v1046, %v1054
      %v3434 = vcombine.high %v1046, %v1054
      %v3436 = vunpack.c.l.s4 1983009808
      %v3437 = vunpack.c.0.s8 %v3436
      %v3438 = vlaneseq
      %v3439 = vshrl.u32 %v3438, 7
      %v3440 = vsub.s32 %v3437, %v3439
      %v3441 = vrot.slane %v3433, %v3440
      %v3443 = vunpack.c.l.s4 1983009808
      %v3444 = vunpack.c.0.s8 %v3443
      %v3445 = vlaneseq
      %v3446 = vshrl.u32 %v3445, 7
      %v3447 = vsub.s32 %v3444, %v3446
      %v3448 = vrot.slane %v3434, %v3447
      %v3449 = vcombine.low %v1058, %v1066
      %v3450 = vcombine.high %v1058, %v1066
      %v3452 = vunpack.c.l.s4 1983009808
      %v3453 = vunpack.c.0.s8 %v3452
      %v3454 = vlaneseq
      %v3455 = vshrl.u32 %v3454, 7
      %v3456 = vsub.s32 %v3453, %v3455
      %v3457 = vrot.slane %v3449, %v3456
      %v3459 = vunpack.c.l.s4 1983009808
      %v3460 = vunpack.c.0.s8 %v3459
      %v3461 = vlaneseq
      %v3462 = vshrl.u32 %v3461, 7
      %v3463 = vsub.s32 %v3460, %v3462
      %v3464 = vrot.slane %v3450, %v3463
      %v3465 = vcombine.low %v1062, %v1070
      %v3466 = vcombine.high %v1062, %v1070
      %v3468 = vunpack.c.l.s4 1983009808
      %v3469 = vunpack.c.0.s8 %v3468
      %v3470 = vlaneseq
      %v3471 = vshrl.u32 %v3470, 7
      %v3472 = vsub.s32 %v3469, %v3471
      %v3473 = vrot.slane %v3465, %v3472
      %v3475 = vunpack.c.l.s4 1983009808
      %v3476 = vunpack.c.0.s8 %v3475
      %v3477 = vlaneseq
      %v3478 = vshrl.u32 %v3477, 7
      %v3479 = vsub.s32 %v3476, %v3478
      %v3480 = vrot.slane %v3466, %v3479
      %v3481 = vcombine.low %v3425, %v3441
      %v3482 = vcombine.high %v3425, %v3441
      %v3484 = vunpack.c.l.s4 1934713408
      %v3485 = vunpack.c.0.s8 %v3484
      %v3486 = vlaneseq
      %v3487 = vshrl.u32 %v3486, 7
      %v3488 = vsub.s32 %v3485, %v3487
      %v3489 = vrot.slane %v3481, %v3488
      %v3491 = vunpack.c.l.s4 1934713408
      %v3492 = vunpack.c.0.s8 %v3491
      %v3493 = vlaneseq
      %v3494 = vshrl.u32 %v3493, 7
      %v3495 = vsub.s32 %v3492, %v3494
      %v3496 = vrot.slane %v3482, %v3495
      %v3497 = vcombine.low %v3432, %v3448
      %v3498 = vcombine.high %v3432, %v3448
      %v3500 = vunpack.c.l.s4 1934713408
      %v3501 = vunpack.c.0.s8 %v3500
      %v3502 = vlaneseq
      %v3503 = vshrl.u32 %v3502, 7
      %v3504 = vsub.s32 %v3501, %v3503
      %v3505 = vrot.slane %v3497, %v3504
      %v3507 = vunpack.c.l.s4 1934713408
      %v3508 = vunpack.c.0.s8 %v3507
      %v3509 = vlaneseq
      %v3510 = vshrl.u32 %v3509, 7
      %v3511 = vsub.s32 %v3508, %v3510
      %v3512 = vrot.slane %v3498, %v3511
      %v3513 = vcombine.low %v3457, %v3473
      %v3514 = vcombine.high %v3457, %v3473
      %v3516 = vunpack.c.l.s4 1934713408
      %v3517 = vunpack.c.0.s8 %v3516
      %v3518 = vlaneseq
      %v3519 = vshrl.u32 %v3518, 7
      %v3520 = vsub.s32 %v3517, %v3519
      %v3521 = vrot.slane %v3513, %v3520
      %v3523 = vunpack.c.l.s4 1934713408
      %v3524 = vunpack.c.0.s8 %v3523
      %v3525 = vlaneseq
      %v3526 = vshrl.u32 %v3525, 7
      %v3527 = vsub.s32 %v3524, %v3526
      %v3528 = vrot.slane %v3514, %v3527
      %v3529 = vcombine.low %v3464, %v3480
      %v3530 = vcombine.high %v3464, %v3480
      %v3532 = vunpack.c.l.s4 1934713408
      %v3533 = vunpack.c.0.s8 %v3532
      %v3534 = vlaneseq
      %v3535 = vshrl.u32 %v3534, 7
      %v3536 = vsub.s32 %v3533, %v3535
      %v3537 = vrot.slane %v3529, %v3536
      %v3539 = vunpack.c.l.s4 1934713408
      %v3540 = vunpack.c.0.s8 %v3539
      %v3541 = vlaneseq
      %v3542 = vshrl.u32 %v3541, 7
      %v3543 = vsub.s32 %v3540, %v3542
      %v3544 = vrot.slane %v3530, %v3543
      %v3545 = vcombine.low %v3489, %v3521
      %v3546 = vcombine.high %v3489, %v3521
      %v3547 = vcombine.low %v3496, %v3528
      %v3548 = vcombine.high %v3496, %v3528
      %v3549 = vcombine.low %v3505, %v3537
      %v3550 = vcombine.high %v3505, %v3537
      %v3551 = vcombine.low %v3512, %v3544
      %v3552 = vcombine.high %v3512, %v3544
      %v3553 = vcombine.low %v208, %v214
      %v3554 = vcombine.high %v208, %v214
      %v3556 = vunpack.c.l.s4 1983009808
      %v3557 = vunpack.c.0.s8 %v3556
      %v3558 = vlaneseq
      %v3559 = vshrl.u32 %v3558, 7
      %v3560 = vsub.s32 %v3557, %v3559
      %v3561 = vrot.slane %v3553, %v3560
      %v3563 = vunpack.c.l.s4 1983009808
      %v3564 = vunpack.c.0.s8 %v3563
      %v3565 = vlaneseq
      %v3566 = vshrl.u32 %v3565, 7
      %v3567 = vsub.s32 %v3564, %v3566
      %v3568 = vrot.slane %v3554, %v3567
      %v3569 = vcombine.low %v211, %v217
      %v3570 = vcombine.high %v211, %v217
      %v3572 = vunpack.c.l.s4 1983009808
      %v3573 = vunpack.c.0.s8 %v3572
      %v3574 = vlaneseq
      %v3575 = vshrl.u32 %v3574, 7
      %v3576 = vsub.s32 %v3573, %v3575
      %v3577 = vrot.slane %v3569, %v3576
      %v3579 = vunpack.c.l.s4 1983009808
      %v3580 = vunpack.c.0.s8 %v3579
      %v3581 = vlaneseq
      %v3582 = vshrl.u32 %v3581, 7
      %v3583 = vsub.s32 %v3580, %v3582
      %v3584 = vrot.slane %v3570, %v3583
      %v3585 = vcombine.low %v220, %v226
      %v3586 = vcombine.high %v220, %v226
      %v3588 = vunpack.c.l.s4 1983009808
      %v3589 = vunpack.c.0.s8 %v3588
      %v3590 = vlaneseq
      %v3591 = vshrl.u32 %v3590, 7
      %v3592 = vsub.s32 %v3589, %v3591
      %v3593 = vrot.slane %v3585, %v3592
      %v3595 = vunpack.c.l.s4 1983009808
      %v3596 = vunpack.c.0.s8 %v3595
      %v3597 = vlaneseq
      %v3598 = vshrl.u32 %v3597, 7
      %v3599 = vsub.s32 %v3596, %v3598
      %v3600 = vrot.slane %v3586, %v3599
      %v3601 = vcombine.low %v223, %v229
      %v3602 = vcombine.high %v223, %v229
      %v3604 = vunpack.c.l.s4 1983009808
      %v3605 = vunpack.c.0.s8 %v3604
      %v3606 = vlaneseq
      %v3607 = vshrl.u32 %v3606, 7
      %v3608 = vsub.s32 %v3605, %v3607
      %v3609 = vrot.slane %v3601, %v3608
      %v3611 = vunpack.c.l.s4 1983009808
      %v3612 = vunpack.c.0.s8 %v3611
      %v3613 = vlaneseq
      %v3614 = vshrl.u32 %v3613, 7
      %v3615 = vsub.s32 %v3612, %v3614
      %v3616 = vrot.slane %v3602, %v3615
      %v3617 = vcombine.low %v3561, %v3577
      %v3618 = vcombine.high %v3561, %v3577
      %v3620 = vunpack.c.l.s4 1934713408
      %v3621 = vunpack.c.0.s8 %v3620
      %v3622 = vlaneseq
      %v3623 = vshrl.u32 %v3622, 7
      %v3624 = vsub.s32 %v3621, %v3623
      %v3625 = vrot.slane %v3617, %v3624
      %v3627 = vunpack.c.l.s4 1934713408
      %v3628 = vunpack.c.0.s8 %v3627
      %v3629 = vlaneseq
      %v3630 = vshrl.u32 %v3629, 7
      %v3631 = vsub.s32 %v3628, %v3630
      %v3632 = vrot.slane %v3618, %v3631
      %v3633 = vcombine.low %v3568, %v3584
      %v3634 = vcombine.high %v3568, %v3584
      %v3636 = vunpack.c.l.s4 1934713408
      %v3637 = vunpack.c.0.s8 %v3636
      %v3638 = vlaneseq
      %v3639 = vshrl.u32 %v3638, 7
      %v3640 = vsub.s32 %v3637, %v3639
      %v3641 = vrot.slane %v3633, %v3640
      %v3643 = vunpack.c.l.s4 1934713408
      %v3644 = vunpack.c.0.s8 %v3643
      %v3645 = vlaneseq
      %v3646 = vshrl.u32 %v3645, 7
      %v3647 = vsub.s32 %v3644, %v3646
      %v3648 = vrot.slane %v3634, %v3647
      %v3649 = vcombine.low %v3593, %v3609
      %v3650 = vcombine.high %v3593, %v3609
      %v3652 = vunpack.c.l.s4 1934713408
      %v3653 = vunpack.c.0.s8 %v3652
      %v3654 = vlaneseq
      %v3655 = vshrl.u32 %v3654, 7
      %v3656 = vsub.s32 %v3653, %v3655
      %v3657 = vrot.slane %v3649, %v3656
      %v3659 = vunpack.c.l.s4 1934713408
      %v3660 = vunpack.c.0.s8 %v3659
      %v3661 = vlaneseq
      %v3662 = vshrl.u32 %v3661, 7
      %v3663 = vsub.s32 %v3660, %v3662
      %v3664 = vrot.slane %v3650, %v3663
      %v3665 = vcombine.low %v3600, %v3616
      %v3666 = vcombine.high %v3600, %v3616
      %v3668 = vunpack.c.l.s4 1934713408
      %v3669 = vunpack.c.0.s8 %v3668
      %v3670 = vlaneseq
      %v3671 = vshrl.u32 %v3670, 7
      %v3672 = vsub.s32 %v3669, %v3671
      %v3673 = vrot.slane %v3665, %v3672
      %v3675 = vunpack.c.l.s4 1934713408
      %v3676 = vunpack.c.0.s8 %v3675
      %v3677 = vlaneseq
      %v3678 = vshrl.u32 %v3677, 7
      %v3679 = vsub.s32 %v3676, %v3678
      %v3680 = vrot.slane %v3666, %v3679
      %v3681 = vcombine.low %v3625, %v3657
      %v3682 = vcombine.high %v3625, %v3657
      %v3683 = vcombine.low %v3632, %v3664
      %v3684 = vcombine.high %v3632, %v3664
      %v3685 = vcombine.low %v3641, %v3673
      %v3686 = vcombine.high %v3641, %v3673
      %v3687 = vcombine.low %v3648, %v3680
      %v3688 = vcombine.high %v3648, %v3680
      %v3689 = vcombine.low %v232, %v238
      %v3690 = vcombine.high %v232, %v238
      %v3692 = vunpack.c.l.s4 1983009808
      %v3693 = vunpack.c.0.s8 %v3692
      %v3694 = vlaneseq
      %v3695 = vshrl.u32 %v3694, 7
      %v3696 = vsub.s32 %v3693, %v3695
      %v3697 = vrot.slane %v3689, %v3696
      %v3699 = vunpack.c.l.s4 1983009808
      %v3700 = vunpack.c.0.s8 %v3699
      %v3701 = vlaneseq
      %v3702 = vshrl.u32 %v3701, 7
      %v3703 = vsub.s32 %v3700, %v3702
      %v3704 = vrot.slane %v3690, %v3703
      %v3705 = vcombine.low %v235, %v241
      %v3706 = vcombine.high %v235, %v241
      %v3708 = vunpack.c.l.s4 1983009808
      %v3709 = vunpack.c.0.s8 %v3708
      %v3710 = vlaneseq
      %v3711 = vshrl.u32 %v3710, 7
      %v3712 = vsub.s32 %v3709, %v3711
      %v3713 = vrot.slane %v3705, %v3712
      %v3715 = vunpack.c.l.s4 1983009808
      %v3716 = vunpack.c.0.s8 %v3715
      %v3717 = vlaneseq
      %v3718 = vshrl.u32 %v3717, 7
      %v3719 = vsub.s32 %v3716, %v3718
      %v3720 = vrot.slane %v3706, %v3719
      %v3721 = vcombine.low %v244, %v250
      %v3722 = vcombine.high %v244, %v250
      %v3724 = vunpack.c.l.s4 1983009808
      %v3725 = vunpack.c.0.s8 %v3724
      %v3726 = vlaneseq
      %v3727 = vshrl.u32 %v3726, 7
      %v3728 = vsub.s32 %v3725, %v3727
      %v3729 = vrot.slane %v3721, %v3728
      %v3731 = vunpack.c.l.s4 1983009808
      %v3732 = vunpack.c.0.s8 %v3731
      %v3733 = vlaneseq
      %v3734 = vshrl.u32 %v3733, 7
      %v3735 = vsub.s32 %v3732, %v3734
      %v3736 = vrot.slane %v3722, %v3735
      %v3737 = vcombine.low %v247, %v253
      %v3738 = vcombine.high %v247, %v253
      %v3740 = vunpack.c.l.s4 1983009808
      %v3741 = vunpack.c.0.s8 %v3740
      %v3742 = vlaneseq
      %v3743 = vshrl.u32 %v3742, 7
      %v3744 = vsub.s32 %v3741, %v3743
      %v3745 = vrot.slane %v3737, %v3744
      %v3747 = vunpack.c.l.s4 1983009808
      %v3748 = vunpack.c.0.s8 %v3747
      %v3749 = vlaneseq
      %v3750 = vshrl.u32 %v3749, 7
      %v3751 = vsub.s32 %v3748, %v3750
      %v3752 = vrot.slane %v3738, %v3751
      %v3753 = vcombine.low %v3697, %v3713
      %v3754 = vcombine.high %v3697, %v3713
      %v3756 = vunpack.c.l.s4 1934713408
      %v3757 = vunpack.c.0.s8 %v3756
      %v3758 = vlaneseq
      %v3759 = vshrl.u32 %v3758, 7
      %v3760 = vsub.s32 %v3757, %v3759
      %v3761 = vrot.slane %v3753, %v3760
      %v3763 = vunpack.c.l.s4 1934713408
      %v3764 = vunpack.c.0.s8 %v3763
      %v3765 = vlaneseq
      %v3766 = vshrl.u32 %v3765, 7
      %v3767 = vsub.s32 %v3764, %v3766
      %v3768 = vrot.slane %v3754, %v3767
      %v3769 = vcombine.low %v3704, %v3720
      %v3770 = vcombine.high %v3704, %v3720
      %v3772 = vunpack.c.l.s4 1934713408
      %v3773 = vunpack.c.0.s8 %v3772
      %v3774 = vlaneseq
      %v3775 = vshrl.u32 %v3774, 7
      %v3776 = vsub.s32 %v3773, %v3775
      %v3777 = vrot.slane %v3769, %v3776
      %v3779 = vunpack.c.l.s4 1934713408
      %v3780 = vunpack.c.0.s8 %v3779
      %v3781 = vlaneseq
      %v3782 = vshrl.u32 %v3781, 7
      %v3783 = vsub.s32 %v3780, %v3782
      %v3784 = vrot.slane %v3770, %v3783
      %v3785 = vcombine.low %v3729, %v3745
      %v3786 = vcombine.high %v3729, %v3745
      %v3788 = vunpack.c.l.s4 1934713408
      %v3789 = vunpack.c.0.s8 %v3788
      %v3790 = vlaneseq
      %v3791 = vshrl.u32 %v3790, 7
      %v3792 = vsub.s32 %v3789, %v3791
      %v3793 = vrot.slane %v3785, %v3792
      %v3795 = vunpack.c.l.s4 1934713408
      %v3796 = vunpack.c.0.s8 %v3795
      %v3797 = vlaneseq
      %v3798 = vshrl.u32 %v3797, 7
      %v3799 = vsub.s32 %v3796, %v3798
      %v3800 = vrot.slane %v3786, %v3799
      %v3801 = vcombine.low %v3736, %v3752
      %v3802 = vcombine.high %v3736, %v3752
      %v3804 = vunpack.c.l.s4 1934713408
      %v3805 = vunpack.c.0.s8 %v3804
      %v3806 = vlaneseq
      %v3807 = vshrl.u32 %v3806, 7
      %v3808 = vsub.s32 %v3805, %v3807
      %v3809 = vrot.slane %v3801, %v3808
      %v3811 = vunpack.c.l.s4 1934713408
      %v3812 = vunpack.c.0.s8 %v3811
      %v3813 = vlaneseq
      %v3814 = vshrl.u32 %v3813, 7
      %v3815 = vsub.s32 %v3812, %v3814
      %v3816 = vrot.slane %v3802, %v3815
      %v3817 = vcombine.low %v3761, %v3793
      %v3818 = vcombine.high %v3761, %v3793
      %v3819 = vcombine.low %v3768, %v3800
      %v3820 = vcombine.high %v3768, %v3800
      %v3821 = vcombine.low %v3777, %v3809
      %v3822 = vcombine.high %v3777, %v3809
      %v3823 = vcombine.low %v3784, %v3816
      %v3824 = vcombine.high %v3784, %v3816
      %v3825 = vcombine.low %v290, %v298
      %v3826 = vcombine.high %v290, %v298
      %v3828 = vunpack.c.l.s4 1983009808
      %v3829 = vunpack.c.0.s8 %v3828
      %v3830 = vlaneseq
      %v3831 = vshrl.u32 %v3830, 7
      %v3832 = vsub.s32 %v3829, %v3831
      %v3833 = vrot.slane %v3825, %v3832
      %v3835 = vunpack.c.l.s4 1983009808
      %v3836 = vunpack.c.0.s8 %v3835
      %v3837 = vlaneseq
      %v3838 = vshrl.u32 %v3837, 7
      %v3839 = vsub.s32 %v3836, %v3838
      %v3840 = vrot.slane %v3826, %v3839
      %v3841 = vcombine.low %v294, %v302
      %v3842 = vcombine.high %v294, %v302
      %v3844 = vunpack.c.l.s4 1983009808
      %v3845 = vunpack.c.0.s8 %v3844
      %v3846 = vlaneseq
      %v3847 = vshrl.u32 %v3846, 7
      %v3848 = vsub.s32 %v3845, %v3847
      %v3849 = vrot.slane %v3841, %v3848
      %v3851 = vunpack.c.l.s4 1983009808
      %v3852 = vunpack.c.0.s8 %v3851
      %v3853 = vlaneseq
      %v3854 = vshrl.u32 %v3853, 7
      %v3855 = vsub.s32 %v3852, %v3854
      %v3856 = vrot.slane %v3842, %v3855
      %v3857 = vcombine.low %v306, %v314
      %v3858 = vcombine.high %v306, %v314
      %v3860 = vunpack.c.l.s4 1983009808
      %v3861 = vunpack.c.0.s8 %v3860
      %v3862 = vlaneseq
      %v3863 = vshrl.u32 %v3862, 7
      %v3864 = vsub.s32 %v3861, %v3863
      %v3865 = vrot.slane %v3857, %v3864
      %v3867 = vunpack.c.l.s4 1983009808
      %v3868 = vunpack.c.0.s8 %v3867
      %v3869 = vlaneseq
      %v3870 = vshrl.u32 %v3869, 7
      %v3871 = vsub.s32 %v3868, %v3870
      %v3872 = vrot.slane %v3858, %v3871
      %v3873 = vcombine.low %v310, %v318
      %v3874 = vcombine.high %v310, %v318
      %v3876 = vunpack.c.l.s4 1983009808
      %v3877 = vunpack.c.0.s8 %v3876
      %v3878 = vlaneseq
      %v3879 = vshrl.u32 %v3878, 7
      %v3880 = vsub.s32 %v3877, %v3879
      %v3881 = vrot.slane %v3873, %v3880
      %v3883 = vunpack.c.l.s4 1983009808
      %v3884 = vunpack.c.0.s8 %v3883
      %v3885 = vlaneseq
      %v3886 = vshrl.u32 %v3885, 7
      %v3887 = vsub.s32 %v3884, %v3886
      %v3888 = vrot.slane %v3874, %v3887
      %v3889 = vcombine.low %v3833, %v3849
      %v3890 = vcombine.high %v3833, %v3849
      %v3892 = vunpack.c.l.s4 1934713408
      %v3893 = vunpack.c.0.s8 %v3892
      %v3894 = vlaneseq
      %v3895 = vshrl.u32 %v3894, 7
      %v3896 = vsub.s32 %v3893, %v3895
      %v3897 = vrot.slane %v3889, %v3896
      %v3899 = vunpack.c.l.s4 1934713408
      %v3900 = vunpack.c.0.s8 %v3899
      %v3901 = vlaneseq
      %v3902 = vshrl.u32 %v3901, 7
      %v3903 = vsub.s32 %v3900, %v3902
      %v3904 = vrot.slane %v3890, %v3903
      %v3905 = vcombine.low %v3840, %v3856
      %v3906 = vcombine.high %v3840, %v3856
      %v3908 = vunpack.c.l.s4 1934713408
      %v3909 = vunpack.c.0.s8 %v3908
      %v3910 = vlaneseq
      %v3911 = vshrl.u32 %v3910, 7
      %v3912 = vsub.s32 %v3909, %v3911
      %v3913 = vrot.slane %v3905, %v3912
      %v3915 = vunpack.c.l.s4 1934713408
      %v3916 = vunpack.c.0.s8 %v3915
      %v3917 = vlaneseq
      %v3918 = vshrl.u32 %v3917, 7
      %v3919 = vsub.s32 %v3916, %v3918
      %v3920 = vrot.slane %v3906, %v3919
      %v3921 = vcombine.low %v3865, %v3881
      %v3922 = vcombine.high %v3865, %v3881
      %v3924 = vunpack.c.l.s4 1934713408
      %v3925 = vunpack.c.0.s8 %v3924
      %v3926 = vlaneseq
      %v3927 = vshrl.u32 %v3926, 7
      %v3928 = vsub.s32 %v3925, %v3927
      %v3929 = vrot.slane %v3921, %v3928
      %v3931 = vunpack.c.l.s4 1934713408
      %v3932 = vunpack.c.0.s8 %v3931
      %v3933 = vlaneseq
      %v3934 = vshrl.u32 %v3933, 7
      %v3935 = vsub.s32 %v3932, %v3934
      %v3936 = vrot.slane %v3922, %v3935
      %v3937 = vcombine.low %v3872, %v3888
      %v3938 = vcombine.high %v3872, %v3888
      %v3940 = vunpack.c.l.s4 1934713408
      %v3941 = vunpack.c.0.s8 %v3940
      %v3942 = vlaneseq
      %v3943 = vshrl.u32 %v3942, 7
      %v3944 = vsub.s32 %v3941, %v3943
      %v3945 = vrot.slane %v3937, %v3944
      %v3947 = vunpack.c.l.s4 1934713408
      %v3948 = vunpack.c.0.s8 %v3947
      %v3949 = vlaneseq
      %v3950 = vshrl.u32 %v3949, 7
      %v3951 = vsub.s32 %v3948, %v3950
      %v3952 = vrot.slane %v3938, %v3951
      %v3953 = vcombine.low %v3897, %v3929
      %v3954 = vcombine.high %v3897, %v3929
      %v3955 = vcombine.low %v3904, %v3936
      %v3956 = vcombine.high %v3904, %v3936
      %v3957 = vcombine.low %v3913, %v3945
      %v3958 = vcombine.high %v3913, %v3945
      %v3959 = vcombine.low %v3920, %v3952
      %v3960 = vcombine.high %v3920, %v3952
      %v3961 = vcombine.low %v322, %v330
      %v3962 = vcombine.high %v322, %v330
      %v3964 = vunpack.c.l.s4 1983009808
      %v3965 = vunpack.c.0.s8 %v3964
      %v3966 = vlaneseq
      %v3967 = vshrl.u32 %v3966, 7
      %v3968 = vsub.s32 %v3965, %v3967
      %v3969 = vrot.slane %v3961, %v3968
      %v3971 = vunpack.c.l.s4 1983009808
      %v3972 = vunpack.c.0.s8 %v3971
      %v3973 = vlaneseq
      %v3974 = vshrl.u32 %v3973, 7
      %v3975 = vsub.s32 %v3972, %v3974
      %v3976 = vrot.slane %v3962, %v3975
      %v3977 = vcombine.low %v326, %v334
      %v3978 = vcombine.high %v326, %v334
      %v3980 = vunpack.c.l.s4 1983009808
      %v3981 = vunpack.c.0.s8 %v3980
      %v3982 = vlaneseq
      %v3983 = vshrl.u32 %v3982, 7
      %v3984 = vsub.s32 %v3981, %v3983
      %v3985 = vrot.slane %v3977, %v3984
      %v3987 = vunpack.c.l.s4 1983009808
      %v3988 = vunpack.c.0.s8 %v3987
      %v3989 = vlaneseq
      %v3990 = vshrl.u32 %v3989, 7
      %v3991 = vsub.s32 %v3988, %v3990
      %v3992 = vrot.slane %v3978, %v3991
      %v3993 = vcombine.low %v338, %v346
      %v3994 = vcombine.high %v338, %v346
      %v3996 = vunpack.c.l.s4 1983009808
      %v3997 = vunpack.c.0.s8 %v3996
      %v3998 = vlaneseq
      %v3999 = vshrl.u32 %v3998, 7
      %v4000 = vsub.s32 %v3997, %v3999
      %v4001 = vrot.slane %v3993, %v4000
      %v4003 = vunpack.c.l.s4 1983009808
      %v4004 = vunpack.c.0.s8 %v4003
      %v4005 = vlaneseq
      %v4006 = vshrl.u32 %v4005, 7
      %v4007 = vsub.s32 %v4004, %v4006
      %v4008 = vrot.slane %v3994, %v4007
      %v4009 = vcombine.low %v342, %v350
      %v4010 = vcombine.high %v342, %v350
      %v4012 = vunpack.c.l.s4 1983009808
      %v4013 = vunpack.c.0.s8 %v4012
      %v4014 = vlaneseq
      %v4015 = vshrl.u32 %v4014, 7
      %v4016 = vsub.s32 %v4013, %v4015
      %v4017 = vrot.slane %v4009, %v4016
      %v4019 = vunpack.c.l.s4 1983009808
      %v4020 = vunpack.c.0.s8 %v4019
      %v4021 = vlaneseq
      %v4022 = vshrl.u32 %v4021, 7
      %v4023 = vsub.s32 %v4020, %v4022
      %v4024 = vrot.slane %v4010, %v4023
      %v4025 = vcombine.low %v3969, %v3985
      %v4026 = vcombine.high %v3969, %v3985
      %v4028 = vunpack.c.l.s4 1934713408
      %v4029 = vunpack.c.0.s8 %v4028
      %v4030 = vlaneseq
      %v4031 = vshrl.u32 %v4030, 7
      %v4032 = vsub.s32 %v4029, %v4031
      %v4033 = vrot.slane %v4025, %v4032
      %v4035 = vunpack.c.l.s4 1934713408
      %v4036 = vunpack.c.0.s8 %v4035
      %v4037 = vlaneseq
      %v4038 = vshrl.u32 %v4037, 7
      %v4039 = vsub.s32 %v4036, %v4038
      %v4040 = vrot.slane %v4026, %v4039
      %v4041 = vcombine.low %v3976, %v3992
      %v4042 = vcombine.high %v3976, %v3992
      %v4044 = vunpack.c.l.s4 1934713408
      %v4045 = vunpack.c.0.s8 %v4044
      %v4046 = vlaneseq
      %v4047 = vshrl.u32 %v4046, 7
      %v4048 = vsub.s32 %v4045, %v4047
      %v4049 = vrot.slane %v4041, %v4048
      %v4051 = vunpack.c.l.s4 1934713408
      %v4052 = vunpack.c.0.s8 %v4051
      %v4053 = vlaneseq
      %v4054 = vshrl.u32 %v4053, 7
      %v4055 = vsub.s32 %v4052, %v4054
      %v4056 = vrot.slane %v4042, %v4055
      %v4057 = vcombine.low %v4001, %v4017
      %v4058 = vcombine.high %v4001, %v4017
      %v4060 = vunpack.c.l.s4 1934713408
      %v4061 = vunpack.c.0.s8 %v4060
      %v4062 = vlaneseq
      %v4063 = vshrl.u32 %v4062, 7
      %v4064 = vsub.s32 %v4061, %v4063
      %v4065 = vrot.slane %v4057, %v4064
      %v4067 = vunpack.c.l.s4 1934713408
      %v4068 = vunpack.c.0.s8 %v4067
      %v4069 = vlaneseq
      %v4070 = vshrl.u32 %v4069, 7
      %v4071 = vsub.s32 %v4068, %v4070
      %v4072 = vrot.slane %v4058, %v4071
      %v4073 = vcombine.low %v4008, %v4024
      %v4074 = vcombine.high %v4008, %v4024
      %v4076 = vunpack.c.l.s4 1934713408
      %v4077 = vunpack.c.0.s8 %v4076
      %v4078 = vlaneseq
      %v4079 = vshrl.u32 %v4078, 7
      %v4080 = vsub.s32 %v4077, %v4079
      %v4081 = vrot.slane %v4073, %v4080
      %v4083 = vunpack.c.l.s4 1934713408
      %v4084 = vunpack.c.0.s8 %v4083
      %v4085 = vlaneseq
      %v4086 = vshrl.u32 %v4085, 7
      %v4087 = vsub.s32 %v4084, %v4086
      %v4088 = vrot.slane %v4074, %v4087
      %v4089 = vcombine.low %v4033, %v4065
      %v4090 = vcombine.high %v4033, %v4065
      %v4091 = vcombine.low %v4040, %v4072
      %v4092 = vcombine.high %v4040, %v4072
      %v4093 = vcombine.low %v4049, %v4081
      %v4094 = vcombine.high %v4049, %v4081
      %v4095 = vcombine.low %v4056, %v4088
      %v4096 = vcombine.high %v4056, %v4088
      %v4097 = vcombine.low %v386, %v394
      %v4098 = vcombine.high %v386, %v394
      %v4100 = vunpack.c.l.s4 1983009808
      %v4101 = vunpack.c.0.s8 %v4100
      %v4102 = vlaneseq
      %v4103 = vshrl.u32 %v4102, 7
      %v4104 = vsub.s32 %v4101, %v4103
      %v4105 = vrot.slane %v4097, %v4104
      %v4107 = vunpack.c.l.s4 1983009808
      %v4108 = vunpack.c.0.s8 %v4107
      %v4109 = vlaneseq
      %v4110 = vshrl.u32 %v4109, 7
      %v4111 = vsub.s32 %v4108, %v4110
      %v4112 = vrot.slane %v4098, %v4111
      %v4113 = vcombine.low %v390, %v398
      %v4114 = vcombine.high %v390, %v398
      %v4116 = vunpack.c.l.s4 1983009808
      %v4117 = vunpack.c.0.s8 %v4116
      %v4118 = vlaneseq
      %v4119 = vshrl.u32 %v4118, 7
      %v4120 = vsub.s32 %v4117, %v4119
      %v4121 = vrot.slane %v4113, %v4120
      %v4123 = vunpack.c.l.s4 1983009808
      %v4124 = vunpack.c.0.s8 %v4123
      %v4125 = vlaneseq
      %v4126 = vshrl.u32 %v4125, 7
      %v4127 = vsub.s32 %v4124, %v4126
      %v4128 = vrot.slane %v4114, %v4127
      %v4129 = vcombine.low %v402, %v410
      %v4130 = vcombine.high %v402, %v410
      %v4132 = vunpack.c.l.s4 1983009808
      %v4133 = vunpack.c.0.s8 %v4132
      %v4134 = vlaneseq
      %v4135 = vshrl.u32 %v4134, 7
      %v4136 = vsub.s32 %v4133, %v4135
      %v4137 = vrot.slane %v4129, %v4136
      %v4139 = vunpack.c.l.s4 1983009808
      %v4140 = vunpack.c.0.s8 %v4139
      %v4141 = vlaneseq
      %v4142 = vshrl.u32 %v4141, 7
      %v4143 = vsub.s32 %v4140, %v4142
      %v4144 = vrot.slane %v4130, %v4143
      %v4145 = vcombine.low %v406, %v414
      %v4146 = vcombine.high %v406, %v414
      %v4148 = vunpack.c.l.s4 1983009808
      %v4149 = vunpack.c.0.s8 %v4148
      %v4150 = vlaneseq
      %v4151 = vshrl.u32 %v4150, 7
      %v4152 = vsub.s32 %v4149, %v4151
      %v4153 = vrot.slane %v4145, %v4152
      %v4155 = vunpack.c.l.s4 1983009808
      %v4156 = vunpack.c.0.s8 %v4155
      %v4157 = vlaneseq
      %v4158 = vshrl.u32 %v4157, 7
      %v4159 = vsub.s32 %v4156, %v4158
      %v4160 = vrot.slane %v4146, %v4159
      %v4161 = vcombine.low %v4105, %v4121
      %v4162 = vcombine.high %v4105, %v4121
      %v4164 = vunpack.c.l.s4 1934713408
      %v4165 = vunpack.c.0.s8 %v4164
      %v4166 = vlaneseq
      %v4167 = vshrl.u32 %v4166, 7
      %v4168 = vsub.s32 %v4165, %v4167
      %v4169 = vrot.slane %v4161, %v4168
      %v4171 = vunpack.c.l.s4 1934713408
      %v4172 = vunpack.c.0.s8 %v4171
      %v4173 = vlaneseq
      %v4174 = vshrl.u32 %v4173, 7
      %v4175 = vsub.s32 %v4172, %v4174
      %v4176 = vrot.slane %v4162, %v4175
      %v4177 = vcombine.low %v4112, %v4128
      %v4178 = vcombine.high %v4112, %v4128
      %v4180 = vunpack.c.l.s4 1934713408
      %v4181 = vunpack.c.0.s8 %v4180
      %v4182 = vlaneseq
      %v4183 = vshrl.u32 %v4182, 7
      %v4184 = vsub.s32 %v4181, %v4183
      %v4185 = vrot.slane %v4177, %v4184
      %v4187 = vunpack.c.l.s4 1934713408
      %v4188 = vunpack.c.0.s8 %v4187
      %v4189 = vlaneseq
      %v4190 = vshrl.u32 %v4189, 7
      %v4191 = vsub.s32 %v4188, %v4190
      %v4192 = vrot.slane %v4178, %v4191
      %v4193 = vcombine.low %v4137, %v4153
      %v4194 = vcombine.high %v4137, %v4153
      %v4196 = vunpack.c.l.s4 1934713408
      %v4197 = vunpack.c.0.s8 %v4196
      %v4198 = vlaneseq
      %v4199 = vshrl.u32 %v4198, 7
      %v4200 = vsub.s32 %v4197, %v4199
      %v4201 = vrot.slane %v4193, %v4200
      %v4203 = vunpack.c.l.s4 1934713408
      %v4204 = vunpack.c.0.s8 %v4203
      %v4205 = vlaneseq
      %v4206 = vshrl.u32 %v4205, 7
      %v4207 = vsub.s32 %v4204, %v4206
      %v4208 = vrot.slane %v4194, %v4207
      %v4209 = vcombine.low %v4144, %v4160
      %v4210 = vcombine.high %v4144, %v4160
      %v4212 = vunpack.c.l.s4 1934713408
      %v4213 = vunpack.c.0.s8 %v4212
      %v4214 = vlaneseq
      %v4215 = vshrl.u32 %v4214, 7
      %v4216 = vsub.s32 %v4213, %v4215
      %v4217 = vrot.slane %v4209, %v4216
      %v4219 = vunpack.c.l.s4 1934713408
      %v4220 = vunpack.c.0.s8 %v4219
      %v4221 = vlaneseq
      %v4222 = vshrl.u32 %v4221, 7
      %v4223 = vsub.s32 %v4220, %v4222
      %v4224 = vrot.slane %v4210, %v4223
      %v4225 = vcombine.low %v4169, %v4201
      %v4226 = vcombine.high %v4169, %v4201
      %v4227 = vcombine.low %v4176, %v4208
      %v4228 = vcombine.high %v4176, %v4208
      %v4229 = vcombine.low %v4185, %v4217
      %v4230 = vcombine.high %v4185, %v4217
      %v4231 = vcombine.low %v4192, %v4224
      %v4232 = vcombine.high %v4192, %v4224
      %v4233 = vcombine.low %v418, %v426
      %v4234 = vcombine.high %v418, %v426
      %v4236 = vunpack.c.l.s4 1983009808
      %v4237 = vunpack.c.0.s8 %v4236
      %v4238 = vlaneseq
      %v4239 = vshrl.u32 %v4238, 7
      %v4240 = vsub.s32 %v4237, %v4239
      %v4241 = vrot.slane %v4233, %v4240
      %v4243 = vunpack.c.l.s4 1983009808
      %v4244 = vunpack.c.0.s8 %v4243
      %v4245 = vlaneseq
      %v4246 = vshrl.u32 %v4245, 7
      %v4247 = vsub.s32 %v4244, %v4246
      %v4248 = vrot.slane %v4234, %v4247
      %v4249 = vcombine.low %v422, %v430
      %v4250 = vcombine.high %v422, %v430
      %v4252 = vunpack.c.l.s4 1983009808
      %v4253 = vunpack.c.0.s8 %v4252
      %v4254 = vlaneseq
      %v4255 = vshrl.u32 %v4254, 7
      %v4256 = vsub.s32 %v4253, %v4255
      %v4257 = vrot.slane %v4249, %v4256
      %v4259 = vunpack.c.l.s4 1983009808
      %v4260 = vunpack.c.0.s8 %v4259
      %v4261 = vlaneseq
      %v4262 = vshrl.u32 %v4261, 7
      %v4263 = vsub.s32 %v4260, %v4262
      %v4264 = vrot.slane %v4250, %v4263
      %v4265 = vcombine.low %v434, %v442
      %v4266 = vcombine.high %v434, %v442
      %v4268 = vunpack.c.l.s4 1983009808
      %v4269 = vunpack.c.0.s8 %v4268
      %v4270 = vlaneseq
      %v4271 = vshrl.u32 %v4270, 7
      %v4272 = vsub.s32 %v4269, %v4271
      %v4273 = vrot.slane %v4265, %v4272
      %v4275 = vunpack.c.l.s4 1983009808
      %v4276 = vunpack.c.0.s8 %v4275
      %v4277 = vlaneseq
      %v4278 = vshrl.u32 %v4277, 7
      %v4279 = vsub.s32 %v4276, %v4278
      %v4280 = vrot.slane %v4266, %v4279
      %v4281 = vcombine.low %v438, %v446
      %v4282 = vcombine.high %v438, %v446
      %v4284 = vunpack.c.l.s4 1983009808
      %v4285 = vunpack.c.0.s8 %v4284
      %v4286 = vlaneseq
      %v4287 = vshrl.u32 %v4286, 7
      %v4288 = vsub.s32 %v4285, %v4287
      %v4289 = vrot.slane %v4281, %v4288
      %v4291 = vunpack.c.l.s4 1983009808
      %v4292 = vunpack.c.0.s8 %v4291
      %v4293 = vlaneseq
      %v4294 = vshrl.u32 %v4293, 7
      %v4295 = vsub.s32 %v4292, %v4294
      %v4296 = vrot.slane %v4282, %v4295
      %v4297 = vcombine.low %v4241, %v4257
      %v4298 = vcombine.high %v4241, %v4257
      %v4300 = vunpack.c.l.s4 1934713408
      %v4301 = vunpack.c.0.s8 %v4300
      %v4302 = vlaneseq
      %v4303 = vshrl.u32 %v4302, 7
      %v4304 = vsub.s32 %v4301, %v4303
      %v4305 = vrot.slane %v4297, %v4304
      %v4307 = vunpack.c.l.s4 1934713408
      %v4308 = vunpack.c.0.s8 %v4307
      %v4309 = vlaneseq
      %v4310 = vshrl.u32 %v4309, 7
      %v4311 = vsub.s32 %v4308, %v4310
      %v4312 = vrot.slane %v4298, %v4311
      %v4313 = vcombine.low %v4248, %v4264
      %v4314 = vcombine.high %v4248, %v4264
      %v4316 = vunpack.c.l.s4 1934713408
      %v4317 = vunpack.c.0.s8 %v4316
      %v4318 = vlaneseq
      %v4319 = vshrl.u32 %v4318, 7
      %v4320 = vsub.s32 %v4317, %v4319
      %v4321 = vrot.slane %v4313, %v4320
      %v4323 = vunpack.c.l.s4 1934713408
      %v4324 = vunpack.c.0.s8 %v4323
      %v4325 = vlaneseq
      %v4326 = vshrl.u32 %v4325, 7
      %v4327 = vsub.s32 %v4324, %v4326
      %v4328 = vrot.slane %v4314, %v4327
      %v4329 = vcombine.low %v4273, %v4289
      %v4330 = vcombine.high %v4273, %v4289
      %v4332 = vunpack.c.l.s4 1934713408
      %v4333 = vunpack.c.0.s8 %v4332
      %v4334 = vlaneseq
      %v4335 = vshrl.u32 %v4334, 7
      %v4336 = vsub.s32 %v4333, %v4335
      %v4337 = vrot.slane %v4329, %v4336
      %v4339 = vunpack.c.l.s4 1934713408
      %v4340 = vunpack.c.0.s8 %v4339
      %v4341 = vlaneseq
      %v4342 = vshrl.u32 %v4341, 7
      %v4343 = vsub.s32 %v4340, %v4342
      %v4344 = vrot.slane %v4330, %v4343
      %v4345 = vcombine.low %v4280, %v4296
      %v4346 = vcombine.high %v4280, %v4296
      %v4348 = vunpack.c.l.s4 1934713408
      %v4349 = vunpack.c.0.s8 %v4348
      %v4350 = vlaneseq
      %v4351 = vshrl.u32 %v4350, 7
      %v4352 = vsub.s32 %v4349, %v4351
      %v4353 = vrot.slane %v4345, %v4352
      %v4355 = vunpack.c.l.s4 1934713408
      %v4356 = vunpack.c.0.s8 %v4355
      %v4357 = vlaneseq
      %v4358 = vshrl.u32 %v4357, 7
      %v4359 = vsub.s32 %v4356, %v4358
      %v4360 = vrot.slane %v4346, %v4359
      %v4361 = vcombine.low %v4305, %v4337
      %v4362 = vcombine.high %v4305, %v4337
      %v4363 = vcombine.low %v4312, %v4344
      %v4364 = vcombine.high %v4312, %v4344
      %v4365 = vcombine.low %v4321, %v4353
      %v4366 = vcombine.high %v4321, %v4353
      %v4367 = vcombine.low %v4328, %v4360
      %v4368 = vcombine.high %v4328, %v4360
      %v4369 = vcombine.low %v500, %v510
      %v4370 = vcombine.high %v500, %v510
      %v4372 = vunpack.c.l.s4 1983009808
      %v4373 = vunpack.c.0.s8 %v4372
      %v4374 = vlaneseq
      %v4375 = vshrl.u32 %v4374, 7
      %v4376 = vsub.s32 %v4373, %v4375
      %v4377 = vrot.slane %v4369, %v4376
      %v4379 = vunpack.c.l.s4 1983009808
      %v4380 = vunpack.c.0.s8 %v4379
      %v4381 = vlaneseq
      %v4382 = vshrl.u32 %v4381, 7
      %v4383 = vsub.s32 %v4380, %v4382
      %v4384 = vrot.slane %v4370, %v4383
      %v4385 = vcombine.low %v505, %v515
      %v4386 = vcombine.high %v505, %v515
      %v4388 = vunpack.c.l.s4 1983009808
      %v4389 = vunpack.c.0.s8 %v4388
      %v4390 = vlaneseq
      %v4391 = vshrl.u32 %v4390, 7
      %v4392 = vsub.s32 %v4389, %v4391
      %v4393 = vrot.slane %v4385, %v4392
      %v4395 = vunpack.c.l.s4 1983009808
      %v4396 = vunpack.c.0.s8 %v4395
      %v4397 = vlaneseq
      %v4398 = vshrl.u32 %v4397, 7
      %v4399 = vsub.s32 %v4396, %v4398
      %v4400 = vrot.slane %v4386, %v4399
      %v4401 = vcombine.low %v520, %v530
      %v4402 = vcombine.high %v520, %v530
      %v4404 = vunpack.c.l.s4 1983009808
      %v4405 = vunpack.c.0.s8 %v4404
      %v4406 = vlaneseq
      %v4407 = vshrl.u32 %v4406, 7
      %v4408 = vsub.s32 %v4405, %v4407
      %v4409 = vrot.slane %v4401, %v4408
      %v4411 = vunpack.c.l.s4 1983009808
      %v4412 = vunpack.c.0.s8 %v4411
      %v4413 = vlaneseq
      %v4414 = vshrl.u32 %v4413, 7
      %v4415 = vsub.s32 %v4412, %v4414
      %v4416 = vrot.slane %v4402, %v4415
      %v4417 = vcombine.low %v525, %v535
      %v4418 = vcombine.high %v525, %v535
      %v4420 = vunpack.c.l.s4 1983009808
      %v4421 = vunpack.c.0.s8 %v4420
      %v4422 = vlaneseq
      %v4423 = vshrl.u32 %v4422, 7
      %v4424 = vsub.s32 %v4421, %v4423
      %v4425 = vrot.slane %v4417, %v4424
      %v4427 = vunpack.c.l.s4 1983009808
      %v4428 = vunpack.c.0.s8 %v4427
      %v4429 = vlaneseq
      %v4430 = vshrl.u32 %v4429, 7
      %v4431 = vsub.s32 %v4428, %v4430
      %v4432 = vrot.slane %v4418, %v4431
      %v4433 = vcombine.low %v4377, %v4393
      %v4434 = vcombine.high %v4377, %v4393
      %v4436 = vunpack.c.l.s4 1934713408
      %v4437 = vunpack.c.0.s8 %v4436
      %v4438 = vlaneseq
      %v4439 = vshrl.u32 %v4438, 7
      %v4440 = vsub.s32 %v4437, %v4439
      %v4441 = vrot.slane %v4433, %v4440
      %v4443 = vunpack.c.l.s4 1934713408
      %v4444 = vunpack.c.0.s8 %v4443
      %v4445 = vlaneseq
      %v4446 = vshrl.u32 %v4445, 7
      %v4447 = vsub.s32 %v4444, %v4446
      %v4448 = vrot.slane %v4434, %v4447
      %v4449 = vcombine.low %v4384, %v4400
      %v4450 = vcombine.high %v4384, %v4400
      %v4452 = vunpack.c.l.s4 1934713408
      %v4453 = vunpack.c.0.s8 %v4452
      %v4454 = vlaneseq
      %v4455 = vshrl.u32 %v4454, 7
      %v4456 = vsub.s32 %v4453, %v4455
      %v4457 = vrot.slane %v4449, %v4456
      %v4459 = vunpack.c.l.s4 1934713408
      %v4460 = vunpack.c.0.s8 %v4459
      %v4461 = vlaneseq
      %v4462 = vshrl.u32 %v4461, 7
      %v4463 = vsub.s32 %v4460, %v4462
      %v4464 = vrot.slane %v4450, %v4463
      %v4465 = vcombine.low %v4409, %v4425
      %v4466 = vcombine.high %v4409, %v4425
      %v4468 = vunpack.c.l.s4 1934713408
      %v4469 = vunpack.c.0.s8 %v4468
      %v4470 = vlaneseq
      %v4471 = vshrl.u32 %v4470, 7
      %v4472 = vsub.s32 %v4469, %v4471
      %v4473 = vrot.slane %v4465, %v4472
      %v4475 = vunpack.c.l.s4 1934713408
      %v4476 = vunpack.c.0.s8 %v4475
      %v4477 = vlaneseq
      %v4478 = vshrl.u32 %v4477, 7
      %v4479 = vsub.s32 %v4476, %v4478
      %v4480 = vrot.slane %v4466, %v4479
      %v4481 = vcombine.low %v4416, %v4432
      %v4482 = vcombine.high %v4416, %v4432
      %v4484 = vunpack.c.l.s4 1934713408
      %v4485 = vunpack.c.0.s8 %v4484
      %v4486 = vlaneseq
      %v4487 = vshrl.u32 %v4486, 7
      %v4488 = vsub.s32 %v4485, %v4487
      %v4489 = vrot.slane %v4481, %v4488
      %v4491 = vunpack.c.l.s4 1934713408
      %v4492 = vunpack.c.0.s8 %v4491
      %v4493 = vlaneseq
      %v4494 = vshrl.u32 %v4493, 7
      %v4495 = vsub.s32 %v4492, %v4494
      %v4496 = vrot.slane %v4482, %v4495
      %v4497 = vcombine.low %v4441, %v4473
      %v4498 = vcombine.high %v4441, %v4473
      %v4499 = vcombine.low %v4448, %v4480
      %v4500 = vcombine.high %v4448, %v4480
      %v4501 = vcombine.low %v4457, %v4489
      %v4502 = vcombine.high %v4457, %v4489
      %v4503 = vcombine.low %v4464, %v4496
      %v4504 = vcombine.high %v4464, %v4496
      %v4505 = vcombine.low %v540, %v550
      %v4506 = vcombine.high %v540, %v550
      %v4508 = vunpack.c.l.s4 1983009808
      %v4509 = vunpack.c.0.s8 %v4508
      %v4510 = vlaneseq
      %v4511 = vshrl.u32 %v4510, 7
      %v4512 = vsub.s32 %v4509, %v4511
      %v4513 = vrot.slane %v4505, %v4512
      %v4515 = vunpack.c.l.s4 1983009808
      %v4516 = vunpack.c.0.s8 %v4515
      %v4517 = vlaneseq
      %v4518 = vshrl.u32 %v4517, 7
      %v4519 = vsub.s32 %v4516, %v4518
      %v4520 = vrot.slane %v4506, %v4519
      %v4521 = vcombine.low %v545, %v555
      %v4522 = vcombine.high %v545, %v555
      %v4524 = vunpack.c.l.s4 1983009808
      %v4525 = vunpack.c.0.s8 %v4524
      %v4526 = vlaneseq
      %v4527 = vshrl.u32 %v4526, 7
      %v4528 = vsub.s32 %v4525, %v4527
      %v4529 = vrot.slane %v4521, %v4528
      %v4531 = vunpack.c.l.s4 1983009808
      %v4532 = vunpack.c.0.s8 %v4531
      %v4533 = vlaneseq
      %v4534 = vshrl.u32 %v4533, 7
      %v4535 = vsub.s32 %v4532, %v4534
      %v4536 = vrot.slane %v4522, %v4535
      %v4537 = vcombine.low %v560, %v570
      %v4538 = vcombine.high %v560, %v570
      %v4540 = vunpack.c.l.s4 1983009808
      %v4541 = vunpack.c.0.s8 %v4540
      %v4542 = vlaneseq
      %v4543 = vshrl.u32 %v4542, 7
      %v4544 = vsub.s32 %v4541, %v4543
      %v4545 = vrot.slane %v4537, %v4544
      %v4547 = vunpack.c.l.s4 1983009808
      %v4548 = vunpack.c.0.s8 %v4547
      %v4549 = vlaneseq
      %v4550 = vshrl.u32 %v4549, 7
      %v4551 = vsub.s32 %v4548, %v4550
      %v4552 = vrot.slane %v4538, %v4551
      %v4553 = vcombine.low %v565, %v575
      %v4554 = vcombine.high %v565, %v575
      %v4556 = vunpack.c.l.s4 1983009808
      %v4557 = vunpack.c.0.s8 %v4556
      %v4558 = vlaneseq
      %v4559 = vshrl.u32 %v4558, 7
      %v4560 = vsub.s32 %v4557, %v4559
      %v4561 = vrot.slane %v4553, %v4560
      %v4563 = vunpack.c.l.s4 1983009808
      %v4564 = vunpack.c.0.s8 %v4563
      %v4565 = vlaneseq
      %v4566 = vshrl.u32 %v4565, 7
      %v4567 = vsub.s32 %v4564, %v4566
      %v4568 = vrot.slane %v4554, %v4567
      %v4569 = vcombine.low %v4513, %v4529
      %v4570 = vcombine.high %v4513, %v4529
      %v4572 = vunpack.c.l.s4 1934713408
      %v4573 = vunpack.c.0.s8 %v4572
      %v4574 = vlaneseq
      %v4575 = vshrl.u32 %v4574, 7
      %v4576 = vsub.s32 %v4573, %v4575
      %v4577 = vrot.slane %v4569, %v4576
      %v4579 = vunpack.c.l.s4 1934713408
      %v4580 = vunpack.c.0.s8 %v4579
      %v4581 = vlaneseq
      %v4582 = vshrl.u32 %v4581, 7
      %v4583 = vsub.s32 %v4580, %v4582
      %v4584 = vrot.slane %v4570, %v4583
      %v4585 = vcombine.low %v4520, %v4536
      %v4586 = vcombine.high %v4520, %v4536
      %v4588 = vunpack.c.l.s4 1934713408
      %v4589 = vunpack.c.0.s8 %v4588
      %v4590 = vlaneseq
      %v4591 = vshrl.u32 %v4590, 7
      %v4592 = vsub.s32 %v4589, %v4591
      %v4593 = vrot.slane %v4585, %v4592
      %v4595 = vunpack.c.l.s4 1934713408
      %v4596 = vunpack.c.0.s8 %v4595
      %v4597 = vlaneseq
      %v4598 = vshrl.u32 %v4597, 7
      %v4599 = vsub.s32 %v4596, %v4598
      %v4600 = vrot.slane %v4586, %v4599
      %v4601 = vcombine.low %v4545, %v4561
      %v4602 = vcombine.high %v4545, %v4561
      %v4604 = vunpack.c.l.s4 1934713408
      %v4605 = vunpack.c.0.s8 %v4604
      %v4606 = vlaneseq
      %v4607 = vshrl.u32 %v4606, 7
      %v4608 = vsub.s32 %v4605, %v4607
      %v4609 = vrot.slane %v4601, %v4608
      %v4611 = vunpack.c.l.s4 1934713408
      %v4612 = vunpack.c.0.s8 %v4611
      %v4613 = vlaneseq
      %v4614 = vshrl.u32 %v4613, 7
      %v4615 = vsub.s32 %v4612, %v4614
      %v4616 = vrot.slane %v4602, %v4615
      %v4617 = vcombine.low %v4552, %v4568
      %v4618 = vcombine.high %v4552, %v4568
      %v4620 = vunpack.c.l.s4 1934713408
      %v4621 = vunpack.c.0.s8 %v4620
      %v4622 = vlaneseq
      %v4623 = vshrl.u32 %v4622, 7
      %v4624 = vsub.s32 %v4621, %v4623
      %v4625 = vrot.slane %v4617, %v4624
      %v4627 = vunpack.c.l.s4 1934713408
      %v4628 = vunpack.c.0.s8 %v4627
      %v4629 = vlaneseq
      %v4630 = vshrl.u32 %v4629, 7
      %v4631 = vsub.s32 %v4628, %v4630
      %v4632 = vrot.slane %v4618, %v4631
      %v4633 = vcombine.low %v4577, %v4609
      %v4634 = vcombine.high %v4577, %v4609
      %v4635 = vcombine.low %v4584, %v4616
      %v4636 = vcombine.high %v4584, %v4616
      %v4637 = vcombine.low %v4593, %v4625
      %v4638 = vcombine.high %v4593, %v4625
      %v4639 = vcombine.low %v4600, %v4632
      %v4640 = vcombine.high %v4600, %v4632
      %v4641 = vcombine.low %v611, %v619
      %v4642 = vcombine.high %v611, %v619
      %v4644 = vunpack.c.l.s4 1983009808
      %v4645 = vunpack.c.0.s8 %v4644
      %v4646 = vlaneseq
      %v4647 = vshrl.u32 %v4646, 7
      %v4648 = vsub.s32 %v4645, %v4647
      %v4649 = vrot.slane %v4641, %v4648
      %v4651 = vunpack.c.l.s4 1983009808
      %v4652 = vunpack.c.0.s8 %v4651
      %v4653 = vlaneseq
      %v4654 = vshrl.u32 %v4653, 7
      %v4655 = vsub.s32 %v4652, %v4654
      %v4656 = vrot.slane %v4642, %v4655
      %v4657 = vcombine.low %v615, %v623
      %v4658 = vcombine.high %v615, %v623
      %v4660 = vunpack.c.l.s4 1983009808
      %v4661 = vunpack.c.0.s8 %v4660
      %v4662 = vlaneseq
      %v4663 = vshrl.u32 %v4662, 7
      %v4664 = vsub.s32 %v4661, %v4663
      %v4665 = vrot.slane %v4657, %v4664
      %v4667 = vunpack.c.l.s4 1983009808
      %v4668 = vunpack.c.0.s8 %v4667
      %v4669 = vlaneseq
      %v4670 = vshrl.u32 %v4669, 7
      %v4671 = vsub.s32 %v4668, %v4670
      %v4672 = vrot.slane %v4658, %v4671
      %v4673 = vcombine.low %v627, %v635
      %v4674 = vcombine.high %v627, %v635
      %v4676 = vunpack.c.l.s4 1983009808
      %v4677 = vunpack.c.0.s8 %v4676
      %v4678 = vlaneseq
      %v4679 = vshrl.u32 %v4678, 7
      %v4680 = vsub.s32 %v4677, %v4679
      %v4681 = vrot.slane %v4673, %v4680
      %v4683 = vunpack.c.l.s4 1983009808
      %v4684 = vunpack.c.0.s8 %v4683
      %v4685 = vlaneseq
      %v4686 = vshrl.u32 %v4685, 7
      %v4687 = vsub.s32 %v4684, %v4686
      %v4688 = vrot.slane %v4674, %v4687
      %v4689 = vcombine.low %v631, %v639
      %v4690 = vcombine.high %v631, %v639
      %v4692 = vunpack.c.l.s4 1983009808
      %v4693 = vunpack.c.0.s8 %v4692
      %v4694 = vlaneseq
      %v4695 = vshrl.u32 %v4694, 7
      %v4696 = vsub.s32 %v4693, %v4695
      %v4697 = vrot.slane %v4689, %v4696
      %v4699 = vunpack.c.l.s4 1983009808
      %v4700 = vunpack.c.0.s8 %v4699
      %v4701 = vlaneseq
      %v4702 = vshrl.u32 %v4701, 7
      %v4703 = vsub.s32 %v4700, %v4702
      %v4704 = vrot.slane %v4690, %v4703
      %v4705 = vcombine.low %v4649, %v4665
      %v4706 = vcombine.high %v4649, %v4665
      %v4708 = vunpack.c.l.s4 1934713408
      %v4709 = vunpack.c.0.s8 %v4708
      %v4710 = vlaneseq
      %v4711 = vshrl.u32 %v4710, 7
      %v4712 = vsub.s32 %v4709, %v4711
      %v4713 = vrot.slane %v4705, %v4712
      %v4715 = vunpack.c.l.s4 1934713408
      %v4716 = vunpack.c.0.s8 %v4715
      %v4717 = vlaneseq
      %v4718 = vshrl.u32 %v4717, 7
      %v4719 = vsub.s32 %v4716, %v4718
      %v4720 = vrot.slane %v4706, %v4719
      %v4721 = vcombine.low %v4656, %v4672
      %v4722 = vcombine.high %v4656, %v4672
      %v4724 = vunpack.c.l.s4 1934713408
      %v4725 = vunpack.c.0.s8 %v4724
      %v4726 = vlaneseq
      %v4727 = vshrl.u32 %v4726, 7
      %v4728 = vsub.s32 %v4725, %v4727
      %v4729 = vrot.slane %v4721, %v4728
      %v4731 = vunpack.c.l.s4 1934713408
      %v4732 = vunpack.c.0.s8 %v4731
      %v4733 = vlaneseq
      %v4734 = vshrl.u32 %v4733, 7
      %v4735 = vsub.s32 %v4732, %v4734
      %v4736 = vrot.slane %v4722, %v4735
      %v4737 = vcombine.low %v4681, %v4697
      %v4738 = vcombine.high %v4681, %v4697
      %v4740 = vunpack.c.l.s4 1934713408
      %v4741 = vunpack.c.0.s8 %v4740
      %v4742 = vlaneseq
      %v4743 = vshrl.u32 %v4742, 7
      %v4744 = vsub.s32 %v4741, %v4743
      %v4745 = vrot.slane %v4737, %v4744
      %v4747 = vunpack.c.l.s4 1934713408
      %v4748 = vunpack.c.0.s8 %v4747
      %v4749 = vlaneseq
      %v4750 = vshrl.u32 %v4749, 7
      %v4751 = vsub.s32 %v4748, %v4750
      %v4752 = vrot.slane %v4738, %v4751
      %v4753 = vcombine.low %v4688, %v4704
      %v4754 = vcombine.high %v4688, %v4704
      %v4756 = vunpack.c.l.s4 1934713408
      %v4757 = vunpack.c.0.s8 %v4756
      %v4758 = vlaneseq
      %v4759 = vshrl.u32 %v4758, 7
      %v4760 = vsub.s32 %v4757, %v4759
      %v4761 = vrot.slane %v4753, %v4760
      %v4763 = vunpack.c.l.s4 1934713408
      %v4764 = vunpack.c.0.s8 %v4763
      %v4765 = vlaneseq
      %v4766 = vshrl.u32 %v4765, 7
      %v4767 = vsub.s32 %v4764, %v4766
      %v4768 = vrot.slane %v4754, %v4767
      %v4769 = vcombine.low %v4713, %v4745
      %v4770 = vcombine.high %v4713, %v4745
      %v4771 = vcombine.low %v4720, %v4752
      %v4772 = vcombine.high %v4720, %v4752
      %v4773 = vcombine.low %v4729, %v4761
      %v4774 = vcombine.high %v4729, %v4761
      %v4775 = vcombine.low %v4736, %v4768
      %v4776 = vcombine.high %v4736, %v4768
      %v4777 = vcombine.low %v643, %v651
      %v4778 = vcombine.high %v643, %v651
      %v4780 = vunpack.c.l.s4 1983009808
      %v4781 = vunpack.c.0.s8 %v4780
      %v4782 = vlaneseq
      %v4783 = vshrl.u32 %v4782, 7
      %v4784 = vsub.s32 %v4781, %v4783
      %v4785 = vrot.slane %v4777, %v4784
      %v4787 = vunpack.c.l.s4 1983009808
      %v4788 = vunpack.c.0.s8 %v4787
      %v4789 = vlaneseq
      %v4790 = vshrl.u32 %v4789, 7
      %v4791 = vsub.s32 %v4788, %v4790
      %v4792 = vrot.slane %v4778, %v4791
      %v4793 = vcombine.low %v647, %v655
      %v4794 = vcombine.high %v647, %v655
      %v4796 = vunpack.c.l.s4 1983009808
      %v4797 = vunpack.c.0.s8 %v4796
      %v4798 = vlaneseq
      %v4799 = vshrl.u32 %v4798, 7
      %v4800 = vsub.s32 %v4797, %v4799
      %v4801 = vrot.slane %v4793, %v4800
      %v4803 = vunpack.c.l.s4 1983009808
      %v4804 = vunpack.c.0.s8 %v4803
      %v4805 = vlaneseq
      %v4806 = vshrl.u32 %v4805, 7
      %v4807 = vsub.s32 %v4804, %v4806
      %v4808 = vrot.slane %v4794, %v4807
      %v4809 = vcombine.low %v659, %v667
      %v4810 = vcombine.high %v659, %v667
      %v4812 = vunpack.c.l.s4 1983009808
      %v4813 = vunpack.c.0.s8 %v4812
      %v4814 = vlaneseq
      %v4815 = vshrl.u32 %v4814, 7
      %v4816 = vsub.s32 %v4813, %v4815
      %v4817 = vrot.slane %v4809, %v4816
      %v4819 = vunpack.c.l.s4 1983009808
      %v4820 = vunpack.c.0.s8 %v4819
      %v4821 = vlaneseq
      %v4822 = vshrl.u32 %v4821, 7
      %v4823 = vsub.s32 %v4820, %v4822
      %v4824 = vrot.slane %v4810, %v4823
      %v4825 = vcombine.low %v663, %v671
      %v4826 = vcombine.high %v663, %v671
      %v4828 = vunpack.c.l.s4 1983009808
      %v4829 = vunpack.c.0.s8 %v4828
      %v4830 = vlaneseq
      %v4831 = vshrl.u32 %v4830, 7
      %v4832 = vsub.s32 %v4829, %v4831
      %v4833 = vrot.slane %v4825, %v4832
      %v4835 = vunpack.c.l.s4 1983009808
      %v4836 = vunpack.c.0.s8 %v4835
      %v4837 = vlaneseq
      %v4838 = vshrl.u32 %v4837, 7
      %v4839 = vsub.s32 %v4836, %v4838
      %v4840 = vrot.slane %v4826, %v4839
      %v4841 = vcombine.low %v4785, %v4801
      %v4842 = vcombine.high %v4785, %v4801
      %v4844 = vunpack.c.l.s4 1934713408
      %v4845 = vunpack.c.0.s8 %v4844
      %v4846 = vlaneseq
      %v4847 = vshrl.u32 %v4846, 7
      %v4848 = vsub.s32 %v4845, %v4847
      %v4849 = vrot.slane %v4841, %v4848
      %v4851 = vunpack.c.l.s4 1934713408
      %v4852 = vunpack.c.0.s8 %v4851
      %v4853 = vlaneseq
      %v4854 = vshrl.u32 %v4853, 7
      %v4855 = vsub.s32 %v4852, %v4854
      %v4856 = vrot.slane %v4842, %v4855
      %v4857 = vcombine.low %v4792, %v4808
      %v4858 = vcombine.high %v4792, %v4808
      %v4860 = vunpack.c.l.s4 1934713408
      %v4861 = vunpack.c.0.s8 %v4860
      %v4862 = vlaneseq
      %v4863 = vshrl.u32 %v4862, 7
      %v4864 = vsub.s32 %v4861, %v4863
      %v4865 = vrot.slane %v4857, %v4864
      %v4867 = vunpack.c.l.s4 1934713408
      %v4868 = vunpack.c.0.s8 %v4867
      %v4869 = vlaneseq
      %v4870 = vshrl.u32 %v4869, 7
      %v4871 = vsub.s32 %v4868, %v4870
      %v4872 = vrot.slane %v4858, %v4871
      %v4873 = vcombine.low %v4817, %v4833
      %v4874 = vcombine.high %v4817, %v4833
      %v4876 = vunpack.c.l.s4 1934713408
      %v4877 = vunpack.c.0.s8 %v4876
      %v4878 = vlaneseq
      %v4879 = vshrl.u32 %v4878, 7
      %v4880 = vsub.s32 %v4877, %v4879
      %v4881 = vrot.slane %v4873, %v4880
      %v4883 = vunpack.c.l.s4 1934713408
      %v4884 = vunpack.c.0.s8 %v4883
      %v4885 = vlaneseq
      %v4886 = vshrl.u32 %v4885, 7
      %v4887 = vsub.s32 %v4884, %v4886
      %v4888 = vrot.slane %v4874, %v4887
      %v4889 = vcombine.low %v4824, %v4840
      %v4890 = vcombine.high %v4824, %v4840
      %v4892 = vunpack.c.l.s4 1934713408
      %v4893 = vunpack.c.0.s8 %v4892
      %v4894 = vlaneseq
      %v4895 = vshrl.u32 %v4894, 7
      %v4896 = vsub.s32 %v4893, %v4895
      %v4897 = vrot.slane %v4889, %v4896
      %v4899 = vunpack.c.l.s4 1934713408
      %v4900 = vunpack.c.0.s8 %v4899
      %v4901 = vlaneseq
      %v4902 = vshrl.u32 %v4901, 7
      %v4903 = vsub.s32 %v4900, %v4902
      %v4904 = vrot.slane %v4890, %v4903
      %v4905 = vcombine.low %v4849, %v4881
      %v4906 = vcombine.high %v4849, %v4881
      %v4907 = vcombine.low %v4856, %v4888
      %v4908 = vcombine.high %v4856, %v4888
      %v4909 = vcombine.low %v4865, %v4897
      %v4910 = vcombine.high %v4865, %v4897
      %v4911 = vcombine.low %v4872, %v4904
      %v4912 = vcombine.high %v4872, %v4904
      %v4913 = vcombine.low %v707, %v715
      %v4914 = vcombine.high %v707, %v715
      %v4916 = vunpack.c.l.s4 1983009808
      %v4917 = vunpack.c.0.s8 %v4916
      %v4918 = vlaneseq
      %v4919 = vshrl.u32 %v4918, 7
      %v4920 = vsub.s32 %v4917, %v4919
      %v4921 = vrot.slane %v4913, %v4920
      %v4923 = vunpack.c.l.s4 1983009808
      %v4924 = vunpack.c.0.s8 %v4923
      %v4925 = vlaneseq
      %v4926 = vshrl.u32 %v4925, 7
      %v4927 = vsub.s32 %v4924, %v4926
      %v4928 = vrot.slane %v4914, %v4927
      %v4929 = vcombine.low %v711, %v719
      %v4930 = vcombine.high %v711, %v719
      %v4932 = vunpack.c.l.s4 1983009808
      %v4933 = vunpack.c.0.s8 %v4932
      %v4934 = vlaneseq
      %v4935 = vshrl.u32 %v4934, 7
      %v4936 = vsub.s32 %v4933, %v4935
      %v4937 = vrot.slane %v4929, %v4936
      %v4939 = vunpack.c.l.s4 1983009808
      %v4940 = vunpack.c.0.s8 %v4939
      %v4941 = vlaneseq
      %v4942 = vshrl.u32 %v4941, 7
      %v4943 = vsub.s32 %v4940, %v4942
      %v4944 = vrot.slane %v4930, %v4943
      %v4945 = vcombine.low %v723, %v731
      %v4946 = vcombine.high %v723, %v731
      %v4948 = vunpack.c.l.s4 1983009808
      %v4949 = vunpack.c.0.s8 %v4948
      %v4950 = vlaneseq
      %v4951 = vshrl.u32 %v4950, 7
      %v4952 = vsub.s32 %v4949, %v4951
      %v4953 = vrot.slane %v4945, %v4952
      %v4955 = vunpack.c.l.s4 1983009808
      %v4956 = vunpack.c.0.s8 %v4955
      %v4957 = vlaneseq
      %v4958 = vshrl.u32 %v4957, 7
      %v4959 = vsub.s32 %v4956, %v4958
      %v4960 = vrot.slane %v4946, %v4959
      %v4961 = vcombine.low %v727, %v735
      %v4962 = vcombine.high %v727, %v735
      %v4964 = vunpack.c.l.s4 1983009808
      %v4965 = vunpack.c.0.s8 %v4964
      %v4966 = vlaneseq
      %v4967 = vshrl.u32 %v4966, 7
      %v4968 = vsub.s32 %v4965, %v4967
      %v4969 = vrot.slane %v4961, %v4968
      %v4971 = vunpack.c.l.s4 1983009808
      %v4972 = vunpack.c.0.s8 %v4971
      %v4973 = vlaneseq
      %v4974 = vshrl.u32 %v4973, 7
      %v4975 = vsub.s32 %v4972, %v4974
      %v4976 = vrot.slane %v4962, %v4975
      %v4977 = vcombine.low %v4921, %v4937
      %v4978 = vcombine.high %v4921, %v4937
      %v4980 = vunpack.c.l.s4 1934713408
      %v4981 = vunpack.c.0.s8 %v4980
      %v4982 = vlaneseq
      %v4983 = vshrl.u32 %v4982, 7
      %v4984 = vsub.s32 %v4981, %v4983
      %v4985 = vrot.slane %v4977, %v4984
      %v4987 = vunpack.c.l.s4 1934713408
      %v4988 = vunpack.c.0.s8 %v4987
      %v4989 = vlaneseq
      %v4990 = vshrl.u32 %v4989, 7
      %v4991 = vsub.s32 %v4988, %v4990
      %v4992 = vrot.slane %v4978, %v4991
      %v4993 = vcombine.low %v4928, %v4944
      %v4994 = vcombine.high %v4928, %v4944
      %v4996 = vunpack.c.l.s4 1934713408
      %v4997 = vunpack.c.0.s8 %v4996
      %v4998 = vlaneseq
      %v4999 = vshrl.u32 %v4998, 7
      %v5000 = vsub.s32 %v4997, %v4999
      %v5001 = vrot.slane %v4993, %v5000
      %v5003 = vunpack.c.l.s4 1934713408
      %v5004 = vunpack.c.0.s8 %v5003
      %v5005 = vlaneseq
      %v5006 = vshrl.u32 %v5005, 7
      %v5007 = vsub.s32 %v5004, %v5006
      %v5008 = vrot.slane %v4994, %v5007
      %v5009 = vcombine.low %v4953, %v4969
      %v5010 = vcombine.high %v4953, %v4969
      %v5012 = vunpack.c.l.s4 1934713408
      %v5013 = vunpack.c.0.s8 %v5012
      %v5014 = vlaneseq
      %v5015 = vshrl.u32 %v5014, 7
      %v5016 = vsub.s32 %v5013, %v5015
      %v5017 = vrot.slane %v5009, %v5016
      %v5019 = vunpack.c.l.s4 1934713408
      %v5020 = vunpack.c.0.s8 %v5019
      %v5021 = vlaneseq
      %v5022 = vshrl.u32 %v5021, 7
      %v5023 = vsub.s32 %v5020, %v5022
      %v5024 = vrot.slane %v5010, %v5023
      %v5025 = vcombine.low %v4960, %v4976
      %v5026 = vcombine.high %v4960, %v4976
      %v5028 = vunpack.c.l.s4 1934713408
      %v5029 = vunpack.c.0.s8 %v5028
      %v5030 = vlaneseq
      %v5031 = vshrl.u32 %v5030, 7
      %v5032 = vsub.s32 %v5029, %v5031
      %v5033 = vrot.slane %v5025, %v5032
      %v5035 = vunpack.c.l.s4 1934713408
      %v5036 = vunpack.c.0.s8 %v5035
      %v5037 = vlaneseq
      %v5038 = vshrl.u32 %v5037, 7
      %v5039 = vsub.s32 %v5036, %v5038
      %v5040 = vrot.slane %v5026, %v5039
      %v5041 = vcombine.low %v4985, %v5017
      %v5042 = vcombine.high %v4985, %v5017
      %v5043 = vcombine.low %v4992, %v5024
      %v5044 = vcombine.high %v4992, %v5024
      %v5045 = vcombine.low %v5001, %v5033
      %v5046 = vcombine.high %v5001, %v5033
      %v5047 = vcombine.low %v5008, %v5040
      %v5048 = vcombine.high %v5008, %v5040
      %v5049 = vcombine.low %v739, %v747
      %v5050 = vcombine.high %v739, %v747
      %v5052 = vunpack.c.l.s4 1983009808
      %v5053 = vunpack.c.0.s8 %v5052
      %v5054 = vlaneseq
      %v5055 = vshrl.u32 %v5054, 7
      %v5056 = vsub.s32 %v5053, %v5055
      %v5057 = vrot.slane %v5049, %v5056
      %v5059 = vunpack.c.l.s4 1983009808
      %v5060 = vunpack.c.0.s8 %v5059
      %v5061 = vlaneseq
      %v5062 = vshrl.u32 %v5061, 7
      %v5063 = vsub.s32 %v5060, %v5062
      %v5064 = vrot.slane %v5050, %v5063
      %v5065 = vcombine.low %v743, %v751
      %v5066 = vcombine.high %v743, %v751
      %v5068 = vunpack.c.l.s4 1983009808
      %v5069 = vunpack.c.0.s8 %v5068
      %v5070 = vlaneseq
      %v5071 = vshrl.u32 %v5070, 7
      %v5072 = vsub.s32 %v5069, %v5071
      %v5073 = vrot.slane %v5065, %v5072
      %v5075 = vunpack.c.l.s4 1983009808
      %v5076 = vunpack.c.0.s8 %v5075
      %v5077 = vlaneseq
      %v5078 = vshrl.u32 %v5077, 7
      %v5079 = vsub.s32 %v5076, %v5078
      %v5080 = vrot.slane %v5066, %v5079
      %v5081 = vcombine.low %v755, %v763
      %v5082 = vcombine.high %v755, %v763
      %v5084 = vunpack.c.l.s4 1983009808
      %v5085 = vunpack.c.0.s8 %v5084
      %v5086 = vlaneseq
      %v5087 = vshrl.u32 %v5086, 7
      %v5088 = vsub.s32 %v5085, %v5087
      %v5089 = vrot.slane %v5081, %v5088
      %v5091 = vunpack.c.l.s4 1983009808
      %v5092 = vunpack.c.0.s8 %v5091
      %v5093 = vlaneseq
      %v5094 = vshrl.u32 %v5093, 7
      %v5095 = vsub.s32 %v5092, %v5094
      %v5096 = vrot.slane %v5082, %v5095
      %v5097 = vcombine.low %v759, %v767
      %v5098 = vcombine.high %v759, %v767
      %v5100 = vunpack.c.l.s4 1983009808
      %v5101 = vunpack.c.0.s8 %v5100
      %v5102 = vlaneseq
      %v5103 = vshrl.u32 %v5102, 7
      %v5104 = vsub.s32 %v5101, %v5103
      %v5105 = vrot.slane %v5097, %v5104
      %v5107 = vunpack.c.l.s4 1983009808
      %v5108 = vunpack.c.0.s8 %v5107
      %v5109 = vlaneseq
      %v5110 = vshrl.u32 %v5109, 7
      %v5111 = vsub.s32 %v5108, %v5110
      %v5112 = vrot.slane %v5098, %v5111
      %v5113 = vcombine.low %v5057, %v5073
      %v5114 = vcombine.high %v5057, %v5073
      %v5116 = vunpack.c.l.s4 1934713408
      %v5117 = vunpack.c.0.s8 %v5116
      %v5118 = vlaneseq
      %v5119 = vshrl.u32 %v5118, 7
      %v5120 = vsub.s32 %v5117, %v5119
      %v5121 = vrot.slane %v5113, %v5120
      %v5123 = vunpack.c.l.s4 1934713408
      %v5124 = vunpack.c.0.s8 %v5123
      %v5125 = vlaneseq
      %v5126 = vshrl.u32 %v5125, 7
      %v5127 = vsub.s32 %v5124, %v5126
      %v5128 = vrot.slane %v5114, %v5127
      %v5129 = vcombine.low %v5064, %v5080
      %v5130 = vcombine.high %v5064, %v5080
      %v5132 = vunpack.c.l.s4 1934713408
      %v5133 = vunpack.c.0.s8 %v5132
      %v5134 = vlaneseq
      %v5135 = vshrl.u32 %v5134, 7
      %v5136 = vsub.s32 %v5133, %v5135
      %v5137 = vrot.slane %v5129, %v5136
      %v5139 = vunpack.c.l.s4 1934713408
      %v5140 = vunpack.c.0.s8 %v5139
      %v5141 = vlaneseq
      %v5142 = vshrl.u32 %v5141, 7
      %v5143 = vsub.s32 %v5140, %v5142
      %v5144 = vrot.slane %v5130, %v5143
      %v5145 = vcombine.low %v5089, %v5105
      %v5146 = vcombine.high %v5089, %v5105
      %v5148 = vunpack.c.l.s4 1934713408
      %v5149 = vunpack.c.0.s8 %v5148
      %v5150 = vlaneseq
      %v5151 = vshrl.u32 %v5150, 7
      %v5152 = vsub.s32 %v5149, %v5151
      %v5153 = vrot.slane %v5145, %v5152
      %v5155 = vunpack.c.l.s4 1934713408
      %v5156 = vunpack.c.0.s8 %v5155
      %v5157 = vlaneseq
      %v5158 = vshrl.u32 %v5157, 7
      %v5159 = vsub.s32 %v5156, %v5158
      %v5160 = vrot.slane %v5146, %v5159
      %v5161 = vcombine.low %v5096, %v5112
      %v5162 = vcombine.high %v5096, %v5112
      %v5164 = vunpack.c.l.s4 1934713408
      %v5165 = vunpack.c.0.s8 %v5164
      %v5166 = vlaneseq
      %v5167 = vshrl.u32 %v5166, 7
      %v5168 = vsub.s32 %v5165, %v5167
      %v5169 = vrot.slane %v5161, %v5168
      %v5171 = vunpack.c.l.s4 1934713408
      %v5172 = vunpack.c.0.s8 %v5171
      %v5173 = vlaneseq
      %v5174 = vshrl.u32 %v5173, 7
      %v5175 = vsub.s32 %v5172, %v5174
      %v5176 = vrot.slane %v5162, %v5175
      %v5177 = vcombine.low %v5121, %v5153
      %v5178 = vcombine.high %v5121, %v5153
      %v5179 = vcombine.low %v5128, %v5160
      %v5180 = vcombine.high %v5128, %v5160
      %v5181 = vcombine.low %v5137, %v5169
      %v5182 = vcombine.high %v5137, %v5169
      %v5183 = vcombine.low %v5144, %v5176
      %v5184 = vcombine.high %v5144, %v5176
      %v5185 = vcombine.low %v805, %v815
      %v5186 = vcombine.high %v805, %v815
      %v5188 = vunpack.c.l.s4 1983009808
      %v5189 = vunpack.c.0.s8 %v5188
      %v5190 = vlaneseq
      %v5191 = vshrl.u32 %v5190, 7
      %v5192 = vsub.s32 %v5189, %v5191
      %v5193 = vrot.slane %v5185, %v5192
      %v5195 = vunpack.c.l.s4 1983009808
      %v5196 = vunpack.c.0.s8 %v5195
      %v5197 = vlaneseq
      %v5198 = vshrl.u32 %v5197, 7
      %v5199 = vsub.s32 %v5196, %v5198
      %v5200 = vrot.slane %v5186, %v5199
      %v5201 = vcombine.low %v810, %v820
      %v5202 = vcombine.high %v810, %v820
      %v5204 = vunpack.c.l.s4 1983009808
      %v5205 = vunpack.c.0.s8 %v5204
      %v5206 = vlaneseq
      %v5207 = vshrl.u32 %v5206, 7
      %v5208 = vsub.s32 %v5205, %v5207
      %v5209 = vrot.slane %v5201, %v5208
      %v5211 = vunpack.c.l.s4 1983009808
      %v5212 = vunpack.c.0.s8 %v5211
      %v5213 = vlaneseq
      %v5214 = vshrl.u32 %v5213, 7
      %v5215 = vsub.s32 %v5212, %v5214
      %v5216 = vrot.slane %v5202, %v5215
      %v5217 = vcombine.low %v825, %v835
      %v5218 = vcombine.high %v825, %v835
      %v5220 = vunpack.c.l.s4 1983009808
      %v5221 = vunpack.c.0.s8 %v5220
      %v5222 = vlaneseq
      %v5223 = vshrl.u32 %v5222, 7
      %v5224 = vsub.s32 %v5221, %v5223
      %v5225 = vrot.slane %v5217, %v5224
      %v5227 = vunpack.c.l.s4 1983009808
      %v5228 = vunpack.c.0.s8 %v5227
      %v5229 = vlaneseq
      %v5230 = vshrl.u32 %v5229, 7
      %v5231 = vsub.s32 %v5228, %v5230
      %v5232 = vrot.slane %v5218, %v5231
      %v5233 = vcombine.low %v830, %v840
      %v5234 = vcombine.high %v830, %v840
      %v5236 = vunpack.c.l.s4 1983009808
      %v5237 = vunpack.c.0.s8 %v5236
      %v5238 = vlaneseq
      %v5239 = vshrl.u32 %v5238, 7
      %v5240 = vsub.s32 %v5237, %v5239
      %v5241 = vrot.slane %v5233, %v5240
      %v5243 = vunpack.c.l.s4 1983009808
      %v5244 = vunpack.c.0.s8 %v5243
      %v5245 = vlaneseq
      %v5246 = vshrl.u32 %v5245, 7
      %v5247 = vsub.s32 %v5244, %v5246
      %v5248 = vrot.slane %v5234, %v5247
      %v5249 = vcombine.low %v5193, %v5209
      %v5250 = vcombine.high %v5193, %v5209
      %v5252 = vunpack.c.l.s4 1934713408
      %v5253 = vunpack.c.0.s8 %v5252
      %v5254 = vlaneseq
      %v5255 = vshrl.u32 %v5254, 7
      %v5256 = vsub.s32 %v5253, %v5255
      %v5257 = vrot.slane %v5249, %v5256
      %v5259 = vunpack.c.l.s4 1934713408
      %v5260 = vunpack.c.0.s8 %v5259
      %v5261 = vlaneseq
      %v5262 = vshrl.u32 %v5261, 7
      %v5263 = vsub.s32 %v5260, %v5262
      %v5264 = vrot.slane %v5250, %v5263
      %v5265 = vcombine.low %v5200, %v5216
      %v5266 = vcombine.high %v5200, %v5216
      %v5268 = vunpack.c.l.s4 1934713408
      %v5269 = vunpack.c.0.s8 %v5268
      %v5270 = vlaneseq
      %v5271 = vshrl.u32 %v5270, 7
      %v5272 = vsub.s32 %v5269, %v5271
      %v5273 = vrot.slane %v5265, %v5272
      %v5275 = vunpack.c.l.s4 1934713408
      %v5276 = vunpack.c.0.s8 %v5275
      %v5277 = vlaneseq
      %v5278 = vshrl.u32 %v5277, 7
      %v5279 = vsub.s32 %v5276, %v5278
      %v5280 = vrot.slane %v5266, %v5279
      %v5281 = vcombine.low %v5225, %v5241
      %v5282 = vcombine.high %v5225, %v5241
      %v5284 = vunpack.c.l.s4 1934713408
      %v5285 = vunpack.c.0.s8 %v5284
      %v5286 = vlaneseq
      %v5287 = vshrl.u32 %v5286, 7
      %v5288 = vsub.s32 %v5285, %v5287
      %v5289 = vrot.slane %v5281, %v5288
      %v5291 = vunpack.c.l.s4 1934713408
      %v5292 = vunpack.c.0.s8 %v5291
      %v5293 = vlaneseq
      %v5294 = vshrl.u32 %v5293, 7
      %v5295 = vsub.s32 %v5292, %v5294
      %v5296 = vrot.slane %v5282, %v5295
      %v5297 = vcombine.low %v5232, %v5248
      %v5298 = vcombine.high %v5232, %v5248
      %v5300 = vunpack.c.l.s4 1934713408
      %v5301 = vunpack.c.0.s8 %v5300
      %v5302 = vlaneseq
      %v5303 = vshrl.u32 %v5302, 7
      %v5304 = vsub.s32 %v5301, %v5303
      %v5305 = vrot.slane %v5297, %v5304
      %v5307 = vunpack.c.l.s4 1934713408
      %v5308 = vunpack.c.0.s8 %v5307
      %v5309 = vlaneseq
      %v5310 = vshrl.u32 %v5309, 7
      %v5311 = vsub.s32 %v5308, %v5310
      %v5312 = vrot.slane %v5298, %v5311
      %v5313 = vcombine.low %v5257, %v5289
      %v5314 = vcombine.high %v5257, %v5289
      %v5315 = vcombine.low %v5264, %v5296
      %v5316 = vcombine.high %v5264, %v5296
      %v5317 = vcombine.low %v5273, %v5305
      %v5318 = vcombine.high %v5273, %v5305
      %v5319 = vcombine.low %v5280, %v5312
      %v5320 = vcombine.high %v5280, %v5312
      %v5321 = vcombine.low %v845, %v855
      %v5322 = vcombine.high %v845, %v855
      %v5324 = vunpack.c.l.s4 1983009808
      %v5325 = vunpack.c.0.s8 %v5324
      %v5326 = vlaneseq
      %v5327 = vshrl.u32 %v5326, 7
      %v5328 = vsub.s32 %v5325, %v5327
      %v5329 = vrot.slane %v5321, %v5328
      %v5331 = vunpack.c.l.s4 1983009808
      %v5332 = vunpack.c.0.s8 %v5331
      %v5333 = vlaneseq
      %v5334 = vshrl.u32 %v5333, 7
      %v5335 = vsub.s32 %v5332, %v5334
      %v5336 = vrot.slane %v5322, %v5335
      %v5337 = vcombine.low %v850, %v860
      %v5338 = vcombine.high %v850, %v860
      %v5340 = vunpack.c.l.s4 1983009808
      %v5341 = vunpack.c.0.s8 %v5340
      %v5342 = vlaneseq
      %v5343 = vshrl.u32 %v5342, 7
      %v5344 = vsub.s32 %v5341, %v5343
      %v5345 = vrot.slane %v5337, %v5344
      %v5347 = vunpack.c.l.s4 1983009808
      %v5348 = vunpack.c.0.s8 %v5347
      %v5349 = vlaneseq
      %v5350 = vshrl.u32 %v5349, 7
      %v5351 = vsub.s32 %v5348, %v5350
      %v5352 = vrot.slane %v5338, %v5351
      %v5353 = vcombine.low %v865, %v875
      %v5354 = vcombine.high %v865, %v875
      %v5356 = vunpack.c.l.s4 1983009808
      %v5357 = vunpack.c.0.s8 %v5356
      %v5358 = vlaneseq
      %v5359 = vshrl.u32 %v5358, 7
      %v5360 = vsub.s32 %v5357, %v5359
      %v5361 = vrot.slane %v5353, %v5360
      %v5363 = vunpack.c.l.s4 1983009808
      %v5364 = vunpack.c.0.s8 %v5363
      %v5365 = vlaneseq
      %v5366 = vshrl.u32 %v5365, 7
      %v5367 = vsub.s32 %v5364, %v5366
      %v5368 = vrot.slane %v5354, %v5367
      %v5369 = vcombine.low %v870, %v880
      %v5370 = vcombine.high %v870, %v880
      %v5372 = vunpack.c.l.s4 1983009808
      %v5373 = vunpack.c.0.s8 %v5372
      %v5374 = vlaneseq
      %v5375 = vshrl.u32 %v5374, 7
      %v5376 = vsub.s32 %v5373, %v5375
      %v5377 = vrot.slane %v5369, %v5376
      %v5379 = vunpack.c.l.s4 1983009808
      %v5380 = vunpack.c.0.s8 %v5379
      %v5381 = vlaneseq
      %v5382 = vshrl.u32 %v5381, 7
      %v5383 = vsub.s32 %v5380, %v5382
      %v5384 = vrot.slane %v5370, %v5383
      %v5385 = vcombine.low %v5329, %v5345
      %v5386 = vcombine.high %v5329, %v5345
      %v5388 = vunpack.c.l.s4 1934713408
      %v5389 = vunpack.c.0.s8 %v5388
      %v5390 = vlaneseq
      %v5391 = vshrl.u32 %v5390, 7
      %v5392 = vsub.s32 %v5389, %v5391
      %v5393 = vrot.slane %v5385, %v5392
      %v5395 = vunpack.c.l.s4 1934713408
      %v5396 = vunpack.c.0.s8 %v5395
      %v5397 = vlaneseq
      %v5398 = vshrl.u32 %v5397, 7
      %v5399 = vsub.s32 %v5396, %v5398
      %v5400 = vrot.slane %v5386, %v5399
      %v5401 = vcombine.low %v5336, %v5352
      %v5402 = vcombine.high %v5336, %v5352
      %v5404 = vunpack.c.l.s4 1934713408
      %v5405 = vunpack.c.0.s8 %v5404
      %v5406 = vlaneseq
      %v5407 = vshrl.u32 %v5406, 7
      %v5408 = vsub.s32 %v5405, %v5407
      %v5409 = vrot.slane %v5401, %v5408
      %v5411 = vunpack.c.l.s4 1934713408
      %v5412 = vunpack.c.0.s8 %v5411
      %v5413 = vlaneseq
      %v5414 = vshrl.u32 %v5413, 7
      %v5415 = vsub.s32 %v5412, %v5414
      %v5416 = vrot.slane %v5402, %v5415
      %v5417 = vcombine.low %v5361, %v5377
      %v5418 = vcombine.high %v5361, %v5377
      %v5420 = vunpack.c.l.s4 1934713408
      %v5421 = vunpack.c.0.s8 %v5420
      %v5422 = vlaneseq
      %v5423 = vshrl.u32 %v5422, 7
      %v5424 = vsub.s32 %v5421, %v5423
      %v5425 = vrot.slane %v5417, %v5424
      %v5427 = vunpack.c.l.s4 1934713408
      %v5428 = vunpack.c.0.s8 %v5427
      %v5429 = vlaneseq
      %v5430 = vshrl.u32 %v5429, 7
      %v5431 = vsub.s32 %v5428, %v5430
      %v5432 = vrot.slane %v5418, %v5431
      %v5433 = vcombine.low %v5368, %v5384
      %v5434 = vcombine.high %v5368, %v5384
      %v5436 = vunpack.c.l.s4 1934713408
      %v5437 = vunpack.c.0.s8 %v5436
      %v5438 = vlaneseq
      %v5439 = vshrl.u32 %v5438, 7
      %v5440 = vsub.s32 %v5437, %v5439
      %v5441 = vrot.slane %v5433, %v5440
      %v5443 = vunpack.c.l.s4 1934713408
      %v5444 = vunpack.c.0.s8 %v5443
      %v5445 = vlaneseq
      %v5446 = vshrl.u32 %v5445, 7
      %v5447 = vsub.s32 %v5444, %v5446
      %v5448 = vrot.slane %v5434, %v5447
      %v5449 = vcombine.low %v5393, %v5425
      %v5450 = vcombine.high %v5393, %v5425
      %v5451 = vcombine.low %v5400, %v5432
      %v5452 = vcombine.high %v5400, %v5432
      %v5453 = vcombine.low %v5409, %v5441
      %v5454 = vcombine.high %v5409, %v5441
      %v5455 = vcombine.low %v5416, %v5448
      %v5456 = vcombine.high %v5416, %v5448
      %v5457 = vcombine.low %v916, %v924
      %v5458 = vcombine.high %v916, %v924
      %v5460 = vunpack.c.l.s4 1983009808
      %v5461 = vunpack.c.0.s8 %v5460
      %v5462 = vlaneseq
      %v5463 = vshrl.u32 %v5462, 7
      %v5464 = vsub.s32 %v5461, %v5463
      %v5465 = vrot.slane %v5457, %v5464
      %v5467 = vunpack.c.l.s4 1983009808
      %v5468 = vunpack.c.0.s8 %v5467
      %v5469 = vlaneseq
      %v5470 = vshrl.u32 %v5469, 7
      %v5471 = vsub.s32 %v5468, %v5470
      %v5472 = vrot.slane %v5458, %v5471
      %v5473 = vcombine.low %v920, %v928
      %v5474 = vcombine.high %v920, %v928
      %v5476 = vunpack.c.l.s4 1983009808
      %v5477 = vunpack.c.0.s8 %v5476
      %v5478 = vlaneseq
      %v5479 = vshrl.u32 %v5478, 7
      %v5480 = vsub.s32 %v5477, %v5479
      %v5481 = vrot.slane %v5473, %v5480
      %v5483 = vunpack.c.l.s4 1983009808
      %v5484 = vunpack.c.0.s8 %v5483
      %v5485 = vlaneseq
      %v5486 = vshrl.u32 %v5485, 7
      %v5487 = vsub.s32 %v5484, %v5486
      %v5488 = vrot.slane %v5474, %v5487
      %v5489 = vcombine.low %v932, %v940
      %v5490 = vcombine.high %v932, %v940
      %v5492 = vunpack.c.l.s4 1983009808
      %v5493 = vunpack.c.0.s8 %v5492
      %v5494 = vlaneseq
      %v5495 = vshrl.u32 %v5494, 7
      %v5496 = vsub.s32 %v5493, %v5495
      %v5497 = vrot.slane %v5489, %v5496
      %v5499 = vunpack.c.l.s4 1983009808
      %v5500 = vunpack.c.0.s8 %v5499
      %v5501 = vlaneseq
      %v5502 = vshrl.u32 %v5501, 7
      %v5503 = vsub.s32 %v5500, %v5502
      %v5504 = vrot.slane %v5490, %v5503
      %v5505 = vcombine.low %v936, %v944
      %v5506 = vcombine.high %v936, %v944
      %v5508 = vunpack.c.l.s4 1983009808
      %v5509 = vunpack.c.0.s8 %v5508
      %v5510 = vlaneseq
      %v5511 = vshrl.u32 %v5510, 7
      %v5512 = vsub.s32 %v5509, %v5511
      %v5513 = vrot.slane %v5505, %v5512
      %v5515 = vunpack.c.l.s4 1983009808
      %v5516 = vunpack.c.0.s8 %v5515
      %v5517 = vlaneseq
      %v5518 = vshrl.u32 %v5517, 7
      %v5519 = vsub.s32 %v5516, %v5518
      %v5520 = vrot.slane %v5506, %v5519
      %v5521 = vcombine.low %v5465, %v5481
      %v5522 = vcombine.high %v5465, %v5481
      %v5524 = vunpack.c.l.s4 1934713408
      %v5525 = vunpack.c.0.s8 %v5524
      %v5526 = vlaneseq
      %v5527 = vshrl.u32 %v5526, 7
      %v5528 = vsub.s32 %v5525, %v5527
      %v5529 = vrot.slane %v5521, %v5528
      %v5531 = vunpack.c.l.s4 1934713408
      %v5532 = vunpack.c.0.s8 %v5531
      %v5533 = vlaneseq
      %v5534 = vshrl.u32 %v5533, 7
      %v5535 = vsub.s32 %v5532, %v5534
      %v5536 = vrot.slane %v5522, %v5535
      %v5537 = vcombine.low %v5472, %v5488
      %v5538 = vcombine.high %v5472, %v5488
      %v5540 = vunpack.c.l.s4 1934713408
      %v5541 = vunpack.c.0.s8 %v5540
      %v5542 = vlaneseq
      %v5543 = vshrl.u32 %v5542, 7
      %v5544 = vsub.s32 %v5541, %v5543
      %v5545 = vrot.slane %v5537, %v5544
      %v5547 = vunpack.c.l.s4 1934713408
      %v5548 = vunpack.c.0.s8 %v5547
      %v5549 = vlaneseq
      %v5550 = vshrl.u32 %v5549, 7
      %v5551 = vsub.s32 %v5548, %v5550
      %v5552 = vrot.slane %v5538, %v5551
      %v5553 = vcombine.low %v5497, %v5513
      %v5554 = vcombine.high %v5497, %v5513
      %v5556 = vunpack.c.l.s4 1934713408
      %v5557 = vunpack.c.0.s8 %v5556
      %v5558 = vlaneseq
      %v5559 = vshrl.u32 %v5558, 7
      %v5560 = vsub.s32 %v5557, %v5559
      %v5561 = vrot.slane %v5553, %v5560
      %v5563 = vunpack.c.l.s4 1934713408
      %v5564 = vunpack.c.0.s8 %v5563
      %v5565 = vlaneseq
      %v5566 = vshrl.u32 %v5565, 7
      %v5567 = vsub.s32 %v5564, %v5566
      %v5568 = vrot.slane %v5554, %v5567
      %v5569 = vcombine.low %v5504, %v5520
      %v5570 = vcombine.high %v5504, %v5520
      %v5572 = vunpack.c.l.s4 1934713408
      %v5573 = vunpack.c.0.s8 %v5572
      %v5574 = vlaneseq
      %v5575 = vshrl.u32 %v5574, 7
      %v5576 = vsub.s32 %v5573, %v5575
      %v5577 = vrot.slane %v5569, %v5576
      %v5579 = vunpack.c.l.s4 1934713408
      %v5580 = vunpack.c.0.s8 %v5579
      %v5581 = vlaneseq
      %v5582 = vshrl.u32 %v5581, 7
      %v5583 = vsub.s32 %v5580, %v5582
      %v5584 = vrot.slane %v5570, %v5583
      %v5585 = vcombine.low %v5529, %v5561
      %v5586 = vcombine.high %v5529, %v5561
      %v5587 = vcombine.low %v5536, %v5568
      %v5588 = vcombine.high %v5536, %v5568
      %v5589 = vcombine.low %v5545, %v5577
      %v5590 = vcombine.high %v5545, %v5577
      %v5591 = vcombine.low %v5552, %v5584
      %v5592 = vcombine.high %v5552, %v5584
      %v5593 = vcombine.low %v948, %v956
      %v5594 = vcombine.high %v948, %v956
      %v5596 = vunpack.c.l.s4 1983009808
      %v5597 = vunpack.c.0.s8 %v5596
      %v5598 = vlaneseq
      %v5599 = vshrl.u32 %v5598, 7
      %v5600 = vsub.s32 %v5597, %v5599
      %v5601 = vrot.slane %v5593, %v5600
      %v5603 = vunpack.c.l.s4 1983009808
      %v5604 = vunpack.c.0.s8 %v5603
      %v5605 = vlaneseq
      %v5606 = vshrl.u32 %v5605, 7
      %v5607 = vsub.s32 %v5604, %v5606
      %v5608 = vrot.slane %v5594, %v5607
      %v5609 = vcombine.low %v952, %v960
      %v5610 = vcombine.high %v952, %v960
      %v5612 = vunpack.c.l.s4 1983009808
      %v5613 = vunpack.c.0.s8 %v5612
      %v5614 = vlaneseq
      %v5615 = vshrl.u32 %v5614, 7
      %v5616 = vsub.s32 %v5613, %v5615
      %v5617 = vrot.slane %v5609, %v5616
      %v5619 = vunpack.c.l.s4 1983009808
      %v5620 = vunpack.c.0.s8 %v5619
      %v5621 = vlaneseq
      %v5622 = vshrl.u32 %v5621, 7
      %v5623 = vsub.s32 %v5620, %v5622
      %v5624 = vrot.slane %v5610, %v5623
      %v5625 = vcombine.low %v964, %v972
      %v5626 = vcombine.high %v964, %v972
      %v5628 = vunpack.c.l.s4 1983009808
      %v5629 = vunpack.c.0.s8 %v5628
      %v5630 = vlaneseq
      %v5631 = vshrl.u32 %v5630, 7
      %v5632 = vsub.s32 %v5629, %v5631
      %v5633 = vrot.slane %v5625, %v5632
      %v5635 = vunpack.c.l.s4 1983009808
      %v5636 = vunpack.c.0.s8 %v5635
      %v5637 = vlaneseq
      %v5638 = vshrl.u32 %v5637, 7
      %v5639 = vsub.s32 %v5636, %v5638
      %v5640 = vrot.slane %v5626, %v5639
      %v5641 = vcombine.low %v968, %v976
      %v5642 = vcombine.high %v968, %v976
      %v5644 = vunpack.c.l.s4 1983009808
      %v5645 = vunpack.c.0.s8 %v5644
      %v5646 = vlaneseq
      %v5647 = vshrl.u32 %v5646, 7
      %v5648 = vsub.s32 %v5645, %v5647
      %v5649 = vrot.slane %v5641, %v5648
      %v5651 = vunpack.c.l.s4 1983009808
      %v5652 = vunpack.c.0.s8 %v5651
      %v5653 = vlaneseq
      %v5654 = vshrl.u32 %v5653, 7
      %v5655 = vsub.s32 %v5652, %v5654
      %v5656 = vrot.slane %v5642, %v5655
      %v5657 = vcombine.low %v5601, %v5617
      %v5658 = vcombine.high %v5601, %v5617
      %v5660 = vunpack.c.l.s4 1934713408
      %v5661 = vunpack.c.0.s8 %v5660
      %v5662 = vlaneseq
      %v5663 = vshrl.u32 %v5662, 7
      %v5664 = vsub.s32 %v5661, %v5663
      %v5665 = vrot.slane %v5657, %v5664
      %v5667 = vunpack.c.l.s4 1934713408
      %v5668 = vunpack.c.0.s8 %v5667
      %v5669 = vlaneseq
      %v5670 = vshrl.u32 %v5669, 7
      %v5671 = vsub.s32 %v5668, %v5670
      %v5672 = vrot.slane %v5658, %v5671
      %v5673 = vcombine.low %v5608, %v5624
      %v5674 = vcombine.high %v5608, %v5624
      %v5676 = vunpack.c.l.s4 1934713408
      %v5677 = vunpack.c.0.s8 %v5676
      %v5678 = vlaneseq
      %v5679 = vshrl.u32 %v5678, 7
      %v5680 = vsub.s32 %v5677, %v5679
      %v5681 = vrot.slane %v5673, %v5680
      %v5683 = vunpack.c.l.s4 1934713408
      %v5684 = vunpack.c.0.s8 %v5683
      %v5685 = vlaneseq
      %v5686 = vshrl.u32 %v5685, 7
      %v5687 = vsub.s32 %v5684, %v5686
      %v5688 = vrot.slane %v5674, %v5687
      %v5689 = vcombine.low %v5633, %v5649
      %v5690 = vcombine.high %v5633, %v5649
      %v5692 = vunpack.c.l.s4 1934713408
      %v5693 = vunpack.c.0.s8 %v5692
      %v5694 = vlaneseq
      %v5695 = vshrl.u32 %v5694, 7
      %v5696 = vsub.s32 %v5693, %v5695
      %v5697 = vrot.slane %v5689, %v5696
      %v5699 = vunpack.c.l.s4 1934713408
      %v5700 = vunpack.c.0.s8 %v5699
      %v5701 = vlaneseq
      %v5702 = vshrl.u32 %v5701, 7
      %v5703 = vsub.s32 %v5700, %v5702
      %v5704 = vrot.slane %v5690, %v5703
      %v5705 = vcombine.low %v5640, %v5656
      %v5706 = vcombine.high %v5640, %v5656
      %v5708 = vunpack.c.l.s4 1934713408
      %v5709 = vunpack.c.0.s8 %v5708
      %v5710 = vlaneseq
      %v5711 = vshrl.u32 %v5710, 7
      %v5712 = vsub.s32 %v5709, %v5711
      %v5713 = vrot.slane %v5705, %v5712
      %v5715 = vunpack.c.l.s4 1934713408
      %v5716 = vunpack.c.0.s8 %v5715
      %v5717 = vlaneseq
      %v5718 = vshrl.u32 %v5717, 7
      %v5719 = vsub.s32 %v5716, %v5718
      %v5720 = vrot.slane %v5706, %v5719
      %v5721 = vcombine.low %v5665, %v5697
      %v5722 = vcombine.high %v5665, %v5697
      %v5723 = vcombine.low %v5672, %v5704
      %v5724 = vcombine.high %v5672, %v5704
      %v5725 = vcombine.low %v5681, %v5713
      %v5726 = vcombine.high %v5681, %v5713
      %v5727 = vcombine.low %v5688, %v5720
      %v5728 = vcombine.high %v5688, %v5720
      %v5729 = vcombine.low %v1012, %v1020
      %v5730 = vcombine.high %v1012, %v1020
      %v5732 = vunpack.c.l.s4 1983009808
      %v5733 = vunpack.c.0.s8 %v5732
      %v5734 = vlaneseq
      %v5735 = vshrl.u32 %v5734, 7
      %v5736 = vsub.s32 %v5733, %v5735
      %v5737 = vrot.slane %v5729, %v5736
      %v5739 = vunpack.c.l.s4 1983009808
      %v5740 = vunpack.c.0.s8 %v5739
      %v5741 = vlaneseq
      %v5742 = vshrl.u32 %v5741, 7
      %v5743 = vsub.s32 %v5740, %v5742
      %v5744 = vrot.slane %v5730, %v5743
      %v5745 = vcombine.low %v1016, %v1024
      %v5746 = vcombine.high %v1016, %v1024
      %v5748 = vunpack.c.l.s4 1983009808
      %v5749 = vunpack.c.0.s8 %v5748
      %v5750 = vlaneseq
      %v5751 = vshrl.u32 %v5750, 7
      %v5752 = vsub.s32 %v5749, %v5751
      %v5753 = vrot.slane %v5745, %v5752
      %v5755 = vunpack.c.l.s4 1983009808
      %v5756 = vunpack.c.0.s8 %v5755
      %v5757 = vlaneseq
      %v5758 = vshrl.u32 %v5757, 7
      %v5759 = vsub.s32 %v5756, %v5758
      %v5760 = vrot.slane %v5746, %v5759
      %v5761 = vcombine.low %v1028, %v1036
      %v5762 = vcombine.high %v1028, %v1036
      %v5764 = vunpack.c.l.s4 1983009808
      %v5765 = vunpack.c.0.s8 %v5764
      %v5766 = vlaneseq
      %v5767 = vshrl.u32 %v5766, 7
      %v5768 = vsub.s32 %v5765, %v5767
      %v5769 = vrot.slane %v5761, %v5768
      %v5771 = vunpack.c.l.s4 1983009808
      %v5772 = vunpack.c.0.s8 %v5771
      %v5773 = vlaneseq
      %v5774 = vshrl.u32 %v5773, 7
      %v5775 = vsub.s32 %v5772, %v5774
      %v5776 = vrot.slane %v5762, %v5775
      %v5777 = vcombine.low %v1032, %v1040
      %v5778 = vcombine.high %v1032, %v1040
      %v5780 = vunpack.c.l.s4 1983009808
      %v5781 = vunpack.c.0.s8 %v5780
      %v5782 = vlaneseq
      %v5783 = vshrl.u32 %v5782, 7
      %v5784 = vsub.s32 %v5781, %v5783
      %v5785 = vrot.slane %v5777, %v5784
      %v5787 = vunpack.c.l.s4 1983009808
      %v5788 = vunpack.c.0.s8 %v5787
      %v5789 = vlaneseq
      %v5790 = vshrl.u32 %v5789, 7
      %v5791 = vsub.s32 %v5788, %v5790
      %v5792 = vrot.slane %v5778, %v5791
      %v5793 = vcombine.low %v5737, %v5753
      %v5794 = vcombine.high %v5737, %v5753
      %v5796 = vunpack.c.l.s4 1934713408
      %v5797 = vunpack.c.0.s8 %v5796
      %v5798 = vlaneseq
      %v5799 = vshrl.u32 %v5798, 7
      %v5800 = vsub.s32 %v5797, %v5799
      %v5801 = vrot.slane %v5793, %v5800
      %v5803 = vunpack.c.l.s4 1934713408
      %v5804 = vunpack.c.0.s8 %v5803
      %v5805 = vlaneseq
      %v5806 = vshrl.u32 %v5805, 7
      %v5807 = vsub.s32 %v5804, %v5806
      %v5808 = vrot.slane %v5794, %v5807
      %v5809 = vcombine.low %v5744, %v5760
      %v5810 = vcombine.high %v5744, %v5760
      %v5812 = vunpack.c.l.s4 1934713408
      %v5813 = vunpack.c.0.s8 %v5812
      %v5814 = vlaneseq
      %v5815 = vshrl.u32 %v5814, 7
      %v5816 = vsub.s32 %v5813, %v5815
      %v5817 = vrot.slane %v5809, %v5816
      %v5819 = vunpack.c.l.s4 1934713408
      %v5820 = vunpack.c.0.s8 %v5819
      %v5821 = vlaneseq
      %v5822 = vshrl.u32 %v5821, 7
      %v5823 = vsub.s32 %v5820, %v5822
      %v5824 = vrot.slane %v5810, %v5823
      %v5825 = vcombine.low %v5769, %v5785
      %v5826 = vcombine.high %v5769, %v5785
      %v5828 = vunpack.c.l.s4 1934713408
      %v5829 = vunpack.c.0.s8 %v5828
      %v5830 = vlaneseq
      %v5831 = vshrl.u32 %v5830, 7
      %v5832 = vsub.s32 %v5829, %v5831
      %v5833 = vrot.slane %v5825, %v5832
      %v5835 = vunpack.c.l.s4 1934713408
      %v5836 = vunpack.c.0.s8 %v5835
      %v5837 = vlaneseq
      %v5838 = vshrl.u32 %v5837, 7
      %v5839 = vsub.s32 %v5836, %v5838
      %v5840 = vrot.slane %v5826, %v5839
      %v5841 = vcombine.low %v5776, %v5792
      %v5842 = vcombine.high %v5776, %v5792
      %v5844 = vunpack.c.l.s4 1934713408
      %v5845 = vunpack.c.0.s8 %v5844
      %v5846 = vlaneseq
      %v5847 = vshrl.u32 %v5846, 7
      %v5848 = vsub.s32 %v5845, %v5847
      %v5849 = vrot.slane %v5841, %v5848
      %v5851 = vunpack.c.l.s4 1934713408
      %v5852 = vunpack.c.0.s8 %v5851
      %v5853 = vlaneseq
      %v5854 = vshrl.u32 %v5853, 7
      %v5855 = vsub.s32 %v5852, %v5854
      %v5856 = vrot.slane %v5842, %v5855
      %v5857 = vcombine.low %v5801, %v5833
      %v5858 = vcombine.high %v5801, %v5833
      %v5859 = vcombine.low %v5808, %v5840
      %v5860 = vcombine.high %v5808, %v5840
      %v5861 = vcombine.low %v5817, %v5849
      %v5862 = vcombine.high %v5817, %v5849
      %v5863 = vcombine.low %v5824, %v5856
      %v5864 = vcombine.high %v5824, %v5856
      %v5865 = vcombine.low %v1044, %v1052
      %v5866 = vcombine.high %v1044, %v1052
      %v5868 = vunpack.c.l.s4 1983009808
      %v5869 = vunpack.c.0.s8 %v5868
      %v5870 = vlaneseq
      %v5871 = vshrl.u32 %v5870, 7
      %v5872 = vsub.s32 %v5869, %v5871
      %v5873 = vrot.slane %v5865, %v5872
      %v5875 = vunpack.c.l.s4 1983009808
      %v5876 = vunpack.c.0.s8 %v5875
      %v5877 = vlaneseq
      %v5878 = vshrl.u32 %v5877, 7
      %v5879 = vsub.s32 %v5876, %v5878
      %v5880 = vrot.slane %v5866, %v5879
      %v5881 = vcombine.low %v1048, %v1056
      %v5882 = vcombine.high %v1048, %v1056
      %v5884 = vunpack.c.l.s4 1983009808
      %v5885 = vunpack.c.0.s8 %v5884
      %v5886 = vlaneseq
      %v5887 = vshrl.u32 %v5886, 7
      %v5888 = vsub.s32 %v5885, %v5887
      %v5889 = vrot.slane %v5881, %v5888
      %v5891 = vunpack.c.l.s4 1983009808
      %v5892 = vunpack.c.0.s8 %v5891
      %v5893 = vlaneseq
      %v5894 = vshrl.u32 %v5893, 7
      %v5895 = vsub.s32 %v5892, %v5894
      %v5896 = vrot.slane %v5882, %v5895
      %v5897 = vcombine.low %v1060, %v1068
      %v5898 = vcombine.high %v1060, %v1068
      %v5900 = vunpack.c.l.s4 1983009808
      %v5901 = vunpack.c.0.s8 %v5900
      %v5902 = vlaneseq
      %v5903 = vshrl.u32 %v5902, 7
      %v5904 = vsub.s32 %v5901, %v5903
      %v5905 = vrot.slane %v5897, %v5904
      %v5907 = vunpack.c.l.s4 1983009808
      %v5908 = vunpack.c.0.s8 %v5907
      %v5909 = vlaneseq
      %v5910 = vshrl.u32 %v5909, 7
      %v5911 = vsub.s32 %v5908, %v5910
      %v5912 = vrot.slane %v5898, %v5911
      %v5913 = vcombine.low %v1064, %v1072
      %v5914 = vcombine.high %v1064, %v1072
      %v5916 = vunpack.c.l.s4 1983009808
      %v5917 = vunpack.c.0.s8 %v5916
      %v5918 = vlaneseq
      %v5919 = vshrl.u32 %v5918, 7
      %v5920 = vsub.s32 %v5917, %v5919
      %v5921 = vrot.slane %v5913, %v5920
      %v5923 = vunpack.c.l.s4 1983009808
      %v5924 = vunpack.c.0.s8 %v5923
      %v5925 = vlaneseq
      %v5926 = vshrl.u32 %v5925, 7
      %v5927 = vsub.s32 %v5924, %v5926
      %v5928 = vrot.slane %v5914, %v5927
      %v5929 = vcombine.low %v5873, %v5889
      %v5930 = vcombine.high %v5873, %v5889
      %v5932 = vunpack.c.l.s4 1934713408
      %v5933 = vunpack.c.0.s8 %v5932
      %v5934 = vlaneseq
      %v5935 = vshrl.u32 %v5934, 7
      %v5936 = vsub.s32 %v5933, %v5935
      %v5937 = vrot.slane %v5929, %v5936
      %v5939 = vunpack.c.l.s4 1934713408
      %v5940 = vunpack.c.0.s8 %v5939
      %v5941 = vlaneseq
      %v5942 = vshrl.u32 %v5941, 7
      %v5943 = vsub.s32 %v5940, %v5942
      %v5944 = vrot.slane %v5930, %v5943
      %v5945 = vcombine.low %v5880, %v5896
      %v5946 = vcombine.high %v5880, %v5896
      %v5948 = vunpack.c.l.s4 1934713408
      %v5949 = vunpack.c.0.s8 %v5948
      %v5950 = vlaneseq
      %v5951 = vshrl.u32 %v5950, 7
      %v5952 = vsub.s32 %v5949, %v5951
      %v5953 = vrot.slane %v5945, %v5952
      %v5955 = vunpack.c.l.s4 1934713408
      %v5956 = vunpack.c.0.s8 %v5955
      %v5957 = vlaneseq
      %v5958 = vshrl.u32 %v5957, 7
      %v5959 = vsub.s32 %v5956, %v5958
      %v5960 = vrot.slane %v5946, %v5959
      %v5961 = vcombine.low %v5905, %v5921
      %v5962 = vcombine.high %v5905, %v5921
      %v5964 = vunpack.c.l.s4 1934713408
      %v5965 = vunpack.c.0.s8 %v5964
      %v5966 = vlaneseq
      %v5967 = vshrl.u32 %v5966, 7
      %v5968 = vsub.s32 %v5965, %v5967
      %v5969 = vrot.slane %v5961, %v5968
      %v5971 = vunpack.c.l.s4 1934713408
      %v5972 = vunpack.c.0.s8 %v5971
      %v5973 = vlaneseq
      %v5974 = vshrl.u32 %v5973, 7
      %v5975 = vsub.s32 %v5972, %v5974
      %v5976 = vrot.slane %v5962, %v5975
      %v5977 = vcombine.low %v5912, %v5928
      %v5978 = vcombine.high %v5912, %v5928
      %v5980 = vunpack.c.l.s4 1934713408
      %v5981 = vunpack.c.0.s8 %v5980
      %v5982 = vlaneseq
      %v5983 = vshrl.u32 %v5982, 7
      %v5984 = vsub.s32 %v5981, %v5983
      %v5985 = vrot.slane %v5977, %v5984
      %v5987 = vunpack.c.l.s4 1934713408
      %v5988 = vunpack.c.0.s8 %v5987
      %v5989 = vlaneseq
      %v5990 = vshrl.u32 %v5989, 7
      %v5991 = vsub.s32 %v5988, %v5990
      %v5992 = vrot.slane %v5978, %v5991
      %v5993 = vcombine.low %v5937, %v5969
      %v5994 = vcombine.high %v5937, %v5969
      %v5995 = vcombine.low %v5944, %v5976
      %v5996 = vcombine.high %v5944, %v5976
      %v5997 = vcombine.low %v5953, %v5985
      %v5998 = vcombine.high %v5953, %v5985
      %v5999 = vcombine.low %v5960, %v5992
      %v6000 = vcombine.high %v5960, %v5992
      %6019 = vrot.lane.b32.xlu0 %v1234, 64
      %v6020 = vpop.permute.xlu0 %6019
      %6021 = vrot.lane.b32.xlu0 %v1370, 64
      %v6022 = vpop.permute.xlu0 %6021
      %6023 = vrot.lane.b32.xlu0 %v1506, 64
      %v6024 = vpop.permute.xlu0 %6023
      %6025 = vrot.lane.b32.xlu0 %v1642, 64
      %v6026 = vpop.permute.xlu0 %6025
      %6027 = vrot.lane.b32.xlu0 %v1778, 64
      %v6028 = vpop.permute.xlu0 %6027
      %6029 = vrot.lane.b32.xlu0 %v1914, 64
      %v6030 = vpop.permute.xlu0 %6029
      %6031 = vrot.lane.b32.xlu0 %v2050, 64
      %v6032 = vpop.permute.xlu0 %6031
      %6033 = vrot.lane.b32.xlu0 %v2186, 64
      %v6034 = vpop.permute.xlu0 %6033
      %6035 = vrot.lane.b32.xlu0 %v2322, 64
      %v6036 = vpop.permute.xlu0 %6035
      %6037 = vrot.lane.b32.xlu0 %v2458, 64
      %v6038 = vpop.permute.xlu0 %6037
      %6039 = vrot.lane.b32.xlu0 %v2594, 64
      %v6040 = vpop.permute.xlu0 %6039
      %6041 = vrot.lane.b32.xlu0 %v2730, 64
      %v6042 = vpop.permute.xlu0 %6041
      %6043 = vrot.lane.b32.xlu0 %v2866, 64
      %v6044 = vpop.permute.xlu0 %6043
      %6045 = vrot.lane.b32.xlu0 %v3002, 64
      %v6046 = vpop.permute.xlu0 %6045
      %6047 = vrot.lane.b32.xlu0 %v3138, 64
      %v6048 = vpop.permute.xlu0 %6047
      %6049 = vrot.lane.b32.xlu0 %v3274, 64
      %v6050 = vpop.permute.xlu0 %6049
      %6051 = vrot.lane.b32.xlu0 %v3410, 64
      %v6052 = vpop.permute.xlu0 %6051
      %6053 = vrot.lane.b32.xlu0 %v3546, 64
      %v6054 = vpop.permute.xlu0 %6053
      %6091 = vrot.lane.b32.xlu0 %v1236, 64
      %v6092 = vpop.permute.xlu0 %6091
      %6093 = vrot.lane.b32.xlu0 %v1372, 64
      %v6094 = vpop.permute.xlu0 %6093
      %6095 = vrot.lane.b32.xlu0 %v1508, 64
      %v6096 = vpop.permute.xlu0 %6095
      %6097 = vrot.lane.b32.xlu0 %v1644, 64
      %v6098 = vpop.permute.xlu0 %6097
      %6099 = vrot.lane.b32.xlu0 %v1780, 64
      %v6100 = vpop.permute.xlu0 %6099
      %6101 = vrot.lane.b32.xlu0 %v1916, 64
      %v6102 = vpop.permute.xlu0 %6101
      %6103 = vrot.lane.b32.xlu0 %v2052, 64
      %v6104 = vpop.permute.xlu0 %6103
      %6105 = vrot.lane.b32.xlu0 %v2188, 64
      %v6106 = vpop.permute.xlu0 %6105
      %6107 = vrot.lane.b32.xlu0 %v2324, 64
      %v6108 = vpop.permute.xlu0 %6107
      %6109 = vrot.lane.b32.xlu0 %v2460, 64
      %v6110 = vpop.permute.xlu0 %6109
      %6111 = vrot.lane.b32.xlu0 %v2596, 64
      %v6112 = vpop.permute.xlu0 %6111
      %6113 = vrot.lane.b32.xlu0 %v2732, 64
      %v6114 = vpop.permute.xlu0 %6113
      %6115 = vrot.lane.b32.xlu0 %v2868, 64
      %v6116 = vpop.permute.xlu0 %6115
      %6117 = vrot.lane.b32.xlu0 %v3004, 64
      %v6118 = vpop.permute.xlu0 %6117
      %6119 = vrot.lane.b32.xlu0 %v3140, 64
      %v6120 = vpop.permute.xlu0 %6119
      %6121 = vrot.lane.b32.xlu0 %v3276, 64
      %v6122 = vpop.permute.xlu0 %6121
      %6123 = vrot.lane.b32.xlu0 %v3412, 64
      %v6124 = vpop.permute.xlu0 %6123
      %6125 = vrot.lane.b32.xlu0 %v3548, 64
      %v6126 = vpop.permute.xlu0 %6125
      %6163 = vrot.lane.b32.xlu0 %v1238, 64
      %v6164 = vpop.permute.xlu0 %6163
      %6165 = vrot.lane.b32.xlu0 %v1374, 64
      %v6166 = vpop.permute.xlu0 %6165
      %6167 = vrot.lane.b32.xlu0 %v1510, 64
      %v6168 = vpop.permute.xlu0 %6167
      %6169 = vrot.lane.b32.xlu0 %v1646, 64
      %v6170 = vpop.permute.xlu0 %6169
      %6171 = vrot.lane.b32.xlu0 %v1782, 64
      %v6172 = vpop.permute.xlu0 %6171
      %6173 = vrot.lane.b32.xlu0 %v1918, 64
      %v6174 = vpop.permute.xlu0 %6173
      %6175 = vrot.lane.b32.xlu0 %v2054, 64
      %v6176 = vpop.permute.xlu0 %6175
      %6177 = vrot.lane.b32.xlu0 %v2190, 64
      %v6178 = vpop.permute.xlu0 %6177
      %6179 = vrot.lane.b32.xlu0 %v2326, 64
      %v6180 = vpop.permute.xlu0 %6179
      %6181 = vrot.lane.b32.xlu0 %v2462, 64
      %v6182 = vpop.permute.xlu0 %6181
      %6183 = vrot.lane.b32.xlu0 %v2598, 64
      %v6184 = vpop.permute.xlu0 %6183
      %6185 = vrot.lane.b32.xlu0 %v2734, 64
      %v6186 = vpop.permute.xlu0 %6185
      %6187 = vrot.lane.b32.xlu0 %v2870, 64
      %v6188 = vpop.permute.xlu0 %6187
      %6189 = vrot.lane.b32.xlu0 %v3006, 64
      %v6190 = vpop.permute.xlu0 %6189
      %6191 = vrot.lane.b32.xlu0 %v3142, 64
      %v6192 = vpop.permute.xlu0 %6191
      %6193 = vrot.lane.b32.xlu0 %v3278, 64
      %v6194 = vpop.permute.xlu0 %6193
      %6195 = vrot.lane.b32.xlu0 %v3414, 64
      %v6196 = vpop.permute.xlu0 %6195
      %6197 = vrot.lane.b32.xlu0 %v3550, 64
      %v6198 = vpop.permute.xlu0 %6197
      %6235 = vrot.lane.b32.xlu0 %v1240, 64
      %v6236 = vpop.permute.xlu0 %6235
      %6237 = vrot.lane.b32.xlu0 %v1376, 64
      %v6238 = vpop.permute.xlu0 %6237
      %6239 = vrot.lane.b32.xlu0 %v1512, 64
      %v6240 = vpop.permute.xlu0 %6239
      %6241 = vrot.lane.b32.xlu0 %v1648, 64
      %v6242 = vpop.permute.xlu0 %6241
      %6243 = vrot.lane.b32.xlu0 %v1784, 64
      %v6244 = vpop.permute.xlu0 %6243
      %6245 = vrot.lane.b32.xlu0 %v1920, 64
      %v6246 = vpop.permute.xlu0 %6245
      %6247 = vrot.lane.b32.xlu0 %v2056, 64
      %v6248 = vpop.permute.xlu0 %6247
      %6249 = vrot.lane.b32.xlu0 %v2192, 64
      %v6250 = vpop.permute.xlu0 %6249
      %6251 = vrot.lane.b32.xlu0 %v2328, 64
      %v6252 = vpop.permute.xlu0 %6251
      %6253 = vrot.lane.b32.xlu0 %v2464, 64
      %v6254 = vpop.permute.xlu0 %6253
      %6255 = vrot.lane.b32.xlu0 %v2600, 64
      %v6256 = vpop.permute.xlu0 %6255
      %6257 = vrot.lane.b32.xlu0 %v2736, 64
      %v6258 = vpop.permute.xlu0 %6257
      %6259 = vrot.lane.b32.xlu0 %v2872, 64
      %v6260 = vpop.permute.xlu0 %6259
      %6261 = vrot.lane.b32.xlu0 %v3008, 64
      %v6262 = vpop.permute.xlu0 %6261
      %6263 = vrot.lane.b32.xlu0 %v3144, 64
      %v6264 = vpop.permute.xlu0 %6263
      %6265 = vrot.lane.b32.xlu0 %v3280, 64
      %v6266 = vpop.permute.xlu0 %6265
      %6267 = vrot.lane.b32.xlu0 %v3416, 64
      %v6268 = vpop.permute.xlu0 %6267
      %6269 = vrot.lane.b32.xlu0 %v3552, 64
      %v6270 = vpop.permute.xlu0 %6269
      %6307 = vrot.lane.b32.xlu0 %v3682, 64
      %v6308 = vpop.permute.xlu0 %6307
      %6309 = vrot.lane.b32.xlu0 %v3818, 64
      %v6310 = vpop.permute.xlu0 %6309
      %6311 = vrot.lane.b32.xlu0 %v3954, 64
      %v6312 = vpop.permute.xlu0 %6311
      %6313 = vrot.lane.b32.xlu0 %v4090, 64
      %v6314 = vpop.permute.xlu0 %6313
      %6315 = vrot.lane.b32.xlu0 %v4226, 64
      %v6316 = vpop.permute.xlu0 %6315
      %6317 = vrot.lane.b32.xlu0 %v4362, 64
      %v6318 = vpop.permute.xlu0 %6317
      %6319 = vrot.lane.b32.xlu0 %v4498, 64
      %v6320 = vpop.permute.xlu0 %6319
      %6321 = vrot.lane.b32.xlu0 %v4634, 64
      %v6322 = vpop.permute.xlu0 %6321
      %6323 = vrot.lane.b32.xlu0 %v4770, 64
      %v6324 = vpop.permute.xlu0 %6323
      %6325 = vrot.lane.b32.xlu0 %v4906, 64
      %v6326 = vpop.permute.xlu0 %6325
      %6327 = vrot.lane.b32.xlu0 %v5042, 64
      %v6328 = vpop.permute.xlu0 %6327
      %6329 = vrot.lane.b32.xlu0 %v5178, 64
      %v6330 = vpop.permute.xlu0 %6329
      %6331 = vrot.lane.b32.xlu0 %v5314, 64
      %v6332 = vpop.permute.xlu0 %6331
      %6333 = vrot.lane.b32.xlu0 %v5450, 64
      %v6334 = vpop.permute.xlu0 %6333
      %6335 = vrot.lane.b32.xlu0 %v5586, 64
      %v6336 = vpop.permute.xlu0 %6335
      %6337 = vrot.lane.b32.xlu0 %v5722, 64
      %v6338 = vpop.permute.xlu0 %6337
      %6339 = vrot.lane.b32.xlu0 %v5858, 64
      %v6340 = vpop.permute.xlu0 %6339
      %6341 = vrot.lane.b32.xlu0 %v5994, 64
      %v6342 = vpop.permute.xlu0 %6341
      %6379 = vrot.lane.b32.xlu0 %v3684, 64
      %v6380 = vpop.permute.xlu0 %6379
      %6381 = vrot.lane.b32.xlu0 %v3820, 64
      %v6382 = vpop.permute.xlu0 %6381
      %6383 = vrot.lane.b32.xlu0 %v3956, 64
      %v6384 = vpop.permute.xlu0 %6383
      %6385 = vrot.lane.b32.xlu0 %v4092, 64
      %v6386 = vpop.permute.xlu0 %6385
      %6387 = vrot.lane.b32.xlu0 %v4228, 64
      %v6388 = vpop.permute.xlu0 %6387
      %6389 = vrot.lane.b32.xlu0 %v4364, 64
      %v6390 = vpop.permute.xlu0 %6389
      %6391 = vrot.lane.b32.xlu0 %v4500, 64
      %v6392 = vpop.permute.xlu0 %6391
      %6393 = vrot.lane.b32.xlu0 %v4636, 64
      %v6394 = vpop.permute.xlu0 %6393
      %6395 = vrot.lane.b32.xlu0 %v4772, 64
      %v6396 = vpop.permute.xlu0 %6395
      %6397 = vrot.lane.b32.xlu0 %v4908, 64
      %v6398 = vpop.permute.xlu0 %6397
      %6399 = vrot.lane.b32.xlu0 %v5044, 64
      %v6400 = vpop.permute.xlu0 %6399
      %6401 = vrot.lane.b32.xlu0 %v5180, 64
      %v6402 = vpop.permute.xlu0 %6401
      %6403 = vrot.lane.b32.xlu0 %v5316, 64
      %v6404 = vpop.permute.xlu0 %6403
      %6405 = vrot.lane.b32.xlu0 %v5452, 64
      %v6406 = vpop.permute.xlu0 %6405
      %6407 = vrot.lane.b32.xlu0 %v5588, 64
      %v6408 = vpop.permute.xlu0 %6407
      %6409 = vrot.lane.b32.xlu0 %v5724, 64
      %v6410 = vpop.permute.xlu0 %6409
      %6411 = vrot.lane.b32.xlu0 %v5860, 64
      %v6412 = vpop.permute.xlu0 %6411
      %6413 = vrot.lane.b32.xlu0 %v5996, 64
      %v6414 = vpop.permute.xlu0 %6413
      %6451 = vrot.lane.b32.xlu0 %v3686, 64
      %v6452 = vpop.permute.xlu0 %6451
      %6453 = vrot.lane.b32.xlu0 %v3822, 64
      %v6454 = vpop.permute.xlu0 %6453
      %6455 = vrot.lane.b32.xlu0 %v3958, 64
      %v6456 = vpop.permute.xlu0 %6455
      %6457 = vrot.lane.b32.xlu0 %v4094, 64
      %v6458 = vpop.permute.xlu0 %6457
      %6459 = vrot.lane.b32.xlu0 %v4230, 64
      %v6460 = vpop.permute.xlu0 %6459
      %6461 = vrot.lane.b32.xlu0 %v4366, 64
      %v6462 = vpop.permute.xlu0 %6461
      %6463 = vrot.lane.b32.xlu0 %v4502, 64
      %v6464 = vpop.permute.xlu0 %6463
      %6465 = vrot.lane.b32.xlu0 %v4638, 64
      %v6466 = vpop.permute.xlu0 %6465
      %6467 = vrot.lane.b32.xlu0 %v4774, 64
      %v6468 = vpop.permute.xlu0 %6467
      %6469 = vrot.lane.b32.xlu0 %v4910, 64
      %v6470 = vpop.permute.xlu0 %6469
      %6471 = vrot.lane.b32.xlu0 %v5046, 64
      %v6472 = vpop.permute.xlu0 %6471
      %6473 = vrot.lane.b32.xlu0 %v5182, 64
      %v6474 = vpop.permute.xlu0 %6473
      %6475 = vrot.lane.b32.xlu0 %v5318, 64
      %v6476 = vpop.permute.xlu0 %6475
      %6477 = vrot.lane.b32.xlu0 %v5454, 64
      %v6478 = vpop.permute.xlu0 %6477
      %6479 = vrot.lane.b32.xlu0 %v5590, 64
      %v6480 = vpop.permute.xlu0 %6479
      %6481 = vrot.lane.b32.xlu0 %v5726, 64
      %v6482 = vpop.permute.xlu0 %6481
      %6483 = vrot.lane.b32.xlu0 %v5862, 64
      %v6484 = vpop.permute.xlu0 %6483
      %6485 = vrot.lane.b32.xlu0 %v5998, 64
      %v6486 = vpop.permute.xlu0 %6485
      %6523 = vrot.lane.b32.xlu0 %v3688, 64
      %v6524 = vpop.permute.xlu0 %6523
      %6525 = vrot.lane.b32.xlu0 %v3824, 64
      %v6526 = vpop.permute.xlu0 %6525
      %6527 = vrot.lane.b32.xlu0 %v3960, 64
      %v6528 = vpop.permute.xlu0 %6527
      %6529 = vrot.lane.b32.xlu0 %v4096, 64
      %v6530 = vpop.permute.xlu0 %6529
      %6531 = vrot.lane.b32.xlu0 %v4232, 64
      %v6532 = vpop.permute.xlu0 %6531
      %6533 = vrot.lane.b32.xlu0 %v4368, 64
      %v6534 = vpop.permute.xlu0 %6533
      %6535 = vrot.lane.b32.xlu0 %v4504, 64
      %v6536 = vpop.permute.xlu0 %6535
      %6537 = vrot.lane.b32.xlu0 %v4640, 64
      %v6538 = vpop.permute.xlu0 %6537
      %6539 = vrot.lane.b32.xlu0 %v4776, 64
      %v6540 = vpop.permute.xlu0 %6539
      %6541 = vrot.lane.b32.xlu0 %v4912, 64
      %v6542 = vpop.permute.xlu0 %6541
      %6543 = vrot.lane.b32.xlu0 %v5048, 64
      %v6544 = vpop.permute.xlu0 %6543
      %6545 = vrot.lane.b32.xlu0 %v5184, 64
      %v6546 = vpop.permute.xlu0 %6545
      %6547 = vrot.lane.b32.xlu0 %v5320, 64
      %v6548 = vpop.permute.xlu0 %6547
      %6549 = vrot.lane.b32.xlu0 %v5456, 64
      %v6550 = vpop.permute.xlu0 %6549
      %6551 = vrot.lane.b32.xlu0 %v5592, 64
      %v6552 = vpop.permute.xlu0 %6551
      %6553 = vrot.lane.b32.xlu0 %v5728, 64
      %v6554 = vpop.permute.xlu0 %6553
      %6555 = vrot.lane.b32.xlu0 %v5864, 64
      %v6556 = vpop.permute.xlu0 %6555
      %6557 = vrot.lane.b32.xlu0 %v6000, 64
      %v6558 = vpop.permute.xlu0 %6557
      %vm6577 = vcmask 523264
      %v6578 = vsel %vm6577, %v1233, %v6020
      %v6579 = vsel %vm6577, %v1369, %v6022
      %v6580 = vsel %vm6577, %v1505, %v6024
      %v6581 = vsel %vm6577, %v1641, %v6026
      %v6582 = vsel %vm6577, %v1777, %v6028
      %v6583 = vsel %vm6577, %v1913, %v6030
      %v6584 = vsel %vm6577, %v2049, %v6032
      %v6585 = vsel %vm6577, %v2185, %v6034
      %v6586 = vsel %vm6577, %v2321, %v6036
      %v6587 = vsel %vm6577, %v2457, %v6038
      %v6588 = vsel %vm6577, %v2593, %v6040
      %v6589 = vsel %vm6577, %v2729, %v6042
      %v6590 = vsel %vm6577, %v2865, %v6044
      %v6591 = vsel %vm6577, %v3001, %v6046
      %v6592 = vsel %vm6577, %v3137, %v6048
      %v6593 = vsel %vm6577, %v3273, %v6050
      %v6594 = vsel %vm6577, %v3409, %v6052
      %v6595 = vsel %vm6577, %v3545, %v6054
      %v6596 = vsel %vm6577, %v1235, %v6092
      %v6597 = vsel %vm6577, %v1371, %v6094
      %v6598 = vsel %vm6577, %v1507, %v6096
      %v6599 = vsel %vm6577, %v1643, %v6098
      %v6600 = vsel %vm6577, %v1779, %v6100
      %v6601 = vsel %vm6577, %v1915, %v6102
      %v6602 = vsel %vm6577, %v2051, %v6104
      %v6603 = vsel %vm6577, %v2187, %v6106
      %v6604 = vsel %vm6577, %v2323, %v6108
      %v6605 = vsel %vm6577, %v2459, %v6110
      %v6606 = vsel %vm6577, %v2595, %v6112
      %v6607 = vsel %vm6577, %v2731, %v6114
      %v6608 = vsel %vm6577, %v2867, %v6116
      %v6609 = vsel %vm6577, %v3003, %v6118
      %v6610 = vsel %vm6577, %v3139, %v6120
      %v6611 = vsel %vm6577, %v3275, %v6122
      %v6612 = vsel %vm6577, %v3411, %v6124
      %v6613 = vsel %vm6577, %v3547, %v6126
      %v6614 = vsel %vm6577, %v1237, %v6164
      %v6615 = vsel %vm6577, %v1373, %v6166
      %v6616 = vsel %vm6577, %v1509, %v6168
      %v6617 = vsel %vm6577, %v1645, %v6170
      %v6618 = vsel %vm6577, %v1781, %v6172
      %v6619 = vsel %vm6577, %v1917, %v6174
      %v6620 = vsel %vm6577, %v2053, %v6176
      %v6621 = vsel %vm6577, %v2189, %v6178
      %v6622 = vsel %vm6577, %v2325, %v6180
      %v6623 = vsel %vm6577, %v2461, %v6182
      %v6624 = vsel %vm6577, %v2597, %v6184
      %v6625 = vsel %vm6577, %v2733, %v6186
      %v6626 = vsel %vm6577, %v2869, %v6188
      %v6627 = vsel %vm6577, %v3005, %v6190
      %v6628 = vsel %vm6577, %v3141, %v6192
      %v6629 = vsel %vm6577, %v3277, %v6194
      %v6630 = vsel %vm6577, %v3413, %v6196
      %v6631 = vsel %vm6577, %v3549, %v6198
      %v6632 = vsel %vm6577, %v1239, %v6236
      %v6633 = vsel %vm6577, %v1375, %v6238
      %v6634 = vsel %vm6577, %v1511, %v6240
      %v6635 = vsel %vm6577, %v1647, %v6242
      %v6636 = vsel %vm6577, %v1783, %v6244
      %v6637 = vsel %vm6577, %v1919, %v6246
      %v6638 = vsel %vm6577, %v2055, %v6248
      %v6639 = vsel %vm6577, %v2191, %v6250
      %v6640 = vsel %vm6577, %v2327, %v6252
      %v6641 = vsel %vm6577, %v2463, %v6254
      %v6642 = vsel %vm6577, %v2599, %v6256
      %v6643 = vsel %vm6577, %v2735, %v6258
      %v6644 = vsel %vm6577, %v2871, %v6260
      %v6645 = vsel %vm6577, %v3007, %v6262
      %v6646 = vsel %vm6577, %v3143, %v6264
      %v6647 = vsel %vm6577, %v3279, %v6266
      %v6648 = vsel %vm6577, %v3415, %v6268
      %v6649 = vsel %vm6577, %v3551, %v6270
      %v6650 = vsel %vm6577, %v3681, %v6308
      %v6651 = vsel %vm6577, %v3817, %v6310
      %v6652 = vsel %vm6577, %v3953, %v6312
      %v6653 = vsel %vm6577, %v4089, %v6314
      %v6654 = vsel %vm6577, %v4225, %v6316
      %v6655 = vsel %vm6577, %v4361, %v6318
      %v6656 = vsel %vm6577, %v4497, %v6320
      %v6657 = vsel %vm6577, %v4633, %v6322
      %v6658 = vsel %vm6577, %v4769, %v6324
      %v6659 = vsel %vm6577, %v4905, %v6326
      %v6660 = vsel %vm6577, %v5041, %v6328
      %v6661 = vsel %vm6577, %v5177, %v6330
      %v6662 = vsel %vm6577, %v5313, %v6332
      %v6663 = vsel %vm6577, %v5449, %v6334
      %v6664 = vsel %vm6577, %v5585, %v6336
      %v6665 = vsel %vm6577, %v5721, %v6338
      %v6666 = vsel %vm6577, %v5857, %v6340
      %v6667 = vsel %vm6577, %v5993, %v6342
      %v6668 = vsel %vm6577, %v3683, %v6380
      %v6669 = vsel %vm6577, %v3819, %v6382
      %v6670 = vsel %vm6577, %v3955, %v6384
      %v6671 = vsel %vm6577, %v4091, %v6386
      %v6672 = vsel %vm6577, %v4227, %v6388
      %v6673 = vsel %vm6577, %v4363, %v6390
      %v6674 = vsel %vm6577, %v4499, %v6392
      %v6675 = vsel %vm6577, %v4635, %v6394
      %v6676 = vsel %vm6577, %v4771, %v6396
      %v6677 = vsel %vm6577, %v4907, %v6398
      %v6678 = vsel %vm6577, %v5043, %v6400
      %v6679 = vsel %vm6577, %v5179, %v6402
      %v6680 = vsel %vm6577, %v5315, %v6404
      %v6681 = vsel %vm6577, %v5451, %v6406
      %v6682 = vsel %vm6577, %v5587, %v6408
      %v6683 = vsel %vm6577, %v5723, %v6410
      %v6684 = vsel %vm6577, %v5859, %v6412
      %v6685 = vsel %vm6577, %v5995, %v6414
      %v6686 = vsel %vm6577, %v3685, %v6452
      %v6687 = vsel %vm6577, %v3821, %v6454
      %v6688 = vsel %vm6577, %v3957, %v6456
      %v6689 = vsel %vm6577, %v4093, %v6458
      %v6690 = vsel %vm6577, %v4229, %v6460
      %v6691 = vsel %vm6577, %v4365, %v6462
      %v6692 = vsel %vm6577, %v4501, %v6464
      %v6693 = vsel %vm6577, %v4637, %v6466
      %v6694 = vsel %vm6577, %v4773, %v6468
      %v6695 = vsel %vm6577, %v4909, %v6470
      %v6696 = vsel %vm6577, %v5045, %v6472
      %v6697 = vsel %vm6577, %v5181, %v6474
      %v6698 = vsel %vm6577, %v5317, %v6476
      %v6699 = vsel %vm6577, %v5453, %v6478
      %v6700 = vsel %vm6577, %v5589, %v6480
      %v6701 = vsel %vm6577, %v5725, %v6482
      %v6702 = vsel %vm6577, %v5861, %v6484
      %v6703 = vsel %vm6577, %v5997, %v6486
      %v6704 = vsel %vm6577, %v3687, %v6524
      %v6705 = vsel %vm6577, %v3823, %v6526
      %v6706 = vsel %vm6577, %v3959, %v6528
      %v6707 = vsel %vm6577, %v4095, %v6530
      %v6708 = vsel %vm6577, %v4231, %v6532
      %v6709 = vsel %vm6577, %v4367, %v6534
      %v6710 = vsel %vm6577, %v4503, %v6536
      %v6711 = vsel %vm6577, %v4639, %v6538
      %v6712 = vsel %vm6577, %v4775, %v6540
      %v6713 = vsel %vm6577, %v4911, %v6542
      %v6714 = vsel %vm6577, %v5047, %v6544
      %v6715 = vsel %vm6577, %v5183, %v6546
      %v6716 = vsel %vm6577, %v5319, %v6548
      %v6717 = vsel %vm6577, %v5455, %v6550
      %v6718 = vsel %vm6577, %v5591, %v6552
      %v6719 = vsel %vm6577, %v5727, %v6554
      %v6720 = vsel %vm6577, %v5863, %v6556
      %v6721 = vsel %vm6577, %v5999, %v6558
      %v6722 = vld [vmem:[%s1] sm:$0xff]
      %v6723 = vld [vmem:[%s1 + $0x8] sm:$0xff]
      %v6724 = vld [vmem:[%s1 + $0x10] sm:$0xff]
      %v6725 = vld [vmem:[%s1 + $0x18] sm:$0xff]
      %v6726 = vld [vmem:[%s1 + $0x20] sm:$0xff]
      %v6727 = vld [vmem:[%s1 + $0x28] sm:$0xff]
      %v6728 = vld [vmem:[%s1 + $0x30] sm:$0xff]
      %v6729 = vld [vmem:[%s1 + $0x38] sm:$0xff]
      %v6730 = vld [vmem:[%s2] sm:$0xff]
      %v6731 = vld [vmem:[%s2 + $0x8] sm:$0xff]
      %v6732 = vld [vmem:[%s2 + $0x10] sm:$0xff]
      %v6733 = vld [vmem:[%s2 + $0x18] sm:$0xff]
      %6735 = vset.pattern.permute.xlu0 0
      %6736 = vperm.xlu0 %6735, %v6730
      %v6737 = vpop.permute.xlu0 %6736
      %6740 = vset.pattern.permute.xlu0 0
      %6741 = vperm.xlu0 %6740, %v6731
      %v6742 = vpop.permute.xlu0 %6741
      %6745 = vset.pattern.permute.xlu0 0
      %6746 = vperm.xlu0 %6745, %v6732
      %v6747 = vpop.permute.xlu0 %6746
      %6750 = vset.pattern.permute.xlu0 0
      %6751 = vperm.xlu0 %6750, %v6733
      %v6752 = vpop.permute.xlu0 %6751
      %vm6754 = vcmask 130048
      %v6756 = vsel %vm6754, %v6723, 0
      %v6759 = vsel %vm6754, %v6725, 0
      %v6762 = vsel %vm6754, %v6727, 0
      %v6765 = vsel %vm6754, %v6729, 0
      %6767 = vmatprep.subr.mxu0 %v6611
      %6768 = vmatpush1.msra.mxu0 %v6593
      %6769 = vmatprep.subr.mxu0 %v6610
      %6770 = vmatpush1.msra.mxu0 %v6592
      %6771 = vmatprep.subr.mxu0 %v6609
      %6772 = vmatpush1.msra.mxu0 %v6591
      %6773 = vmatprep.subr.mxu0 %v6608
      %6774 = vmatpush1.msra.mxu0 %v6590
      %6775 = vmatprep.subr.mxu0 %v6607
      %6776 = vmatpush1.msra.mxu0 %v6589
      %6777 = vmatprep.subr.mxu0 %v6606
      %6778 = vmatpush1.msra.mxu0 %v6588
      %6779 = vmatprep.subr.mxu0 %v6605
      %6780 = vmatpush1.msra.mxu0 %v6587
      %6781 = vmatprep.subr.mxu0 %v6604
      %6782 = vmatpush1.msra.mxu0 %v6586
      %6783 = vmatprep.subr.mxu0 %v6603
      %6784 = vmatpush1.msra.mxu0 %v6585
      %6785 = vmatprep.subr.mxu0 %v6602
      %6786 = vmatpush1.msra.mxu0 %v6584
      %6787 = vmatprep.subr.mxu0 %v6601
      %6788 = vmatpush1.msra.mxu0 %v6583
      %6789 = vmatprep.subr.mxu0 %v6600
      %6790 = vmatpush1.msra.mxu0 %v6582
      %6791 = vmatprep.subr.mxu0 %v6599
      %6792 = vmatpush1.msra.mxu0 %v6581
      %6793 = vmatprep.subr.mxu0 %v6598
      %6794 = vmatpush1.msra.mxu0 %v6580
      %6795 = vmatprep.subr.mxu0 %v6597
      %6796 = vmatpush1.msra.mxu0 %v6579
      %6797 = vmatprep.subr.mxu0 %v6596
      %6798 = vmatpush1.msra.mxu0 %v6578
      %6799 = vmatprep.subr.mxu0 0.0
      %6800 = vmatpush2.msra.mxu0 0.0
      %6801 = vmatprep.subr.mxu0 0.0
      %6802 = vmatpush2.msra.mxu0 0.0
      %6803 = vmatprep.subr.mxu0 0.0
      %6804 = vmatpush2.msra.mxu0 0.0
      %6805 = vmatprep.subr.mxu0 0.0
      %6806 = vmatpush2.msra.mxu0 0.0
      %6807 = vmatprep.subr.mxu0 0.0
      %6808 = vmatpush2.msra.mxu0 0.0
      %6809 = vmatprep.subr.mxu0 0.0
      %6810 = vmatpush2.msra.mxu0 0.0
      %6811 = vmatprep.subr.mxu0 0.0
      %6812 = vmatpush2.msra.mxu0 0.0
      %6813 = vmatprep.subr.mxu0 0.0
      %6814 = vmatpush2.msra.mxu0 0.0
      %6815 = vmatprep.subr.mxu0 0.0
      %6816 = vmatpush2.msra.mxu0 0.0
      %6817 = vmatprep.subr.mxu0 0.0
      %6818 = vmatpush2.msra.mxu0 0.0
      %6819 = vmatprep.subr.mxu0 0.0
      %6820 = vmatpush2.msra.mxu0 0.0
      %6821 = vmatprep.subr.mxu0 0.0
      %6822 = vmatpush2.msra.mxu0 0.0
      %6823 = vmatprep.subr.mxu0 0.0
      %6824 = vmatpush2.msra.mxu0 0.0
      %6825 = vmatprep.subr.mxu0 0.0
      %6826 = vmatpush2.msra.mxu0 0.0
      %6827 = vmatprep.subr.mxu0 %v6613
      %6828 = vmatpush2.msra.mxu0 %v6595
      %6829 = vmatprep.subr.mxu0 %v6612
      %6830 = vmatpush2.msra.mxu0 %v6594
      %6831 = vmatprep.mubr.f32.mxu0 %v6756
      %6832 = vmatmul.mubr.f32.gmra.mxu0 %v6722
      %v6833 = vpop.f32.mrf.mxu0
      %v6834 = vadd.f32 %v6737, %v6833
      %v6835 = vpop.f32.mrf.mxu0
      %v6836 = vadd.f32 %v6737, %v6835
      %6837 = vmatprep.mubr.f32.mxu0 %v6759
      %6838 = vmatmul.mubr.f32.gmra.mxu0 %v6724
      %v6839 = vpop.f32.mrf.mxu0
      %v6840 = vadd.f32 %v6742, %v6839
      %v6841 = vpop.f32.mrf.mxu0
      %v6842 = vadd.f32 %v6742, %v6841
      %6843 = vmatprep.mubr.f32.mxu0 %v6762
      %6844 = vmatmul.mubr.f32.gmra.mxu0 %v6726
      %v6845 = vpop.f32.mrf.mxu0
      %v6846 = vadd.f32 %v6747, %v6845
      %v6847 = vpop.f32.mrf.mxu0
      %v6848 = vadd.f32 %v6747, %v6847
      %6849 = vmatprep.mubr.f32.mxu0 %v6765
      %6850 = vmatmul.mubr.f32.gmra.mxu0 %v6728
      %v6851 = vpop.f32.mrf.mxu0
      %v6852 = vadd.f32 %v6752, %v6851
      %v6853 = vpop.f32.mrf.mxu0
      %v6854 = vadd.f32 %v6752, %v6853
      %6855 = vdwg.mxu0
      %6856 = vmatprep.subr.mxu0 %v6647
      %6857 = vmatpush1.msra.mxu0 %v6629
      %6858 = vmatprep.subr.mxu0 %v6646
      %6859 = vmatpush1.msra.mxu0 %v6628
      %6860 = vmatprep.subr.mxu0 %v6645
      %6861 = vmatpush1.msra.mxu0 %v6627
      %6862 = vmatprep.subr.mxu0 %v6644
      %6863 = vmatpush1.msra.mxu0 %v6626
      %6864 = vmatprep.subr.mxu0 %v6643
      %6865 = vmatpush1.msra.mxu0 %v6625
      %6866 = vmatprep.subr.mxu0 %v6642
      %6867 = vmatpush1.msra.mxu0 %v6624
      %6868 = vmatprep.subr.mxu0 %v6641
      %6869 = vmatpush1.msra.mxu0 %v6623
      %6870 = vmatprep.subr.mxu0 %v6640
      %6871 = vmatpush1.msra.mxu0 %v6622
      %6872 = vmatprep.subr.mxu0 %v6639
      %6873 = vmatpush1.msra.mxu0 %v6621
      %6874 = vmatprep.subr.mxu0 %v6638
      %6875 = vmatpush1.msra.mxu0 %v6620
      %6876 = vmatprep.subr.mxu0 %v6637
      %6877 = vmatpush1.msra.mxu0 %v6619
      %6878 = vmatprep.subr.mxu0 %v6636
      %6879 = vmatpush1.msra.mxu0 %v6618
      %6880 = vmatprep.subr.mxu0 %v6635
      %6881 = vmatpush1.msra.mxu0 %v6617
      %6882 = vmatprep.subr.mxu0 %v6634
      %6883 = vmatpush1.msra.mxu0 %v6616
      %6884 = vmatprep.subr.mxu0 %v6633
      %6885 = vmatpush1.msra.mxu0 %v6615
      %6886 = vmatprep.subr.mxu0 %v6632
      %6887 = vmatpush1.msra.mxu0 %v6614
      %6888 = vmatprep.subr.mxu0 0.0
      %6889 = vmatpush2.msra.mxu0 0.0
      %6890 = vmatprep.subr.mxu0 0.0
      %6891 = vmatpush2.msra.mxu0 0.0
      %6892 = vmatprep.subr.mxu0 0.0
      %6893 = vmatpush2.msra.mxu0 0.0
      %6894 = vmatprep.subr.mxu0 0.0
      %6895 = vmatpush2.msra.mxu0 0.0
      %6896 = vmatprep.subr.mxu0 0.0
      %6897 = vmatpush2.msra.mxu0 0.0
      %6898 = vmatprep.subr.mxu0 0.0
      %6899 = vmatpush2.msra.mxu0 0.0
      %6900 = vmatprep.subr.mxu0 0.0
      %6901 = vmatpush2.msra.mxu0 0.0
      %6902 = vmatprep.subr.mxu0 0.0
      %6903 = vmatpush2.msra.mxu0 0.0
      %6904 = vmatprep.subr.mxu0 0.0
      %6905 = vmatpush2.msra.mxu0 0.0
      %6906 = vmatprep.subr.mxu0 0.0
      %6907 = vmatpush2.msra.mxu0 0.0
      %6908 = vmatprep.subr.mxu0 0.0
      %6909 = vmatpush2.msra.mxu0 0.0
      %6910 = vmatprep.subr.mxu0 0.0
      %6911 = vmatpush2.msra.mxu0 0.0
      %6912 = vmatprep.subr.mxu0 0.0
      %6913 = vmatpush2.msra.mxu0 0.0
      %6914 = vmatprep.subr.mxu0 0.0
      %6915 = vmatpush2.msra.mxu0 0.0
      %6916 = vmatprep.subr.mxu0 %v6649
      %6917 = vmatpush2.msra.mxu0 %v6631
      %6918 = vmatprep.subr.mxu0 %v6648
      %6919 = vmatpush2.msra.mxu0 %v6630
      %6920 = vmatprep.mubr.f32.mxu0 %v6756
      %6921 = vmatmul.mubr.f32.gmra.mxu0 %v6722
      %v6922 = vpop.f32.mrf.mxu0
      %v6923 = vadd.f32 %v6737, %v6922
      %v6924 = vpop.f32.mrf.mxu0
      %v6925 = vadd.f32 %v6737, %v6924
      %6926 = vmatprep.mubr.f32.mxu0 %v6759
      %6927 = vmatmul.mubr.f32.gmra.mxu0 %v6724
      %v6928 = vpop.f32.mrf.mxu0
      %v6929 = vadd.f32 %v6742, %v6928
      %v6930 = vpop.f32.mrf.mxu0
      %v6931 = vadd.f32 %v6742, %v6930
      %6932 = vmatprep.mubr.f32.mxu0 %v6762
      %6933 = vmatmul.mubr.f32.gmra.mxu0 %v6726
      %v6934 = vpop.f32.mrf.mxu0
      %v6935 = vadd.f32 %v6747, %v6934
      %v6936 = vpop.f32.mrf.mxu0
      %v6937 = vadd.f32 %v6747, %v6936
      %6938 = vmatprep.mubr.f32.mxu0 %v6765
      %6939 = vmatmul.mubr.f32.gmra.mxu0 %v6728
      %v6940 = vpop.f32.mrf.mxu0
      %v6941 = vadd.f32 %v6752, %v6940
      %v6942 = vpop.f32.mrf.mxu0
      %v6943 = vadd.f32 %v6752, %v6942
      %6944 = vdwg.mxu0
      %6945 = vmatprep.subr.mxu0 %v6683
      %6946 = vmatpush1.msra.mxu0 %v6665
      %6947 = vmatprep.subr.mxu0 %v6682
      %6948 = vmatpush1.msra.mxu0 %v6664
      %6949 = vmatprep.subr.mxu0 %v6681
      %6950 = vmatpush1.msra.mxu0 %v6663
      %6951 = vmatprep.subr.mxu0 %v6680
      %6952 = vmatpush1.msra.mxu0 %v6662
      %6953 = vmatprep.subr.mxu0 %v6679
      %6954 = vmatpush1.msra.mxu0 %v6661
      %6955 = vmatprep.subr.mxu0 %v6678
      %6956 = vmatpush1.msra.mxu0 %v6660
      %6957 = vmatprep.subr.mxu0 %v6677
      %6958 = vmatpush1.msra.mxu0 %v6659
      %6959 = vmatprep.subr.mxu0 %v6676
      %6960 = vmatpush1.msra.mxu0 %v6658
      %6961 = vmatprep.subr.mxu0 %v6675
      %6962 = vmatpush1.msra.mxu0 %v6657
      %6963 = vmatprep.subr.mxu0 %v6674
      %6964 = vmatpush1.msra.mxu0 %v6656
      %6965 = vmatprep.subr.mxu0 %v6673
      %6966 = vmatpush1.msra.mxu0 %v6655
      %6967 = vmatprep.subr.mxu0 %v6672
      %6968 = vmatpush1.msra.mxu0 %v6654
      %6969 = vmatprep.subr.mxu0 %v6671
      %6970 = vmatpush1.msra.mxu0 %v6653
      %6971 = vmatprep.subr.mxu0 %v6670
      %6972 = vmatpush1.msra.mxu0 %v6652
      %6973 = vmatprep.subr.mxu0 %v6669
      %6974 = vmatpush1.msra.mxu0 %v6651
      %6975 = vmatprep.subr.mxu0 %v6668
      %6976 = vmatpush1.msra.mxu0 %v6650
      %6977 = vmatprep.subr.mxu0 0.0
      %6978 = vmatpush2.msra.mxu0 0.0
      %6979 = vmatprep.subr.mxu0 0.0
      %6980 = vmatpush2.msra.mxu0 0.0
      %6981 = vmatprep.subr.mxu0 0.0
      %6982 = vmatpush2.msra.mxu0 0.0
      %6983 = vmatprep.subr.mxu0 0.0
      %6984 = vmatpush2.msra.mxu0 0.0
      %6985 = vmatprep.subr.mxu0 0.0
      %6986 = vmatpush2.msra.mxu0 0.0
      %6987 = vmatprep.subr.mxu0 0.0
      %6988 = vmatpush2.msra.mxu0 0.0
      %6989 = vmatprep.subr.mxu0 0.0
      %6990 = vmatpush2.msra.mxu0 0.0
      %6991 = vmatprep.subr.mxu0 0.0
      %6992 = vmatpush2.msra.mxu0 0.0
      %6993 = vmatprep.subr.mxu0 0.0
      %6994 = vmatpush2.msra.mxu0 0.0
      %6995 = vmatprep.subr.mxu0 0.0
      %6996 = vmatpush2.msra.mxu0 0.0
      %6997 = vmatprep.subr.mxu0 0.0
      %6998 = vmatpush2.msra.mxu0 0.0
      %6999 = vmatprep.subr.mxu0 0.0
      %7000 = vmatpush2.msra.mxu0 0.0
      %7001 = vmatprep.subr.mxu0 0.0
      %7002 = vmatpush2.msra.mxu0 0.0
      %7003 = vmatprep.subr.mxu0 0.0
      %7004 = vmatpush2.msra.mxu0 0.0
      %7005 = vmatprep.subr.mxu0 %v6685
      %7006 = vmatpush2.msra.mxu0 %v6667
      %7007 = vmatprep.subr.mxu0 %v6684
      %7008 = vmatpush2.msra.mxu0 %v6666
      %7009 = vmatprep.mubr.f32.mxu0 %v6756
      %7010 = vmatmul.mubr.f32.gmra.mxu0 %v6722
      %v7011 = vpop.f32.mrf.mxu0
      %v7012 = vadd.f32 %v6737, %v7011
      %v7013 = vpop.f32.mrf.mxu0
      %v7014 = vadd.f32 %v6737, %v7013
      %7015 = vmatprep.mubr.f32.mxu0 %v6759
      %7016 = vmatmul.mubr.f32.gmra.mxu0 %v6724
      %v7017 = vpop.f32.mrf.mxu0
      %v7018 = vadd.f32 %v6742, %v7017
      %v7019 = vpop.f32.mrf.mxu0
      %v7020 = vadd.f32 %v6742, %v7019
      %7021 = vmatprep.mubr.f32.mxu0 %v6762
      %7022 = vmatmul.mubr.f32.gmra.mxu0 %v6726
      %v7023 = vpop.f32.mrf.mxu0
      %v7024 = vadd.f32 %v6747, %v7023
      %v7025 = vpop.f32.mrf.mxu0
      %v7026 = vadd.f32 %v6747, %v7025
      %7027 = vmatprep.mubr.f32.mxu0 %v6765
      %7028 = vmatmul.mubr.f32.gmra.mxu0 %v6728
      %v7029 = vpop.f32.mrf.mxu0
      %v7030 = vadd.f32 %v6752, %v7029
      %v7031 = vpop.f32.mrf.mxu0
      %v7032 = vadd.f32 %v6752, %v7031
      %7033 = vdwg.mxu0
      %7034 = vmatprep.subr.mxu0 %v6719
      %7035 = vmatpush1.msra.mxu0 %v6701
      %7036 = vmatprep.subr.mxu0 %v6718
      %7037 = vmatpush1.msra.mxu0 %v6700
      %7038 = vmatprep.subr.mxu0 %v6717
      %7039 = vmatpush1.msra.mxu0 %v6699
      %7040 = vmatprep.subr.mxu0 %v6716
      %7041 = vmatpush1.msra.mxu0 %v6698
      %7042 = vmatprep.subr.mxu0 %v6715
      %7043 = vmatpush1.msra.mxu0 %v6697
      %7044 = vmatprep.subr.mxu0 %v6714
      %7045 = vmatpush1.msra.mxu0 %v6696
      %7046 = vmatprep.subr.mxu0 %v6713
      %7047 = vmatpush1.msra.mxu0 %v6695
      %7048 = vmatprep.subr.mxu0 %v6712
      %7049 = vmatpush1.msra.mxu0 %v6694
      %7050 = vmatprep.subr.mxu0 %v6711
      %7051 = vmatpush1.msra.mxu0 %v6693
      %7052 = vmatprep.subr.mxu0 %v6710
      %7053 = vmatpush1.msra.mxu0 %v6692
      %7054 = vmatprep.subr.mxu0 %v6709
      %7055 = vmatpush1.msra.mxu0 %v6691
      %7056 = vmatprep.subr.mxu0 %v6708
      %7057 = vmatpush1.msra.mxu0 %v6690
      %7058 = vmatprep.subr.mxu0 %v6707
      %7059 = vmatpush1.msra.mxu0 %v6689
      %7060 = vmatprep.subr.mxu0 %v6706
      %7061 = vmatpush1.msra.mxu0 %v6688
      %7062 = vmatprep.subr.mxu0 %v6705
      %7063 = vmatpush1.msra.mxu0 %v6687
      %7064 = vmatprep.subr.mxu0 %v6704
      %7065 = vmatpush1.msra.mxu0 %v6686
      %7066 = vmatprep.subr.mxu0 0.0
      %7067 = vmatpush2.msra.mxu0 0.0
      %7068 = vmatprep.subr.mxu0 0.0
      %7069 = vmatpush2.msra.mxu0 0.0
      %7070 = vmatprep.subr.mxu0 0.0
      %7071 = vmatpush2.msra.mxu0 0.0
      %7072 = vmatprep.subr.mxu0 0.0
      %7073 = vmatpush2.msra.mxu0 0.0
      %7074 = vmatprep.subr.mxu0 0.0
      %7075 = vmatpush2.msra.mxu0 0.0
      %7076 = vmatprep.subr.mxu0 0.0
      %7077 = vmatpush2.msra.mxu0 0.0
      %7078 = vmatprep.subr.mxu0 0.0
      %7079 = vmatpush2.msra.mxu0 0.0
      %7080 = vmatprep.subr.mxu0 0.0
      %7081 = vmatpush2.msra.mxu0 0.0
      %7082 = vmatprep.subr.mxu0 0.0
      %7083 = vmatpush2.msra.mxu0 0.0
      %7084 = vmatprep.subr.mxu0 0.0
      %7085 = vmatpush2.msra.mxu0 0.0
      %7086 = vmatprep.subr.mxu0 0.0
      %7087 = vmatpush2.msra.mxu0 0.0
      %7088 = vmatprep.subr.mxu0 0.0
      %7089 = vmatpush2.msra.mxu0 0.0
      %7090 = vmatprep.subr.mxu0 0.0
      %7091 = vmatpush2.msra.mxu0 0.0
      %7092 = vmatprep.subr.mxu0 0.0
      %7093 = vmatpush2.msra.mxu0 0.0
      %7094 = vmatprep.subr.mxu0 %v6721
      %7095 = vmatpush2.msra.mxu0 %v6703
      %7096 = vmatprep.subr.mxu0 %v6720
      %7097 = vmatpush2.msra.mxu0 %v6702
      %7098 = vmatprep.mubr.f32.mxu0 %v6756
      %7099 = vmatmul.mubr.f32.gmra.mxu0 %v6722
      %v7100 = vpop.f32.mrf.mxu0
      %v7101 = vadd.f32 %v6737, %v7100
      %v7102 = vpop.f32.mrf.mxu0
      %v7103 = vadd.f32 %v6737, %v7102
      %7104 = vmatprep.mubr.f32.mxu0 %v6759
      %7105 = vmatmul.mubr.f32.gmra.mxu0 %v6724
      %v7106 = vpop.f32.mrf.mxu0
      %v7107 = vadd.f32 %v6742, %v7106
      %v7108 = vpop.f32.mrf.mxu0
      %v7109 = vadd.f32 %v6742, %v7108
      %7110 = vmatprep.mubr.f32.mxu0 %v6762
      %7111 = vmatmul.mubr.f32.gmra.mxu0 %v6726
      %v7112 = vpop.f32.mrf.mxu0
      %v7113 = vadd.f32 %v6747, %v7112
      %v7114 = vpop.f32.mrf.mxu0
      %v7115 = vadd.f32 %v6747, %v7114
      %7116 = vmatprep.mubr.f32.mxu0 %v6765
      %7117 = vmatmul.mubr.f32.gmra.mxu0 %v6728
      %v7118 = vpop.f32.mrf.mxu0
      %v7119 = vadd.f32 %v6752, %v7118
      %v7120 = vpop.f32.mrf.mxu0
      %v7121 = vadd.f32 %v6752, %v7120
      %7122 = vdwg.mxu0
      %v7123 = vmax.f32 %v6834, 0.0
      %v7124 = vmax.f32 %v6836, 0.0
      %v7125 = vmax.f32 %v6923, 0.0
      %v7126 = vmax.f32 %v6925, 0.0
      %v7127 = vmax.f32 %v7012, 0.0
      %v7128 = vmax.f32 %v7014, 0.0
      %v7129 = vmax.f32 %v7101, 0.0
      %v7130 = vmax.f32 %v7103, 0.0
      %v7131 = vmax.f32 %v6840, 0.0
      %v7132 = vmax.f32 %v6842, 0.0
      %v7133 = vmax.f32 %v6929, 0.0
      %v7134 = vmax.f32 %v6931, 0.0
      %v7135 = vmax.f32 %v7018, 0.0
      %v7136 = vmax.f32 %v7020, 0.0
      %v7137 = vmax.f32 %v7107, 0.0
      %v7138 = vmax.f32 %v7109, 0.0
      %v7139 = vmax.f32 %v6846, 0.0
      %v7140 = vmax.f32 %v6848, 0.0
      %v7141 = vmax.f32 %v6935, 0.0
      %v7142 = vmax.f32 %v6937, 0.0
      %v7143 = vmax.f32 %v7024, 0.0
      %v7144 = vmax.f32 %v7026, 0.0
      %v7145 = vmax.f32 %v7113, 0.0
      %v7146 = vmax.f32 %v7115, 0.0
      %v7147 = vmax.f32 %v6852, 0.0
      %v7148 = vmax.f32 %v6854, 0.0
      %v7149 = vmax.f32 %v6941, 0.0
      %v7150 = vmax.f32 %v6943, 0.0
      %v7151 = vmax.f32 %v7030, 0.0
      %v7152 = vmax.f32 %v7032, 0.0
      %v7153 = vmax.f32 %v7119, 0.0
      %v7154 = vmax.f32 %v7121, 0.0
      %v7187 = vcombine.low %v7123, %v7124
      %v7188 = vcombine.high %v7123, %v7124
      %v7189 = vcombine.low %v7125, %v7126
      %v7190 = vcombine.high %v7125, %v7126
      %v7191 = vcombine.low %v7127, %v7128
      %v7192 = vcombine.high %v7127, %v7128
      %v7193 = vcombine.low %v7129, %v7130
      %v7194 = vcombine.high %v7129, %v7130
      %v7196 = vunpack.c.l.s4 1966171168
      %v7197 = vunpack.c.0.s8 %v7196
      %v7198 = vlaneseq
      %v7199 = vshrl.u32 %v7198, 7
      %v7200 = vsub.s32 %v7197, %v7199
      %v7201 = vrot.slane %v7187, %v7200
      %v7203 = vunpack.c.l.s4 1966171168
      %v7204 = vunpack.c.0.s8 %v7203
      %v7205 = vlaneseq
      %v7206 = vshrl.u32 %v7205, 7
      %v7207 = vsub.s32 %v7204, %v7206
      %v7208 = vrot.slane %v7188, %v7207
      %v7210 = vunpack.c.l.s4 1966171168
      %v7211 = vunpack.c.0.s8 %v7210
      %v7212 = vlaneseq
      %v7213 = vshrl.u32 %v7212, 7
      %v7214 = vsub.s32 %v7211, %v7213
      %v7215 = vrot.slane %v7189, %v7214
      %v7217 = vunpack.c.l.s4 1966171168
      %v7218 = vunpack.c.0.s8 %v7217
      %v7219 = vlaneseq
      %v7220 = vshrl.u32 %v7219, 7
      %v7221 = vsub.s32 %v7218, %v7220
      %v7222 = vrot.slane %v7190, %v7221
      %v7224 = vunpack.c.l.s4 1966171168
      %v7225 = vunpack.c.0.s8 %v7224
      %v7226 = vlaneseq
      %v7227 = vshrl.u32 %v7226, 7
      %v7228 = vsub.s32 %v7225, %v7227
      %v7229 = vrot.slane %v7191, %v7228
      %v7231 = vunpack.c.l.s4 1966171168
      %v7232 = vunpack.c.0.s8 %v7231
      %v7233 = vlaneseq
      %v7234 = vshrl.u32 %v7233, 7
      %v7235 = vsub.s32 %v7232, %v7234
      %v7236 = vrot.slane %v7192, %v7235
      %v7238 = vunpack.c.l.s4 1966171168
      %v7239 = vunpack.c.0.s8 %v7238
      %v7240 = vlaneseq
      %v7241 = vshrl.u32 %v7240, 7
      %v7242 = vsub.s32 %v7239, %v7241
      %v7243 = vrot.slane %v7193, %v7242
      %v7245 = vunpack.c.l.s4 1966171168
      %v7246 = vunpack.c.0.s8 %v7245
      %v7247 = vlaneseq
      %v7248 = vshrl.u32 %v7247, 7
      %v7249 = vsub.s32 %v7246, %v7248
      %v7250 = vrot.slane %v7194, %v7249
      %v7251 = vcombine.low %v7201, %v7215
      %v7252 = vcombine.high %v7201, %v7215
      %v7253 = vcombine.low %v7208, %v7222
      %v7254 = vcombine.high %v7208, %v7222
      %v7255 = vcombine.low %v7229, %v7243
      %v7256 = vcombine.high %v7229, %v7243
      %v7257 = vcombine.low %v7236, %v7250
      %v7258 = vcombine.high %v7236, %v7250
      %v7260 = vunpack.c.l.s4 1966171168
      %v7261 = vunpack.c.0.s8 %v7260
      %v7262 = vlaneseq
      %v7263 = vshrl.u32 %v7262, 7
      %v7264 = vsub.s32 %v7261, %v7263
      %v7265 = vrot.slane %v7251, %v7264
      %v7267 = vunpack.c.l.s4 1966171168
      %v7268 = vunpack.c.0.s8 %v7267
      %v7269 = vlaneseq
      %v7270 = vshrl.u32 %v7269, 7
      %v7271 = vsub.s32 %v7268, %v7270
      %v7272 = vrot.slane %v7253, %v7271
      %v7274 = vunpack.c.l.s4 1966171168
      %v7275 = vunpack.c.0.s8 %v7274
      %v7276 = vlaneseq
      %v7277 = vshrl.u32 %v7276, 7
      %v7278 = vsub.s32 %v7275, %v7277
      %v7279 = vrot.slane %v7252, %v7278
      %v7281 = vunpack.c.l.s4 1966171168
      %v7282 = vunpack.c.0.s8 %v7281
      %v7283 = vlaneseq
      %v7284 = vshrl.u32 %v7283, 7
      %v7285 = vsub.s32 %v7282, %v7284
      %v7286 = vrot.slane %v7254, %v7285
      %v7288 = vunpack.c.l.s4 1966171168
      %v7289 = vunpack.c.0.s8 %v7288
      %v7290 = vlaneseq
      %v7291 = vshrl.u32 %v7290, 7
      %v7292 = vsub.s32 %v7289, %v7291
      %v7293 = vrot.slane %v7255, %v7292
      %v7295 = vunpack.c.l.s4 1966171168
      %v7296 = vunpack.c.0.s8 %v7295
      %v7297 = vlaneseq
      %v7298 = vshrl.u32 %v7297, 7
      %v7299 = vsub.s32 %v7296, %v7298
      %v7300 = vrot.slane %v7257, %v7299
      %v7302 = vunpack.c.l.s4 1966171168
      %v7303 = vunpack.c.0.s8 %v7302
      %v7304 = vlaneseq
      %v7305 = vshrl.u32 %v7304, 7
      %v7306 = vsub.s32 %v7303, %v7305
      %v7307 = vrot.slane %v7256, %v7306
      %v7309 = vunpack.c.l.s4 1966171168
      %v7310 = vunpack.c.0.s8 %v7309
      %v7311 = vlaneseq
      %v7312 = vshrl.u32 %v7311, 7
      %v7313 = vsub.s32 %v7310, %v7312
      %v7314 = vrot.slane %v7258, %v7313
      %v7315 = vcombine.low %v7265, %v7293
      %v7316 = vcombine.high %v7265, %v7293
      %v7317 = vcombine.low %v7272, %v7300
      %v7318 = vcombine.high %v7272, %v7300
      %v7319 = vcombine.low %v7279, %v7307
      %v7320 = vcombine.high %v7279, %v7307
      %v7321 = vcombine.low %v7286, %v7314
      %v7322 = vcombine.high %v7286, %v7314
      %v7323 = vcombine.low %v7131, %v7132
      %v7324 = vcombine.high %v7131, %v7132
      %v7325 = vcombine.low %v7133, %v7134
      %v7326 = vcombine.high %v7133, %v7134
      %v7327 = vcombine.low %v7135, %v7136
      %v7328 = vcombine.high %v7135, %v7136
      %v7329 = vcombine.low %v7137, %v7138
      %v7330 = vcombine.high %v7137, %v7138
      %v7332 = vunpack.c.l.s4 1966171168
      %v7333 = vunpack.c.0.s8 %v7332
      %v7334 = vlaneseq
      %v7335 = vshrl.u32 %v7334, 7
      %v7336 = vsub.s32 %v7333, %v7335
      %v7337 = vrot.slane %v7323, %v7336
      %v7339 = vunpack.c.l.s4 1966171168
      %v7340 = vunpack.c.0.s8 %v7339
      %v7341 = vlaneseq
      %v7342 = vshrl.u32 %v7341, 7
      %v7343 = vsub.s32 %v7340, %v7342
      %v7344 = vrot.slane %v7324, %v7343
      %v7346 = vunpack.c.l.s4 1966171168
      %v7347 = vunpack.c.0.s8 %v7346
      %v7348 = vlaneseq
      %v7349 = vshrl.u32 %v7348, 7
      %v7350 = vsub.s32 %v7347, %v7349
      %v7351 = vrot.slane %v7325, %v7350
      %v7353 = vunpack.c.l.s4 1966171168
      %v7354 = vunpack.c.0.s8 %v7353
      %v7355 = vlaneseq
      %v7356 = vshrl.u32 %v7355, 7
      %v7357 = vsub.s32 %v7354, %v7356
      %v7358 = vrot.slane %v7326, %v7357
      %v7360 = vunpack.c.l.s4 1966171168
      %v7361 = vunpack.c.0.s8 %v7360
      %v7362 = vlaneseq
      %v7363 = vshrl.u32 %v7362, 7
      %v7364 = vsub.s32 %v7361, %v7363
      %v7365 = vrot.slane %v7327, %v7364
      %v7367 = vunpack.c.l.s4 1966171168
      %v7368 = vunpack.c.0.s8 %v7367
      %v7369 = vlaneseq
      %v7370 = vshrl.u32 %v7369, 7
      %v7371 = vsub.s32 %v7368, %v7370
      %v7372 = vrot.slane %v7328, %v7371
      %v7374 = vunpack.c.l.s4 1966171168
      %v7375 = vunpack.c.0.s8 %v7374
      %v7376 = vlaneseq
      %v7377 = vshrl.u32 %v7376, 7
      %v7378 = vsub.s32 %v7375, %v7377
      %v7379 = vrot.slane %v7329, %v7378
      %v7381 = vunpack.c.l.s4 1966171168
      %v7382 = vunpack.c.0.s8 %v7381
      %v7383 = vlaneseq
      %v7384 = vshrl.u32 %v7383, 7
      %v7385 = vsub.s32 %v7382, %v7384
      %v7386 = vrot.slane %v7330, %v7385
      %v7387 = vcombine.low %v7337, %v7351
      %v7388 = vcombine.high %v7337, %v7351
      %v7389 = vcombine.low %v7344, %v7358
      %v7390 = vcombine.high %v7344, %v7358
      %v7391 = vcombine.low %v7365, %v7379
      %v7392 = vcombine.high %v7365, %v7379
      %v7393 = vcombine.low %v7372, %v7386
      %v7394 = vcombine.high %v7372, %v7386
      %v7396 = vunpack.c.l.s4 1966171168
      %v7397 = vunpack.c.0.s8 %v7396
      %v7398 = vlaneseq
      %v7399 = vshrl.u32 %v7398, 7
      %v7400 = vsub.s32 %v7397, %v7399
      %v7401 = vrot.slane %v7387, %v7400
      %v7403 = vunpack.c.l.s4 1966171168
      %v7404 = vunpack.c.0.s8 %v7403
      %v7405 = vlaneseq
      %v7406 = vshrl.u32 %v7405, 7
      %v7407 = vsub.s32 %v7404, %v7406
      %v7408 = vrot.slane %v7389, %v7407
      %v7410 = vunpack.c.l.s4 1966171168
      %v7411 = vunpack.c.0.s8 %v7410
      %v7412 = vlaneseq
      %v7413 = vshrl.u32 %v7412, 7
      %v7414 = vsub.s32 %v7411, %v7413
      %v7415 = vrot.slane %v7388, %v7414
      %v7417 = vunpack.c.l.s4 1966171168
      %v7418 = vunpack.c.0.s8 %v7417
      %v7419 = vlaneseq
      %v7420 = vshrl.u32 %v7419, 7
      %v7421 = vsub.s32 %v7418, %v7420
      %v7422 = vrot.slane %v7390, %v7421
      %v7424 = vunpack.c.l.s4 1966171168
      %v7425 = vunpack.c.0.s8 %v7424
      %v7426 = vlaneseq
      %v7427 = vshrl.u32 %v7426, 7
      %v7428 = vsub.s32 %v7425, %v7427
      %v7429 = vrot.slane %v7391, %v7428
      %v7431 = vunpack.c.l.s4 1966171168
      %v7432 = vunpack.c.0.s8 %v7431
      %v7433 = vlaneseq
      %v7434 = vshrl.u32 %v7433, 7
      %v7435 = vsub.s32 %v7432, %v7434
      %v7436 = vrot.slane %v7393, %v7435
      %v7438 = vunpack.c.l.s4 1966171168
      %v7439 = vunpack.c.0.s8 %v7438
      %v7440 = vlaneseq
      %v7441 = vshrl.u32 %v7440, 7
      %v7442 = vsub.s32 %v7439, %v7441
      %v7443 = vrot.slane %v7392, %v7442
      %v7445 = vunpack.c.l.s4 1966171168
      %v7446 = vunpack.c.0.s8 %v7445
      %v7447 = vlaneseq
      %v7448 = vshrl.u32 %v7447, 7
      %v7449 = vsub.s32 %v7446, %v7448
      %v7450 = vrot.slane %v7394, %v7449
      %v7451 = vcombine.low %v7401, %v7429
      %v7452 = vcombine.high %v7401, %v7429
      %v7453 = vcombine.low %v7408, %v7436
      %v7454 = vcombine.high %v7408, %v7436
      %v7455 = vcombine.low %v7415, %v7443
      %v7456 = vcombine.high %v7415, %v7443
      %v7457 = vcombine.low %v7422, %v7450
      %v7458 = vcombine.high %v7422, %v7450
      %v7459 = vcombine.low %v7139, %v7140
      %v7460 = vcombine.high %v7139, %v7140
      %v7461 = vcombine.low %v7141, %v7142
      %v7462 = vcombine.high %v7141, %v7142
      %v7463 = vcombine.low %v7143, %v7144
      %v7464 = vcombine.high %v7143, %v7144
      %v7465 = vcombine.low %v7145, %v7146
      %v7466 = vcombine.high %v7145, %v7146
      %v7468 = vunpack.c.l.s4 1966171168
      %v7469 = vunpack.c.0.s8 %v7468
      %v7470 = vlaneseq
      %v7471 = vshrl.u32 %v7470, 7
      %v7472 = vsub.s32 %v7469, %v7471
      %v7473 = vrot.slane %v7459, %v7472
      %v7475 = vunpack.c.l.s4 1966171168
      %v7476 = vunpack.c.0.s8 %v7475
      %v7477 = vlaneseq
      %v7478 = vshrl.u32 %v7477, 7
      %v7479 = vsub.s32 %v7476, %v7478
      %v7480 = vrot.slane %v7460, %v7479
      %v7482 = vunpack.c.l.s4 1966171168
      %v7483 = vunpack.c.0.s8 %v7482
      %v7484 = vlaneseq
      %v7485 = vshrl.u32 %v7484, 7
      %v7486 = vsub.s32 %v7483, %v7485
      %v7487 = vrot.slane %v7461, %v7486
      %v7489 = vunpack.c.l.s4 1966171168
      %v7490 = vunpack.c.0.s8 %v7489
      %v7491 = vlaneseq
      %v7492 = vshrl.u32 %v7491, 7
      %v7493 = vsub.s32 %v7490, %v7492
      %v7494 = vrot.slane %v7462, %v7493
      %v7496 = vunpack.c.l.s4 1966171168
      %v7497 = vunpack.c.0.s8 %v7496
      %v7498 = vlaneseq
      %v7499 = vshrl.u32 %v7498, 7
      %v7500 = vsub.s32 %v7497, %v7499
      %v7501 = vrot.slane %v7463, %v7500
      %v7503 = vunpack.c.l.s4 1966171168
      %v7504 = vunpack.c.0.s8 %v7503
      %v7505 = vlaneseq
      %v7506 = vshrl.u32 %v7505, 7
      %v7507 = vsub.s32 %v7504, %v7506
      %v7508 = vrot.slane %v7464, %v7507
      %v7510 = vunpack.c.l.s4 1966171168
      %v7511 = vunpack.c.0.s8 %v7510
      %v7512 = vlaneseq
      %v7513 = vshrl.u32 %v7512, 7
      %v7514 = vsub.s32 %v7511, %v7513
      %v7515 = vrot.slane %v7465, %v7514
      %v7517 = vunpack.c.l.s4 1966171168
      %v7518 = vunpack.c.0.s8 %v7517
      %v7519 = vlaneseq
      %v7520 = vshrl.u32 %v7519, 7
      %v7521 = vsub.s32 %v7518, %v7520
      %v7522 = vrot.slane %v7466, %v7521
      %v7523 = vcombine.low %v7473, %v7487
      %v7524 = vcombine.high %v7473, %v7487
      %v7525 = vcombine.low %v7480, %v7494
      %v7526 = vcombine.high %v7480, %v7494
      %v7527 = vcombine.low %v7501, %v7515
      %v7528 = vcombine.high %v7501, %v7515
      %v7529 = vcombine.low %v7508, %v7522
      %v7530 = vcombine.high %v7508, %v7522
      %v7532 = vunpack.c.l.s4 1966171168
      %v7533 = vunpack.c.0.s8 %v7532
      %v7534 = vlaneseq
      %v7535 = vshrl.u32 %v7534, 7
      %v7536 = vsub.s32 %v7533, %v7535
      %v7537 = vrot.slane %v7523, %v7536
      %v7539 = vunpack.c.l.s4 1966171168
      %v7540 = vunpack.c.0.s8 %v7539
      %v7541 = vlaneseq
      %v7542 = vshrl.u32 %v7541, 7
      %v7543 = vsub.s32 %v7540, %v7542
      %v7544 = vrot.slane %v7525, %v7543
      %v7546 = vunpack.c.l.s4 1966171168
      %v7547 = vunpack.c.0.s8 %v7546
      %v7548 = vlaneseq
      %v7549 = vshrl.u32 %v7548, 7
      %v7550 = vsub.s32 %v7547, %v7549
      %v7551 = vrot.slane %v7524, %v7550
      %v7553 = vunpack.c.l.s4 1966171168
      %v7554 = vunpack.c.0.s8 %v7553
      %v7555 = vlaneseq
      %v7556 = vshrl.u32 %v7555, 7
      %v7557 = vsub.s32 %v7554, %v7556
      %v7558 = vrot.slane %v7526, %v7557
      %v7560 = vunpack.c.l.s4 1966171168
      %v7561 = vunpack.c.0.s8 %v7560
      %v7562 = vlaneseq
      %v7563 = vshrl.u32 %v7562, 7
      %v7564 = vsub.s32 %v7561, %v7563
      %v7565 = vrot.slane %v7527, %v7564
      %v7567 = vunpack.c.l.s4 1966171168
      %v7568 = vunpack.c.0.s8 %v7567
      %v7569 = vlaneseq
      %v7570 = vshrl.u32 %v7569, 7
      %v7571 = vsub.s32 %v7568, %v7570
      %v7572 = vrot.slane %v7529, %v7571
      %v7574 = vunpack.c.l.s4 1966171168
      %v7575 = vunpack.c.0.s8 %v7574
      %v7576 = vlaneseq
      %v7577 = vshrl.u32 %v7576, 7
      %v7578 = vsub.s32 %v7575, %v7577
      %v7579 = vrot.slane %v7528, %v7578
      %v7581 = vunpack.c.l.s4 1966171168
      %v7582 = vunpack.c.0.s8 %v7581
      %v7583 = vlaneseq
      %v7584 = vshrl.u32 %v7583, 7
      %v7585 = vsub.s32 %v7582, %v7584
      %v7586 = vrot.slane %v7530, %v7585
      %v7587 = vcombine.low %v7537, %v7565
      %v7588 = vcombine.high %v7537, %v7565
      %v7589 = vcombine.low %v7544, %v7572
      %v7590 = vcombine.high %v7544, %v7572
      %v7591 = vcombine.low %v7551, %v7579
      %v7592 = vcombine.high %v7551, %v7579
      %v7593 = vcombine.low %v7558, %v7586
      %v7594 = vcombine.high %v7558, %v7586
      %v7595 = vcombine.low %v7147, %v7148
      %v7596 = vcombine.high %v7147, %v7148
      %v7597 = vcombine.low %v7149, %v7150
      %v7598 = vcombine.high %v7149, %v7150
      %v7599 = vcombine.low %v7151, %v7152
      %v7600 = vcombine.high %v7151, %v7152
      %v7601 = vcombine.low %v7153, %v7154
      %v7602 = vcombine.high %v7153, %v7154
      %v7604 = vunpack.c.l.s4 1966171168
      %v7605 = vunpack.c.0.s8 %v7604
      %v7606 = vlaneseq
      %v7607 = vshrl.u32 %v7606, 7
      %v7608 = vsub.s32 %v7605, %v7607
      %v7609 = vrot.slane %v7595, %v7608
      %v7611 = vunpack.c.l.s4 1966171168
      %v7612 = vunpack.c.0.s8 %v7611
      %v7613 = vlaneseq
      %v7614 = vshrl.u32 %v7613, 7
      %v7615 = vsub.s32 %v7612, %v7614
      %v7616 = vrot.slane %v7596, %v7615
      %v7618 = vunpack.c.l.s4 1966171168
      %v7619 = vunpack.c.0.s8 %v7618
      %v7620 = vlaneseq
      %v7621 = vshrl.u32 %v7620, 7
      %v7622 = vsub.s32 %v7619, %v7621
      %v7623 = vrot.slane %v7597, %v7622
      %v7625 = vunpack.c.l.s4 1966171168
      %v7626 = vunpack.c.0.s8 %v7625
      %v7627 = vlaneseq
      %v7628 = vshrl.u32 %v7627, 7
      %v7629 = vsub.s32 %v7626, %v7628
      %v7630 = vrot.slane %v7598, %v7629
      %v7632 = vunpack.c.l.s4 1966171168
      %v7633 = vunpack.c.0.s8 %v7632
      %v7634 = vlaneseq
      %v7635 = vshrl.u32 %v7634, 7
      %v7636 = vsub.s32 %v7633, %v7635
      %v7637 = vrot.slane %v7599, %v7636
      %v7639 = vunpack.c.l.s4 1966171168
      %v7640 = vunpack.c.0.s8 %v7639
      %v7641 = vlaneseq
      %v7642 = vshrl.u32 %v7641, 7
      %v7643 = vsub.s32 %v7640, %v7642
      %v7644 = vrot.slane %v7600, %v7643
      %v7646 = vunpack.c.l.s4 1966171168
      %v7647 = vunpack.c.0.s8 %v7646
      %v7648 = vlaneseq
      %v7649 = vshrl.u32 %v7648, 7
      %v7650 = vsub.s32 %v7647, %v7649
      %v7651 = vrot.slane %v7601, %v7650
      %v7653 = vunpack.c.l.s4 1966171168
      %v7654 = vunpack.c.0.s8 %v7653
      %v7655 = vlaneseq
      %v7656 = vshrl.u32 %v7655, 7
      %v7657 = vsub.s32 %v7654, %v7656
      %v7658 = vrot.slane %v7602, %v7657
      %v7659 = vcombine.low %v7609, %v7623
      %v7660 = vcombine.high %v7609, %v7623
      %v7661 = vcombine.low %v7616, %v7630
      %v7662 = vcombine.high %v7616, %v7630
      %v7663 = vcombine.low %v7637, %v7651
      %v7664 = vcombine.high %v7637, %v7651
      %v7665 = vcombine.low %v7644, %v7658
      %v7666 = vcombine.high %v7644, %v7658
      %v7668 = vunpack.c.l.s4 1966171168
      %v7669 = vunpack.c.0.s8 %v7668
      %v7670 = vlaneseq
      %v7671 = vshrl.u32 %v7670, 7
      %v7672 = vsub.s32 %v7669, %v7671
      %v7673 = vrot.slane %v7659, %v7672
      %v7675 = vunpack.c.l.s4 1966171168
      %v7676 = vunpack.c.0.s8 %v7675
      %v7677 = vlaneseq
      %v7678 = vshrl.u32 %v7677, 7
      %v7679 = vsub.s32 %v7676, %v7678
      %v7680 = vrot.slane %v7661, %v7679
      %v7682 = vunpack.c.l.s4 1966171168
      %v7683 = vunpack.c.0.s8 %v7682
      %v7684 = vlaneseq
      %v7685 = vshrl.u32 %v7684, 7
      %v7686 = vsub.s32 %v7683, %v7685
      %v7687 = vrot.slane %v7660, %v7686
      %v7689 = vunpack.c.l.s4 1966171168
      %v7690 = vunpack.c.0.s8 %v7689
      %v7691 = vlaneseq
      %v7692 = vshrl.u32 %v7691, 7
      %v7693 = vsub.s32 %v7690, %v7692
      %v7694 = vrot.slane %v7662, %v7693
      %v7696 = vunpack.c.l.s4 1966171168
      %v7697 = vunpack.c.0.s8 %v7696
      %v7698 = vlaneseq
      %v7699 = vshrl.u32 %v7698, 7
      %v7700 = vsub.s32 %v7697, %v7699
      %v7701 = vrot.slane %v7663, %v7700
      %v7703 = vunpack.c.l.s4 1966171168
      %v7704 = vunpack.c.0.s8 %v7703
      %v7705 = vlaneseq
      %v7706 = vshrl.u32 %v7705, 7
      %v7707 = vsub.s32 %v7704, %v7706
      %v7708 = vrot.slane %v7665, %v7707
      %v7710 = vunpack.c.l.s4 1966171168
      %v7711 = vunpack.c.0.s8 %v7710
      %v7712 = vlaneseq
      %v7713 = vshrl.u32 %v7712, 7
      %v7714 = vsub.s32 %v7711, %v7713
      %v7715 = vrot.slane %v7664, %v7714
      %v7717 = vunpack.c.l.s4 1966171168
      %v7718 = vunpack.c.0.s8 %v7717
      %v7719 = vlaneseq
      %v7720 = vshrl.u32 %v7719, 7
      %v7721 = vsub.s32 %v7718, %v7720
      %v7722 = vrot.slane %v7666, %v7721
      %v7723 = vcombine.low %v7673, %v7701
      %v7724 = vcombine.high %v7673, %v7701
      %v7725 = vcombine.low %v7680, %v7708
      %v7726 = vcombine.high %v7680, %v7708
      %v7727 = vcombine.low %v7687, %v7715
      %v7728 = vcombine.high %v7687, %v7715
      %v7729 = vcombine.low %v7694, %v7722
      %v7730 = vcombine.high %v7694, %v7722
      %7763 = vrot.lane.b32.xlu0 %v7315, 64
      %v7764 = vpop.permute.xlu0 %7763
      %7765 = vrot.lane.b32.xlu0 %v7319, 64
      %v7766 = vpop.permute.xlu0 %7765
      %7767 = vrot.lane.b32.xlu0 %v7316, 64
      %v7768 = vpop.permute.xlu0 %7767
      %7769 = vrot.lane.b32.xlu0 %v7320, 64
      %v7770 = vpop.permute.xlu0 %7769
      %7771 = vrot.lane.b32.xlu0 %v7317, 64
      %v7772 = vpop.permute.xlu0 %7771
      %7773 = vrot.lane.b32.xlu0 %v7321, 64
      %v7774 = vpop.permute.xlu0 %7773
      %7775 = vrot.lane.b32.xlu0 %v7318, 64
      %v7776 = vpop.permute.xlu0 %7775
      %7777 = vrot.lane.b32.xlu0 %v7322, 64
      %v7778 = vpop.permute.xlu0 %7777
      %7779 = vrot.lane.b32.xlu0 %v7451, 64
      %v7780 = vpop.permute.xlu0 %7779
      %7781 = vrot.lane.b32.xlu0 %v7455, 64
      %v7782 = vpop.permute.xlu0 %7781
      %7783 = vrot.lane.b32.xlu0 %v7452, 64
      %v7784 = vpop.permute.xlu0 %7783
      %7785 = vrot.lane.b32.xlu0 %v7456, 64
      %v7786 = vpop.permute.xlu0 %7785
      %7787 = vrot.lane.b32.xlu0 %v7453, 64
      %v7788 = vpop.permute.xlu0 %7787
      %7789 = vrot.lane.b32.xlu0 %v7457, 64
      %v7790 = vpop.permute.xlu0 %7789
      %7791 = vrot.lane.b32.xlu0 %v7454, 64
      %v7792 = vpop.permute.xlu0 %7791
      %7793 = vrot.lane.b32.xlu0 %v7458, 64
      %v7794 = vpop.permute.xlu0 %7793
      %7795 = vrot.lane.b32.xlu0 %v7587, 64
      %v7796 = vpop.permute.xlu0 %7795
      %7797 = vrot.lane.b32.xlu0 %v7591, 64
      %v7798 = vpop.permute.xlu0 %7797
      %7799 = vrot.lane.b32.xlu0 %v7588, 64
      %v7800 = vpop.permute.xlu0 %7799
      %7801 = vrot.lane.b32.xlu0 %v7592, 64
      %v7802 = vpop.permute.xlu0 %7801
      %7803 = vrot.lane.b32.xlu0 %v7589, 64
      %v7804 = vpop.permute.xlu0 %7803
      %7805 = vrot.lane.b32.xlu0 %v7593, 64
      %v7806 = vpop.permute.xlu0 %7805
      %7807 = vrot.lane.b32.xlu0 %v7590, 64
      %v7808 = vpop.permute.xlu0 %7807
      %7809 = vrot.lane.b32.xlu0 %v7594, 64
      %v7810 = vpop.permute.xlu0 %7809
      %7811 = vrot.lane.b32.xlu0 %v7723, 64
      %v7812 = vpop.permute.xlu0 %7811
      %7813 = vrot.lane.b32.xlu0 %v7727, 64
      %v7814 = vpop.permute.xlu0 %7813
      %7815 = vrot.lane.b32.xlu0 %v7724, 64
      %v7816 = vpop.permute.xlu0 %7815
      %7817 = vrot.lane.b32.xlu0 %v7728, 64
      %v7818 = vpop.permute.xlu0 %7817
      %7819 = vrot.lane.b32.xlu0 %v7725, 64
      %v7820 = vpop.permute.xlu0 %7819
      %7821 = vrot.lane.b32.xlu0 %v7729, 64
      %v7822 = vpop.permute.xlu0 %7821
      %7823 = vrot.lane.b32.xlu0 %v7726, 64
      %v7824 = vpop.permute.xlu0 %7823
      %7825 = vrot.lane.b32.xlu0 %v7730, 64
      %v7826 = vpop.permute.xlu0 %7825
      %v7859 = vmax.f32 %v7315, %v7764
      %v7860 = vmax.f32 %v7319, %v7766
      %v7861 = vmax.f32 %v7316, %v7768
      %v7862 = vmax.f32 %v7320, %v7770
      %v7863 = vmax.f32 %v7317, %v7772
      %v7864 = vmax.f32 %v7321, %v7774
      %v7865 = vmax.f32 %v7318, %v7776
      %v7866 = vmax.f32 %v7322, %v7778
      %v7867 = vmax.f32 %v7451, %v7780
      %v7868 = vmax.f32 %v7455, %v7782
      %v7869 = vmax.f32 %v7452, %v7784
      %v7870 = vmax.f32 %v7456, %v7786
      %v7871 = vmax.f32 %v7453, %v7788
      %v7872 = vmax.f32 %v7457, %v7790
      %v7873 = vmax.f32 %v7454, %v7792
      %v7874 = vmax.f32 %v7458, %v7794
      %v7875 = vmax.f32 %v7587, %v7796
      %v7876 = vmax.f32 %v7591, %v7798
      %v7877 = vmax.f32 %v7588, %v7800
      %v7878 = vmax.f32 %v7592, %v7802
      %v7879 = vmax.f32 %v7589, %v7804
      %v7880 = vmax.f32 %v7593, %v7806
      %v7881 = vmax.f32 %v7590, %v7808
      %v7882 = vmax.f32 %v7594, %v7810
      %v7883 = vmax.f32 %v7723, %v7812
      %v7884 = vmax.f32 %v7727, %v7814
      %v7885 = vmax.f32 %v7724, %v7816
      %v7886 = vmax.f32 %v7728, %v7818
      %v7887 = vmax.f32 %v7725, %v7820
      %v7888 = vmax.f32 %v7729, %v7822
      %v7889 = vmax.f32 %v7726, %v7824
      %v7890 = vmax.f32 %v7730, %v7826
      %7891 = vxpose.xlu0.b32.start [1/16] %v7859, 128
      %7892 = vxpose.xlu0.b32.cont [2/16] %v7860, 128
      %7893 = vxpose.xlu0.b32.cont [3/16] %v7861, 128
      %7894 = vxpose.xlu0.b32.cont [4/16] %v7862, 128
      %7895 = vxpose.xlu0.b32.cont [5/16] %v7863, 128
      %7896 = vxpose.xlu0.b32.cont [6/16] %v7864, 128
      %7897 = vxpose.xlu0.b32.cont [7/16] %v7865, 128
      %7898 = vxpose.xlu0.b32.cont [8/16] %v7866, 128
      %7899 = vxpose.xlu0.b32.cont [9/16] %v7867, 128
      %7900 = vxpose.xlu0.b32.cont [10/16] %v7868, 128
      %7901 = vxpose.xlu0.b32.cont [11/16] %v7869, 128
      %7902 = vxpose.xlu0.b32.cont [12/16] %v7870, 128
      %7903 = vxpose.xlu0.b32.cont [13/16] %v7871, 128
      %7904 = vxpose.xlu0.b32.cont [14/16] %v7872, 128
      %7905 = vxpose.xlu0.b32.cont [15/16] %v7873, 128
      %7906 = vxpose.xlu0.b32.end [16/16] %v7874, 128
      %v7907 = vpop.trf.xlu0
      %v7908 = vpop.trf.xlu0
      %v7909 = vpop.trf.xlu0
      %v7910 = vpop.trf.xlu0
      %v7911 = vpop.trf.xlu0
      %v7912 = vpop.trf.xlu0
      %v7913 = vpop.trf.xlu0
      %v7914 = vpop.trf.xlu0
      %v7915 = vpop.trf.xlu0
      %v7916 = vpop.trf.xlu0
      %v7917 = vpop.trf.xlu0
      %v7918 = vpop.trf.xlu0
      %v7919 = vpop.trf.xlu0
      %v7920 = vpop.trf.xlu0
      %v7921 = vpop.trf.xlu0
      %v7922 = vpop.trf.xlu0
      %7923 = vxpose.xlu0.b32.start [1/16] %v7875, 128
      %7924 = vxpose.xlu0.b32.cont [2/16] %v7876, 128
      %7925 = vxpose.xlu0.b32.cont [3/16] %v7877, 128
      %7926 = vxpose.xlu0.b32.cont [4/16] %v7878, 128
      %7927 = vxpose.xlu0.b32.cont [5/16] %v7879, 128
      %7928 = vxpose.xlu0.b32.cont [6/16] %v7880, 128
      %7929 = vxpose.xlu0.b32.cont [7/16] %v7881, 128
      %7930 = vxpose.xlu0.b32.cont [8/16] %v7882, 128
      %7931 = vxpose.xlu0.b32.cont [9/16] %v7883, 128
      %7932 = vxpose.xlu0.b32.cont [10/16] %v7884, 128
      %7933 = vxpose.xlu0.b32.cont [11/16] %v7885, 128
      %7934 = vxpose.xlu0.b32.cont [12/16] %v7886, 128
      %7935 = vxpose.xlu0.b32.cont [13/16] %v7887, 128
      %7936 = vxpose.xlu0.b32.cont [14/16] %v7888, 128
      %7937 = vxpose.xlu0.b32.cont [15/16] %v7889, 128
      %7938 = vxpose.xlu0.b32.end [16/16] %v7890, 128
      %v7939 = vpop.trf.xlu0
      %v7940 = vpop.trf.xlu0
      %v7941 = vpop.trf.xlu0
      %v7942 = vpop.trf.xlu0
      %v7943 = vpop.trf.xlu0
      %v7944 = vpop.trf.xlu0
      %v7945 = vpop.trf.xlu0
      %v7946 = vpop.trf.xlu0
      %v7947 = vpop.trf.xlu0
      %v7948 = vpop.trf.xlu0
      %v7949 = vpop.trf.xlu0
      %v7950 = vpop.trf.xlu0
      %v7951 = vpop.trf.xlu0
      %v7952 = vpop.trf.xlu0
      %v7953 = vpop.trf.xlu0
      %v7954 = vpop.trf.xlu0
      %v7971 = vcombine.low %v7907, %v7939
      %v7972 = vcombine.high %v7907, %v7939
      %v7973 = vcombine.low %v7908, %v7940
      %v7974 = vcombine.high %v7908, %v7940
      %v7975 = vcombine.low %v7909, %v7941
      %v7976 = vcombine.high %v7909, %v7941
      %v7977 = vcombine.low %v7910, %v7942
      %v7978 = vcombine.high %v7910, %v7942
      %v7979 = vcombine.low %v7911, %v7943
      %v7980 = vcombine.high %v7911, %v7943
      %v7981 = vcombine.low %v7912, %v7944
      %v7982 = vcombine.high %v7912, %v7944
      %v7983 = vcombine.low %v7913, %v7945
      %v7984 = vcombine.high %v7913, %v7945
      %v7985 = vcombine.low %v7914, %v7946
      %v7986 = vcombine.high %v7914, %v7946
      %v8004 = vunpack.c.l.s4 1966171168
      %v8005 = vunpack.c.0.s8 %v8004
      %v8006 = vlaneseq
      %v8007 = vshrl.u32 %v8006, 7
      %v8008 = vsub.s32 %v8005, %v8007
      %v8009 = vrot.slane %v7971, %v8008
      %v8011 = vunpack.c.l.s4 1966171168
      %v8012 = vunpack.c.0.s8 %v8011
      %v8013 = vlaneseq
      %v8014 = vshrl.u32 %v8013, 7
      %v8015 = vsub.s32 %v8012, %v8014
      %v8016 = vrot.slane %v7972, %v8015
      %v8018 = vunpack.c.l.s4 1966171168
      %v8019 = vunpack.c.0.s8 %v8018
      %v8020 = vlaneseq
      %v8021 = vshrl.u32 %v8020, 7
      %v8022 = vsub.s32 %v8019, %v8021
      %v8023 = vrot.slane %v7973, %v8022
      %v8025 = vunpack.c.l.s4 1966171168
      %v8026 = vunpack.c.0.s8 %v8025
      %v8027 = vlaneseq
      %v8028 = vshrl.u32 %v8027, 7
      %v8029 = vsub.s32 %v8026, %v8028
      %v8030 = vrot.slane %v7974, %v8029
      %v8032 = vunpack.c.l.s4 1966171168
      %v8033 = vunpack.c.0.s8 %v8032
      %v8034 = vlaneseq
      %v8035 = vshrl.u32 %v8034, 7
      %v8036 = vsub.s32 %v8033, %v8035
      %v8037 = vrot.slane %v7975, %v8036
      %v8039 = vunpack.c.l.s4 1966171168
      %v8040 = vunpack.c.0.s8 %v8039
      %v8041 = vlaneseq
      %v8042 = vshrl.u32 %v8041, 7
      %v8043 = vsub.s32 %v8040, %v8042
      %v8044 = vrot.slane %v7976, %v8043
      %v8046 = vunpack.c.l.s4 1966171168
      %v8047 = vunpack.c.0.s8 %v8046
      %v8048 = vlaneseq
      %v8049 = vshrl.u32 %v8048, 7
      %v8050 = vsub.s32 %v8047, %v8049
      %v8051 = vrot.slane %v7977, %v8050
      %v8053 = vunpack.c.l.s4 1966171168
      %v8054 = vunpack.c.0.s8 %v8053
      %v8055 = vlaneseq
      %v8056 = vshrl.u32 %v8055, 7
      %v8057 = vsub.s32 %v8054, %v8056
      %v8058 = vrot.slane %v7978, %v8057
      %v8060 = vunpack.c.l.s4 1966171168
      %v8061 = vunpack.c.0.s8 %v8060
      %v8062 = vlaneseq
      %v8063 = vshrl.u32 %v8062, 7
      %v8064 = vsub.s32 %v8061, %v8063
      %v8065 = vrot.slane %v7979, %v8064
      %v8067 = vunpack.c.l.s4 1966171168
      %v8068 = vunpack.c.0.s8 %v8067
      %v8069 = vlaneseq
      %v8070 = vshrl.u32 %v8069, 7
      %v8071 = vsub.s32 %v8068, %v8070
      %v8072 = vrot.slane %v7980, %v8071
      %v8074 = vunpack.c.l.s4 1966171168
      %v8075 = vunpack.c.0.s8 %v8074
      %v8076 = vlaneseq
      %v8077 = vshrl.u32 %v8076, 7
      %v8078 = vsub.s32 %v8075, %v8077
      %v8079 = vrot.slane %v7981, %v8078
      %v8081 = vunpack.c.l.s4 1966171168
      %v8082 = vunpack.c.0.s8 %v8081
      %v8083 = vlaneseq
      %v8084 = vshrl.u32 %v8083, 7
      %v8085 = vsub.s32 %v8082, %v8084
      %v8086 = vrot.slane %v7982, %v8085
      %v8088 = vunpack.c.l.s4 1966171168
      %v8089 = vunpack.c.0.s8 %v8088
      %v8090 = vlaneseq
      %v8091 = vshrl.u32 %v8090, 7
      %v8092 = vsub.s32 %v8089, %v8091
      %v8093 = vrot.slane %v7983, %v8092
      %v8095 = vunpack.c.l.s4 1966171168
      %v8096 = vunpack.c.0.s8 %v8095
      %v8097 = vlaneseq
      %v8098 = vshrl.u32 %v8097, 7
      %v8099 = vsub.s32 %v8096, %v8098
      %v8100 = vrot.slane %v7984, %v8099
      %v8102 = vunpack.c.l.s4 1966171168
      %v8103 = vunpack.c.0.s8 %v8102
      %v8104 = vlaneseq
      %v8105 = vshrl.u32 %v8104, 7
      %v8106 = vsub.s32 %v8103, %v8105
      %v8107 = vrot.slane %v7985, %v8106
      %v8109 = vunpack.c.l.s4 1966171168
      %v8110 = vunpack.c.0.s8 %v8109
      %v8111 = vlaneseq
      %v8112 = vshrl.u32 %v8111, 7
      %v8113 = vsub.s32 %v8110, %v8112
      %v8114 = vrot.slane %v7986, %v8113
      %v8131 = vrot.slane %v8009, 4
      %v8132 = vrot.slane %v8016, 4
      %v8133 = vrot.slane %v8023, 4
      %v8134 = vrot.slane %v8030, 4
      %v8135 = vrot.slane %v8037, 4
      %v8136 = vrot.slane %v8044, 4
      %v8137 = vrot.slane %v8051, 4
      %v8138 = vrot.slane %v8058, 4
      %v8139 = vrot.slane %v8065, 4
      %v8140 = vrot.slane %v8072, 4
      %v8141 = vrot.slane %v8079, 4
      %v8142 = vrot.slane %v8086, 4
      %v8143 = vrot.slane %v8093, 4
      %v8144 = vrot.slane %v8100, 4
      %v8145 = vrot.slane %v8107, 4
      %v8146 = vrot.slane %v8114, 4
      %v8163 = vmax.f32 %v8009, %v8131
      %v8164 = vmax.f32 %v8016, %v8132
      %v8165 = vmax.f32 %v8023, %v8133
      %v8166 = vmax.f32 %v8030, %v8134
      %v8167 = vmax.f32 %v8037, %v8135
      %v8168 = vmax.f32 %v8044, %v8136
      %v8169 = vmax.f32 %v8051, %v8137
      %v8170 = vmax.f32 %v8058, %v8138
      %v8171 = vmax.f32 %v8065, %v8139
      %v8172 = vmax.f32 %v8072, %v8140
      %v8173 = vmax.f32 %v8079, %v8141
      %v8174 = vmax.f32 %v8086, %v8142
      %v8175 = vmax.f32 %v8093, %v8143
      %v8176 = vmax.f32 %v8100, %v8144
      %v8177 = vmax.f32 %v8107, %v8145
      %v8178 = vmax.f32 %v8114, %v8146
      %v8195 = vcombine.low %v8163, %v8164
      %v8196 = vcombine.low %v8165, %v8166
      %v8198 = vunpack.c.l.s4 1983009808
      %v8199 = vunpack.c.0.s8 %v8198
      %v8200 = vlaneseq
      %v8201 = vshrl.u32 %v8200, 7
      %v8202 = vsub.s32 %v8199, %v8201
      %v8203 = vrot.slane %v8195, %v8202
      %v8205 = vunpack.c.l.s4 1983009808
      %v8206 = vunpack.c.0.s8 %v8205
      %v8207 = vlaneseq
      %v8208 = vshrl.u32 %v8207, 7
      %v8209 = vsub.s32 %v8206, %v8208
      %v8210 = vrot.slane %v8196, %v8209
      %v8211 = vcombine.low %v8203, %v8210
      %v8212 = vcombine.high %v8203, %v8210
      %v8213 = vcombine.low %v8167, %v8168
      %v8214 = vcombine.low %v8169, %v8170
      %v8216 = vunpack.c.l.s4 1983009808
      %v8217 = vunpack.c.0.s8 %v8216
      %v8218 = vlaneseq
      %v8219 = vshrl.u32 %v8218, 7
      %v8220 = vsub.s32 %v8217, %v8219
      %v8221 = vrot.slane %v8213, %v8220
      %v8223 = vunpack.c.l.s4 1983009808
      %v8224 = vunpack.c.0.s8 %v8223
      %v8225 = vlaneseq
      %v8226 = vshrl.u32 %v8225, 7
      %v8227 = vsub.s32 %v8224, %v8226
      %v8228 = vrot.slane %v8214, %v8227
      %v8229 = vcombine.low %v8221, %v8228
      %v8230 = vcombine.high %v8221, %v8228
      %v8231 = vcombine.low %v8171, %v8172
      %v8232 = vcombine.low %v8173, %v8174
      %v8234 = vunpack.c.l.s4 1983009808
      %v8235 = vunpack.c.0.s8 %v8234
      %v8236 = vlaneseq
      %v8237 = vshrl.u32 %v8236, 7
      %v8238 = vsub.s32 %v8235, %v8237
      %v8239 = vrot.slane %v8231, %v8238
      %v8241 = vunpack.c.l.s4 1983009808
      %v8242 = vunpack.c.0.s8 %v8241
      %v8243 = vlaneseq
      %v8244 = vshrl.u32 %v8243, 7
      %v8245 = vsub.s32 %v8242, %v8244
      %v8246 = vrot.slane %v8232, %v8245
      %v8247 = vcombine.low %v8239, %v8246
      %v8248 = vcombine.high %v8239, %v8246
      %v8249 = vcombine.low %v8175, %v8176
      %v8250 = vcombine.low %v8177, %v8178
      %v8252 = vunpack.c.l.s4 1983009808
      %v8253 = vunpack.c.0.s8 %v8252
      %v8254 = vlaneseq
      %v8255 = vshrl.u32 %v8254, 7
      %v8256 = vsub.s32 %v8253, %v8255
      %v8257 = vrot.slane %v8249, %v8256
      %v8259 = vunpack.c.l.s4 1983009808
      %v8260 = vunpack.c.0.s8 %v8259
      %v8261 = vlaneseq
      %v8262 = vshrl.u32 %v8261, 7
      %v8263 = vsub.s32 %v8260, %v8262
      %v8264 = vrot.slane %v8250, %v8263
      %v8265 = vcombine.low %v8257, %v8264
      %v8266 = vcombine.high %v8257, %v8264
      %8275 = vst [vmem:[%s206] sm:$0xff] %v8211
      %8276 = vst [vmem:[%s206 + $0x8] sm:$0xff] %v8212
      %8277 = vst [vmem:[%s206 + $0x10] sm:$0xff] %v8229
      %8278 = vst [vmem:[%s206 + $0x18] sm:$0xff] %v8230
      %8279 = vst [vmem:[%s206 + $0x20] sm:$0xff] %v8247
      %8280 = vst [vmem:[%s206 + $0x28] sm:$0xff] %v8248
      %8281 = vst [vmem:[%s206 + $0x30] sm:$0xff] %v8265
      %8282 = vst [vmem:[%s206 + $0x38] sm:$0xff] %v8266
      %p8283 = scmp.lt.s32.totalorder %s18, 1
      %s8284 = scalar_select %p8283, %s18, 1
      %p8285 = scmp.lt.s32.totalorder %s19, 3
      %s8286 = scalar_select %p8285, %s19, 3
      %s8287 = smul.addr %s8286, 8
      %s8288 = smul.addr %s8284, 32
      %s8289 = sadd.s32 %s8287, %s8288
      %s8290 = smul.addr %s8289, 8
      %s8291 = scalar_lea.vmem %s3, %s8290
      // Predicated region
      $region33: #{conv_features.3} parent=31 // pred_check
        %p8292 = pneg %p116
      $region34: #{conv_features.3} parent=31 // pred_check_branch
        %8294 = sbr.rel (%p8292) target = $region36
      $region35: #{conv_features.3} parent=31 // pred_region
        _
      $region36: #{conv_features.3} parent=31 // pred_fallthru
        _
    $region32: #{conv_features.3} parent=5 // pred_fallthru
      _
    %p8295 = scmp.le.s32.totalorder 2, %s9
    // Predicated region
    $region37: #{conv_features.3} parent=5 // pred_check
      %p8296 = pneg %p8295
    $region38: #{conv_features.3} parent=5 // pred_check_branch
      %8298 = sbr.rel (%p8296) target = $region40
    $region39: #{conv_features.3} parent=5 // pred_region
      %s8299 = ssub.s32 %s9, 2
      // Predicated region
      $region41: #{conv_features.3} parent=39 // pred_check
        %p8300 = pneg %p122
      $region42: #{conv_features.3} parent=39 // pred_check_branch
        %8302 = sbr.rel (%p8300) target = $region44
      $region43: #{conv_features.3} parent=39 // pred_region
        %p8303 = scmp.lt.s32.totalorder %s20, 1
        %s8304 = scalar_select %p8303, %s20, 1
        %p8305 = scmp.lt.s32.totalorder %s21, 3
        %s8306 = scalar_select %p8305, %s21, 3
        %s8307 = smul.addr %s8306, 8
        %s8308 = smul.addr %s8304, 32
        %s8309 = sadd.s32 %s8307, %s8308
        %s8310 = smul.addr %s8309, 8
        %s8311 = scalar_lea.vmem %s3, %s8310
      $region44: #{conv_features.3} parent=39 // pred_fallthru
        _
    $region40: #{conv_features.3} parent=5 // pred_fallthru
      _
  $region6: #{conv_features.3} parent=0 // loop_footer
    %s13 = sadd.s32 1, %s9
  $region7: #{conv_features.3} parent=0 // loop_footer_branch
    %8 = sbr.rel target = $region3
  $region8: #{conv_features.3} parent=0 // loop_exit
    _

// kernel: conv_features.2
$region0: #{conv_features.2}
  #allocation0 [shape = 'u32[]', space=smem, size = 0x4, offset = 0x4, fixed_abs, tag = 'smem constant byte address 0x4 - core index']
  #allocation1 [shape = 'u32[144,128]{1,0:T(1,128)}', space=vmem, size = 0x12000, scoped, tag = 'internal scratch']
  %s0 = inlined_call_operand.vmem [shape: f32[2,8,3,18,130], index: 0, kind: input, shape index: {}]
  %s1 = inlined_call_operand.vmem [shape: f32[16,27], index: 1, kind: input, shape index: {}]
  %s2 = inlined_call_operand.vmem [shape: f32[16,1], index: 2, kind: input, shape index: {}]
  %s3 = inlined_call_operand.vmem [shape: f32[2,8,64,128], index: 3, kind: output, shape index: {}]
  %s4 = sld [smem:[#allocation0]]
  $region45: #{conv_features.2} parent=0
    _
  %s6 = ssub.s32 1, %s4
  %s7 = scalar_select 0, %s6, %s4
  loop: start=0, step=1, limit=18
  $region2: #{conv_features.2} parent=0 // loop_pre_header
    _
  $region3: #{conv_features.2} parent=0 // loop_header
    %s9 = sphi 0, %s13
    %p10 = scmp.ge.s32.totalorder %s9, 18
    %s16 = sphi 0, %s28
    %s17 = sphi 0, %s24
    %s18 = sphi 0, %s16
    %s19 = sphi 0, %s17
    %s20 = sphi 0, %s18
    %s21 = sphi 0, %s19
    %s33 = sphi 0, %s35
    %s36 = sphi 0, %s33
    %s37 = sphi 0, %s36
    %s53 = sphi 0, %s37
    %s57 = sphi 0, %s57
    %s59 = sphi 0, %s57
    %s60 = sphi 0, %s59
    %s74 = sphi 0, %s60
    %s78 = sphi 0, %s78
    %s80 = sphi 0, %s78
    %s81 = sphi 0, %s80
    %s95 = sphi 0, %s81
    %s103 = sphi 0, %s105
    %s106 = sphi 0, %s103
    %s107 = sphi 0, %s106
    %s123 = sphi 0, %s107
  $region4: #{conv_features.2} parent=0 // loop_header_branch
    %12 = sbr.rel (%p10) target = $region8
  $region5: #{conv_features.2} parent=0 // loop_body
    %s14 = ssub.s32 %s9, 1
    %s15 = ssub.s32 %s9, 2
    %s22 = sadd.s32 1, %s17
    %p23 = scmp.ge.s32.totalorder %s22, 8
    %s24 = scalar_select %p23, 0, %s22
    %s25 = sadd.s32 1, %s16
    %s26 = scalar_select %p23, %s25, %s16
    %p27 = scmp.ge.s32.totalorder %s26, 2
    %s28 = scalar_select %p27, 0, %s26
    %s29 = ssub.s32 %s16, %s28
    %s30 = ssub.s32 %s17, %s24
    %s31 = sor.u32 %s29, %s30
    %p32 = scmp.eq.s32.totalorder %s31, 0
    %s34 = sadd.s32 %s33, 1
    %s35 = scalar_select %p32, %s33, %s34
    %p38 = pneg %p32
    %p39 = scmp.eq.s32.totalorder %s9, 15
    %p40 = por %p38, %p39
    %p41 = scmp.ne.s32.totalorder %s33, %s36
    %p42 = scmp.eq.s32.totalorder %s9, 0
    %p43 = por %p41, %p42
    %p44 = scmp.ne.s32.totalorder %s33, %s36
    %p45 = scmp.eq.s32.totalorder %s14, 15
    %p46 = por %p44, %p45
    %p47 = scmp.ne.s32.totalorder %s36, %s37
    %p48 = scmp.eq.s32.totalorder %s14, 0
    %p49 = por %p47, %p48
    %p50 = scmp.ne.s32.totalorder %s36, %s37
    %p51 = scmp.eq.s32.totalorder %s15, 15
    %p52 = por %p50, %p51
    %p54 = scmp.ne.s32.totalorder %s37, %s53
    %p55 = scmp.eq.s32.totalorder %s15, 0
    %p56 = por %p54, %p55
    %s58 = sadd.s32 %s57, 1
    %p61 = scmp.eq.s32.totalorder %s9, 15
    %p62 = scmp.ne.s32.totalorder %s57, %s59
    %p63 = scmp.eq.s32.totalorder %s9, 0
    %p64 = por %p62, %p63
    %p65 = scmp.ne.s32.totalorder %s57, %s59
    %p66 = scmp.eq.s32.totalorder %s14, 15
    %p67 = por %p65, %p66
    %p68 = scmp.ne.s32.totalorder %s59, %s60
    %p69 = scmp.eq.s32.totalorder %s14, 0
    %p70 = por %p68, %p69
    %p71 = scmp.ne.s32.totalorder %s59, %s60
    %p72 = scmp.eq.s32.totalorder %s15, 15
    %p73 = por %p71, %p72
    %p75 = scmp.ne.s32.totalorder %s60, %s74
    %p76 = scmp.eq.s32.totalorder %s15, 0
    %p77 = por %p75, %p76
    %s79 = sadd.s32 %s78, 1
    %p82 = scmp.eq.s32.totalorder %s9, 15
    %p83 = scmp.ne.s32.totalorder %s78, %s80
    %p84 = scmp.eq.s32.totalorder %s9, 0
    %p85 = por %p83, %p84
    %p86 = scmp.ne.s32.totalorder %s78, %s80
    %p87 = scmp.eq.s32.totalorder %s14, 15
    %p88 = por %p86, %p87
    %p89 = scmp.ne.s32.totalorder %s80, %s81
    %p90 = scmp.eq.s32.totalorder %s14, 0
    %p91 = por %p89, %p90
    %p92 = scmp.ne.s32.totalorder %s80, %s81
    %p93 = scmp.eq.s32.totalorder %s15, 15
    %p94 = por %p92, %p93
    %p96 = scmp.ne.s32.totalorder %s81, %s95
    %p97 = scmp.eq.s32.totalorder %s15, 0
    %p98 = por %p96, %p97
    %s99 = ssub.s32 %s16, %s28
    %s100 = ssub.s32 %s17, %s24
    %s101 = sor.u32 %s99, %s100
    %p102 = scmp.eq.s32.totalorder %s101, 0
    %s104 = sadd.s32 %s103, 1
    %s105 = scalar_select %p102, %s103, %s104
    %p108 = pneg %p102
    %p109 = scmp.eq.s32.totalorder %s9, 15
    %p110 = por %p108, %p109
    %p111 = scmp.ne.s32.totalorder %s103, %s106
    %p112 = scmp.eq.s32.totalorder %s9, 0
    %p113 = por %p111, %p112
    %p114 = scmp.ne.s32.totalorder %s103, %s106
    %p115 = scmp.eq.s32.totalorder %s14, 15
    %p116 = por %p114, %p115
    %p117 = scmp.ne.s32.totalorder %s106, %s107
    %p118 = scmp.eq.s32.totalorder %s14, 0
    %p119 = por %p117, %p118
    %p120 = scmp.ne.s32.totalorder %s106, %s107
    %p121 = scmp.eq.s32.totalorder %s15, 15
    %p122 = por %p120, %p121
    %p124 = scmp.ne.s32.totalorder %s107, %s123
    %p125 = scmp.eq.s32.totalorder %s15, 0
    %p126 = por %p124, %p125
    %p127 = scmp.le.s32.totalorder 1, %s9
    %p128 = scmp.lt.s32.totalorder %s9, 17
    %p129 = pnand %p127, %p128
    %p130 = pneg %p129
    // Predicated region
    $region9: #{conv_features.2} parent=5 // pred_check
      _
    $region10: #{conv_features.2} parent=5 // pred_check_branch
      %132 = sbr.rel (%p129) target = $region12
    $region11: #{conv_features.2} parent=5 // pred_region
      %s133 = ssub.s32 %s9, 1
      // Predicated region
      $region13: #{conv_features.2} parent=11 // pred_check
        %p134 = pneg %p70
      $region14: #{conv_features.2} parent=11 // pred_check_branch
        %136 = sbr.rel (%p134) target = $region16
      $region15: #{conv_features.2} parent=11 // pred_region
        _
      $region16: #{conv_features.2} parent=11 // pred_fallthru
        _
      // Predicated region
      $region17: #{conv_features.2} parent=11 // pred_check
        %p137 = pneg %p91
      $region18: #{conv_features.2} parent=11 // pred_check_branch
        %139 = sbr.rel (%p137) target = $region20
      $region19: #{conv_features.2} parent=11 // pred_region
        _
      $region20: #{conv_features.2} parent=11 // pred_fallthru
        _
    $region12: #{conv_features.2} parent=5 // pred_fallthru
      _
    %p140 = scmp.lt.s32.totalorder %s9, 16
    // Predicated region
    $region21: #{conv_features.2} parent=5 // pred_check
      %p141 = pneg %p140
    $region22: #{conv_features.2} parent=5 // pred_check_branch
      %143 = sbr.rel (%p141) target = $region24
    $region23: #{conv_features.2} parent=5 // pred_region
      // Predicated region
      $region25: #{conv_features.2} parent=23 // pred_check
        %p144 = pneg %p43
      $region26: #{conv_features.2} parent=23 // pred_check_branch
        %146 = sbr.rel (%p144) target = $region28
      $region27: #{conv_features.2} parent=23 // pred_region
        %p147 = scmp.lt.s32.totalorder %s16, 1
        %s148 = scalar_select %p147, %s16, 1
        %p149 = scmp.lt.s32.totalorder %s17, 7
        %s150 = scalar_select %p149, %s17, 7
        %s151 = smul.addr %s150, 18
        %s152 = smul.addr %s148, 144
        %s153 = sadd.s32 %s151, %s152
        %s154 = smul.addr %s153, 8
        %s155 = scalar_lea.vmem %s0, %s154
      $region28: #{conv_features.2} parent=23 // pred_fallthru
        _
    $region24: #{conv_features.2} parent=5 // pred_fallthru
      _
    %p156 = scmp.le.s32.totalorder 1, %s9
    %p157 = scmp.lt.s32.totalorder %s9, 17
    %p158 = pnand %p156, %p157
    %p159 = pneg %p158
    // Predicated region
    $region29: #{conv_features.2} parent=5 // pred_check
      _
    $region30: #{conv_features.2} parent=5 // pred_check_branch
      %161 = sbr.rel (%p158) target = $region32
    $region31: #{conv_features.2} parent=5 // pred_region
      %s162 = ssub.s32 %s9, 1
      %p163 = scmp.lt.s32.totalorder %s18, 1
      %s164 = scalar_select %p163, %s18, 1
      %p165 = scmp.lt.s32.totalorder %s19, 7
      %s166 = scalar_select %p165, %s19, 7
      %s167 = smul.addr %s166, 18
      %s168 = smul.addr %s164, 144
      %s169 = sadd.s32 %s167, %s168
      %s170 = smul.addr %s169, 8
      %s171 = scalar_lea.vmem %s0, %s170
      %p172 = pneg %p49
      %p173 = pneg %p46
      %p174 = pneg %p70
      %p175 = pneg %p67
      %p176 = pneg %p91
      %p177 = pneg %p88
      %p178 = pneg %p119
      %p179 = pneg %p116
      %p180 = scmp.lt.s32.totalorder %s18, 1
      %s181 = scalar_select %p180, %s18, 1
      %p182 = scmp.lt.s32.totalorder %s19, 7
      %s183 = scalar_select %p182, %s19, 7
      %s184 = smul.addr %s183, 8
      %s185 = smul.addr %s181, 64
      %s186 = sadd.s32 %s184, %s185
      %s187 = smul.addr %s186, 8
      %s188 = scalar_lea.vmem %s3, %s187
      %p189 = scmp.lt.s32.totalorder %s18, 1
      %s190 = scalar_select %p189, %s18, 1
      %p191 = scmp.lt.s32.totalorder %s19, 7
      %s192 = scalar_select %p191, %s19, 7
      %s193 = smul.addr %s192, 18
      %s194 = smul.addr %s190, 144
      %s195 = sadd.s32 %s193, %s194
      %s196 = smul.addr %s195, 8
      %s197 = scalar_lea.vmem %s0, %s196
      %p198 = scmp.lt.s32.totalorder %s18, 1
      %s199 = scalar_select %p198, %s18, 1
      %p200 = scmp.lt.s32.totalorder %s19, 7
      %s201 = scalar_select %p200, %s19, 7
      %s202 = smul.addr %s201, 8
      %s203 = smul.addr %s199, 64
      %s204 = sadd.s32 %s202, %s203
      %s205 = smul.addr %s204, 8
      %s206 = scalar_lea.vmem %s3, %s205
      %v207 = vld [vmem:[%s197] sm:$0xff]
      %v208 = vld [vmem:[%s197 + $0x8] sm:$0xff]
      %v209 = vld [vmem:[%s197 + $0x10] sm:$0xff]
      %v210 = vld [vmem:[%s197 + $0x18] sm:$0xff]
      %v211 = vld [vmem:[%s197 + $0x20] sm:$0x3]
      %v212 = vld [vmem:[%s197 + $0x28] sm:$0x3]
      %v213 = vld [vmem:[%s197 + $0x30] sm:$0xff]
      %v214 = vld [vmem:[%s197 + $0x38] sm:$0xff]
      %v215 = vld [vmem:[%s197 + $0x40] sm:$0xff]
      %v216 = vld [vmem:[%s197 + $0x48] sm:$0xff]
      %v217 = vld [vmem:[%s197 + $0x50] sm:$0x3]
      %v218 = vld [vmem:[%s197 + $0x58] sm:$0x3]
      %v219 = vld [vmem:[%s197 + $0x60] sm:$0xff]
      %v220 = vld [vmem:[%s197 + $0x68] sm:$0xff]
      %v221 = vld [vmem:[%s197 + $0x70] sm:$0xff]
      %v222 = vld [vmem:[%s197 + $0x78] sm:$0xff]
      %v223 = vld [vmem:[%s197 + $0x80] sm:$0x3]
      %v224 = vld [vmem:[%s197 + $0x88] sm:$0x3]
      %237 = vrot.lane.b32.xlu0 %v207, 127
      %v238 = vpop.permute.xlu0 %237
      %239 = vrot.lane.b32.xlu0 %v208, 127
      %v240 = vpop.permute.xlu0 %239
      %241 = vrot.lane.b32.xlu0 %v209, 127
      %v242 = vpop.permute.xlu0 %241
      %243 = vrot.lane.b32.xlu0 %v210, 127
      %v244 = vpop.permute.xlu0 %243
      %245 = vrot.lane.b32.xlu0 %v213, 127
      %v246 = vpop.permute.xlu0 %245
      %247 = vrot.lane.b32.xlu0 %v214, 127
      %v248 = vpop.permute.xlu0 %247
      %249 = vrot.lane.b32.xlu0 %v215, 127
      %v250 = vpop.permute.xlu0 %249
      %251 = vrot.lane.b32.xlu0 %v216, 127
      %v252 = vpop.permute.xlu0 %251
      %253 = vrot.lane.b32.xlu0 %v219, 127
      %v254 = vpop.permute.xlu0 %253
      %255 = vrot.lane.b32.xlu0 %v220, 127
      %v256 = vpop.permute.xlu0 %255
      %257 = vrot.lane.b32.xlu0 %v221, 127
      %v258 = vpop.permute.xlu0 %257
      %259 = vrot.lane.b32.xlu0 %v222, 127
      %v260 = vpop.permute.xlu0 %259
      %vm261 = vcmask 1039360
      %v262 = vsel %vm261, %v238, %v240
      %v263 = vsel %vm261, %v242, %v244
      %v264 = vsel %vm261, %v246, %v248
      %v265 = vsel %vm261, %v250, %v252
      %v266 = vsel %vm261, %v254, %v256
      %v267 = vsel %vm261, %v258, %v260
      %274 = vrot.lane.b32.xlu0 %v207, 126
      %v275 = vpop.permute.xlu0 %274
      %276 = vrot.lane.b32.xlu0 %v208, 126
      %v277 = vpop.permute.xlu0 %276
      %278 = vrot.lane.b32.xlu0 %v209, 126
      %v279 = vpop.permute.xlu0 %278
      %280 = vrot.lane.b32.xlu0 %v210, 126
      %v281 = vpop.permute.xlu0 %280
      %282 = vrot.lane.b32.xlu0 %v213, 126
      %v283 = vpop.permute.xlu0 %282
      %284 = vrot.lane.b32.xlu0 %v214, 126
      %v285 = vpop.permute.xlu0 %284
      %286 = vrot.lane.b32.xlu0 %v215, 126
      %v287 = vpop.permute.xlu0 %286
      %288 = vrot.lane.b32.xlu0 %v216, 126
      %v289 = vpop.permute.xlu0 %288
      %290 = vrot.lane.b32.xlu0 %v219, 126
      %v291 = vpop.permute.xlu0 %290
      %292 = vrot.lane.b32.xlu0 %v220, 126
      %v293 = vpop.permute.xlu0 %292
      %294 = vrot.lane.b32.xlu0 %v221, 126
      %v295 = vpop.permute.xlu0 %294
      %296 = vrot.lane.b32.xlu0 %v222, 126
      %v297 = vpop.permute.xlu0 %296
      %vm298 = vcmask 1031168
      %v299 = vsel %vm298, %v275, %v277
      %v300 = vsel %vm298, %v279, %v281
      %v301 = vsel %vm298, %v283, %v285
      %v302 = vsel %vm298, %v287, %v289
      %v303 = vsel %vm298, %v291, %v293
      %v304 = vsel %vm298, %v295, %v297
      %vm314 = vcmask 1046528
      %v315 = vrot.slane %v207, 1
      %v316 = vrot.slane %v209, 1
      %v317 = vsel %vm314, %v315, %v316
      %v318 = vrot.slane %v211, 1
      %v319 = vsel %vm314, %v316, %v318
      %v320 = vrot.slane %v213, 1
      %v321 = vrot.slane %v215, 1
      %v322 = vsel %vm314, %v320, %v321
      %v323 = vrot.slane %v217, 1
      %v324 = vsel %vm314, %v321, %v323
      %v325 = vrot.slane %v219, 1
      %v326 = vrot.slane %v221, 1
      %v327 = vsel %vm314, %v325, %v326
      %v328 = vrot.slane %v223, 1
      %v329 = vsel %vm314, %v326, %v328
      %v339 = vrot.slane %v208, 1
      %v340 = vrot.slane %v210, 1
      %v341 = vsel %vm314, %v339, %v340
      %v342 = vrot.slane %v212, 1
      %v343 = vsel %vm314, %v340, %v342
      %v344 = vrot.slane %v214, 1
      %v345 = vrot.slane %v216, 1
      %v346 = vsel %vm314, %v344, %v345
      %v347 = vrot.slane %v218, 1
      %v348 = vsel %vm314, %v345, %v347
      %v349 = vrot.slane %v220, 1
      %v350 = vrot.slane %v222, 1
      %v351 = vsel %vm314, %v349, %v350
      %v352 = vrot.slane %v224, 1
      %v353 = vsel %vm314, %v350, %v352
      %354 = vrot.lane.b32.xlu0 %v317, 127
      %v355 = vpop.permute.xlu0 %354
      %356 = vrot.lane.b32.xlu0 %v341, 127
      %v357 = vpop.permute.xlu0 %356
      %358 = vrot.lane.b32.xlu0 %v319, 127
      %v359 = vpop.permute.xlu0 %358
      %360 = vrot.lane.b32.xlu0 %v343, 127
      %v361 = vpop.permute.xlu0 %360
      %362 = vrot.lane.b32.xlu0 %v322, 127
      %v363 = vpop.permute.xlu0 %362
      %364 = vrot.lane.b32.xlu0 %v346, 127
      %v365 = vpop.permute.xlu0 %364
      %366 = vrot.lane.b32.xlu0 %v324, 127
      %v367 = vpop.permute.xlu0 %366
      %368 = vrot.lane.b32.xlu0 %v348, 127
      %v369 = vpop.permute.xlu0 %368
      %370 = vrot.lane.b32.xlu0 %v327, 127
      %v371 = vpop.permute.xlu0 %370
      %372 = vrot.lane.b32.xlu0 %v351, 127
      %v373 = vpop.permute.xlu0 %372
      %374 = vrot.lane.b32.xlu0 %v329, 127
      %v375 = vpop.permute.xlu0 %374
      %376 = vrot.lane.b32.xlu0 %v353, 127
      %v377 = vpop.permute.xlu0 %376
      %v378 = vsel %vm261, %v355, %v357
      %v379 = vsel %vm261, %v359, %v361
      %v380 = vsel %vm261, %v363, %v365
      %v381 = vsel %vm261, %v367, %v369
      %v382 = vsel %vm261, %v371, %v373
      %v383 = vsel %vm261, %v375, %v377
      %390 = vrot.lane.b32.xlu0 %v317, 126
      %v391 = vpop.permute.xlu0 %390
      %392 = vrot.lane.b32.xlu0 %v341, 126
      %v393 = vpop.permute.xlu0 %392
      %394 = vrot.lane.b32.xlu0 %v319, 126
      %v395 = vpop.permute.xlu0 %394
      %396 = vrot.lane.b32.xlu0 %v343, 126
      %v397 = vpop.permute.xlu0 %396
      %398 = vrot.lane.b32.xlu0 %v322, 126
      %v399 = vpop.permute.xlu0 %398
      %400 = vrot.lane.b32.xlu0 %v346, 126
      %v401 = vpop.permute.xlu0 %400
      %402 = vrot.lane.b32.xlu0 %v324, 126
      %v403 = vpop.permute.xlu0 %402
      %404 = vrot.lane.b32.xlu0 %v348, 126
      %v405 = vpop.permute.xlu0 %404
      %406 = vrot.lane.b32.xlu0 %v327, 126
      %v407 = vpop.permute.xlu0 %406
      %408 = vrot.lane.b32.xlu0 %v351, 126
      %v409 = vpop.permute.xlu0 %408
      %410 = vrot.lane.b32.xlu0 %v329, 126
      %v411 = vpop.permute.xlu0 %410
      %412 = vrot.lane.b32.xlu0 %v353, 126
      %v413 = vpop.permute.xlu0 %412
      %v414 = vsel %vm298, %v391, %v393
      %v415 = vsel %vm298, %v395, %v397
      %v416 = vsel %vm298, %v399, %v401
      %v417 = vsel %vm298, %v403, %v405
      %v418 = vsel %vm298, %v407, %v409
      %v419 = vsel %vm298, %v411, %v413
      %vm426 = vcmask 1045504
      %v427 = vrot.slane %v207, 2
      %v428 = vrot.slane %v209, 2
      %v429 = vsel %vm426, %v427, %v428
      %v430 = vrot.slane %v211, 2
      %v431 = vsel %vm426, %v428, %v430
      %v432 = vrot.slane %v213, 2
      %v433 = vrot.slane %v215, 2
      %v434 = vsel %vm426, %v432, %v433
      %v435 = vrot.slane %v217, 2
      %v436 = vsel %vm426, %v433, %v435
      %v437 = vrot.slane %v219, 2
      %v438 = vrot.slane %v221, 2
      %v439 = vsel %vm426, %v437, %v438
      %v440 = vrot.slane %v223, 2
      %v441 = vsel %vm426, %v438, %v440
      %v448 = vrot.slane %v208, 2
      %v449 = vrot.slane %v210, 2
      %v450 = vsel %vm426, %v448, %v449
      %v451 = vrot.slane %v212, 2
      %v452 = vsel %vm426, %v449, %v451
      %v453 = vrot.slane %v214, 2
      %v454 = vrot.slane %v216, 2
      %v455 = vsel %vm426, %v453, %v454
      %v456 = vrot.slane %v218, 2
      %v457 = vsel %vm426, %v454, %v456
      %v458 = vrot.slane %v220, 2
      %v459 = vrot.slane %v222, 2
      %v460 = vsel %vm426, %v458, %v459
      %v461 = vrot.slane %v224, 2
      %v462 = vsel %vm426, %v459, %v461
      %463 = vrot.lane.b32.xlu0 %v429, 127
      %v464 = vpop.permute.xlu0 %463
      %465 = vrot.lane.b32.xlu0 %v450, 127
      %v466 = vpop.permute.xlu0 %465
      %467 = vrot.lane.b32.xlu0 %v431, 127
      %v468 = vpop.permute.xlu0 %467
      %469 = vrot.lane.b32.xlu0 %v452, 127
      %v470 = vpop.permute.xlu0 %469
      %471 = vrot.lane.b32.xlu0 %v434, 127
      %v472 = vpop.permute.xlu0 %471
      %473 = vrot.lane.b32.xlu0 %v455, 127
      %v474 = vpop.permute.xlu0 %473
      %475 = vrot.lane.b32.xlu0 %v436, 127
      %v476 = vpop.permute.xlu0 %475
      %477 = vrot.lane.b32.xlu0 %v457, 127
      %v478 = vpop.permute.xlu0 %477
      %479 = vrot.lane.b32.xlu0 %v439, 127
      %v480 = vpop.permute.xlu0 %479
      %481 = vrot.lane.b32.xlu0 %v460, 127
      %v482 = vpop.permute.xlu0 %481
      %483 = vrot.lane.b32.xlu0 %v441, 127
      %v484 = vpop.permute.xlu0 %483
      %485 = vrot.lane.b32.xlu0 %v462, 127
      %v486 = vpop.permute.xlu0 %485
      %v487 = vsel %vm261, %v464, %v466
      %v488 = vsel %vm261, %v468, %v470
      %v489 = vsel %vm261, %v472, %v474
      %v490 = vsel %vm261, %v476, %v478
      %v491 = vsel %vm261, %v480, %v482
      %v492 = vsel %vm261, %v484, %v486
      %499 = vrot.lane.b32.xlu0 %v429, 126
      %v500 = vpop.permute.xlu0 %499
      %501 = vrot.lane.b32.xlu0 %v450, 126
      %v502 = vpop.permute.xlu0 %501
      %503 = vrot.lane.b32.xlu0 %v431, 126
      %v504 = vpop.permute.xlu0 %503
      %505 = vrot.lane.b32.xlu0 %v452, 126
      %v506 = vpop.permute.xlu0 %505
      %507 = vrot.lane.b32.xlu0 %v434, 126
      %v508 = vpop.permute.xlu0 %507
      %509 = vrot.lane.b32.xlu0 %v455, 126
      %v510 = vpop.permute.xlu0 %509
      %511 = vrot.lane.b32.xlu0 %v436, 126
      %v512 = vpop.permute.xlu0 %511
      %513 = vrot.lane.b32.xlu0 %v457, 126
      %v514 = vpop.permute.xlu0 %513
      %515 = vrot.lane.b32.xlu0 %v439, 126
      %v516 = vpop.permute.xlu0 %515
      %517 = vrot.lane.b32.xlu0 %v460, 126
      %v518 = vpop.permute.xlu0 %517
      %519 = vrot.lane.b32.xlu0 %v441, 126
      %v520 = vpop.permute.xlu0 %519
      %521 = vrot.lane.b32.xlu0 %v462, 126
      %v522 = vpop.permute.xlu0 %521
      %v523 = vsel %vm298, %v500, %v502
      %v524 = vsel %vm298, %v504, %v506
      %v525 = vsel %vm298, %v508, %v510
      %v526 = vsel %vm298, %v512, %v514
      %v527 = vsel %vm298, %v516, %v518
      %v528 = vsel %vm298, %v520, %v522
      %v535 = vcombine.low %v207, %v219
      %v536 = vcombine.high %v207, %v219
      %v538 = vunpack.c.l.s4 1983009808
      %v539 = vunpack.c.0.s8 %v538
      %v540 = vlaneseq
      %v541 = vshrl.u32 %v540, 7
      %v542 = vsub.s32 %v539, %v541
      %v543 = vrot.slane %v535, %v542
      %v545 = vunpack.c.l.s4 1983009808
      %v546 = vunpack.c.0.s8 %v545
      %v547 = vlaneseq
      %v548 = vshrl.u32 %v547, 7
      %v549 = vsub.s32 %v546, %v548
      %v550 = vrot.slane %v536, %v549
      %v551 = vcombine.low %v213, %v262
      %v552 = vcombine.high %v213, %v262
      %v554 = vunpack.c.l.s4 1983009808
      %v555 = vunpack.c.0.s8 %v554
      %v556 = vlaneseq
      %v557 = vshrl.u32 %v556, 7
      %v558 = vsub.s32 %v555, %v557
      %v559 = vrot.slane %v551, %v558
      %v561 = vunpack.c.l.s4 1983009808
      %v562 = vunpack.c.0.s8 %v561
      %v563 = vlaneseq
      %v564 = vshrl.u32 %v563, 7
      %v565 = vsub.s32 %v562, %v564
      %v566 = vrot.slane %v552, %v565
      %v567 = vcombine.low %v264, %v299
      %v568 = vcombine.high %v264, %v299
      %v570 = vunpack.c.l.s4 1983009808
      %v571 = vunpack.c.0.s8 %v570
      %v572 = vlaneseq
      %v573 = vshrl.u32 %v572, 7
      %v574 = vsub.s32 %v571, %v573
      %v575 = vrot.slane %v567, %v574
      %v577 = vunpack.c.l.s4 1983009808
      %v578 = vunpack.c.0.s8 %v577
      %v579 = vlaneseq
      %v580 = vshrl.u32 %v579, 7
      %v581 = vsub.s32 %v578, %v580
      %v582 = vrot.slane %v568, %v581
      %v583 = vcombine.low %v266, %v301
      %v584 = vcombine.high %v266, %v301
      %v586 = vunpack.c.l.s4 1983009808
      %v587 = vunpack.c.0.s8 %v586
      %v588 = vlaneseq
      %v589 = vshrl.u32 %v588, 7
      %v590 = vsub.s32 %v587, %v589
      %v591 = vrot.slane %v583, %v590
      %v593 = vunpack.c.l.s4 1983009808
      %v594 = vunpack.c.0.s8 %v593
      %v595 = vlaneseq
      %v596 = vshrl.u32 %v595, 7
      %v597 = vsub.s32 %v594, %v596
      %v598 = vrot.slane %v584, %v597
      %v599 = vcombine.low %v543, %v559
      %v600 = vcombine.high %v543, %v559
      %v602 = vunpack.c.l.s4 1934713408
      %v603 = vunpack.c.0.s8 %v602
      %v604 = vlaneseq
      %v605 = vshrl.u32 %v604, 7
      %v606 = vsub.s32 %v603, %v605
      %v607 = vrot.slane %v599, %v606
      %v609 = vunpack.c.l.s4 1934713408
      %v610 = vunpack.c.0.s8 %v609
      %v611 = vlaneseq
      %v612 = vshrl.u32 %v611, 7
      %v613 = vsub.s32 %v610, %v612
      %v614 = vrot.slane %v600, %v613
      %v615 = vcombine.low %v550, %v566
      %v616 = vcombine.high %v550, %v566
      %v618 = vunpack.c.l.s4 1934713408
      %v619 = vunpack.c.0.s8 %v618
      %v620 = vlaneseq
      %v621 = vshrl.u32 %v620, 7
      %v622 = vsub.s32 %v619, %v621
      %v623 = vrot.slane %v615, %v622
      %v625 = vunpack.c.l.s4 1934713408
      %v626 = vunpack.c.0.s8 %v625
      %v627 = vlaneseq
      %v628 = vshrl.u32 %v627, 7
      %v629 = vsub.s32 %v626, %v628
      %v630 = vrot.slane %v616, %v629
      %v631 = vcombine.low %v575, %v591
      %v632 = vcombine.high %v575, %v591
      %v634 = vunpack.c.l.s4 1934713408
      %v635 = vunpack.c.0.s8 %v634
      %v636 = vlaneseq
      %v637 = vshrl.u32 %v636, 7
      %v638 = vsub.s32 %v635, %v637
      %v639 = vrot.slane %v631, %v638
      %v641 = vunpack.c.l.s4 1934713408
      %v642 = vunpack.c.0.s8 %v641
      %v643 = vlaneseq
      %v644 = vshrl.u32 %v643, 7
      %v645 = vsub.s32 %v642, %v644
      %v646 = vrot.slane %v632, %v645
      %v647 = vcombine.low %v582, %v598
      %v648 = vcombine.high %v582, %v598
      %v650 = vunpack.c.l.s4 1934713408
      %v651 = vunpack.c.0.s8 %v650
      %v652 = vlaneseq
      %v653 = vshrl.u32 %v652, 7
      %v654 = vsub.s32 %v651, %v653
      %v655 = vrot.slane %v647, %v654
      %v657 = vunpack.c.l.s4 1934713408
      %v658 = vunpack.c.0.s8 %v657
      %v659 = vlaneseq
      %v660 = vshrl.u32 %v659, 7
      %v661 = vsub.s32 %v658, %v660
      %v662 = vrot.slane %v648, %v661
      %v663 = vcombine.low %v607, %v639
      %v664 = vcombine.high %v607, %v639
      %v665 = vcombine.low %v614, %v646
      %v666 = vcombine.high %v614, %v646
      %v667 = vcombine.low %v623, %v655
      %v668 = vcombine.high %v623, %v655
      %v669 = vcombine.low %v630, %v662
      %v670 = vcombine.high %v630, %v662
      %v671 = vcombine.low %v303, %v322
      %v672 = vcombine.high %v303, %v322
      %v674 = vunpack.c.l.s4 1983009808
      %v675 = vunpack.c.0.s8 %v674
      %v676 = vlaneseq
      %v677 = vshrl.u32 %v676, 7
      %v678 = vsub.s32 %v675, %v677
      %v679 = vrot.slane %v671, %v678
      %v681 = vunpack.c.l.s4 1983009808
      %v682 = vunpack.c.0.s8 %v681
      %v683 = vlaneseq
      %v684 = vshrl.u32 %v683, 7
      %v685 = vsub.s32 %v682, %v684
      %v686 = vrot.slane %v672, %v685
      %v687 = vcombine.low %v317, %v327
      %v688 = vcombine.high %v317, %v327
      %v690 = vunpack.c.l.s4 1983009808
      %v691 = vunpack.c.0.s8 %v690
      %v692 = vlaneseq
      %v693 = vshrl.u32 %v692, 7
      %v694 = vsub.s32 %v691, %v693
      %v695 = vrot.slane %v687, %v694
      %v697 = vunpack.c.l.s4 1983009808
      %v698 = vunpack.c.0.s8 %v697
      %v699 = vlaneseq
      %v700 = vshrl.u32 %v699, 7
      %v701 = vsub.s32 %v698, %v700
      %v702 = vrot.slane %v688, %v701
      %v703 = vcombine.low %v378, %v382
      %v704 = vcombine.high %v378, %v382
      %v706 = vunpack.c.l.s4 1983009808
      %v707 = vunpack.c.0.s8 %v706
      %v708 = vlaneseq
      %v709 = vshrl.u32 %v708, 7
      %v710 = vsub.s32 %v707, %v709
      %v711 = vrot.slane %v703, %v710
      %v713 = vunpack.c.l.s4 1983009808
      %v714 = vunpack.c.0.s8 %v713
      %v715 = vlaneseq
      %v716 = vshrl.u32 %v715, 7
      %v717 = vsub.s32 %v714, %v716
      %v718 = vrot.slane %v704, %v717
      %v719 = vcombine.low %v380, %v414
      %v720 = vcombine.high %v380, %v414
      %v722 = vunpack.c.l.s4 1983009808
      %v723 = vunpack.c.0.s8 %v722
      %v724 = vlaneseq
      %v725 = vshrl.u32 %v724, 7
      %v726 = vsub.s32 %v723, %v725
      %v727 = vrot.slane %v719, %v726
      %v729 = vunpack.c.l.s4 1983009808
      %v730 = vunpack.c.0.s8 %v729
      %v731 = vlaneseq
      %v732 = vshrl.u32 %v731, 7
      %v733 = vsub.s32 %v730, %v732
      %v734 = vrot.slane %v720, %v733
      %v735 = vcombine.low %v679, %v695
      %v736 = vcombine.high %v679, %v695
      %v738 = vunpack.c.l.s4 1934713408
      %v739 = vunpack.c.0.s8 %v738
      %v740 = vlaneseq
      %v741 = vshrl.u32 %v740, 7
      %v742 = vsub.s32 %v739, %v741
      %v743 = vrot.slane %v735, %v742
      %v745 = vunpack.c.l.s4 1934713408
      %v746 = vunpack.c.0.s8 %v745
      %v747 = vlaneseq
      %v748 = vshrl.u32 %v747, 7
      %v749 = vsub.s32 %v746, %v748
      %v750 = vrot.slane %v736, %v749
      %v751 = vcombine.low %v686, %v702
      %v752 = vcombine.high %v686, %v702
      %v754 = vunpack.c.l.s4 1934713408
      %v755 = vunpack.c.0.s8 %v754
      %v756 = vlaneseq
      %v757 = vshrl.u32 %v756, 7
      %v758 = vsub.s32 %v755, %v757
      %v759 = vrot.slane %v751, %v758
      %v761 = vunpack.c.l.s4 1934713408
      %v762 = vunpack.c.0.s8 %v761
      %v763 = vlaneseq
      %v764 = vshrl.u32 %v763, 7
      %v765 = vsub.s32 %v762, %v764
      %v766 = vrot.slane %v752, %v765
      %v767 = vcombine.low %v711, %v727
      %v768 = vcombine.high %v711, %v727
      %v770 = vunpack.c.l.s4 1934713408
      %v771 = vunpack.c.0.s8 %v770
      %v772 = vlaneseq
      %v773 = vshrl.u32 %v772, 7
      %v774 = vsub.s32 %v771, %v773
      %v775 = vrot.slane %v767, %v774
      %v777 = vunpack.c.l.s4 1934713408
      %v778 = vunpack.c.0.s8 %v777
      %v779 = vlaneseq
      %v780 = vshrl.u32 %v779, 7
      %v781 = vsub.s32 %v778, %v780
      %v782 = vrot.slane %v768, %v781
      %v783 = vcombine.low %v718, %v734
      %v784 = vcombine.high %v718, %v734
      %v786 = vunpack.c.l.s4 1934713408
      %v787 = vunpack.c.0.s8 %v786
      %v788 = vlaneseq
      %v789 = vshrl.u32 %v788, 7
      %v790 = vsub.s32 %v787, %v789
      %v791 = vrot.slane %v783, %v790
      %v793 = vunpack.c.l.s4 1934713408
      %v794 = vunpack.c.0.s8 %v793
      %v795 = vlaneseq
      %v796 = vshrl.u32 %v795, 7
      %v797 = vsub.s32 %v794, %v796
      %v798 = vrot.slane %v784, %v797
      %v799 = vcombine.low %v743, %v775
      %v800 = vcombine.high %v743, %v775
      %v801 = vcombine.low %v750, %v782
      %v802 = vcombine.high %v750, %v782
      %v803 = vcombine.low %v759, %v791
      %v804 = vcombine.high %v759, %v791
      %v805 = vcombine.low %v766, %v798
      %v806 = vcombine.high %v766, %v798
      %v807 = vcombine.low %v416, %v429
      %v808 = vcombine.high %v416, %v429
      %v810 = vunpack.c.l.s4 1983009808
      %v811 = vunpack.c.0.s8 %v810
      %v812 = vlaneseq
      %v813 = vshrl.u32 %v812, 7
      %v814 = vsub.s32 %v811, %v813
      %v815 = vrot.slane %v807, %v814
      %v817 = vunpack.c.l.s4 1983009808
      %v818 = vunpack.c.0.s8 %v817
      %v819 = vlaneseq
      %v820 = vshrl.u32 %v819, 7
      %v821 = vsub.s32 %v818, %v820
      %v822 = vrot.slane %v808, %v821
      %v823 = vcombine.low %v418, %v434
      %v824 = vcombine.high %v418, %v434
      %v826 = vunpack.c.l.s4 1983009808
      %v827 = vunpack.c.0.s8 %v826
      %v828 = vlaneseq
      %v829 = vshrl.u32 %v828, 7
      %v830 = vsub.s32 %v827, %v829
      %v831 = vrot.slane %v823, %v830
      %v833 = vunpack.c.l.s4 1983009808
      %v834 = vunpack.c.0.s8 %v833
      %v835 = vlaneseq
      %v836 = vshrl.u32 %v835, 7
      %v837 = vsub.s32 %v834, %v836
      %v838 = vrot.slane %v824, %v837
      %v839 = vcombine.low %v439, %v489
      %v840 = vcombine.high %v439, %v489
      %v842 = vunpack.c.l.s4 1983009808
      %v843 = vunpack.c.0.s8 %v842
      %v844 = vlaneseq
      %v845 = vshrl.u32 %v844, 7
      %v846 = vsub.s32 %v843, %v845
      %v847 = vrot.slane %v839, %v846
      %v849 = vunpack.c.l.s4 1983009808
      %v850 = vunpack.c.0.s8 %v849
      %v851 = vlaneseq
      %v852 = vshrl.u32 %v851, 7
      %v853 = vsub.s32 %v850, %v852
      %v854 = vrot.slane %v840, %v853
      %v855 = vcombine.low %v487, %v491
      %v856 = vcombine.high %v487, %v491
      %v858 = vunpack.c.l.s4 1983009808
      %v859 = vunpack.c.0.s8 %v858
      %v860 = vlaneseq
      %v861 = vshrl.u32 %v860, 7
      %v862 = vsub.s32 %v859, %v861
      %v863 = vrot.slane %v855, %v862
      %v865 = vunpack.c.l.s4 1983009808
      %v866 = vunpack.c.0.s8 %v865
      %v867 = vlaneseq
      %v868 = vshrl.u32 %v867, 7
      %v869 = vsub.s32 %v866, %v868
      %v870 = vrot.slane %v856, %v869
      %v871 = vcombine.low %v815, %v831
      %v872 = vcombine.high %v815, %v831
      %v874 = vunpack.c.l.s4 1934713408
      %v875 = vunpack.c.0.s8 %v874
      %v876 = vlaneseq
      %v877 = vshrl.u32 %v876, 7
      %v878 = vsub.s32 %v875, %v877
      %v879 = vrot.slane %v871, %v878
      %v881 = vunpack.c.l.s4 1934713408
      %v882 = vunpack.c.0.s8 %v881
      %v883 = vlaneseq
      %v884 = vshrl.u32 %v883, 7
      %v885 = vsub.s32 %v882, %v884
      %v886 = vrot.slane %v872, %v885
      %v887 = vcombine.low %v822, %v838
      %v888 = vcombine.high %v822, %v838
      %v890 = vunpack.c.l.s4 1934713408
      %v891 = vunpack.c.0.s8 %v890
      %v892 = vlaneseq
      %v893 = vshrl.u32 %v892, 7
      %v894 = vsub.s32 %v891, %v893
      %v895 = vrot.slane %v887, %v894
      %v897 = vunpack.c.l.s4 1934713408
      %v898 = vunpack.c.0.s8 %v897
      %v899 = vlaneseq
      %v900 = vshrl.u32 %v899, 7
      %v901 = vsub.s32 %v898, %v900
      %v902 = vrot.slane %v888, %v901
      %v903 = vcombine.low %v847, %v863
      %v904 = vcombine.high %v847, %v863
      %v906 = vunpack.c.l.s4 1934713408
      %v907 = vunpack.c.0.s8 %v906
      %v908 = vlaneseq
      %v909 = vshrl.u32 %v908, 7
      %v910 = vsub.s32 %v907, %v909
      %v911 = vrot.slane %v903, %v910
      %v913 = vunpack.c.l.s4 1934713408
      %v914 = vunpack.c.0.s8 %v913
      %v915 = vlaneseq
      %v916 = vshrl.u32 %v915, 7
      %v917 = vsub.s32 %v914, %v916
      %v918 = vrot.slane %v904, %v917
      %v919 = vcombine.low %v854, %v870
      %v920 = vcombine.high %v854, %v870
      %v922 = vunpack.c.l.s4 1934713408
      %v923 = vunpack.c.0.s8 %v922
      %v924 = vlaneseq
      %v925 = vshrl.u32 %v924, 7
      %v926 = vsub.s32 %v923, %v925
      %v927 = vrot.slane %v919, %v926
      %v929 = vunpack.c.l.s4 1934713408
      %v930 = vunpack.c.0.s8 %v929
      %v931 = vlaneseq
      %v932 = vshrl.u32 %v931, 7
      %v933 = vsub.s32 %v930, %v932
      %v934 = vrot.slane %v920, %v933
      %v935 = vcombine.low %v879, %v911
      %v936 = vcombine.high %v879, %v911
      %v937 = vcombine.low %v886, %v918
      %v938 = vcombine.high %v886, %v918
      %v939 = vcombine.low %v895, %v927
      %v940 = vcombine.high %v895, %v927
      %v941 = vcombine.low %v902, %v934
      %v942 = vcombine.high %v902, %v934
      %v943 = vcombine.low %v523, %v527
      %v944 = vcombine.high %v523, %v527
      %v946 = vunpack.c.l.s4 1983009808
      %v947 = vunpack.c.0.s8 %v946
      %v948 = vlaneseq
      %v949 = vshrl.u32 %v948, 7
      %v950 = vsub.s32 %v947, %v949
      %v951 = vrot.slane %v943, %v950
      %v953 = vunpack.c.l.s4 1983009808
      %v954 = vunpack.c.0.s8 %v953
      %v955 = vlaneseq
      %v956 = vshrl.u32 %v955, 7
      %v957 = vsub.s32 %v954, %v956
      %v958 = vrot.slane %v944, %v957
      %v959 = vcombine.high %v525, 0.0
      %v961 = vunpack.c.l.s4 1983009808
      %v962 = vunpack.c.0.s8 %v961
      %v963 = vlaneseq
      %v964 = vshrl.u32 %v963, 7
      %v965 = vsub.s32 %v962, %v964
      %v966 = vrot.slane %v525, %v965
      %v968 = vunpack.c.l.s4 1983009808
      %v969 = vunpack.c.0.s8 %v968
      %v970 = vlaneseq
      %v971 = vshrl.u32 %v970, 7
      %v972 = vsub.s32 %v969, %v971
      %v973 = vrot.slane %v959, %v972
      %v974 = vcombine.low %v951, %v966
      %v975 = vcombine.high %v951, %v966
      %v977 = vunpack.c.l.s4 1934713408
      %v978 = vunpack.c.0.s8 %v977
      %v979 = vlaneseq
      %v980 = vshrl.u32 %v979, 7
      %v981 = vsub.s32 %v978, %v980
      %v982 = vrot.slane %v974, %v981
      %v984 = vunpack.c.l.s4 1934713408
      %v985 = vunpack.c.0.s8 %v984
      %v986 = vlaneseq
      %v987 = vshrl.u32 %v986, 7
      %v988 = vsub.s32 %v985, %v987
      %v989 = vrot.slane %v975, %v988
      %v990 = vcombine.low %v958, %v973
      %v991 = vcombine.high %v958, %v973
      %v993 = vunpack.c.l.s4 1934713408
      %v994 = vunpack.c.0.s8 %v993
      %v995 = vlaneseq
      %v996 = vshrl.u32 %v995, 7
      %v997 = vsub.s32 %v994, %v996
      %v998 = vrot.slane %v990, %v997
      %v1000 = vunpack.c.l.s4 1934713408
      %v1001 = vunpack.c.0.s8 %v1000
      %v1002 = vlaneseq
      %v1003 = vshrl.u32 %v1002, 7
      %v1004 = vsub.s32 %v1001, %v1003
      %v1005 = vrot.slane %v991, %v1004
      %v1006 = vcombine.high %v982, 0.0
      %v1007 = vcombine.high %v989, 0.0
      %v1008 = vcombine.high %v998, 0.0
      %v1009 = vcombine.high %v1005, 0.0
      %v1010 = vcombine.low %v209, %v221
      %v1011 = vcombine.high %v209, %v221
      %v1013 = vunpack.c.l.s4 1983009808
      %v1014 = vunpack.c.0.s8 %v1013
      %v1015 = vlaneseq
      %v1016 = vshrl.u32 %v1015, 7
      %v1017 = vsub.s32 %v1014, %v1016
      %v1018 = vrot.slane %v1010, %v1017
      %v1020 = vunpack.c.l.s4 1983009808
      %v1021 = vunpack.c.0.s8 %v1020
      %v1022 = vlaneseq
      %v1023 = vshrl.u32 %v1022, 7
      %v1024 = vsub.s32 %v1021, %v1023
      %v1025 = vrot.slane %v1011, %v1024
      %v1026 = vcombine.low %v215, %v263
      %v1027 = vcombine.high %v215, %v263
      %v1029 = vunpack.c.l.s4 1983009808
      %v1030 = vunpack.c.0.s8 %v1029
      %v1031 = vlaneseq
      %v1032 = vshrl.u32 %v1031, 7
      %v1033 = vsub.s32 %v1030, %v1032
      %v1034 = vrot.slane %v1026, %v1033
      %v1036 = vunpack.c.l.s4 1983009808
      %v1037 = vunpack.c.0.s8 %v1036
      %v1038 = vlaneseq
      %v1039 = vshrl.u32 %v1038, 7
      %v1040 = vsub.s32 %v1037, %v1039
      %v1041 = vrot.slane %v1027, %v1040
      %v1042 = vcombine.low %v265, %v300
      %v1043 = vcombine.high %v265, %v300
      %v1045 = vunpack.c.l.s4 1983009808
      %v1046 = vunpack.c.0.s8 %v1045
      %v1047 = vlaneseq
      %v1048 = vshrl.u32 %v1047, 7
      %v1049 = vsub.s32 %v1046, %v1048
      %v1050 = vrot.slane %v1042, %v1049
      %v1052 = vunpack.c.l.s4 1983009808
      %v1053 = vunpack.c.0.s8 %v1052
      %v1054 = vlaneseq
      %v1055 = vshrl.u32 %v1054, 7
      %v1056 = vsub.s32 %v1053, %v1055
      %v1057 = vrot.slane %v1043, %v1056
      %v1058 = vcombine.low %v267, %v302
      %v1059 = vcombine.high %v267, %v302
      %v1061 = vunpack.c.l.s4 1983009808
      %v1062 = vunpack.c.0.s8 %v1061
      %v1063 = vlaneseq
      %v1064 = vshrl.u32 %v1063, 7
      %v1065 = vsub.s32 %v1062, %v1064
      %v1066 = vrot.slane %v1058, %v1065
      %v1068 = vunpack.c.l.s4 1983009808
      %v1069 = vunpack.c.0.s8 %v1068
      %v1070 = vlaneseq
      %v1071 = vshrl.u32 %v1070, 7
      %v1072 = vsub.s32 %v1069, %v1071
      %v1073 = vrot.slane %v1059, %v1072
      %v1074 = vcombine.low %v1018, %v1034
      %v1075 = vcombine.high %v1018, %v1034
      %v1077 = vunpack.c.l.s4 1934713408
      %v1078 = vunpack.c.0.s8 %v1077
      %v1079 = vlaneseq
      %v1080 = vshrl.u32 %v1079, 7
      %v1081 = vsub.s32 %v1078, %v1080
      %v1082 = vrot.slane %v1074, %v1081
      %v1084 = vunpack.c.l.s4 1934713408
      %v1085 = vunpack.c.0.s8 %v1084
      %v1086 = vlaneseq
      %v1087 = vshrl.u32 %v1086, 7
      %v1088 = vsub.s32 %v1085, %v1087
      %v1089 = vrot.slane %v1075, %v1088
      %v1090 = vcombine.low %v1025, %v1041
      %v1091 = vcombine.high %v1025, %v1041
      %v1093 = vunpack.c.l.s4 1934713408
      %v1094 = vunpack.c.0.s8 %v1093
      %v1095 = vlaneseq
      %v1096 = vshrl.u32 %v1095, 7
      %v1097 = vsub.s32 %v1094, %v1096
      %v1098 = vrot.slane %v1090, %v1097
      %v1100 = vunpack.c.l.s4 1934713408
      %v1101 = vunpack.c.0.s8 %v1100
      %v1102 = vlaneseq
      %v1103 = vshrl.u32 %v1102, 7
      %v1104 = vsub.s32 %v1101, %v1103
      %v1105 = vrot.slane %v1091, %v1104
      %v1106 = vcombine.low %v1050, %v1066
      %v1107 = vcombine.high %v1050, %v1066
      %v1109 = vunpack.c.l.s4 1934713408
      %v1110 = vunpack.c.0.s8 %v1109
      %v1111 = vlaneseq
      %v1112 = vshrl.u32 %v1111, 7
      %v1113 = vsub.s32 %v1110, %v1112
      %v1114 = vrot.slane %v1106, %v1113
      %v1116 = vunpack.c.l.s4 1934713408
      %v1117 = vunpack.c.0.s8 %v1116
      %v1118 = vlaneseq
      %v1119 = vshrl.u32 %v1118, 7
      %v1120 = vsub.s32 %v1117, %v1119
      %v1121 = vrot.slane %v1107, %v1120
      %v1122 = vcombine.low %v1057, %v1073
      %v1123 = vcombine.high %v1057, %v1073
      %v1125 = vunpack.c.l.s4 1934713408
      %v1126 = vunpack.c.0.s8 %v1125
      %v1127 = vlaneseq
      %v1128 = vshrl.u32 %v1127, 7
      %v1129 = vsub.s32 %v1126, %v1128
      %v1130 = vrot.slane %v1122, %v1129
      %v1132 = vunpack.c.l.s4 1934713408
      %v1133 = vunpack.c.0.s8 %v1132
      %v1134 = vlaneseq
      %v1135 = vshrl.u32 %v1134, 7
      %v1136 = vsub.s32 %v1133, %v1135
      %v1137 = vrot.slane %v1123, %v1136
      %v1138 = vcombine.low %v1082, %v1114
      %v1139 = vcombine.high %v1082, %v1114
      %v1140 = vcombine.low %v1089, %v1121
      %v1141 = vcombine.high %v1089, %v1121
      %v1142 = vcombine.low %v1098, %v1130
      %v1143 = vcombine.high %v1098, %v1130
      %v1144 = vcombine.low %v1105, %v1137
      %v1145 = vcombine.high %v1105, %v1137
      %v1146 = vcombine.low %v304, %v324
      %v1147 = vcombine.high %v304, %v324
      %v1149 = vunpack.c.l.s4 1983009808
      %v1150 = vunpack.c.0.s8 %v1149
      %v1151 = vlaneseq
      %v1152 = vshrl.u32 %v1151, 7
      %v1153 = vsub.s32 %v1150, %v1152
      %v1154 = vrot.slane %v1146, %v1153
      %v1156 = vunpack.c.l.s4 1983009808
      %v1157 = vunpack.c.0.s8 %v1156
      %v1158 = vlaneseq
      %v1159 = vshrl.u32 %v1158, 7
      %v1160 = vsub.s32 %v1157, %v1159
      %v1161 = vrot.slane %v1147, %v1160
      %v1162 = vcombine.low %v319, %v329
      %v1163 = vcombine.high %v319, %v329
      %v1165 = vunpack.c.l.s4 1983009808
      %v1166 = vunpack.c.0.s8 %v1165
      %v1167 = vlaneseq
      %v1168 = vshrl.u32 %v1167, 7
      %v1169 = vsub.s32 %v1166, %v1168
      %v1170 = vrot.slane %v1162, %v1169
      %v1172 = vunpack.c.l.s4 1983009808
      %v1173 = vunpack.c.0.s8 %v1172
      %v1174 = vlaneseq
      %v1175 = vshrl.u32 %v1174, 7
      %v1176 = vsub.s32 %v1173, %v1175
      %v1177 = vrot.slane %v1163, %v1176
      %v1178 = vcombine.low %v379, %v383
      %v1179 = vcombine.high %v379, %v383
      %v1181 = vunpack.c.l.s4 1983009808
      %v1182 = vunpack.c.0.s8 %v1181
      %v1183 = vlaneseq
      %v1184 = vshrl.u32 %v1183, 7
      %v1185 = vsub.s32 %v1182, %v1184
      %v1186 = vrot.slane %v1178, %v1185
      %v1188 = vunpack.c.l.s4 1983009808
      %v1189 = vunpack.c.0.s8 %v1188
      %v1190 = vlaneseq
      %v1191 = vshrl.u32 %v1190, 7
      %v1192 = vsub.s32 %v1189, %v1191
      %v1193 = vrot.slane %v1179, %v1192
      %v1194 = vcombine.low %v381, %v415
      %v1195 = vcombine.high %v381, %v415
      %v1197 = vunpack.c.l.s4 1983009808
      %v1198 = vunpack.c.0.s8 %v1197
      %v1199 = vlaneseq
      %v1200 = vshrl.u32 %v1199, 7
      %v1201 = vsub.s32 %v1198, %v1200
      %v1202 = vrot.slane %v1194, %v1201
      %v1204 = vunpack.c.l.s4 1983009808
      %v1205 = vunpack.c.0.s8 %v1204
      %v1206 = vlaneseq
      %v1207 = vshrl.u32 %v1206, 7
      %v1208 = vsub.s32 %v1205, %v1207
      %v1209 = vrot.slane %v1195, %v1208
      %v1210 = vcombine.low %v1154, %v1170
      %v1211 = vcombine.high %v1154, %v1170
      %v1213 = vunpack.c.l.s4 1934713408
      %v1214 = vunpack.c.0.s8 %v1213
      %v1215 = vlaneseq
      %v1216 = vshrl.u32 %v1215, 7
      %v1217 = vsub.s32 %v1214, %v1216
      %v1218 = vrot.slane %v1210, %v1217
      %v1220 = vunpack.c.l.s4 1934713408
      %v1221 = vunpack.c.0.s8 %v1220
      %v1222 = vlaneseq
      %v1223 = vshrl.u32 %v1222, 7
      %v1224 = vsub.s32 %v1221, %v1223
      %v1225 = vrot.slane %v1211, %v1224
      %v1226 = vcombine.low %v1161, %v1177
      %v1227 = vcombine.high %v1161, %v1177
      %v1229 = vunpack.c.l.s4 1934713408
      %v1230 = vunpack.c.0.s8 %v1229
      %v1231 = vlaneseq
      %v1232 = vshrl.u32 %v1231, 7
      %v1233 = vsub.s32 %v1230, %v1232
      %v1234 = vrot.slane %v1226, %v1233
      %v1236 = vunpack.c.l.s4 1934713408
      %v1237 = vunpack.c.0.s8 %v1236
      %v1238 = vlaneseq
      %v1239 = vshrl.u32 %v1238, 7
      %v1240 = vsub.s32 %v1237, %v1239
      %v1241 = vrot.slane %v1227, %v1240
      %v1242 = vcombine.low %v1186, %v1202
      %v1243 = vcombine.high %v1186, %v1202
      %v1245 = vunpack.c.l.s4 1934713408
      %v1246 = vunpack.c.0.s8 %v1245
      %v1247 = vlaneseq
      %v1248 = vshrl.u32 %v1247, 7
      %v1249 = vsub.s32 %v1246, %v1248
      %v1250 = vrot.slane %v1242, %v1249
      %v1252 = vunpack.c.l.s4 1934713408
      %v1253 = vunpack.c.0.s8 %v1252
      %v1254 = vlaneseq
      %v1255 = vshrl.u32 %v1254, 7
      %v1256 = vsub.s32 %v1253, %v1255
      %v1257 = vrot.slane %v1243, %v1256
      %v1258 = vcombine.low %v1193, %v1209
      %v1259 = vcombine.high %v1193, %v1209
      %v1261 = vunpack.c.l.s4 1934713408
      %v1262 = vunpack.c.0.s8 %v1261
      %v1263 = vlaneseq
      %v1264 = vshrl.u32 %v1263, 7
      %v1265 = vsub.s32 %v1262, %v1264
      %v1266 = vrot.slane %v1258, %v1265
      %v1268 = vunpack.c.l.s4 1934713408
      %v1269 = vunpack.c.0.s8 %v1268
      %v1270 = vlaneseq
      %v1271 = vshrl.u32 %v1270, 7
      %v1272 = vsub.s32 %v1269, %v1271
      %v1273 = vrot.slane %v1259, %v1272
      %v1274 = vcombine.low %v1218, %v1250
      %v1275 = vcombine.high %v1218, %v1250
      %v1276 = vcombine.low %v1225, %v1257
      %v1277 = vcombine.high %v1225, %v1257
      %v1278 = vcombine.low %v1234, %v1266
      %v1279 = vcombine.high %v1234, %v1266
      %v1280 = vcombine.low %v1241, %v1273
      %v1281 = vcombine.high %v1241, %v1273
      %v1282 = vcombine.low %v417, %v431
      %v1283 = vcombine.high %v417, %v431
      %v1285 = vunpack.c.l.s4 1983009808
      %v1286 = vunpack.c.0.s8 %v1285
      %v1287 = vlaneseq
      %v1288 = vshrl.u32 %v1287, 7
      %v1289 = vsub.s32 %v1286, %v1288
      %v1290 = vrot.slane %v1282, %v1289
      %v1292 = vunpack.c.l.s4 1983009808
      %v1293 = vunpack.c.0.s8 %v1292
      %v1294 = vlaneseq
      %v1295 = vshrl.u32 %v1294, 7
      %v1296 = vsub.s32 %v1293, %v1295
      %v1297 = vrot.slane %v1283, %v1296
      %v1298 = vcombine.low %v419, %v436
      %v1299 = vcombine.high %v419, %v436
      %v1301 = vunpack.c.l.s4 1983009808
      %v1302 = vunpack.c.0.s8 %v1301
      %v1303 = vlaneseq
      %v1304 = vshrl.u32 %v1303, 7
      %v1305 = vsub.s32 %v1302, %v1304
      %v1306 = vrot.slane %v1298, %v1305
      %v1308 = vunpack.c.l.s4 1983009808
      %v1309 = vunpack.c.0.s8 %v1308
      %v1310 = vlaneseq
      %v1311 = vshrl.u32 %v1310, 7
      %v1312 = vsub.s32 %v1309, %v1311
      %v1313 = vrot.slane %v1299, %v1312
      %v1314 = vcombine.low %v441, %v490
      %v1315 = vcombine.high %v441, %v490
      %v1317 = vunpack.c.l.s4 1983009808
      %v1318 = vunpack.c.0.s8 %v1317
      %v1319 = vlaneseq
      %v1320 = vshrl.u32 %v1319, 7
      %v1321 = vsub.s32 %v1318, %v1320
      %v1322 = vrot.slane %v1314, %v1321
      %v1324 = vunpack.c.l.s4 1983009808
      %v1325 = vunpack.c.0.s8 %v1324
      %v1326 = vlaneseq
      %v1327 = vshrl.u32 %v1326, 7
      %v1328 = vsub.s32 %v1325, %v1327
      %v1329 = vrot.slane %v1315, %v1328
      %v1330 = vcombine.low %v488, %v492
      %v1331 = vcombine.high %v488, %v492
      %v1333 = vunpack.c.l.s4 1983009808
      %v1334 = vunpack.c.0.s8 %v1333
      %v1335 = vlaneseq
      %v1336 = vshrl.u32 %v1335, 7
      %v1337 = vsub.s32 %v1334, %v1336
      %v1338 = vrot.slane %v1330, %v1337
      %v1340 = vunpack.c.l.s4 1983009808
      %v1341 = vunpack.c.0.s8 %v1340
      %v1342 = vlaneseq
      %v1343 = vshrl.u32 %v1342, 7
      %v1344 = vsub.s32 %v1341, %v1343
      %v1345 = vrot.slane %v1331, %v1344
      %v1346 = vcombine.low %v1290, %v1306
      %v1347 = vcombine.high %v1290, %v1306
      %v1349 = vunpack.c.l.s4 1934713408
      %v1350 = vunpack.c.0.s8 %v1349
      %v1351 = vlaneseq
      %v1352 = vshrl.u32 %v1351, 7
      %v1353 = vsub.s32 %v1350, %v1352
      %v1354 = vrot.slane %v1346, %v1353
      %v1356 = vunpack.c.l.s4 1934713408
      %v1357 = vunpack.c.0.s8 %v1356
      %v1358 = vlaneseq
      %v1359 = vshrl.u32 %v1358, 7
      %v1360 = vsub.s32 %v1357, %v1359
      %v1361 = vrot.slane %v1347, %v1360
      %v1362 = vcombine.low %v1297, %v1313
      %v1363 = vcombine.high %v1297, %v1313
      %v1365 = vunpack.c.l.s4 1934713408
      %v1366 = vunpack.c.0.s8 %v1365
      %v1367 = vlaneseq
      %v1368 = vshrl.u32 %v1367, 7
      %v1369 = vsub.s32 %v1366, %v1368
      %v1370 = vrot.slane %v1362, %v1369
      %v1372 = vunpack.c.l.s4 1934713408
      %v1373 = vunpack.c.0.s8 %v1372
      %v1374 = vlaneseq
      %v1375 = vshrl.u32 %v1374, 7
      %v1376 = vsub.s32 %v1373, %v1375
      %v1377 = vrot.slane %v1363, %v1376
      %v1378 = vcombine.low %v1322, %v1338
      %v1379 = vcombine.high %v1322, %v1338
      %v1381 = vunpack.c.l.s4 1934713408
      %v1382 = vunpack.c.0.s8 %v1381
      %v1383 = vlaneseq
      %v1384 = vshrl.u32 %v1383, 7
      %v1385 = vsub.s32 %v1382, %v1384
      %v1386 = vrot.slane %v1378, %v1385
      %v1388 = vunpack.c.l.s4 1934713408
      %v1389 = vunpack.c.0.s8 %v1388
      %v1390 = vlaneseq
      %v1391 = vshrl.u32 %v1390, 7
      %v1392 = vsub.s32 %v1389, %v1391
      %v1393 = vrot.slane %v1379, %v1392
      %v1394 = vcombine.low %v1329, %v1345
      %v1395 = vcombine.high %v1329, %v1345
      %v1397 = vunpack.c.l.s4 1934713408
      %v1398 = vunpack.c.0.s8 %v1397
      %v1399 = vlaneseq
      %v1400 = vshrl.u32 %v1399, 7
      %v1401 = vsub.s32 %v1398, %v1400
      %v1402 = vrot.slane %v1394, %v1401
      %v1404 = vunpack.c.l.s4 1934713408
      %v1405 = vunpack.c.0.s8 %v1404
      %v1406 = vlaneseq
      %v1407 = vshrl.u32 %v1406, 7
      %v1408 = vsub.s32 %v1405, %v1407
      %v1409 = vrot.slane %v1395, %v1408
      %v1410 = vcombine.low %v1354, %v1386
      %v1411 = vcombine.high %v1354, %v1386
      %v1412 = vcombine.low %v1361, %v1393
      %v1413 = vcombine.high %v1361, %v1393
      %v1414 = vcombine.low %v1370, %v1402
      %v1415 = vcombine.high %v1370, %v1402
      %v1416 = vcombine.low %v1377, %v1409
      %v1417 = vcombine.high %v1377, %v1409
      %v1418 = vcombine.low %v524, %v528
      %v1419 = vcombine.high %v524, %v528
      %v1421 = vunpack.c.l.s4 1983009808
      %v1422 = vunpack.c.0.s8 %v1421
      %v1423 = vlaneseq
      %v1424 = vshrl.u32 %v1423, 7
      %v1425 = vsub.s32 %v1422, %v1424
      %v1426 = vrot.slane %v1418, %v1425
      %v1428 = vunpack.c.l.s4 1983009808
      %v1429 = vunpack.c.0.s8 %v1428
      %v1430 = vlaneseq
      %v1431 = vshrl.u32 %v1430, 7
      %v1432 = vsub.s32 %v1429, %v1431
      %v1433 = vrot.slane %v1419, %v1432
      %v1434 = vcombine.high %v526, 0.0
      %v1436 = vunpack.c.l.s4 1983009808
      %v1437 = vunpack.c.0.s8 %v1436
      %v1438 = vlaneseq
      %v1439 = vshrl.u32 %v1438, 7
      %v1440 = vsub.s32 %v1437, %v1439
      %v1441 = vrot.slane %v526, %v1440
      %v1443 = vunpack.c.l.s4 1983009808
      %v1444 = vunpack.c.0.s8 %v1443
      %v1445 = vlaneseq
      %v1446 = vshrl.u32 %v1445, 7
      %v1447 = vsub.s32 %v1444, %v1446
      %v1448 = vrot.slane %v1434, %v1447
      %v1449 = vcombine.low %v1426, %v1441
      %v1450 = vcombine.high %v1426, %v1441
      %v1452 = vunpack.c.l.s4 1934713408
      %v1453 = vunpack.c.0.s8 %v1452
      %v1454 = vlaneseq
      %v1455 = vshrl.u32 %v1454, 7
      %v1456 = vsub.s32 %v1453, %v1455
      %v1457 = vrot.slane %v1449, %v1456
      %v1459 = vunpack.c.l.s4 1934713408
      %v1460 = vunpack.c.0.s8 %v1459
      %v1461 = vlaneseq
      %v1462 = vshrl.u32 %v1461, 7
      %v1463 = vsub.s32 %v1460, %v1462
      %v1464 = vrot.slane %v1450, %v1463
      %v1465 = vcombine.low %v1433, %v1448
      %v1466 = vcombine.high %v1433, %v1448
      %v1468 = vunpack.c.l.s4 1934713408
      %v1469 = vunpack.c.0.s8 %v1468
      %v1470 = vlaneseq
      %v1471 = vshrl.u32 %v1470, 7
      %v1472 = vsub.s32 %v1469, %v1471
      %v1473 = vrot.slane %v1465, %v1472
      %v1475 = vunpack.c.l.s4 1934713408
      %v1476 = vunpack.c.0.s8 %v1475
      %v1477 = vlaneseq
      %v1478 = vshrl.u32 %v1477, 7
      %v1479 = vsub.s32 %v1476, %v1478
      %v1480 = vrot.slane %v1466, %v1479
      %v1481 = vcombine.high %v1457, 0.0
      %v1482 = vcombine.high %v1464, 0.0
      %v1483 = vcombine.high %v1473, 0.0
      %v1484 = vcombine.high %v1480, 0.0
      %v1485 = vld [vmem:[%s1] sm:$0xff]
      %v1486 = vld [vmem:[%s1 + $0x8] sm:$0xff]
      %v1487 = vld [vmem:[%s2] sm:$0xff]
      %v1488 = vld [vmem:[%s2 + $0x8] sm:$0xff]
      %1490 = vset.pattern.permute.xlu0 0
      %1491 = vperm.xlu0 %1490, %v1487
      %v1492 = vpop.permute.xlu0 %1491
      %1495 = vset.pattern.permute.xlu0 0
      %1496 = vperm.xlu0 %1495, %v1488
      %v1497 = vpop.permute.xlu0 %1496
      %vm1499 = vcmask 220160
      %v1501 = vsel %vm1499, %v1485, 0
      %v1504 = vsel %vm1499, %v1486, 0
      %vm1506 = vcmask 1042432
      %v1508 = vsel %vm1506, %v982, 0
      %v1511 = vsel %vm1506, %v1006, 0
      %v1514 = vsel %vm1506, %v989, 0
      %v1517 = vsel %vm1506, %v1007, 0
      %v1520 = vsel %vm1506, %v998, 0
      %v1523 = vsel %vm1506, %v1008, 0
      %v1526 = vsel %vm1506, %v1005, 0
      %v1529 = vsel %vm1506, %v1009, 0
      %v1532 = vsel %vm1506, %v1457, 0
      %v1535 = vsel %vm1506, %v1481, 0
      %v1538 = vsel %vm1506, %v1464, 0
      %v1541 = vsel %vm1506, %v1482, 0
      %v1544 = vsel %vm1506, %v1473, 0
      %v1547 = vsel %vm1506, %v1483, 0
      %v1550 = vsel %vm1506, %v1480, 0
      %v1553 = vsel %vm1506, %v1484, 0
      %1555 = vmatprep.subr.mxu0 0.0
      %1556 = vmatpush1.msra.mxu0 0.0
      %1557 = vmatprep.subr.mxu0 0.0
      %1558 = vmatpush1.msra.mxu0 0.0
      %1559 = vmatprep.subr.mxu0 0.0
      %1560 = vmatpush1.msra.mxu0 0.0
      %1561 = vmatprep.subr.mxu0 0.0
      %1562 = vmatpush1.msra.mxu0 0.0
      %1563 = vmatprep.subr.mxu0 0.0
      %1564 = vmatpush1.msra.mxu0 0.0
      %1565 = vmatprep.subr.mxu0 0.0
      %1566 = vmatpush1.msra.mxu0 0.0
      %1567 = vmatprep.subr.mxu0 0.0
      %1568 = vmatpush1.msra.mxu0 0.0
      %1569 = vmatprep.subr.mxu0 0.0
      %1570 = vmatpush1.msra.mxu0 0.0
      %1571 = vmatprep.subr.mxu0 0.0
      %1572 = vmatpush1.msra.mxu0 0.0
      %1573 = vmatprep.subr.mxu0 0.0
      %1574 = vmatpush1.msra.mxu0 0.0
      %1575 = vmatprep.subr.mxu0 0.0
      %1576 = vmatpush1.msra.mxu0 0.0
      %1577 = vmatprep.subr.mxu0 0.0
      %1578 = vmatpush1.msra.mxu0 0.0
      %1579 = vmatprep.subr.mxu0 %v1511
      %1580 = vmatpush1.msra.mxu0 %v1508
      %1581 = vmatprep.subr.mxu0 %v936
      %1582 = vmatpush1.msra.mxu0 %v935
      %1583 = vmatprep.subr.mxu0 %v800
      %1584 = vmatpush1.msra.mxu0 %v799
      %1585 = vmatprep.subr.mxu0 %v664
      %1586 = vmatpush1.msra.mxu0 %v663
      %1587 = vmatprep.subr.mxu0 0.0
      %1588 = vmatpush2.msra.mxu0 0.0
      %1589 = vmatprep.subr.mxu0 0.0
      %1590 = vmatpush2.msra.mxu0 0.0
      %1591 = vmatprep.subr.mxu0 0.0
      %1592 = vmatpush2.msra.mxu0 0.0
      %1593 = vmatprep.subr.mxu0 0.0
      %1594 = vmatpush2.msra.mxu0 0.0
      %1595 = vmatprep.subr.mxu0 0.0
      %1596 = vmatpush2.msra.mxu0 0.0
      %1597 = vmatprep.subr.mxu0 0.0
      %1598 = vmatpush2.msra.mxu0 0.0
      %1599 = vmatprep.subr.mxu0 0.0
      %1600 = vmatpush2.msra.mxu0 0.0
      %1601 = vmatprep.subr.mxu0 0.0
      %1602 = vmatpush2.msra.mxu0 0.0
      %1603 = vmatprep.subr.mxu0 0.0
      %1604 = vmatpush2.msra.mxu0 0.0
      %1605 = vmatprep.subr.mxu0 0.0
      %1606 = vmatpush2.msra.mxu0 0.0
      %1607 = vmatprep.subr.mxu0 0.0
      %1608 = vmatpush2.msra.mxu0 0.0
      %1609 = vmatprep.subr.mxu0 0.0
      %1610 = vmatpush2.msra.mxu0 0.0
      %1611 = vmatprep.subr.mxu0 0.0
      %1612 = vmatpush2.msra.mxu0 0.0
      %1613 = vmatprep.subr.mxu0 0.0
      %1614 = vmatpush2.msra.mxu0 0.0
      %1615 = vmatprep.subr.mxu0 0.0
      %1616 = vmatpush2.msra.mxu0 0.0
      %1617 = vmatprep.subr.mxu0 0.0
      %1618 = vmatpush2.msra.mxu0 0.0
      %1619 = vmatprep.mubr.f32.mxu0 0.0
      %1620 = vmatmul.mubr.f32.gmra.mxu0 %v1501
      %v1621 = vpop.f32.mrf.mxu0
      %v1622 = vadd.f32 %v1492, %v1621
      %v1623 = vpop.f32.mrf.mxu0
      %v1624 = vadd.f32 %v1492, %v1623
      %1625 = vmatprep.mubr.f32.mxu0 0.0
      %1626 = vmatmul.mubr.f32.gmra.mxu0 %v1504
      %v1627 = vpop.f32.mrf.mxu0
      %v1628 = vadd.f32 %v1497, %v1627
      %v1629 = vpop.f32.mrf.mxu0
      %v1630 = vadd.f32 %v1497, %v1629
      %1631 = vdwg.mxu0
      %1632 = vmatprep.subr.mxu0 0.0
      %1633 = vmatpush1.msra.mxu0 0.0
      %1634 = vmatprep.subr.mxu0 0.0
      %1635 = vmatpush1.msra.mxu0 0.0
      %1636 = vmatprep.subr.mxu0 0.0
      %1637 = vmatpush1.msra.mxu0 0.0
      %1638 = vmatprep.subr.mxu0 0.0
      %1639 = vmatpush1.msra.mxu0 0.0
      %1640 = vmatprep.subr.mxu0 0.0
      %1641 = vmatpush1.msra.mxu0 0.0
      %1642 = vmatprep.subr.mxu0 0.0
      %1643 = vmatpush1.msra.mxu0 0.0
      %1644 = vmatprep.subr.mxu0 0.0
      %1645 = vmatpush1.msra.mxu0 0.0
      %1646 = vmatprep.subr.mxu0 0.0
      %1647 = vmatpush1.msra.mxu0 0.0
      %1648 = vmatprep.subr.mxu0 0.0
      %1649 = vmatpush1.msra.mxu0 0.0
      %1650 = vmatprep.subr.mxu0 0.0
      %1651 = vmatpush1.msra.mxu0 0.0
      %1652 = vmatprep.subr.mxu0 0.0
      %1653 = vmatpush1.msra.mxu0 0.0
      %1654 = vmatprep.subr.mxu0 0.0
      %1655 = vmatpush1.msra.mxu0 0.0
      %1656 = vmatprep.subr.mxu0 %v1517
      %1657 = vmatpush1.msra.mxu0 %v1514
      %1658 = vmatprep.subr.mxu0 %v938
      %1659 = vmatpush1.msra.mxu0 %v937
      %1660 = vmatprep.subr.mxu0 %v802
      %1661 = vmatpush1.msra.mxu0 %v801
      %1662 = vmatprep.subr.mxu0 %v666
      %1663 = vmatpush1.msra.mxu0 %v665
      %1664 = vmatprep.subr.mxu0 0.0
      %1665 = vmatpush2.msra.mxu0 0.0
      %1666 = vmatprep.subr.mxu0 0.0
      %1667 = vmatpush2.msra.mxu0 0.0
      %1668 = vmatprep.subr.mxu0 0.0
      %1669 = vmatpush2.msra.mxu0 0.0
      %1670 = vmatprep.subr.mxu0 0.0
      %1671 = vmatpush2.msra.mxu0 0.0
      %1672 = vmatprep.subr.mxu0 0.0
      %1673 = vmatpush2.msra.mxu0 0.0
      %1674 = vmatprep.subr.mxu0 0.0
      %1675 = vmatpush2.msra.mxu0 0.0
      %1676 = vmatprep.subr.mxu0 0.0
      %1677 = vmatpush2.msra.mxu0 0.0
      %1678 = vmatprep.subr.mxu0 0.0
      %1679 = vmatpush2.msra.mxu0 0.0
      %1680 = vmatprep.subr.mxu0 0.0
      %1681 = vmatpush2.msra.mxu0 0.0
      %1682 = vmatprep.subr.mxu0 0.0
      %1683 = vmatpush2.msra.mxu0 0.0
      %1684 = vmatprep.subr.mxu0 0.0
      %1685 = vmatpush2.msra.mxu0 0.0
      %1686 = vmatprep.subr.mxu0 0.0
      %1687 = vmatpush2.msra.mxu0 0.0
      %1688 = vmatprep.subr.mxu0 0.0
      %1689 = vmatpush2.msra.mxu0 0.0
      %1690 = vmatprep.subr.mxu0 0.0
      %1691 = vmatpush2.msra.mxu0 0.0
      %1692 = vmatprep.subr.mxu0 0.0
      %1693 = vmatpush2.msra.mxu0 0.0
      %1694 = vmatprep.subr.mxu0 0.0
      %1695 = vmatpush2.msra.mxu0 0.0
      %1696 = vmatprep.mubr.f32.mxu0 0.0
      %1697 = vmatmul.mubr.f32.gmra.mxu0 %v1501
      %v1698 = vpop.f32.mrf.mxu0
      %v1699 = vadd.f32 %v1492, %v1698
      %v1700 = vpop.f32.mrf.mxu0
      %v1701 = vadd.f32 %v1492, %v1700
      %1702 = vmatprep.mubr.f32.mxu0 0.0
      %1703 = vmatmul.mubr.f32.gmra.mxu0 %v1504
      %v1704 = vpop.f32.mrf.mxu0
      %v1705 = vadd.f32 %v1497, %v1704
      %v1706 = vpop.f32.mrf.mxu0
      %v1707 = vadd.f32 %v1497, %v1706
      %1708 = vdwg.mxu0
      %1709 = vmatprep.subr.mxu0 0.0
      %1710 = vmatpush1.msra.mxu0 0.0
      %1711 = vmatprep.subr.mxu0 0.0
      %1712 = vmatpush1.msra.mxu0 0.0
      %1713 = vmatprep.subr.mxu0 0.0
      %1714 = vmatpush1.msra.mxu0 0.0
      %1715 = vmatprep.subr.mxu0 0.0
      %1716 = vmatpush1.msra.mxu0 0.0
      %1717 = vmatprep.subr.mxu0 0.0
      %1718 = vmatpush1.msra.mxu0 0.0
      %1719 = vmatprep.subr.mxu0 0.0
      %1720 = vmatpush1.msra.mxu0 0.0
      %1721 = vmatprep.subr.mxu0 0.0
      %1722 = vmatpush1.msra.mxu0 0.0
      %1723 = vmatprep.subr.mxu0 0.0
      %1724 = vmatpush1.msra.mxu0 0.0
      %1725 = vmatprep.subr.mxu0 0.0
      %1726 = vmatpush1.msra.mxu0 0.0
      %1727 = vmatprep.subr.mxu0 0.0
      %1728 = vmatpush1.msra.mxu0 0.0
      %1729 = vmatprep.subr.mxu0 0.0
      %1730 = vmatpush1.msra.mxu0 0.0
      %1731 = vmatprep.subr.mxu0 0.0
      %1732 = vmatpush1.msra.mxu0 0.0
      %1733 = vmatprep.subr.mxu0 %v1523
      %1734 = vmatpush1.msra.mxu0 %v1520
      %1735 = vmatprep.subr.mxu0 %v940
      %1736 = vmatpush1.msra.mxu0 %v939
      %1737 = vmatprep.subr.mxu0 %v804
      %1738 = vmatpush1.msra.mxu0 %v803
      %1739 = vmatprep.subr.mxu0 %v668
      %1740 = vmatpush1.msra.mxu0 %v667
      %1741 = vmatprep.subr.mxu0 0.0
      %1742 = vmatpush2.msra.mxu0 0.0
      %1743 = vmatprep.subr.mxu0 0.0
      %1744 = vmatpush2.msra.mxu0 0.0
      %1745 = vmatprep.subr.mxu0 0.0
      %1746 = vmatpush2.msra.mxu0 0.0
      %1747 = vmatprep.subr.mxu0 0.0
      %1748 = vmatpush2.msra.mxu0 0.0
      %1749 = vmatprep.subr.mxu0 0.0
      %1750 = vmatpush2.msra.mxu0 0.0
      %1751 = vmatprep.subr.mxu0 0.0
      %1752 = vmatpush2.msra.mxu0 0.0
      %1753 = vmatprep.subr.mxu0 0.0
      %1754 = vmatpush2.msra.mxu0 0.0
      %1755 = vmatprep.subr.mxu0 0.0
      %1756 = vmatpush2.msra.mxu0 0.0
      %1757 = vmatprep.subr.mxu0 0.0
      %1758 = vmatpush2.msra.mxu0 0.0
      %1759 = vmatprep.subr.mxu0 0.0
      %1760 = vmatpush2.msra.mxu0 0.0
      %1761 = vmatprep.subr.mxu0 0.0
      %1762 = vmatpush2.msra.mxu0 0.0
      %1763 = vmatprep.subr.mxu0 0.0
      %1764 = vmatpush2.msra.mxu0 0.0
      %1765 = vmatprep.subr.mxu0 0.0
      %1766 = vmatpush2.msra.mxu0 0.0
      %1767 = vmatprep.subr.mxu0 0.0
      %1768 = vmatpush2.msra.mxu0 0.0
      %1769 = vmatprep.subr.mxu0 0.0
      %1770 = vmatpush2.msra.mxu0 0.0
      %1771 = vmatprep.subr.mxu0 0.0
      %1772 = vmatpush2.msra.mxu0 0.0
      %1773 = vmatprep.mubr.f32.mxu0 0.0
      %1774 = vmatmul.mubr.f32.gmra.mxu0 %v1501
      %v1775 = vpop.f32.mrf.mxu0
      %v1776 = vadd.f32 %v1492, %v1775
      %v1777 = vpop.f32.mrf.mxu0
      %v1778 = vadd.f32 %v1492, %v1777
      %1779 = vmatprep.mubr.f32.mxu0 0.0
      %1780 = vmatmul.mubr.f32.gmra.mxu0 %v1504
      %v1781 = vpop.f32.mrf.mxu0
      %v1782 = vadd.f32 %v1497, %v1781
      %v1783 = vpop.f32.mrf.mxu0
      %v1784 = vadd.f32 %v1497, %v1783
      %1785 = vdwg.mxu0
      %1786 = vmatprep.subr.mxu0 0.0
      %1787 = vmatpush1.msra.mxu0 0.0
      %1788 = vmatprep.subr.mxu0 0.0
      %1789 = vmatpush1.msra.mxu0 0.0
      %1790 = vmatprep.subr.mxu0 0.0
      %1791 = vmatpush1.msra.mxu0 0.0
      %1792 = vmatprep.subr.mxu0 0.0
      %1793 = vmatpush1.msra.mxu0 0.0
      %1794 = vmatprep.subr.mxu0 0.0
      %1795 = vmatpush1.msra.mxu0 0.0
      %1796 = vmatprep.subr.mxu0 0.0
      %1797 = vmatpush1.msra.mxu0 0.0
      %1798 = vmatprep.subr.mxu0 0.0
      %1799 = vmatpush1.msra.mxu0 0.0
      %1800 = vmatprep.subr.mxu0 0.0
      %1801 = vmatpush1.msra.mxu0 0.0
      %1802 = vmatprep.subr.mxu0 0.0
      %1803 = vmatpush1.msra.mxu0 0.0
      %1804 = vmatprep.subr.mxu0 0.0
      %1805 = vmatpush1.msra.mxu0 0.0
      %1806 = vmatprep.subr.mxu0 0.0
      %1807 = vmatpush1.msra.mxu0 0.0
      %1808 = vmatprep.subr.mxu0 0.0
      %1809 = vmatpush1.msra.mxu0 0.0
      %1810 = vmatprep.subr.mxu0 %v1529
      %1811 = vmatpush1.msra.mxu0 %v1526
      %1812 = vmatprep.subr.mxu0 %v942
      %1813 = vmatpush1.msra.mxu0 %v941
      %1814 = vmatprep.subr.mxu0 %v806
      %1815 = vmatpush1.msra.mxu0 %v805
      %1816 = vmatprep.subr.mxu0 %v670
      %1817 = vmatpush1.msra.mxu0 %v669
      %1818 = vmatprep.subr.mxu0 0.0
      %1819 = vmatpush2.msra.mxu0 0.0
      %1820 = vmatprep.subr.mxu0 0.0
      %1821 = vmatpush2.msra.mxu0 0.0
      %1822 = vmatprep.subr.mxu0 0.0
      %1823 = vmatpush2.msra.mxu0 0.0
      %1824 = vmatprep.subr.mxu0 0.0
      %1825 = vmatpush2.msra.mxu0 0.0
      %1826 = vmatprep.subr.mxu0 0.0
      %1827 = vmatpush2.msra.mxu0 0.0
      %1828 = vmatprep.subr.mxu0 0.0
      %1829 = vmatpush2.msra.mxu0 0.0
      %1830 = vmatprep.subr.mxu0 0.0
      %1831 = vmatpush2.msra.mxu0 0.0
      %1832 = vmatprep.subr.mxu0 0.0
      %1833 = vmatpush2.msra.mxu0 0.0
      %1834 = vmatprep.subr.mxu0 0.0
      %1835 = vmatpush2.msra.mxu0 0.0
      %1836 = vmatprep.subr.mxu0 0.0
      %1837 = vmatpush2.msra.mxu0 0.0
      %1838 = vmatprep.subr.mxu0 0.0
      %1839 = vmatpush2.msra.mxu0 0.0
      %1840 = vmatprep.subr.mxu0 0.0
      %1841 = vmatpush2.msra.mxu0 0.0
      %1842 = vmatprep.subr.mxu0 0.0
      %1843 = vmatpush2.msra.mxu0 0.0
      %1844 = vmatprep.subr.mxu0 0.0
      %1845 = vmatpush2.msra.mxu0 0.0
      %1846 = vmatprep.subr.mxu0 0.0
      %1847 = vmatpush2.msra.mxu0 0.0
      %1848 = vmatprep.subr.mxu0 0.0
      %1849 = vmatpush2.msra.mxu0 0.0
      %1850 = vmatprep.mubr.f32.mxu0 0.0
      %1851 = vmatmul.mubr.f32.gmra.mxu0 %v1501
      %v1852 = vpop.f32.mrf.mxu0
      %v1853 = vadd.f32 %v1492, %v1852
      %v1854 = vpop.f32.mrf.mxu0
      %v1855 = vadd.f32 %v1492, %v1854
      %1856 = vmatprep.mubr.f32.mxu0 0.0
      %1857 = vmatmul.mubr.f32.gmra.mxu0 %v1504
      %v1858 = vpop.f32.mrf.mxu0
      %v1859 = vadd.f32 %v1497, %v1858
      %v1860 = vpop.f32.mrf.mxu0
      %v1861 = vadd.f32 %v1497, %v1860
      %1862 = vdwg.mxu0
      %1863 = vmatprep.subr.mxu0 0.0
      %1864 = vmatpush1.msra.mxu0 0.0
      %1865 = vmatprep.subr.mxu0 0.0
      %1866 = vmatpush1.msra.mxu0 0.0
      %1867 = vmatprep.subr.mxu0 0.0
      %1868 = vmatpush1.msra.mxu0 0.0
      %1869 = vmatprep.subr.mxu0 0.0
      %1870 = vmatpush1.msra.mxu0 0.0
      %1871 = vmatprep.subr.mxu0 0.0
      %1872 = vmatpush1.msra.mxu0 0.0
      %1873 = vmatprep.subr.mxu0 0.0
      %1874 = vmatpush1.msra.mxu0 0.0
      %1875 = vmatprep.subr.mxu0 0.0
      %1876 = vmatpush1.msra.mxu0 0.0
      %1877 = vmatprep.subr.mxu0 0.0
      %1878 = vmatpush1.msra.mxu0 0.0
      %1879 = vmatprep.subr.mxu0 0.0
      %1880 = vmatpush1.msra.mxu0 0.0
      %1881 = vmatprep.subr.mxu0 0.0
      %1882 = vmatpush1.msra.mxu0 0.0
      %1883 = vmatprep.subr.mxu0 0.0
      %1884 = vmatpush1.msra.mxu0 0.0
      %1885 = vmatprep.subr.mxu0 0.0
      %1886 = vmatpush1.msra.mxu0 0.0
      %1887 = vmatprep.subr.mxu0 %v1535
      %1888 = vmatpush1.msra.mxu0 %v1532
      %1889 = vmatprep.subr.mxu0 %v1411
      %1890 = vmatpush1.msra.mxu0 %v1410
      %1891 = vmatprep.subr.mxu0 %v1275
      %1892 = vmatpush1.msra.mxu0 %v1274
      %1893 = vmatprep.subr.mxu0 %v1139
      %1894 = vmatpush1.msra.mxu0 %v1138
      %1895 = vmatprep.subr.mxu0 0.0
      %1896 = vmatpush2.msra.mxu0 0.0
      %1897 = vmatprep.subr.mxu0 0.0
      %1898 = vmatpush2.msra.mxu0 0.0
      %1899 = vmatprep.subr.mxu0 0.0
      %1900 = vmatpush2.msra.mxu0 0.0
      %1901 = vmatprep.subr.mxu0 0.0
      %1902 = vmatpush2.msra.mxu0 0.0
      %1903 = vmatprep.subr.mxu0 0.0
      %1904 = vmatpush2.msra.mxu0 0.0
      %1905 = vmatprep.subr.mxu0 0.0
      %1906 = vmatpush2.msra.mxu0 0.0
      %1907 = vmatprep.subr.mxu0 0.0
      %1908 = vmatpush2.msra.mxu0 0.0
      %1909 = vmatprep.subr.mxu0 0.0
      %1910 = vmatpush2.msra.mxu0 0.0
      %1911 = vmatprep.subr.mxu0 0.0
      %1912 = vmatpush2.msra.mxu0 0.0
      %1913 = vmatprep.subr.mxu0 0.0
      %1914 = vmatpush2.msra.mxu0 0.0
      %1915 = vmatprep.subr.mxu0 0.0
      %1916 = vmatpush2.msra.mxu0 0.0
      %1917 = vmatprep.subr.mxu0 0.0
      %1918 = vmatpush2.msra.mxu0 0.0
      %1919 = vmatprep.subr.mxu0 0.0
      %1920 = vmatpush2.msra.mxu0 0.0
      %1921 = vmatprep.subr.mxu0 0.0
      %1922 = vmatpush2.msra.mxu0 0.0
      %1923 = vmatprep.subr.mxu0 0.0
      %1924 = vmatpush2.msra.mxu0 0.0
      %1925 = vmatprep.subr.mxu0 0.0
      %1926 = vmatpush2.msra.mxu0 0.0
      %1927 = vmatprep.mubr.f32.mxu0 0.0
      %1928 = vmatmul.mubr.f32.gmra.mxu0 %v1501
      %v1929 = vpop.f32.mrf.mxu0
      %v1930 = vadd.f32 %v1492, %v1929
      %v1931 = vpop.f32.mrf.mxu0
      %v1932 = vadd.f32 %v1492, %v1931
      %1933 = vmatprep.mubr.f32.mxu0 0.0
      %1934 = vmatmul.mubr.f32.gmra.mxu0 %v1504
      %v1935 = vpop.f32.mrf.mxu0
      %v1936 = vadd.f32 %v1497, %v1935
      %v1937 = vpop.f32.mrf.mxu0
      %v1938 = vadd.f32 %v1497, %v1937
      %1939 = vdwg.mxu0
      %1940 = vmatprep.subr.mxu0 0.0
      %1941 = vmatpush1.msra.mxu0 0.0
      %1942 = vmatprep.subr.mxu0 0.0
      %1943 = vmatpush1.msra.mxu0 0.0
      %1944 = vmatprep.subr.mxu0 0.0
      %1945 = vmatpush1.msra.mxu0 0.0
      %1946 = vmatprep.subr.mxu0 0.0
      %1947 = vmatpush1.msra.mxu0 0.0
      %1948 = vmatprep.subr.mxu0 0.0
      %1949 = vmatpush1.msra.mxu0 0.0
      %1950 = vmatprep.subr.mxu0 0.0
      %1951 = vmatpush1.msra.mxu0 0.0
      %1952 = vmatprep.subr.mxu0 0.0
      %1953 = vmatpush1.msra.mxu0 0.0
      %1954 = vmatprep.subr.mxu0 0.0
      %1955 = vmatpush1.msra.mxu0 0.0
      %1956 = vmatprep.subr.mxu0 0.0
      %1957 = vmatpush1.msra.mxu0 0.0
      %1958 = vmatprep.subr.mxu0 0.0
      %1959 = vmatpush1.msra.mxu0 0.0
      %1960 = vmatprep.subr.mxu0 0.0
      %1961 = vmatpush1.msra.mxu0 0.0
      %1962 = vmatprep.subr.mxu0 0.0
      %1963 = vmatpush1.msra.mxu0 0.0
      %1964 = vmatprep.subr.mxu0 %v1541
      %1965 = vmatpush1.msra.mxu0 %v1538
      %1966 = vmatprep.subr.mxu0 %v1413
      %1967 = vmatpush1.msra.mxu0 %v1412
      %1968 = vmatprep.subr.mxu0 %v1277
      %1969 = vmatpush1.msra.mxu0 %v1276
      %1970 = vmatprep.subr.mxu0 %v1141
      %1971 = vmatpush1.msra.mxu0 %v1140
      %1972 = vmatprep.subr.mxu0 0.0
      %1973 = vmatpush2.msra.mxu0 0.0
      %1974 = vmatprep.subr.mxu0 0.0
      %1975 = vmatpush2.msra.mxu0 0.0
      %1976 = vmatprep.subr.mxu0 0.0
      %1977 = vmatpush2.msra.mxu0 0.0
      %1978 = vmatprep.subr.mxu0 0.0
      %1979 = vmatpush2.msra.mxu0 0.0
      %1980 = vmatprep.subr.mxu0 0.0
      %1981 = vmatpush2.msra.mxu0 0.0
      %1982 = vmatprep.subr.mxu0 0.0
      %1983 = vmatpush2.msra.mxu0 0.0
      %1984 = vmatprep.subr.mxu0 0.0
      %1985 = vmatpush2.msra.mxu0 0.0
      %1986 = vmatprep.subr.mxu0 0.0
      %1987 = vmatpush2.msra.mxu0 0.0
      %1988 = vmatprep.subr.mxu0 0.0
      %1989 = vmatpush2.msra.mxu0 0.0
      %1990 = vmatprep.subr.mxu0 0.0
      %1991 = vmatpush2.msra.mxu0 0.0
      %1992 = vmatprep.subr.mxu0 0.0
      %1993 = vmatpush2.msra.mxu0 0.0
      %1994 = vmatprep.subr.mxu0 0.0
      %1995 = vmatpush2.msra.mxu0 0.0
      %1996 = vmatprep.subr.mxu0 0.0
      %1997 = vmatpush2.msra.mxu0 0.0
      %1998 = vmatprep.subr.mxu0 0.0
      %1999 = vmatpush2.msra.mxu0 0.0
      %2000 = vmatprep.subr.mxu0 0.0
      %2001 = vmatpush2.msra.mxu0 0.0
      %2002 = vmatprep.subr.mxu0 0.0
      %2003 = vmatpush2.msra.mxu0 0.0
      %2004 = vmatprep.mubr.f32.mxu0 0.0
      %2005 = vmatmul.mubr.f32.gmra.mxu0 %v1501
      %v2006 = vpop.f32.mrf.mxu0
      %v2007 = vadd.f32 %v1492, %v2006
      %v2008 = vpop.f32.mrf.mxu0
      %v2009 = vadd.f32 %v1492, %v2008
      %2010 = vmatprep.mubr.f32.mxu0 0.0
      %2011 = vmatmul.mubr.f32.gmra.mxu0 %v1504
      %v2012 = vpop.f32.mrf.mxu0
      %v2013 = vadd.f32 %v1497, %v2012
      %v2014 = vpop.f32.mrf.mxu0
      %v2015 = vadd.f32 %v1497, %v2014
      %2016 = vdwg.mxu0
      %2017 = vmatprep.subr.mxu0 0.0
      %2018 = vmatpush1.msra.mxu0 0.0
      %2019 = vmatprep.subr.mxu0 0.0
      %2020 = vmatpush1.msra.mxu0 0.0
      %2021 = vmatprep.subr.mxu0 0.0
      %2022 = vmatpush1.msra.mxu0 0.0
      %2023 = vmatprep.subr.mxu0 0.0
      %2024 = vmatpush1.msra.mxu0 0.0
      %2025 = vmatprep.subr.mxu0 0.0
      %2026 = vmatpush1.msra.mxu0 0.0
      %2027 = vmatprep.subr.mxu0 0.0
      %2028 = vmatpush1.msra.mxu0 0.0
      %2029 = vmatprep.subr.mxu0 0.0
      %2030 = vmatpush1.msra.mxu0 0.0
      %2031 = vmatprep.subr.mxu0 0.0
      %2032 = vmatpush1.msra.mxu0 0.0
      %2033 = vmatprep.subr.mxu0 0.0
      %2034 = vmatpush1.msra.mxu0 0.0
      %2035 = vmatprep.subr.mxu0 0.0
      %2036 = vmatpush1.msra.mxu0 0.0
      %2037 = vmatprep.subr.mxu0 0.0
      %2038 = vmatpush1.msra.mxu0 0.0
      %2039 = vmatprep.subr.mxu0 0.0
      %2040 = vmatpush1.msra.mxu0 0.0
      %2041 = vmatprep.subr.mxu0 %v1547
      %2042 = vmatpush1.msra.mxu0 %v1544
      %2043 = vmatprep.subr.mxu0 %v1415
      %2044 = vmatpush1.msra.mxu0 %v1414
      %2045 = vmatprep.subr.mxu0 %v1279
      %2046 = vmatpush1.msra.mxu0 %v1278
      %2047 = vmatprep.subr.mxu0 %v1143
      %2048 = vmatpush1.msra.mxu0 %v1142
      %2049 = vmatprep.subr.mxu0 0.0
      %2050 = vmatpush2.msra.mxu0 0.0
      %2051 = vmatprep.subr.mxu0 0.0
      %2052 = vmatpush2.msra.mxu0 0.0
      %2053 = vmatprep.subr.mxu0 0.0
      %2054 = vmatpush2.msra.mxu0 0.0
      %2055 = vmatprep.subr.mxu0 0.0
      %2056 = vmatpush2.msra.mxu0 0.0
      %2057 = vmatprep.subr.mxu0 0.0
      %2058 = vmatpush2.msra.mxu0 0.0
      %2059 = vmatprep.subr.mxu0 0.0
      %2060 = vmatpush2.msra.mxu0 0.0
      %2061 = vmatprep.subr.mxu0 0.0
      %2062 = vmatpush2.msra.mxu0 0.0
      %2063 = vmatprep.subr.mxu0 0.0
      %2064 = vmatpush2.msra.mxu0 0.0
      %2065 = vmatprep.subr.mxu0 0.0
      %2066 = vmatpush2.msra.mxu0 0.0
      %2067 = vmatprep.subr.mxu0 0.0
      %2068 = vmatpush2.msra.mxu0 0.0
      %2069 = vmatprep.subr.mxu0 0.0
      %2070 = vmatpush2.msra.mxu0 0.0
      %2071 = vmatprep.subr.mxu0 0.0
      %2072 = vmatpush2.msra.mxu0 0.0
      %2073 = vmatprep.subr.mxu0 0.0
      %2074 = vmatpush2.msra.mxu0 0.0
      %2075 = vmatprep.subr.mxu0 0.0
      %2076 = vmatpush2.msra.mxu0 0.0
      %2077 = vmatprep.subr.mxu0 0.0
      %2078 = vmatpush2.msra.mxu0 0.0
      %2079 = vmatprep.subr.mxu0 0.0
      %2080 = vmatpush2.msra.mxu0 0.0
      %2081 = vmatprep.mubr.f32.mxu0 0.0
      %2082 = vmatmul.mubr.f32.gmra.mxu0 %v1501
      %v2083 = vpop.f32.mrf.mxu0
      %v2084 = vadd.f32 %v1492, %v2083
      %v2085 = vpop.f32.mrf.mxu0
      %v2086 = vadd.f32 %v1492, %v2085
      %2087 = vmatprep.mubr.f32.mxu0 0.0
      %2088 = vmatmul.mubr.f32.gmra.mxu0 %v1504
      %v2089 = vpop.f32.mrf.mxu0
      %v2090 = vadd.f32 %v1497, %v2089
      %v2091 = vpop.f32.mrf.mxu0
      %v2092 = vadd.f32 %v1497, %v2091
      %2093 = vdwg.mxu0
      %2094 = vmatprep.subr.mxu0 0.0
      %2095 = vmatpush1.msra.mxu0 0.0
      %2096 = vmatprep.subr.mxu0 0.0
      %2097 = vmatpush1.msra.mxu0 0.0
      %2098 = vmatprep.subr.mxu0 0.0
      %2099 = vmatpush1.msra.mxu0 0.0
      %2100 = vmatprep.subr.mxu0 0.0
      %2101 = vmatpush1.msra.mxu0 0.0
      %2102 = vmatprep.subr.mxu0 0.0
      %2103 = vmatpush1.msra.mxu0 0.0
      %2104 = vmatprep.subr.mxu0 0.0
      %2105 = vmatpush1.msra.mxu0 0.0
      %2106 = vmatprep.subr.mxu0 0.0
      %2107 = vmatpush1.msra.mxu0 0.0
      %2108 = vmatprep.subr.mxu0 0.0
      %2109 = vmatpush1.msra.mxu0 0.0
      %2110 = vmatprep.subr.mxu0 0.0
      %2111 = vmatpush1.msra.mxu0 0.0
      %2112 = vmatprep.subr.mxu0 0.0
      %2113 = vmatpush1.msra.mxu0 0.0
      %2114 = vmatprep.subr.mxu0 0.0
      %2115 = vmatpush1.msra.mxu0 0.0
      %2116 = vmatprep.subr.mxu0 0.0
      %2117 = vmatpush1.msra.mxu0 0.0
      %2118 = vmatprep.subr.mxu0 %v1553
      %2119 = vmatpush1.msra.mxu0 %v1550
      %2120 = vmatprep.subr.mxu0 %v1417
      %2121 = vmatpush1.msra.mxu0 %v1416
      %2122 = vmatprep.subr.mxu0 %v1281
      %2123 = vmatpush1.msra.mxu0 %v1280
      %2124 = vmatprep.subr.mxu0 %v1145
      %2125 = vmatpush1.msra.mxu0 %v1144
      %2126 = vmatprep.subr.mxu0 0.0
      %2127 = vmatpush2.msra.mxu0 0.0
      %2128 = vmatprep.subr.mxu0 0.0
      %2129 = vmatpush2.msra.mxu0 0.0
      %2130 = vmatprep.subr.mxu0 0.0
      %2131 = vmatpush2.msra.mxu0 0.0
      %2132 = vmatprep.subr.mxu0 0.0
      %2133 = vmatpush2.msra.mxu0 0.0
      %2134 = vmatprep.subr.mxu0 0.0
      %2135 = vmatpush2.msra.mxu0 0.0
      %2136 = vmatprep.subr.mxu0 0.0
      %2137 = vmatpush2.msra.mxu0 0.0
      %2138 = vmatprep.subr.mxu0 0.0
      %2139 = vmatpush2.msra.mxu0 0.0
      %2140 = vmatprep.subr.mxu0 0.0
      %2141 = vmatpush2.msra.mxu0 0.0
      %2142 = vmatprep.subr.mxu0 0.0
      %2143 = vmatpush2.msra.mxu0 0.0
      %2144 = vmatprep.subr.mxu0 0.0
      %2145 = vmatpush2.msra.mxu0 0.0
      %2146 = vmatprep.subr.mxu0 0.0
      %2147 = vmatpush2.msra.mxu0 0.0
      %2148 = vmatprep.subr.mxu0 0.0
      %2149 = vmatpush2.msra.mxu0 0.0
      %2150 = vmatprep.subr.mxu0 0.0
      %2151 = vmatpush2.msra.mxu0 0.0
      %2152 = vmatprep.subr.mxu0 0.0
      %2153 = vmatpush2.msra.mxu0 0.0
      %2154 = vmatprep.subr.mxu0 0.0
      %2155 = vmatpush2.msra.mxu0 0.0
      %2156 = vmatprep.subr.mxu0 0.0
      %2157 = vmatpush2.msra.mxu0 0.0
      %2158 = vmatprep.mubr.f32.mxu0 0.0
      %2159 = vmatmul.mubr.f32.gmra.mxu0 %v1501
      %v2160 = vpop.f32.mrf.mxu0
      %v2161 = vadd.f32 %v1492, %v2160
      %v2162 = vpop.f32.mrf.mxu0
      %v2163 = vadd.f32 %v1492, %v2162
      %2164 = vmatprep.mubr.f32.mxu0 0.0
      %2165 = vmatmul.mubr.f32.gmra.mxu0 %v1504
      %v2166 = vpop.f32.mrf.mxu0
      %v2167 = vadd.f32 %v1497, %v2166
      %v2168 = vpop.f32.mrf.mxu0
      %v2169 = vadd.f32 %v1497, %v2168
      %2170 = vdwg.mxu0
      %v2171 = vmax.f32 %v1622, 0.0
      %v2172 = vmax.f32 %v1624, 0.0
      %v2173 = vmax.f32 %v1699, 0.0
      %v2174 = vmax.f32 %v1701, 0.0
      %v2175 = vmax.f32 %v1776, 0.0
      %v2176 = vmax.f32 %v1778, 0.0
      %v2177 = vmax.f32 %v1853, 0.0
      %v2178 = vmax.f32 %v1855, 0.0
      %v2179 = vmax.f32 %v1930, 0.0
      %v2180 = vmax.f32 %v1932, 0.0
      %v2181 = vmax.f32 %v2007, 0.0
      %v2182 = vmax.f32 %v2009, 0.0
      %v2183 = vmax.f32 %v2084, 0.0
      %v2184 = vmax.f32 %v2086, 0.0
      %v2185 = vmax.f32 %v2161, 0.0
      %v2186 = vmax.f32 %v2163, 0.0
      %v2187 = vmax.f32 %v1628, 0.0
      %v2188 = vmax.f32 %v1630, 0.0
      %v2189 = vmax.f32 %v1705, 0.0
      %v2190 = vmax.f32 %v1707, 0.0
      %v2191 = vmax.f32 %v1782, 0.0
      %v2192 = vmax.f32 %v1784, 0.0
      %v2193 = vmax.f32 %v1859, 0.0
      %v2194 = vmax.f32 %v1861, 0.0
      %v2195 = vmax.f32 %v1936, 0.0
      %v2196 = vmax.f32 %v1938, 0.0
      %v2197 = vmax.f32 %v2013, 0.0
      %v2198 = vmax.f32 %v2015, 0.0
      %v2199 = vmax.f32 %v2090, 0.0
      %v2200 = vmax.f32 %v2092, 0.0
      %v2201 = vmax.f32 %v2167, 0.0
      %v2202 = vmax.f32 %v2169, 0.0
      %v2235 = vcombine.low %v2171, %v2172
      %v2236 = vcombine.high %v2171, %v2172
      %v2237 = vcombine.low %v2173, %v2174
      %v2238 = vcombine.high %v2173, %v2174
      %v2239 = vcombine.low %v2175, %v2176
      %v2240 = vcombine.high %v2175, %v2176
      %v2241 = vcombine.low %v2177, %v2178
      %v2242 = vcombine.high %v2177, %v2178
      %v2244 = vunpack.c.l.s4 1966171168
      %v2245 = vunpack.c.0.s8 %v2244
      %v2246 = vlaneseq
      %v2247 = vshrl.u32 %v2246, 7
      %v2248 = vsub.s32 %v2245, %v2247
      %v2249 = vrot.slane %v2235, %v2248
      %v2251 = vunpack.c.l.s4 1966171168
      %v2252 = vunpack.c.0.s8 %v2251
      %v2253 = vlaneseq
      %v2254 = vshrl.u32 %v2253, 7
      %v2255 = vsub.s32 %v2252, %v2254
      %v2256 = vrot.slane %v2236, %v2255
      %v2258 = vunpack.c.l.s4 1966171168
      %v2259 = vunpack.c.0.s8 %v2258
      %v2260 = vlaneseq
      %v2261 = vshrl.u32 %v2260, 7
      %v2262 = vsub.s32 %v2259, %v2261
      %v2263 = vrot.slane %v2237, %v2262
      %v2265 = vunpack.c.l.s4 1966171168
      %v2266 = vunpack.c.0.s8 %v2265
      %v2267 = vlaneseq
      %v2268 = vshrl.u32 %v2267, 7
      %v2269 = vsub.s32 %v2266, %v2268
      %v2270 = vrot.slane %v2238, %v2269
      %v2272 = vunpack.c.l.s4 1966171168
      %v2273 = vunpack.c.0.s8 %v2272
      %v2274 = vlaneseq
      %v2275 = vshrl.u32 %v2274, 7
      %v2276 = vsub.s32 %v2273, %v2275
      %v2277 = vrot.slane %v2239, %v2276
      %v2279 = vunpack.c.l.s4 1966171168
      %v2280 = vunpack.c.0.s8 %v2279
      %v2281 = vlaneseq
      %v2282 = vshrl.u32 %v2281, 7
      %v2283 = vsub.s32 %v2280, %v2282
      %v2284 = vrot.slane %v2240, %v2283
      %v2286 = vunpack.c.l.s4 1966171168
      %v2287 = vunpack.c.0.s8 %v2286
      %v2288 = vlaneseq
      %v2289 = vshrl.u32 %v2288, 7
      %v2290 = vsub.s32 %v2287, %v2289
      %v2291 = vrot.slane %v2241, %v2290
      %v2293 = vunpack.c.l.s4 1966171168
      %v2294 = vunpack.c.0.s8 %v2293
      %v2295 = vlaneseq
      %v2296 = vshrl.u32 %v2295, 7
      %v2297 = vsub.s32 %v2294, %v2296
      %v2298 = vrot.slane %v2242, %v2297
      %v2299 = vcombine.low %v2249, %v2263
      %v2300 = vcombine.high %v2249, %v2263
      %v2301 = vcombine.low %v2256, %v2270
      %v2302 = vcombine.high %v2256, %v2270
      %v2303 = vcombine.low %v2277, %v2291
      %v2304 = vcombine.high %v2277, %v2291
      %v2305 = vcombine.low %v2284, %v2298
      %v2306 = vcombine.high %v2284, %v2298
      %v2308 = vunpack.c.l.s4 1966171168
      %v2309 = vunpack.c.0.s8 %v2308
      %v2310 = vlaneseq
      %v2311 = vshrl.u32 %v2310, 7
      %v2312 = vsub.s32 %v2309, %v2311
      %v2313 = vrot.slane %v2299, %v2312
      %v2315 = vunpack.c.l.s4 1966171168
      %v2316 = vunpack.c.0.s8 %v2315
      %v2317 = vlaneseq
      %v2318 = vshrl.u32 %v2317, 7
      %v2319 = vsub.s32 %v2316, %v2318
      %v2320 = vrot.slane %v2301, %v2319
      %v2322 = vunpack.c.l.s4 1966171168
      %v2323 = vunpack.c.0.s8 %v2322
      %v2324 = vlaneseq
      %v2325 = vshrl.u32 %v2324, 7
      %v2326 = vsub.s32 %v2323, %v2325
      %v2327 = vrot.slane %v2300, %v2326
      %v2329 = vunpack.c.l.s4 1966171168
      %v2330 = vunpack.c.0.s8 %v2329
      %v2331 = vlaneseq
      %v2332 = vshrl.u32 %v2331, 7
      %v2333 = vsub.s32 %v2330, %v2332
      %v2334 = vrot.slane %v2302, %v2333
      %v2336 = vunpack.c.l.s4 1966171168
      %v2337 = vunpack.c.0.s8 %v2336
      %v2338 = vlaneseq
      %v2339 = vshrl.u32 %v2338, 7
      %v2340 = vsub.s32 %v2337, %v2339
      %v2341 = vrot.slane %v2303, %v2340
      %v2343 = vunpack.c.l.s4 1966171168
      %v2344 = vunpack.c.0.s8 %v2343
      %v2345 = vlaneseq
      %v2346 = vshrl.u32 %v2345, 7
      %v2347 = vsub.s32 %v2344, %v2346
      %v2348 = vrot.slane %v2305, %v2347
      %v2350 = vunpack.c.l.s4 1966171168
      %v2351 = vunpack.c.0.s8 %v2350
      %v2352 = vlaneseq
      %v2353 = vshrl.u32 %v2352, 7
      %v2354 = vsub.s32 %v2351, %v2353
      %v2355 = vrot.slane %v2304, %v2354
      %v2357 = vunpack.c.l.s4 1966171168
      %v2358 = vunpack.c.0.s8 %v2357
      %v2359 = vlaneseq
      %v2360 = vshrl.u32 %v2359, 7
      %v2361 = vsub.s32 %v2358, %v2360
      %v2362 = vrot.slane %v2306, %v2361
      %v2363 = vcombine.low %v2313, %v2341
      %v2364 = vcombine.high %v2313, %v2341
      %v2365 = vcombine.low %v2320, %v2348
      %v2366 = vcombine.high %v2320, %v2348
      %v2367 = vcombine.low %v2327, %v2355
      %v2368 = vcombine.high %v2327, %v2355
      %v2369 = vcombine.low %v2334, %v2362
      %v2370 = vcombine.high %v2334, %v2362
      %v2371 = vcombine.low %v2179, %v2180
      %v2372 = vcombine.high %v2179, %v2180
      %v2373 = vcombine.low %v2181, %v2182
      %v2374 = vcombine.high %v2181, %v2182
      %v2375 = vcombine.low %v2183, %v2184
      %v2376 = vcombine.high %v2183, %v2184
      %v2377 = vcombine.low %v2185, %v2186
      %v2378 = vcombine.high %v2185, %v2186
      %v2380 = vunpack.c.l.s4 1966171168
      %v2381 = vunpack.c.0.s8 %v2380
      %v2382 = vlaneseq
      %v2383 = vshrl.u32 %v2382, 7
      %v2384 = vsub.s32 %v2381, %v2383
      %v2385 = vrot.slane %v2371, %v2384
      %v2387 = vunpack.c.l.s4 1966171168
      %v2388 = vunpack.c.0.s8 %v2387
      %v2389 = vlaneseq
      %v2390 = vshrl.u32 %v2389, 7
      %v2391 = vsub.s32 %v2388, %v2390
      %v2392 = vrot.slane %v2372, %v2391
      %v2394 = vunpack.c.l.s4 1966171168
      %v2395 = vunpack.c.0.s8 %v2394
      %v2396 = vlaneseq
      %v2397 = vshrl.u32 %v2396, 7
      %v2398 = vsub.s32 %v2395, %v2397
      %v2399 = vrot.slane %v2373, %v2398
      %v2401 = vunpack.c.l.s4 1966171168
      %v2402 = vunpack.c.0.s8 %v2401
      %v2403 = vlaneseq
      %v2404 = vshrl.u32 %v2403, 7
      %v2405 = vsub.s32 %v2402, %v2404
      %v2406 = vrot.slane %v2374, %v2405
      %v2408 = vunpack.c.l.s4 1966171168
      %v2409 = vunpack.c.0.s8 %v2408
      %v2410 = vlaneseq
      %v2411 = vshrl.u32 %v2410, 7
      %v2412 = vsub.s32 %v2409, %v2411
      %v2413 = vrot.slane %v2375, %v2412
      %v2415 = vunpack.c.l.s4 1966171168
      %v2416 = vunpack.c.0.s8 %v2415
      %v2417 = vlaneseq
      %v2418 = vshrl.u32 %v2417, 7
      %v2419 = vsub.s32 %v2416, %v2418
      %v2420 = vrot.slane %v2376, %v2419
      %v2422 = vunpack.c.l.s4 1966171168
      %v2423 = vunpack.c.0.s8 %v2422
      %v2424 = vlaneseq
      %v2425 = vshrl.u32 %v2424, 7
      %v2426 = vsub.s32 %v2423, %v2425
      %v2427 = vrot.slane %v2377, %v2426
      %v2429 = vunpack.c.l.s4 1966171168
      %v2430 = vunpack.c.0.s8 %v2429
      %v2431 = vlaneseq
      %v2432 = vshrl.u32 %v2431, 7
      %v2433 = vsub.s32 %v2430, %v2432
      %v2434 = vrot.slane %v2378, %v2433
      %v2435 = vcombine.low %v2385, %v2399
      %v2436 = vcombine.high %v2385, %v2399
      %v2437 = vcombine.low %v2392, %v2406
      %v2438 = vcombine.high %v2392, %v2406
      %v2439 = vcombine.low %v2413, %v2427
      %v2440 = vcombine.high %v2413, %v2427
      %v2441 = vcombine.low %v2420, %v2434
      %v2442 = vcombine.high %v2420, %v2434
      %v2444 = vunpack.c.l.s4 1966171168
      %v2445 = vunpack.c.0.s8 %v2444
      %v2446 = vlaneseq
      %v2447 = vshrl.u32 %v2446, 7
      %v2448 = vsub.s32 %v2445, %v2447
      %v2449 = vrot.slane %v2435, %v2448
      %v2451 = vunpack.c.l.s4 1966171168
      %v2452 = vunpack.c.0.s8 %v2451
      %v2453 = vlaneseq
      %v2454 = vshrl.u32 %v2453, 7
      %v2455 = vsub.s32 %v2452, %v2454
      %v2456 = vrot.slane %v2437, %v2455
      %v2458 = vunpack.c.l.s4 1966171168
      %v2459 = vunpack.c.0.s8 %v2458
      %v2460 = vlaneseq
      %v2461 = vshrl.u32 %v2460, 7
      %v2462 = vsub.s32 %v2459, %v2461
      %v2463 = vrot.slane %v2436, %v2462
      %v2465 = vunpack.c.l.s4 1966171168
      %v2466 = vunpack.c.0.s8 %v2465
      %v2467 = vlaneseq
      %v2468 = vshrl.u32 %v2467, 7
      %v2469 = vsub.s32 %v2466, %v2468
      %v2470 = vrot.slane %v2438, %v2469
      %v2472 = vunpack.c.l.s4 1966171168
      %v2473 = vunpack.c.0.s8 %v2472
      %v2474 = vlaneseq
      %v2475 = vshrl.u32 %v2474, 7
      %v2476 = vsub.s32 %v2473, %v2475
      %v2477 = vrot.slane %v2439, %v2476
      %v2479 = vunpack.c.l.s4 1966171168
      %v2480 = vunpack.c.0.s8 %v2479
      %v2481 = vlaneseq
      %v2482 = vshrl.u32 %v2481, 7
      %v2483 = vsub.s32 %v2480, %v2482
      %v2484 = vrot.slane %v2441, %v2483
      %v2486 = vunpack.c.l.s4 1966171168
      %v2487 = vunpack.c.0.s8 %v2486
      %v2488 = vlaneseq
      %v2489 = vshrl.u32 %v2488, 7
      %v2490 = vsub.s32 %v2487, %v2489
      %v2491 = vrot.slane %v2440, %v2490
      %v2493 = vunpack.c.l.s4 1966171168
      %v2494 = vunpack.c.0.s8 %v2493
      %v2495 = vlaneseq
      %v2496 = vshrl.u32 %v2495, 7
      %v2497 = vsub.s32 %v2494, %v2496
      %v2498 = vrot.slane %v2442, %v2497
      %v2499 = vcombine.low %v2449, %v2477
      %v2500 = vcombine.high %v2449, %v2477
      %v2501 = vcombine.low %v2456, %v2484
      %v2502 = vcombine.high %v2456, %v2484
      %v2503 = vcombine.low %v2463, %v2491
      %v2504 = vcombine.high %v2463, %v2491
      %v2505 = vcombine.low %v2470, %v2498
      %v2506 = vcombine.high %v2470, %v2498
      %v2507 = vcombine.low %v2187, %v2188
      %v2508 = vcombine.high %v2187, %v2188
      %v2509 = vcombine.low %v2189, %v2190
      %v2510 = vcombine.high %v2189, %v2190
      %v2511 = vcombine.low %v2191, %v2192
      %v2512 = vcombine.high %v2191, %v2192
      %v2513 = vcombine.low %v2193, %v2194
      %v2514 = vcombine.high %v2193, %v2194
      %v2516 = vunpack.c.l.s4 1966171168
      %v2517 = vunpack.c.0.s8 %v2516
      %v2518 = vlaneseq
      %v2519 = vshrl.u32 %v2518, 7
      %v2520 = vsub.s32 %v2517, %v2519
      %v2521 = vrot.slane %v2507, %v2520
      %v2523 = vunpack.c.l.s4 1966171168
      %v2524 = vunpack.c.0.s8 %v2523
      %v2525 = vlaneseq
      %v2526 = vshrl.u32 %v2525, 7
      %v2527 = vsub.s32 %v2524, %v2526
      %v2528 = vrot.slane %v2508, %v2527
      %v2530 = vunpack.c.l.s4 1966171168
      %v2531 = vunpack.c.0.s8 %v2530
      %v2532 = vlaneseq
      %v2533 = vshrl.u32 %v2532, 7
      %v2534 = vsub.s32 %v2531, %v2533
      %v2535 = vrot.slane %v2509, %v2534
      %v2537 = vunpack.c.l.s4 1966171168
      %v2538 = vunpack.c.0.s8 %v2537
      %v2539 = vlaneseq
      %v2540 = vshrl.u32 %v2539, 7
      %v2541 = vsub.s32 %v2538, %v2540
      %v2542 = vrot.slane %v2510, %v2541
      %v2544 = vunpack.c.l.s4 1966171168
      %v2545 = vunpack.c.0.s8 %v2544
      %v2546 = vlaneseq
      %v2547 = vshrl.u32 %v2546, 7
      %v2548 = vsub.s32 %v2545, %v2547
      %v2549 = vrot.slane %v2511, %v2548
      %v2551 = vunpack.c.l.s4 1966171168
      %v2552 = vunpack.c.0.s8 %v2551
      %v2553 = vlaneseq
      %v2554 = vshrl.u32 %v2553, 7
      %v2555 = vsub.s32 %v2552, %v2554
      %v2556 = vrot.slane %v2512, %v2555
      %v2558 = vunpack.c.l.s4 1966171168
      %v2559 = vunpack.c.0.s8 %v2558
      %v2560 = vlaneseq
      %v2561 = vshrl.u32 %v2560, 7
      %v2562 = vsub.s32 %v2559, %v2561
      %v2563 = vrot.slane %v2513, %v2562
      %v2565 = vunpack.c.l.s4 1966171168
      %v2566 = vunpack.c.0.s8 %v2565
      %v2567 = vlaneseq
      %v2568 = vshrl.u32 %v2567, 7
      %v2569 = vsub.s32 %v2566, %v2568
      %v2570 = vrot.slane %v2514, %v2569
      %v2571 = vcombine.low %v2521, %v2535
      %v2572 = vcombine.high %v2521, %v2535
      %v2573 = vcombine.low %v2528, %v2542
      %v2574 = vcombine.high %v2528, %v2542
      %v2575 = vcombine.low %v2549, %v2563
      %v2576 = vcombine.high %v2549, %v2563
      %v2577 = vcombine.low %v2556, %v2570
      %v2578 = vcombine.high %v2556, %v2570
      %v2580 = vunpack.c.l.s4 1966171168
      %v2581 = vunpack.c.0.s8 %v2580
      %v2582 = vlaneseq
      %v2583 = vshrl.u32 %v2582, 7
      %v2584 = vsub.s32 %v2581, %v2583
      %v2585 = vrot.slane %v2571, %v2584
      %v2587 = vunpack.c.l.s4 1966171168
      %v2588 = vunpack.c.0.s8 %v2587
      %v2589 = vlaneseq
      %v2590 = vshrl.u32 %v2589, 7
      %v2591 = vsub.s32 %v2588, %v2590
      %v2592 = vrot.slane %v2573, %v2591
      %v2594 = vunpack.c.l.s4 1966171168
      %v2595 = vunpack.c.0.s8 %v2594
      %v2596 = vlaneseq
      %v2597 = vshrl.u32 %v2596, 7
      %v2598 = vsub.s32 %v2595, %v2597
      %v2599 = vrot.slane %v2572, %v2598
      %v2601 = vunpack.c.l.s4 1966171168
      %v2602 = vunpack.c.0.s8 %v2601
      %v2603 = vlaneseq
      %v2604 = vshrl.u32 %v2603, 7
      %v2605 = vsub.s32 %v2602, %v2604
      %v2606 = vrot.slane %v2574, %v2605
      %v2608 = vunpack.c.l.s4 1966171168
      %v2609 = vunpack.c.0.s8 %v2608
      %v2610 = vlaneseq
      %v2611 = vshrl.u32 %v2610, 7
      %v2612 = vsub.s32 %v2609, %v2611
      %v2613 = vrot.slane %v2575, %v2612
      %v2615 = vunpack.c.l.s4 1966171168
      %v2616 = vunpack.c.0.s8 %v2615
      %v2617 = vlaneseq
      %v2618 = vshrl.u32 %v2617, 7
      %v2619 = vsub.s32 %v2616, %v2618
      %v2620 = vrot.slane %v2577, %v2619
      %v2622 = vunpack.c.l.s4 1966171168
      %v2623 = vunpack.c.0.s8 %v2622
      %v2624 = vlaneseq
      %v2625 = vshrl.u32 %v2624, 7
      %v2626 = vsub.s32 %v2623, %v2625
      %v2627 = vrot.slane %v2576, %v2626
      %v2629 = vunpack.c.l.s4 1966171168
      %v2630 = vunpack.c.0.s8 %v2629
      %v2631 = vlaneseq
      %v2632 = vshrl.u32 %v2631, 7
      %v2633 = vsub.s32 %v2630, %v2632
      %v2634 = vrot.slane %v2578, %v2633
      %v2635 = vcombine.low %v2585, %v2613
      %v2636 = vcombine.high %v2585, %v2613
      %v2637 = vcombine.low %v2592, %v2620
      %v2638 = vcombine.high %v2592, %v2620
      %v2639 = vcombine.low %v2599, %v2627
      %v2640 = vcombine.high %v2599, %v2627
      %v2641 = vcombine.low %v2606, %v2634
      %v2642 = vcombine.high %v2606, %v2634
      %v2643 = vcombine.low %v2195, %v2196
      %v2644 = vcombine.high %v2195, %v2196
      %v2645 = vcombine.low %v2197, %v2198
      %v2646 = vcombine.high %v2197, %v2198
      %v2647 = vcombine.low %v2199, %v2200
      %v2648 = vcombine.high %v2199, %v2200
      %v2649 = vcombine.low %v2201, %v2202
      %v2650 = vcombine.high %v2201, %v2202
      %v2652 = vunpack.c.l.s4 1966171168
      %v2653 = vunpack.c.0.s8 %v2652
      %v2654 = vlaneseq
      %v2655 = vshrl.u32 %v2654, 7
      %v2656 = vsub.s32 %v2653, %v2655
      %v2657 = vrot.slane %v2643, %v2656
      %v2659 = vunpack.c.l.s4 1966171168
      %v2660 = vunpack.c.0.s8 %v2659
      %v2661 = vlaneseq
      %v2662 = vshrl.u32 %v2661, 7
      %v2663 = vsub.s32 %v2660, %v2662
      %v2664 = vrot.slane %v2644, %v2663
      %v2666 = vunpack.c.l.s4 1966171168
      %v2667 = vunpack.c.0.s8 %v2666
      %v2668 = vlaneseq
      %v2669 = vshrl.u32 %v2668, 7
      %v2670 = vsub.s32 %v2667, %v2669
      %v2671 = vrot.slane %v2645, %v2670
      %v2673 = vunpack.c.l.s4 1966171168
      %v2674 = vunpack.c.0.s8 %v2673
      %v2675 = vlaneseq
      %v2676 = vshrl.u32 %v2675, 7
      %v2677 = vsub.s32 %v2674, %v2676
      %v2678 = vrot.slane %v2646, %v2677
      %v2680 = vunpack.c.l.s4 1966171168
      %v2681 = vunpack.c.0.s8 %v2680
      %v2682 = vlaneseq
      %v2683 = vshrl.u32 %v2682, 7
      %v2684 = vsub.s32 %v2681, %v2683
      %v2685 = vrot.slane %v2647, %v2684
      %v2687 = vunpack.c.l.s4 1966171168
      %v2688 = vunpack.c.0.s8 %v2687
      %v2689 = vlaneseq
      %v2690 = vshrl.u32 %v2689, 7
      %v2691 = vsub.s32 %v2688, %v2690
      %v2692 = vrot.slane %v2648, %v2691
      %v2694 = vunpack.c.l.s4 1966171168
      %v2695 = vunpack.c.0.s8 %v2694
      %v2696 = vlaneseq
      %v2697 = vshrl.u32 %v2696, 7
      %v2698 = vsub.s32 %v2695, %v2697
      %v2699 = vrot.slane %v2649, %v2698
      %v2701 = vunpack.c.l.s4 1966171168
      %v2702 = vunpack.c.0.s8 %v2701
      %v2703 = vlaneseq
      %v2704 = vshrl.u32 %v2703, 7
      %v2705 = vsub.s32 %v2702, %v2704
      %v2706 = vrot.slane %v2650, %v2705
      %v2707 = vcombine.low %v2657, %v2671
      %v2708 = vcombine.high %v2657, %v2671
      %v2709 = vcombine.low %v2664, %v2678
      %v2710 = vcombine.high %v2664, %v2678
      %v2711 = vcombine.low %v2685, %v2699
      %v2712 = vcombine.high %v2685, %v2699
      %v2713 = vcombine.low %v2692, %v2706
      %v2714 = vcombine.high %v2692, %v2706
      %v2716 = vunpack.c.l.s4 1966171168
      %v2717 = vunpack.c.0.s8 %v2716
      %v2718 = vlaneseq
      %v2719 = vshrl.u32 %v2718, 7
      %v2720 = vsub.s32 %v2717, %v2719
      %v2721 = vrot.slane %v2707, %v2720
      %v2723 = vunpack.c.l.s4 1966171168
      %v2724 = vunpack.c.0.s8 %v2723
      %v2725 = vlaneseq
      %v2726 = vshrl.u32 %v2725, 7
      %v2727 = vsub.s32 %v2724, %v2726
      %v2728 = vrot.slane %v2709, %v2727
      %v2730 = vunpack.c.l.s4 1966171168
      %v2731 = vunpack.c.0.s8 %v2730
      %v2732 = vlaneseq
      %v2733 = vshrl.u32 %v2732, 7
      %v2734 = vsub.s32 %v2731, %v2733
      %v2735 = vrot.slane %v2708, %v2734
      %v2737 = vunpack.c.l.s4 1966171168
      %v2738 = vunpack.c.0.s8 %v2737
      %v2739 = vlaneseq
      %v2740 = vshrl.u32 %v2739, 7
      %v2741 = vsub.s32 %v2738, %v2740
      %v2742 = vrot.slane %v2710, %v2741
      %v2744 = vunpack.c.l.s4 1966171168
      %v2745 = vunpack.c.0.s8 %v2744
      %v2746 = vlaneseq
      %v2747 = vshrl.u32 %v2746, 7
      %v2748 = vsub.s32 %v2745, %v2747
      %v2749 = vrot.slane %v2711, %v2748
      %v2751 = vunpack.c.l.s4 1966171168
      %v2752 = vunpack.c.0.s8 %v2751
      %v2753 = vlaneseq
      %v2754 = vshrl.u32 %v2753, 7
      %v2755 = vsub.s32 %v2752, %v2754
      %v2756 = vrot.slane %v2713, %v2755
      %v2758 = vunpack.c.l.s4 1966171168
      %v2759 = vunpack.c.0.s8 %v2758
      %v2760 = vlaneseq
      %v2761 = vshrl.u32 %v2760, 7
      %v2762 = vsub.s32 %v2759, %v2761
      %v2763 = vrot.slane %v2712, %v2762
      %v2765 = vunpack.c.l.s4 1966171168
      %v2766 = vunpack.c.0.s8 %v2765
      %v2767 = vlaneseq
      %v2768 = vshrl.u32 %v2767, 7
      %v2769 = vsub.s32 %v2766, %v2768
      %v2770 = vrot.slane %v2714, %v2769
      %v2771 = vcombine.low %v2721, %v2749
      %v2772 = vcombine.high %v2721, %v2749
      %v2773 = vcombine.low %v2728, %v2756
      %v2774 = vcombine.high %v2728, %v2756
      %v2775 = vcombine.low %v2735, %v2763
      %v2776 = vcombine.high %v2735, %v2763
      %v2777 = vcombine.low %v2742, %v2770
      %v2778 = vcombine.high %v2742, %v2770
      %v2812 = vunpack.c.l.s4 1966171168
      %v2813 = vunpack.c.0.s8 %v2812
      %v2814 = vlaneseq
      %v2815 = vshrl.u32 %v2814, 7
      %v2816 = vsub.s32 %v2813, %v2815
      %v2817 = vrot.slane %v2363, %v2816
      %v2819 = vunpack.c.l.s4 1966171168
      %v2820 = vunpack.c.0.s8 %v2819
      %v2821 = vlaneseq
      %v2822 = vshrl.u32 %v2821, 7
      %v2823 = vsub.s32 %v2820, %v2822
      %v2824 = vrot.slane %v2499, %v2823
      %v2826 = vunpack.c.l.s4 1966171168
      %v2827 = vunpack.c.0.s8 %v2826
      %v2828 = vlaneseq
      %v2829 = vshrl.u32 %v2828, 7
      %v2830 = vsub.s32 %v2827, %v2829
      %v2831 = vrot.slane %v2367, %v2830
      %v2833 = vunpack.c.l.s4 1966171168
      %v2834 = vunpack.c.0.s8 %v2833
      %v2835 = vlaneseq
      %v2836 = vshrl.u32 %v2835, 7
      %v2837 = vsub.s32 %v2834, %v2836
      %v2838 = vrot.slane %v2503, %v2837
      %v2840 = vunpack.c.l.s4 1966171168
      %v2841 = vunpack.c.0.s8 %v2840
      %v2842 = vlaneseq
      %v2843 = vshrl.u32 %v2842, 7
      %v2844 = vsub.s32 %v2841, %v2843
      %v2845 = vrot.slane %v2364, %v2844
      %v2847 = vunpack.c.l.s4 1966171168
      %v2848 = vunpack.c.0.s8 %v2847
      %v2849 = vlaneseq
      %v2850 = vshrl.u32 %v2849, 7
      %v2851 = vsub.s32 %v2848, %v2850
      %v2852 = vrot.slane %v2500, %v2851
      %v2854 = vunpack.c.l.s4 1966171168
      %v2855 = vunpack.c.0.s8 %v2854
      %v2856 = vlaneseq
      %v2857 = vshrl.u32 %v2856, 7
      %v2858 = vsub.s32 %v2855, %v2857
      %v2859 = vrot.slane %v2368, %v2858
      %v2861 = vunpack.c.l.s4 1966171168
      %v2862 = vunpack.c.0.s8 %v2861
      %v2863 = vlaneseq
      %v2864 = vshrl.u32 %v2863, 7
      %v2865 = vsub.s32 %v2862, %v2864
      %v2866 = vrot.slane %v2504, %v2865
      %v2868 = vunpack.c.l.s4 1966171168
      %v2869 = vunpack.c.0.s8 %v2868
      %v2870 = vlaneseq
      %v2871 = vshrl.u32 %v2870, 7
      %v2872 = vsub.s32 %v2869, %v2871
      %v2873 = vrot.slane %v2365, %v2872
      %v2875 = vunpack.c.l.s4 1966171168
      %v2876 = vunpack.c.0.s8 %v2875
      %v2877 = vlaneseq
      %v2878 = vshrl.u32 %v2877, 7
      %v2879 = vsub.s32 %v2876, %v2878
      %v2880 = vrot.slane %v2501, %v2879
      %v2882 = vunpack.c.l.s4 1966171168
      %v2883 = vunpack.c.0.s8 %v2882
      %v2884 = vlaneseq
      %v2885 = vshrl.u32 %v2884, 7
      %v2886 = vsub.s32 %v2883, %v2885
      %v2887 = vrot.slane %v2369, %v2886
      %v2889 = vunpack.c.l.s4 1966171168
      %v2890 = vunpack.c.0.s8 %v2889
      %v2891 = vlaneseq
      %v2892 = vshrl.u32 %v2891, 7
      %v2893 = vsub.s32 %v2890, %v2892
      %v2894 = vrot.slane %v2505, %v2893
      %v2896 = vunpack.c.l.s4 1966171168
      %v2897 = vunpack.c.0.s8 %v2896
      %v2898 = vlaneseq
      %v2899 = vshrl.u32 %v2898, 7
      %v2900 = vsub.s32 %v2897, %v2899
      %v2901 = vrot.slane %v2366, %v2900
      %v2903 = vunpack.c.l.s4 1966171168
      %v2904 = vunpack.c.0.s8 %v2903
      %v2905 = vlaneseq
      %v2906 = vshrl.u32 %v2905, 7
      %v2907 = vsub.s32 %v2904, %v2906
      %v2908 = vrot.slane %v2502, %v2907
      %v2910 = vunpack.c.l.s4 1966171168
      %v2911 = vunpack.c.0.s8 %v2910
      %v2912 = vlaneseq
      %v2913 = vshrl.u32 %v2912, 7
      %v2914 = vsub.s32 %v2911, %v2913
      %v2915 = vrot.slane %v2370, %v2914
      %v2917 = vunpack.c.l.s4 1966171168
      %v2918 = vunpack.c.0.s8 %v2917
      %v2919 = vlaneseq
      %v2920 = vshrl.u32 %v2919, 7
      %v2921 = vsub.s32 %v2918, %v2920
      %v2922 = vrot.slane %v2506, %v2921
      %v2924 = vunpack.c.l.s4 1966171168
      %v2925 = vunpack.c.0.s8 %v2924
      %v2926 = vlaneseq
      %v2927 = vshrl.u32 %v2926, 7
      %v2928 = vsub.s32 %v2925, %v2927
      %v2929 = vrot.slane %v2635, %v2928
      %v2931 = vunpack.c.l.s4 1966171168
      %v2932 = vunpack.c.0.s8 %v2931
      %v2933 = vlaneseq
      %v2934 = vshrl.u32 %v2933, 7
      %v2935 = vsub.s32 %v2932, %v2934
      %v2936 = vrot.slane %v2771, %v2935
      %v2938 = vunpack.c.l.s4 1966171168
      %v2939 = vunpack.c.0.s8 %v2938
      %v2940 = vlaneseq
      %v2941 = vshrl.u32 %v2940, 7
      %v2942 = vsub.s32 %v2939, %v2941
      %v2943 = vrot.slane %v2639, %v2942
      %v2945 = vunpack.c.l.s4 1966171168
      %v2946 = vunpack.c.0.s8 %v2945
      %v2947 = vlaneseq
      %v2948 = vshrl.u32 %v2947, 7
      %v2949 = vsub.s32 %v2946, %v2948
      %v2950 = vrot.slane %v2775, %v2949
      %v2952 = vunpack.c.l.s4 1966171168
      %v2953 = vunpack.c.0.s8 %v2952
      %v2954 = vlaneseq
      %v2955 = vshrl.u32 %v2954, 7
      %v2956 = vsub.s32 %v2953, %v2955
      %v2957 = vrot.slane %v2636, %v2956
      %v2959 = vunpack.c.l.s4 1966171168
      %v2960 = vunpack.c.0.s8 %v2959
      %v2961 = vlaneseq
      %v2962 = vshrl.u32 %v2961, 7
      %v2963 = vsub.s32 %v2960, %v2962
      %v2964 = vrot.slane %v2772, %v2963
      %v2966 = vunpack.c.l.s4 1966171168
      %v2967 = vunpack.c.0.s8 %v2966
      %v2968 = vlaneseq
      %v2969 = vshrl.u32 %v2968, 7
      %v2970 = vsub.s32 %v2967, %v2969
      %v2971 = vrot.slane %v2640, %v2970
      %v2973 = vunpack.c.l.s4 1966171168
      %v2974 = vunpack.c.0.s8 %v2973
      %v2975 = vlaneseq
      %v2976 = vshrl.u32 %v2975, 7
      %v2977 = vsub.s32 %v2974, %v2976
      %v2978 = vrot.slane %v2776, %v2977
      %v2980 = vunpack.c.l.s4 1966171168
      %v2981 = vunpack.c.0.s8 %v2980
      %v2982 = vlaneseq
      %v2983 = vshrl.u32 %v2982, 7
      %v2984 = vsub.s32 %v2981, %v2983
      %v2985 = vrot.slane %v2637, %v2984
      %v2987 = vunpack.c.l.s4 1966171168
      %v2988 = vunpack.c.0.s8 %v2987
      %v2989 = vlaneseq
      %v2990 = vshrl.u32 %v2989, 7
      %v2991 = vsub.s32 %v2988, %v2990
      %v2992 = vrot.slane %v2773, %v2991
      %v2994 = vunpack.c.l.s4 1966171168
      %v2995 = vunpack.c.0.s8 %v2994
      %v2996 = vlaneseq
      %v2997 = vshrl.u32 %v2996, 7
      %v2998 = vsub.s32 %v2995, %v2997
      %v2999 = vrot.slane %v2641, %v2998
      %v3001 = vunpack.c.l.s4 1966171168
      %v3002 = vunpack.c.0.s8 %v3001
      %v3003 = vlaneseq
      %v3004 = vshrl.u32 %v3003, 7
      %v3005 = vsub.s32 %v3002, %v3004
      %v3006 = vrot.slane %v2777, %v3005
      %v3008 = vunpack.c.l.s4 1966171168
      %v3009 = vunpack.c.0.s8 %v3008
      %v3010 = vlaneseq
      %v3011 = vshrl.u32 %v3010, 7
      %v3012 = vsub.s32 %v3009, %v3011
      %v3013 = vrot.slane %v2638, %v3012
      %v3015 = vunpack.c.l.s4 1966171168
      %v3016 = vunpack.c.0.s8 %v3015
      %v3017 = vlaneseq
      %v3018 = vshrl.u32 %v3017, 7
      %v3019 = vsub.s32 %v3016, %v3018
      %v3020 = vrot.slane %v2774, %v3019
      %v3022 = vunpack.c.l.s4 1966171168
      %v3023 = vunpack.c.0.s8 %v3022
      %v3024 = vlaneseq
      %v3025 = vshrl.u32 %v3024, 7
      %v3026 = vsub.s32 %v3023, %v3025
      %v3027 = vrot.slane %v2642, %v3026
      %v3029 = vunpack.c.l.s4 1966171168
      %v3030 = vunpack.c.0.s8 %v3029
      %v3031 = vlaneseq
      %v3032 = vshrl.u32 %v3031, 7
      %v3033 = vsub.s32 %v3030, %v3032
      %v3034 = vrot.slane %v2778, %v3033
      %v3067 = vrot.slane %v2817, 4
      %v3068 = vrot.slane %v2824, 4
      %v3069 = vrot.slane %v2831, 4
      %v3070 = vrot.slane %v2838, 4
      %v3071 = vrot.slane %v2845, 4
      %v3072 = vrot.slane %v2852, 4
      %v3073 = vrot.slane %v2859, 4
      %v3074 = vrot.slane %v2866, 4
      %v3075 = vrot.slane %v2873, 4
      %v3076 = vrot.slane %v2880, 4
      %v3077 = vrot.slane %v2887, 4
      %v3078 = vrot.slane %v2894, 4
      %v3079 = vrot.slane %v2901, 4
      %v3080 = vrot.slane %v2908, 4
      %v3081 = vrot.slane %v2915, 4
      %v3082 = vrot.slane %v2922, 4
      %v3083 = vrot.slane %v2929, 4
      %v3084 = vrot.slane %v2936, 4
      %v3085 = vrot.slane %v2943, 4
      %v3086 = vrot.slane %v2950, 4
      %v3087 = vrot.slane %v2957, 4
      %v3088 = vrot.slane %v2964, 4
      %v3089 = vrot.slane %v2971, 4
      %v3090 = vrot.slane %v2978, 4
      %v3091 = vrot.slane %v2985, 4
      %v3092 = vrot.slane %v2992, 4
      %v3093 = vrot.slane %v2999, 4
      %v3094 = vrot.slane %v3006, 4
      %v3095 = vrot.slane %v3013, 4
      %v3096 = vrot.slane %v3020, 4
      %v3097 = vrot.slane %v3027, 4
      %v3098 = vrot.slane %v3034, 4
      %v3131 = vmax.f32 %v2817, %v3067
      %v3132 = vmax.f32 %v2824, %v3068
      %v3133 = vmax.f32 %v2831, %v3069
      %v3134 = vmax.f32 %v2838, %v3070
      %v3135 = vmax.f32 %v2845, %v3071
      %v3136 = vmax.f32 %v2852, %v3072
      %v3137 = vmax.f32 %v2859, %v3073
      %v3138 = vmax.f32 %v2866, %v3074
      %v3139 = vmax.f32 %v2873, %v3075
      %v3140 = vmax.f32 %v2880, %v3076
      %v3141 = vmax.f32 %v2887, %v3077
      %v3142 = vmax.f32 %v2894, %v3078
      %v3143 = vmax.f32 %v2901, %v3079
      %v3144 = vmax.f32 %v2908, %v3080
      %v3145 = vmax.f32 %v2915, %v3081
      %v3146 = vmax.f32 %v2922, %v3082
      %v3147 = vmax.f32 %v2929, %v3083
      %v3148 = vmax.f32 %v2936, %v3084
      %v3149 = vmax.f32 %v2943, %v3085
      %v3150 = vmax.f32 %v2950, %v3086
      %v3151 = vmax.f32 %v2957, %v3087
      %v3152 = vmax.f32 %v2964, %v3088
      %v3153 = vmax.f32 %v2971, %v3089
      %v3154 = vmax.f32 %v2978, %v3090
      %v3155 = vmax.f32 %v2985, %v3091
      %v3156 = vmax.f32 %v2992, %v3092
      %v3157 = vmax.f32 %v2999, %v3093
      %v3158 = vmax.f32 %v3006, %v3094
      %v3159 = vmax.f32 %v3013, %v3095
      %v3160 = vmax.f32 %v3020, %v3096
      %v3161 = vmax.f32 %v3027, %v3097
      %v3162 = vmax.f32 %v3034, %v3098
      %v3195 = vcombine.low %v3131, %v3132
      %v3196 = vcombine.low %v3133, %v3134
      %v3197 = vcombine.low %v3135, %v3136
      %v3198 = vcombine.low %v3137, %v3138
      %v3199 = vcombine.low %v3139, %v3140
      %v3200 = vcombine.low %v3141, %v3142
      %v3201 = vcombine.low %v3143, %v3144
      %v3202 = vcombine.low %v3145, %v3146
      %v3203 = vcombine.low %v3147, %v3148
      %v3204 = vcombine.low %v3149, %v3150
      %v3205 = vcombine.low %v3151, %v3152
      %v3206 = vcombine.low %v3153, %v3154
      %v3207 = vcombine.low %v3155, %v3156
      %v3208 = vcombine.low %v3157, %v3158
      %v3209 = vcombine.low %v3159, %v3160
      %v3210 = vcombine.low %v3161, %v3162
      %3227 = vxpose.xlu0.b32.start [1/16] %v3195, 128
      %3228 = vxpose.xlu0.b32.cont [2/16] %v3196, 128
      %3229 = vxpose.xlu0.b32.cont [3/16] %v3197, 128
      %3230 = vxpose.xlu0.b32.cont [4/16] %v3198, 128
      %3231 = vxpose.xlu0.b32.cont [5/16] %v3199, 128
      %3232 = vxpose.xlu0.b32.cont [6/16] %v3200, 128
      %3233 = vxpose.xlu0.b32.cont [7/16] %v3201, 128
      %3234 = vxpose.xlu0.b32.cont [8/16] %v3202, 128
      %3235 = vxpose.xlu0.b32.cont [9/16] %v3203, 128
      %3236 = vxpose.xlu0.b32.cont [10/16] %v3204, 128
      %3237 = vxpose.xlu0.b32.cont [11/16] %v3205, 128
      %3238 = vxpose.xlu0.b32.cont [12/16] %v3206, 128
      %3239 = vxpose.xlu0.b32.cont [13/16] %v3207, 128
      %3240 = vxpose.xlu0.b32.cont [14/16] %v3208, 128
      %3241 = vxpose.xlu0.b32.cont [15/16] %v3209, 128
      %3242 = vxpose.xlu0.b32.end [16/16] %v3210, 128
      %v3243 = vpop.trf.xlu0
      %v3244 = vpop.trf.xlu0
      %v3245 = vpop.trf.xlu0
      %v3246 = vpop.trf.xlu0
      %v3247 = vpop.trf.xlu0
      %v3248 = vpop.trf.xlu0
      %v3249 = vpop.trf.xlu0
      %v3250 = vpop.trf.xlu0
      %v3251 = vpop.trf.xlu0
      %v3252 = vpop.trf.xlu0
      %v3253 = vpop.trf.xlu0
      %v3254 = vpop.trf.xlu0
      %v3255 = vpop.trf.xlu0
      %v3256 = vpop.trf.xlu0
      %v3257 = vpop.trf.xlu0
      %v3258 = vpop.trf.xlu0
      %v3260 = vunpack.c.l.s4 1966171168
      %v3261 = vunpack.c.0.s8 %v3260
      %v3262 = vlaneseq
      %v3263 = vshrl.u32 %v3262, 7
      %v3264 = vsub.s32 %v3261, %v3263
      %v3265 = vrot.slane %v3243, %v3264
      %v3267 = vunpack.c.l.s4 1966171168
      %v3268 = vunpack.c.0.s8 %v3267
      %v3269 = vlaneseq
      %v3270 = vshrl.u32 %v3269, 7
      %v3271 = vsub.s32 %v3268, %v3270
      %v3272 = vrot.slane %v3244, %v3271
      %v3274 = vunpack.c.l.s4 1966171168
      %v3275 = vunpack.c.0.s8 %v3274
      %v3276 = vlaneseq
      %v3277 = vshrl.u32 %v3276, 7
      %v3278 = vsub.s32 %v3275, %v3277
      %v3279 = vrot.slane %v3245, %v3278
      %v3281 = vunpack.c.l.s4 1966171168
      %v3282 = vunpack.c.0.s8 %v3281
      %v3283 = vlaneseq
      %v3284 = vshrl.u32 %v3283, 7
      %v3285 = vsub.s32 %v3282, %v3284
      %v3286 = vrot.slane %v3246, %v3285
      %v3288 = vunpack.c.l.s4 1966171168
      %v3289 = vunpack.c.0.s8 %v3288
      %v3290 = vlaneseq
      %v3291 = vshrl.u32 %v3290, 7
      %v3292 = vsub.s32 %v3289, %v3291
      %v3293 = vrot.slane %v3247, %v3292
      %v3295 = vunpack.c.l.s4 1966171168
      %v3296 = vunpack.c.0.s8 %v3295
      %v3297 = vlaneseq
      %v3298 = vshrl.u32 %v3297, 7
      %v3299 = vsub.s32 %v3296, %v3298
      %v3300 = vrot.slane %v3248, %v3299
      %v3302 = vunpack.c.l.s4 1966171168
      %v3303 = vunpack.c.0.s8 %v3302
      %v3304 = vlaneseq
      %v3305 = vshrl.u32 %v3304, 7
      %v3306 = vsub.s32 %v3303, %v3305
      %v3307 = vrot.slane %v3249, %v3306
      %v3309 = vunpack.c.l.s4 1966171168
      %v3310 = vunpack.c.0.s8 %v3309
      %v3311 = vlaneseq
      %v3312 = vshrl.u32 %v3311, 7
      %v3313 = vsub.s32 %v3310, %v3312
      %v3314 = vrot.slane %v3250, %v3313
      %v3316 = vunpack.c.l.s4 1966171168
      %v3317 = vunpack.c.0.s8 %v3316
      %v3318 = vlaneseq
      %v3319 = vshrl.u32 %v3318, 7
      %v3320 = vsub.s32 %v3317, %v3319
      %v3321 = vrot.slane %v3251, %v3320
      %v3323 = vunpack.c.l.s4 1966171168
      %v3324 = vunpack.c.0.s8 %v3323
      %v3325 = vlaneseq
      %v3326 = vshrl.u32 %v3325, 7
      %v3327 = vsub.s32 %v3324, %v3326
      %v3328 = vrot.slane %v3252, %v3327
      %v3330 = vunpack.c.l.s4 1966171168
      %v3331 = vunpack.c.0.s8 %v3330
      %v3332 = vlaneseq
      %v3333 = vshrl.u32 %v3332, 7
      %v3334 = vsub.s32 %v3331, %v3333
      %v3335 = vrot.slane %v3253, %v3334
      %v3337 = vunpack.c.l.s4 1966171168
      %v3338 = vunpack.c.0.s8 %v3337
      %v3339 = vlaneseq
      %v3340 = vshrl.u32 %v3339, 7
      %v3341 = vsub.s32 %v3338, %v3340
      %v3342 = vrot.slane %v3254, %v3341
      %v3344 = vunpack.c.l.s4 1966171168
      %v3345 = vunpack.c.0.s8 %v3344
      %v3346 = vlaneseq
      %v3347 = vshrl.u32 %v3346, 7
      %v3348 = vsub.s32 %v3345, %v3347
      %v3349 = vrot.slane %v3255, %v3348
      %v3351 = vunpack.c.l.s4 1966171168
      %v3352 = vunpack.c.0.s8 %v3351
      %v3353 = vlaneseq
      %v3354 = vshrl.u32 %v3353, 7
      %v3355 = vsub.s32 %v3352, %v3354
      %v3356 = vrot.slane %v3256, %v3355
      %v3358 = vunpack.c.l.s4 1966171168
      %v3359 = vunpack.c.0.s8 %v3358
      %v3360 = vlaneseq
      %v3361 = vshrl.u32 %v3360, 7
      %v3362 = vsub.s32 %v3359, %v3361
      %v3363 = vrot.slane %v3257, %v3362
      %v3365 = vunpack.c.l.s4 1966171168
      %v3366 = vunpack.c.0.s8 %v3365
      %v3367 = vlaneseq
      %v3368 = vshrl.u32 %v3367, 7
      %v3369 = vsub.s32 %v3366, %v3368
      %v3370 = vrot.slane %v3258, %v3369
      %v3387 = vrot.slane %v3265, 4
      %v3388 = vrot.slane %v3272, 4
      %v3389 = vrot.slane %v3279, 4
      %v3390 = vrot.slane %v3286, 4
      %v3391 = vrot.slane %v3293, 4
      %v3392 = vrot.slane %v3300, 4
      %v3393 = vrot.slane %v3307, 4
      %v3394 = vrot.slane %v3314, 4
      %v3395 = vrot.slane %v3321, 4
      %v3396 = vrot.slane %v3328, 4
      %v3397 = vrot.slane %v3335, 4
      %v3398 = vrot.slane %v3342, 4
      %v3399 = vrot.slane %v3349, 4
      %v3400 = vrot.slane %v3356, 4
      %v3401 = vrot.slane %v3363, 4
      %v3402 = vrot.slane %v3370, 4
      %v3419 = vmax.f32 %v3265, %v3387
      %v3420 = vmax.f32 %v3272, %v3388
      %v3421 = vmax.f32 %v3279, %v3389
      %v3422 = vmax.f32 %v3286, %v3390
      %v3423 = vmax.f32 %v3293, %v3391
      %v3424 = vmax.f32 %v3300, %v3392
      %v3425 = vmax.f32 %v3307, %v3393
      %v3426 = vmax.f32 %v3314, %v3394
      %v3427 = vmax.f32 %v3321, %v3395
      %v3428 = vmax.f32 %v3328, %v3396
      %v3429 = vmax.f32 %v3335, %v3397
      %v3430 = vmax.f32 %v3342, %v3398
      %v3431 = vmax.f32 %v3349, %v3399
      %v3432 = vmax.f32 %v3356, %v3400
      %v3433 = vmax.f32 %v3363, %v3401
      %v3434 = vmax.f32 %v3370, %v3402
      %v3451 = vcombine.low %v3419, %v3420
      %v3452 = vcombine.low %v3421, %v3422
      %v3453 = vcombine.low %v3423, %v3424
      %v3454 = vcombine.low %v3425, %v3426
      %v3455 = vcombine.low %v3427, %v3428
      %v3456 = vcombine.low %v3429, %v3430
      %v3457 = vcombine.low %v3431, %v3432
      %v3458 = vcombine.low %v3433, %v3434
      %3467 = vst [vmem:[%s206] sm:$0xff] %v3451
      %3468 = vst [vmem:[%s206 + $0x8] sm:$0xff] %v3452
      %3469 = vst [vmem:[%s206 + $0x10] sm:$0xff] %v3453
      %3470 = vst [vmem:[%s206 + $0x18] sm:$0xff] %v3454
      %3471 = vst [vmem:[%s206 + $0x20] sm:$0xff] %v3455
      %3472 = vst [vmem:[%s206 + $0x28] sm:$0xff] %v3456
      %3473 = vst [vmem:[%s206 + $0x30] sm:$0xff] %v3457
      %3474 = vst [vmem:[%s206 + $0x38] sm:$0xff] %v3458
      %p3475 = scmp.lt.s32.totalorder %s18, 1
      %s3476 = scalar_select %p3475, %s18, 1
      %p3477 = scmp.lt.s32.totalorder %s19, 7
      %s3478 = scalar_select %p3477, %s19, 7
      %s3479 = smul.addr %s3478, 8
      %s3480 = smul.addr %s3476, 64
      %s3481 = sadd.s32 %s3479, %s3480
      %s3482 = smul.addr %s3481, 8
      %s3483 = scalar_lea.vmem %s3, %s3482
      // Predicated region
      $region33: #{conv_features.2} parent=31 // pred_check
        %p3484 = pneg %p116
      $region34: #{conv_features.2} parent=31 // pred_check_branch
        %3486 = sbr.rel (%p3484) target = $region36
      $region35: #{conv_features.2} parent=31 // pred_region
        _
      $region36: #{conv_features.2} parent=31 // pred_fallthru
        _
    $region32: #{conv_features.2} parent=5 // pred_fallthru
      _
    %p3487 = scmp.le.s32.totalorder 2, %s9
    // Predicated region
    $region37: #{conv_features.2} parent=5 // pred_check
      %p3488 = pneg %p3487
    $region38: #{conv_features.2} parent=5 // pred_check_branch
      %3490 = sbr.rel (%p3488) target = $region40
    $region39: #{conv_features.2} parent=5 // pred_region
      %s3491 = ssub.s32 %s9, 2
      // Predicated region
      $region41: #{conv_features.2} parent=39 // pred_check
        %p3492 = pneg %p122
      $region42: #{conv_features.2} parent=39 // pred_check_branch
        %3494 = sbr.rel (%p3492) target = $region44
      $region43: #{conv_features.2} parent=39 // pred_region
        %p3495 = scmp.lt.s32.totalorder %s20, 1
        %s3496 = scalar_select %p3495, %s20, 1
        %p3497 = scmp.lt.s32.totalorder %s21, 7
        %s3498 = scalar_select %p3497, %s21, 7
        %s3499 = smul.addr %s3498, 8
        %s3500 = smul.addr %s3496, 64
        %s3501 = sadd.s32 %s3499, %s3500
        %s3502 = smul.addr %s3501, 8
        %s3503 = scalar_lea.vmem %s3, %s3502
      $region44: #{conv_features.2} parent=39 // pred_fallthru
        _
    $region40: #{conv_features.2} parent=5 // pred_fallthru
      _
  $region6: #{conv_features.2} parent=0 // loop_footer
    %s13 = sadd.s32 1, %s9
  $region7: #{conv_features.2} parent=0 // loop_footer_branch
    %8 = sbr.rel target = $region3
  $region8: #{conv_features.2} parent=0 // loop_exit
    _

</llo_original>
